<compile_context>
chip_gen: v6e
topology: v6e:2x2x1
jax: 0.10.0
libtpu: 0.0.40
codegen_flags: <defaults>
</compile_context>

<pallas_src>
import jax
import jax.numpy as jnp
from jax import lax
from jax.experimental import pallas as pl
from jax.experimental.pallas import tpu as pltpu

INPUT_SIZE = 28 * 28      # 784
HIDDEN1 = 1024
HIDDEN2 = 512
OUTPUT_SIZE = 10
OUT_PAD = 128             # lane-dense padded output width
BN_EPS = 1e-5


def _mlp_kernel(x_ref, scale_ref, shift_ref,
                w1_ref, b1_ref, w2_ref, b2_ref, w3_ref, b3_ref,
                out_ref):
    # ---- BatchNorm1d: x arrives bf16, BN math in f32 (scale/shift precomputed) ----
    x = x_ref[...].astype(jnp.float32)                        # [TILE_B, 784]
    xn = (x * scale_ref[...] + shift_ref[...]).astype(jnp.bfloat16)

    # ---- fc1 + ReLU (bf16 MXU matmul, f32 accumulation) ----
    z1 = jnp.dot(xn, w1_ref[...], preferred_element_type=jnp.float32) + b1_ref[...]
    z1 = jnp.maximum(z1, 0.0).astype(jnp.bfloat16)            # [TILE_B, 1024]

    # ---- fc2 + ReLU ----
    z2 = jnp.dot(z1, w2_ref[...], preferred_element_type=jnp.float32) + b2_ref[...]
    z2 = jnp.maximum(z2, 0.0).astype(jnp.bfloat16)            # [TILE_B, 512]

    # ---- fc3 (output padded to 128 lanes for unmasked lane-dense stores) ----
    y = jnp.dot(z2, w3_ref[...], preferred_element_type=jnp.float32) + b3_ref[...]
    out_ref[...] = y.astype(out_ref.dtype)                    # [TILE_B, 128]


def _pick_tile_b(batch):
    """Batch tile: amortize per-grid-step overhead, keep >= 2 tiles for v7x megacore."""
    if batch <= 256:
        return 128                              # 2 tiles at B=256 -> both v7x TCs busy
    if batch <= 2048:
        # exactly 2 tiles: half the padded batch, rounded up to a multiple of 128
        return ((batch + 255) // 256) * 128
    return 1024 if batch >= 4096 else 512       # many (even) tiles at big B


def mnist_net_forward(x, params, *, training=True, tile_b=None, out_dtype=jnp.float32):
    """x: [B, 784]. Returns [B, 10] logits (out_dtype, default f32).

    training=True  -> BatchNorm uses batch statistics (PyTorch .train() forward).
    training=False -> BatchNorm uses running_mean / running_var (PyTorch .eval()).
    """
    B, feat = x.shape
    assert feat == INPUT_SIZE
    if tile_b is None:
        tile_b = _pick_tile_b(B)
    n_tiles = pl.cdiv(B, tile_b)
    b_pad = n_tiles * tile_b

    gamma = params["gamma"].reshape(1, INPUT_SIZE).astype(jnp.float32)
    beta = params["beta"].reshape(1, INPUT_SIZE).astype(jnp.float32)

    if training:
        # One fused pass over x: sum + sum-of-squares (single HBM read), f32 math.
        # Biased variance (as PyTorch uses for normalization), clamped >= 0 against
        # E[x^2] - mean^2 cancellation.
        xf = x.astype(jnp.float32)
        s1 = jnp.sum(xf, axis=0, keepdims=True)
        s2 = jnp.sum(xf * xf, axis=0, keepdims=True)
        mean = s1 / B
        var = jnp.maximum(s2 / B - mean * mean, 0.0)
    else:
        mean = params["running_mean"].reshape(1, INPUT_SIZE).astype(jnp.float32)
        var = params["running_var"].reshape(1, INPUT_SIZE).astype(jnp.float32)
    # TODO(synk): train-mode running-stat momentum update (a PyTorch forward side effect)
    # is not emitted; it does not affect the returned logits.

    inv_std = lax.rsqrt(var + BN_EPS)
    scale = gamma * inv_std                                   # [1, 784] f32
    shift = beta - mean * scale                               # [1, 784] f32

    # x goes over the wire in bf16 (halves the dominant per-step HBM stream). Cast BEFORE
    # padding so the padded copy (if any) is half-size; skip the pad when B is tile-aligned.
    x_bf = x.astype(jnp.bfloat16)
    if b_pad != B:
        x_bf = jnp.pad(x_bf, ((0, b_pad - B), (0, 0)))

    # bf16 weights (halve HBM traffic and resident VMEM); f32 accumulation in-kernel.
    w1 = params["w1"].astype(jnp.bfloat16)                    # [784, 1024]
    w2 = params["w2"].astype(jnp.bfloat16)                    # [1024, 512]
    w3 = jnp.zeros((HIDDEN2, OUT_PAD), jnp.bfloat16).at[:, :OUTPUT_SIZE].set(
        params["w3"].astype(jnp.bfloat16))                    # [512, 128] padded
    b1 = params["b1"].reshape(1, HIDDEN1).astype(jnp.float32)
    b2 = params["b2"].reshape(1, HIDDEN2).astype(jnp.float32)
    b3 = jnp.zeros((1, OUT_PAD), jnp.float32).at[:, :OUTPUT_SIZE].set(
        params["b3"].reshape(1, OUTPUT_SIZE).astype(jnp.float32))

    batch_spec = lambda shape: pl.BlockSpec(shape, lambda i: (i, 0))   # tiled over batch
    # Constant index_map => VMEM-resident, DMA'd once; single buffer (no dead 2nd buffer).
    resident = lambda shape: pl.BlockSpec(shape, lambda i: (0, 0),
                                          pipeline_mode=pl.Buffered(1))

    y_pad = pl.pallas_call(
        _mlp_kernel,
        out_shape=jax.ShapeDtypeStruct((b_pad, OUT_PAD), out_dtype),
        grid=(n_tiles,),
        in_specs=[
            batch_spec((tile_b, INPUT_SIZE)),     # x tile (bf16)
            resident((1, INPUT_SIZE)),            # BN scale (f32)
            resident((1, INPUT_SIZE)),            # BN shift (f32)
            resident((INPUT_SIZE, HIDDEN1)),      # w1
            resident((1, HIDDEN1)),               # b1
            resident((HIDDEN1, HIDDEN2)),         # w2
            resident((1, HIDDEN2)),               # b2
            resident((HIDDEN2, OUT_PAD)),         # w3 (padded)
            resident((1, OUT_PAD)),               # b3 (padded)
        ],
        out_specs=batch_spec((tile_b, OUT_PAD)),
        compiler_params=pltpu.CompilerParams(
            dimension_semantics=("parallel",),    # shard batch tiles across v7x's 2 TCs
            # ~7 MiB real working set even at tile_b=1024; 32 MiB leaves pipelining
            # headroom and respects v7x's 64 MiB physical VMEM.
            vmem_limit_bytes=32 << 20,
        ),
    )(x_bf, scale, shift, w1, b1, w2, b2, w3, b3)

    return y_pad[:B, :OUTPUT_SIZE]


def init_params(key):
    """Deterministic init mimicking PyTorch defaults (U(-1/sqrt(fan_in), +1/sqrt(fan_in)))."""
    ks = jax.random.split(key, 6)

    def linear(kw, kb, fan_in, fan_out):
        bound = 1.0 / jnp.sqrt(fan_in)
        # stored as [in, out] for direct x @ W in the kernel
        w = jax.random.uniform(kw, (fan_in, fan_out), jnp.float32, -bound, bound)
        b = jax.random.uniform(kb, (fan_out,), jnp.float32, -bound, bound)
        return w, b

    w1, b1 = linear(ks[0], ks[1], INPUT_SIZE, HIDDEN1)
    w2, b2 = linear(ks[2], ks[3], HIDDEN1, HIDDEN2)
    w3, b3 = linear(ks[4], ks[5], HIDDEN2, OUTPUT_SIZE)
    return {
        "gamma": jnp.ones((INPUT_SIZE,), jnp.float32),          # BatchNorm1d weight
        "beta": jnp.zeros((INPUT_SIZE,), jnp.float32),          # BatchNorm1d bias
        "running_mean": jnp.zeros((INPUT_SIZE,), jnp.float32),  # BatchNorm1d eval stats
        "running_var": jnp.ones((INPUT_SIZE,), jnp.float32),
        "w1": w1, "b1": b1,
        "w2": w2, "b2": b2,
        "w3": w3, "b3": b3,
    }


def _reference_forward(x, params, mean, var, *, quantize):
    """Pure-JAX reference. quantize=False reproduces the original f32 PyTorch module;
    quantize=True mirrors the kernel's bf16-input / f32-accumulate recipe."""
    inv_std = lax.rsqrt(var + BN_EPS)
    scale = params["gamma"].reshape(1, -1) * inv_std
    shift = params["beta"].reshape(1, -1) - mean * scale
    if quantize:
        xq = x.astype(jnp.bfloat16).astype(jnp.float32)
        xn = (xq * scale + shift).astype(jnp.bfloat16)
        w1, w2, w3 = (params[k].astype(jnp.bfloat16) for k in ("w1", "w2", "w3"))
    else:
        xn = x * scale + shift
        w1, w2, w3 = params["w1"], params["w2"], params["w3"]
    z1 = jnp.maximum(jnp.dot(xn, w1, preferred_element_type=jnp.float32)
                     + params["b1"][None, :], 0.0)
    if quantize:
        z1 = z1.astype(jnp.bfloat16)
    z2 = jnp.maximum(jnp.dot(z1, w2, preferred_element_type=jnp.float32)
                     + params["b2"][None, :], 0.0)
    if quantize:
        z2 = z2.astype(jnp.bfloat16)
    return jnp.dot(z2, w3, preferred_element_type=jnp.float32) + params["b3"][None, :]


if __name__ == "__main__":
    key = jax.random.PRNGKey(0)
    k_x, k_p = jax.random.split(key)

    B = 8  # small example batch; feature dims fixed by the module (784 -> 1024 -> 512 -> 10)
    x = jax.random.normal(k_x, (B, INPUT_SIZE), jnp.float32)
    params = init_params(k_p)

    # ---- training mode (batch statistics), like the PyTorch module under .train() ----
    y = jax.block_until_ready(mnist_net_forward(x, params, training=True))
    assert y.shape == (B, OUTPUT_SIZE)

    mean = jnp.mean(x, axis=0, keepdims=True)
    var = jnp.mean((x - mean) ** 2, axis=0, keepdims=True)     # biased, like PyTorch train
    y_bf = _reference_forward(x, params, mean, var, quantize=True)    # matched bf16 recipe
    y_f32 = _reference_forward(x, params, mean, var, quantize=False)  # original f32 module
    assert jnp.allclose(y, y_bf, atol=1e-2, rtol=1e-2), \
        f"bf16-recipe mismatch: max abs diff {jnp.max(jnp.abs(y - y_bf))}"
    assert jnp.allclose(y, y_f32, atol=5e-2, rtol=5e-2), \
        f"f32-module drift: max abs diff {jnp.max(jnp.abs(y - y_f32))}"

    # ---- eval mode (running statistics), like the PyTorch module under .eval() ----
    y_ev = jax.block_until_ready(mnist_net_forward(x, params, training=False))
    assert y_ev.shape == (B, OUTPUT_SIZE)
    y_ev_f32 = _reference_forward(x, params,
                                  params["running_mean"].reshape(1, -1),
                                  params["running_var"].reshape(1, -1),
                                  quantize=False)
    assert jnp.allclose(y_ev, y_ev_f32, atol=5e-2, rtol=5e-2), \
        f"eval-mode drift: max abs diff {jnp.max(jnp.abs(y_ev - y_ev_f32))}"

    print("KERNEL_OK")
</pallas_src>

<mosaic_0001>
module attributes {stable_mosaic.version = 11 : i64} {
  func.func @_mlp_kernel(%arg0: i32, %arg1: memref<128x784xbf16, #tpu.memory_space<vmem>>, %arg2: memref<1x784xf32, #tpu.memory_space<vmem>>, %arg3: memref<1x784xf32, #tpu.memory_space<vmem>>, %arg4: memref<784x1024xbf16, #tpu.memory_space<vmem>>, %arg5: memref<1x1024xf32, #tpu.memory_space<vmem>>, %arg6: memref<1024x512xbf16, #tpu.memory_space<vmem>>, %arg7: memref<1x512xf32, #tpu.memory_space<vmem>>, %arg8: memref<512x128xbf16, #tpu.memory_space<vmem>>, %arg9: memref<1x128xf32, #tpu.memory_space<vmem>>, %arg10: memref<128x128xf32, #tpu.memory_space<vmem>>) attributes {dimension_semantics = [#tpu.dimension_semantics<parallel>], iteration_bounds = array<i64: 1>, scalar_prefetch = 0 : i64, scratch_operands = 0 : i64, tpu.core_type = #tpu.core_type<tc>, window_params = [{transform_indices = @transform_0, window_bounds = array<i64: 128, 784>}, {pipeline_mode = #tpu.pipeline_mode<synchronous>, transform_indices = @transform_1, window_bounds = array<i64: 1, 784>}, {pipeline_mode = #tpu.pipeline_mode<synchronous>, transform_indices = @transform_2, window_bounds = array<i64: 1, 784>}, {pipeline_mode = #tpu.pipeline_mode<synchronous>, transform_indices = @transform_3, window_bounds = array<i64: 784, 1024>}, {pipeline_mode = #tpu.pipeline_mode<synchronous>, transform_indices = @transform_4, window_bounds = array<i64: 1, 1024>}, {pipeline_mode = #tpu.pipeline_mode<synchronous>, transform_indices = @transform_5, window_bounds = array<i64: 1024, 512>}, {pipeline_mode = #tpu.pipeline_mode<synchronous>, transform_indices = @transform_6, window_bounds = array<i64: 1, 512>}, {pipeline_mode = #tpu.pipeline_mode<synchronous>, transform_indices = @transform_7, window_bounds = array<i64: 512, 128>}, {pipeline_mode = #tpu.pipeline_mode<synchronous>, transform_indices = @transform_8, window_bounds = array<i64: 1, 128>}, {transform_indices = @transform_9, window_bounds = array<i64: 128, 128>}]} {
    %c0 = arith.constant 0 : index
    %c0_0 = arith.constant 0 : index
    %0 = vector.load %arg1[%c0, %c0_0] : memref<128x784xbf16, #tpu.memory_space<vmem>>, vector<128x784xbf16>
    %1 = arith.extf %0 : vector<128x784xbf16> to vector<128x784xf32>
    %c0_1 = arith.constant 0 : index
    %c0_2 = arith.constant 0 : index
    %2 = vector.load %arg2[%c0_1, %c0_2] : memref<1x784xf32, #tpu.memory_space<vmem>>, vector<1x784xf32>
    %3 = vector.broadcast %2 : vector<1x784xf32> to vector<128x784xf32>
    %4 = arith.mulf %1, %3 : vector<128x784xf32>
    %c0_3 = arith.constant 0 : index
    %c0_4 = arith.constant 0 : index
    %5 = vector.load %arg3[%c0_3, %c0_4] : memref<1x784xf32, #tpu.memory_space<vmem>>, vector<1x784xf32>
    %6 = vector.broadcast %5 : vector<1x784xf32> to vector<128x784xf32>
    %7 = arith.addf %4, %6 : vector<128x784xf32>
    %8 = arith.truncf %7 : vector<128x784xf32> to vector<128x784xbf16>
    %c0_5 = arith.constant 0 : index
    %c0_6 = arith.constant 0 : index
    %9 = vector.load %arg4[%c0_5, %c0_6] : memref<784x1024xbf16, #tpu.memory_space<vmem>>, vector<784x1024xbf16>
    %cst = arith.constant dense<0.000000e+00> : vector<128x1024xf32>
    %10 = tpu.matmul %8, %9, %cst {dimension_numbers = #tpu.dot_dimension_numbers<[1], [0], [0], [1], [0, 0, 1, 1], [], []>} : vector<128x784xbf16>, vector<784x1024xbf16>, vector<128x1024xf32> -> vector<128x1024xf32>
    %c0_7 = arith.constant 0 : index
    %c0_8 = arith.constant 0 : index
    %11 = vector.load %arg5[%c0_7, %c0_8] : memref<1x1024xf32, #tpu.memory_space<vmem>>, vector<1x1024xf32>
    %12 = vector.broadcast %11 : vector<1x1024xf32> to vector<128x1024xf32>
    %13 = arith.addf %10, %12 : vector<128x1024xf32>
    %cst_9 = arith.constant 0.000000e+00 : f32
    %14 = vector.broadcast %cst_9 : f32 to vector<128x1024xf32>
    %15 = arith.maximumf %13, %14 : vector<128x1024xf32>
    %16 = arith.truncf %15 : vector<128x1024xf32> to vector<128x1024xbf16>
    %c0_10 = arith.constant 0 : index
    %c0_11 = arith.constant 0 : index
    %17 = vector.load %arg6[%c0_10, %c0_11] : memref<1024x512xbf16, #tpu.memory_space<vmem>>, vector<1024x512xbf16>
    %cst_12 = arith.constant dense<0.000000e+00> : vector<128x512xf32>
    %18 = tpu.matmul %16, %17, %cst_12 {dimension_numbers = #tpu.dot_dimension_numbers<[1], [0], [0], [1], [0, 0, 1, 1], [], []>} : vector<128x1024xbf16>, vector<1024x512xbf16>, vector<128x512xf32> -> vector<128x512xf32>
    %c0_13 = arith.constant 0 : index
    %c0_14 = arith.constant 0 : index
    %19 = vector.load %arg7[%c0_13, %c0_14] : memref<1x512xf32, #tpu.memory_space<vmem>>, vector<1x512xf32>
    %20 = vector.broadcast %19 : vector<1x512xf32> to vector<128x512xf32>
    %21 = arith.addf %18, %20 : vector<128x512xf32>
    %cst_15 = arith.constant 0.000000e+00 : f32
    %22 = vector.broadcast %cst_15 : f32 to vector<128x512xf32>
    %23 = arith.maximumf %21, %22 : vector<128x512xf32>
    %24 = arith.truncf %23 : vector<128x512xf32> to vector<128x512xbf16>
    %c0_16 = arith.constant 0 : index
    %c0_17 = arith.constant 0 : index
    %25 = vector.load %arg8[%c0_16, %c0_17] : memref<512x128xbf16, #tpu.memory_space<vmem>>, vector<512x128xbf16>
    %cst_18 = arith.constant dense<0.000000e+00> : vector<128x128xf32>
    %26 = tpu.matmul %24, %25, %cst_18 {dimension_numbers = #tpu.dot_dimension_numbers<[1], [0], [0], [1], [0, 0, 1, 1], [], []>} : vector<128x512xbf16>, vector<512x128xbf16>, vector<128x128xf32> -> vector<128x128xf32>
    %c0_19 = arith.constant 0 : index
    %c0_20 = arith.constant 0 : index
    %27 = vector.load %arg9[%c0_19, %c0_20] : memref<1x128xf32, #tpu.memory_space<vmem>>, vector<1x128xf32>
    %28 = vector.broadcast %27 : vector<1x128xf32> to vector<128x128xf32>
    %29 = arith.addf %26, %28 : vector<128x128xf32>
    %c0_21 = arith.constant 0 : index
    %c0_22 = arith.constant 0 : index
    %30 = vector.load %arg10[%c0_21, %c0_22] : memref<128x128xf32, #tpu.memory_space<vmem>>, vector<128x128xf32>
    tpu.vector_store %arg10[%c0_21, %c0_22], %29 {strides = array<i32>} : memref<128x128xf32, #tpu.memory_space<vmem>>, vector<128x128xf32>,
    return
  }
  func.func @transform_0(%arg0: i32) -> (i32, i32) {
    %c0_i32 = arith.constant 0 : i32
    %c0_i32_0 = arith.constant 0 : i32
    return %arg0, %c0_i32 : i32, i32
  }
  func.func @transform_1(%arg0: i32) -> (i32, i32) {
    %c0_i32 = arith.constant 0 : i32
    %c0_i32_0 = arith.constant 0 : i32
    %c0_i32_1 = arith.constant 0 : i32
    return %c0_i32, %c0_i32_0 : i32, i32
  }
  func.func @transform_2(%arg0: i32) -> (i32, i32) {
    %c0_i32 = arith.constant 0 : i32
    %c0_i32_0 = arith.constant 0 : i32
    %c0_i32_1 = arith.constant 0 : i32
    return %c0_i32, %c0_i32_0 : i32, i32
  }
  func.func @transform_3(%arg0: i32) -> (i32, i32) {
    %c0_i32 = arith.constant 0 : i32
    %c0_i32_0 = arith.constant 0 : i32
    %c0_i32_1 = arith.constant 0 : i32
    return %c0_i32, %c0_i32_0 : i32, i32
  }
  func.func @transform_4(%arg0: i32) -> (i32, i32) {
    %c0_i32 = arith.constant 0 : i32
    %c0_i32_0 = arith.constant 0 : i32
    %c0_i32_1 = arith.constant 0 : i32
    return %c0_i32, %c0_i32_0 : i32, i32
  }
  func.func @transform_5(%arg0: i32) -> (i32, i32) {
    %c0_i32 = arith.constant 0 : i32
    %c0_i32_0 = arith.constant 0 : i32
    %c0_i32_1 = arith.constant 0 : i32
    return %c0_i32, %c0_i32_0 : i32, i32
  }
  func.func @transform_6(%arg0: i32) -> (i32, i32) {
    %c0_i32 = arith.constant 0 : i32
    %c0_i32_0 = arith.constant 0 : i32
    %c0_i32_1 = arith.constant 0 : i32
    return %c0_i32, %c0_i32_0 : i32, i32
  }
  func.func @transform_7(%arg0: i32) -> (i32, i32) {
    %c0_i32 = arith.constant 0 : i32
    %c0_i32_0 = arith.constant 0 : i32
    %c0_i32_1 = arith.constant 0 : i32
    return %c0_i32, %c0_i32_0 : i32, i32
  }
  func.func @transform_8(%arg0: i32) -> (i32, i32) {
    %c0_i32 = arith.constant 0 : i32
    %c0_i32_0 = arith.constant 0 : i32
    %c0_i32_1 = arith.constant 0 : i32
    return %c0_i32, %c0_i32_0 : i32, i32
  }
  func.func @transform_9(%arg0: i32) -> (i32, i32) {
    %c0_i32 = arith.constant 0 : i32
    %c0_i32_0 = arith.constant 0 : i32
    return %arg0, %c0_i32 : i32, i32
  }
}

</mosaic_0001>

<llo_original>
// kernel: tpu_custom_call.1
$region0: #{tpu_custom_call.1}
  #allocation0 [shape = 'u32[]', space=smem, size = 0x4, offset = 0x4, fixed_abs, tag = 'smem constant byte address 0x4 - core index']
  #allocation1 [shape = 'u32[144,128]{1,0:T(1,128)}', space=vmem, size = 0x12000, scoped, tag = 'internal scratch']
  %s0 = inlined_call_operand.vmem [shape: bf16[128,784], index: 0, kind: input, shape index: {}]
  %s1 = inlined_call_operand.hbm [shape: f32[1,784], index: 1, kind: input, shape index: {}]
  %s2 = inlined_call_operand.hbm [shape: f32[1,784], index: 2, kind: input, shape index: {}]
  %s3 = inlined_call_operand.hbm [shape: bf16[784,1024], index: 3, kind: input, shape index: {}]
  %s4 = inlined_call_operand.hbm [shape: f32[1,1024], index: 4, kind: input, shape index: {}]
  %s5 = inlined_call_operand.hbm [shape: bf16[1024,512], index: 5, kind: input, shape index: {}]
  %s6 = inlined_call_operand.hbm [shape: f32[1,512], index: 6, kind: input, shape index: {}]
  %s7 = inlined_call_operand.hbm [shape: bf16[512,128], index: 7, kind: input, shape index: {}]
  %s8 = inlined_call_operand.hbm [shape: f32[1,128], index: 8, kind: input, shape index: {}]
  %s9 = inlined_call_operand.hbm [shape: f32[128,128], index: 9, kind: output, shape index: {}]
  %s10 = sld [smem:[#allocation0]]
  $region78: #{tpu_custom_call.1} parent=0
    _
  %s12 = ssub.s32 1, %s10
  %s13 = scalar_select 0, %s12, %s10
  $region1: #{tpu_custom_call.1} parent=0
    #allocation2 [shape = 'u8[3584]{0}', space=vmem, size = 0x1000, scoped, tag = 'input window, operand 1, single buffered']
    #allocation3 [shape = 's32[1]{0}', space=sflag, size = 0x4, scoped, tag = 'scoped memory for tpu_custom_call.1']
    #allocation4 [shape = 's32[1]{0}', space=sflag, size = 0x4, scoped, tag = 'scoped memory for tpu_custom_call.1']
    #allocation5 [shape = 'u8[3584]{0}', space=vmem, size = 0x1000, scoped, tag = 'input window, operand 2, single buffered']
    #allocation6 [shape = 's32[1]{0}', space=sflag, size = 0x4, scoped, tag = 'scoped memory for tpu_custom_call.1']
    #allocation7 [shape = 'u8[1605632]{0}', space=vmem, size = 0x188000, scoped, tag = 'input window, operand 3, single buffered']
    #allocation8 [shape = 'u8[4096]{0}', space=vmem, size = 0x1000, scoped, tag = 'input window, operand 4, single buffered']
    #allocation9 [shape = 's32[1]{0}', space=sflag, size = 0x4, scoped, tag = 'scoped memory for tpu_custom_call.1']
    #allocation10 [shape = 'u8[1048576]{0}', space=vmem, size = 0x100000, scoped, tag = 'input window, operand 5, single buffered']
    #allocation11 [shape = 'u8[2048]{0}', space=vmem, size = 0x800, scoped, tag = 'input window, operand 6, single buffered']
    #allocation12 [shape = 's32[1]{0}', space=sflag, size = 0x4, scoped, tag = 'scoped memory for tpu_custom_call.1']
    #allocation13 [shape = 'u8[131072]{0}', space=vmem, size = 0x20000, scoped, tag = 'input window, operand 7, single buffered']
    #allocation14 [shape = 'u8[512]{0}', space=vmem, size = 0x400, scoped, tag = 'input window, operand 8, single buffered']
    #allocation15 [shape = 's32[1]{0}', space=sflag, size = 0x4, scoped, tag = 'scoped memory for tpu_custom_call.1']
    #allocation16 [shape = 'u8[65536]{0}', space=vmem, size = 0x10000, scoped, tag = 'output window, operand 0, single buffered']
    %14 = vsyncpa [#allocation3], 0
    %15 = vsyncpa [#allocation6], 0
    %16 = vsyncpa [#allocation9], 0
    %17 = vsyncpa [#allocation12], 0
    %18 = vsyncpa [#allocation15], 0
    %19 = vsyncpa [#allocation4], 0
    // Predicated region
    $region2: #{tpu_custom_call.1} parent=1 // pred_check
      _
    $region3: #{tpu_custom_call.1} parent=1 // pred_check_branch
      %21 = sbr.rel (0) target = $region5
    $region4: #{tpu_custom_call.1} parent=1 // pred_region
      _
    $region5: #{tpu_custom_call.1} parent=1 // pred_fallthru
      _
    // Predicated region
    $region6: #{tpu_custom_call.1} parent=1 // pred_check
      _
    $region7: #{tpu_custom_call.1} parent=1 // pred_check_branch
      %23 = sbr.rel (0) target = $region9
    $region8: #{tpu_custom_call.1} parent=1 // pred_region
      %s25 = ssub.s32 112, 112
      %26 = vsyncadd [#allocation3], %s25
      %s28 = sshll.u32 [#allocation2], 4
      %s29 = int_to_ptr.vmem [resolvable:$true] %s28
      %31 = dma.hbm_to_vmem [thread:$0]  %s1, 112, %s29, [#allocation3]
    $region9: #{tpu_custom_call.1} parent=1 // pred_fallthru
      _
    // Predicated region
    $region10: #{tpu_custom_call.1} parent=1 // pred_check
      _
    $region11: #{tpu_custom_call.1} parent=1 // pred_check_branch
      %33 = sbr.rel (0) target = $region13
    $region12: #{tpu_custom_call.1} parent=1 // pred_region
      %s35 = ssub.s32 112, 112
      %36 = vsyncadd [#allocation6], %s35
      %s38 = sshll.u32 [#allocation5], 4
      %s39 = int_to_ptr.vmem [resolvable:$true] %s38
      %41 = dma.hbm_to_vmem [thread:$0]  %s2, 112, %s39, [#allocation6]
    $region13: #{tpu_custom_call.1} parent=1 // pred_fallthru
      _
    // Predicated region
    $region14: #{tpu_custom_call.1} parent=1 // pred_check
      _
    $region15: #{tpu_custom_call.1} parent=1 // pred_check_branch
      %43 = sbr.rel (0) target = $region17
    $region16: #{tpu_custom_call.1} parent=1 // pred_region
      %s45 = ssub.s32 50176, 50176
      %46 = vsyncadd [#allocation6], %s45
      %s47 = sshll.u32 [#allocation7], 4
      %s48 = int_to_ptr.vmem [resolvable:$true] %s47
      %53 = dma.hbm_to_vmem [thread:$0]  %s3, 50176, %s48, [#allocation6], 512, 512, 32
    $region17: #{tpu_custom_call.1} parent=1 // pred_fallthru
      _
    // Predicated region
    $region18: #{tpu_custom_call.1} parent=1 // pred_check
      _
    $region19: #{tpu_custom_call.1} parent=1 // pred_check_branch
      %55 = sbr.rel (0) target = $region21
    $region20: #{tpu_custom_call.1} parent=1 // pred_region
      %s57 = ssub.s32 128, 128
      %58 = vsyncadd [#allocation9], %s57
      %s60 = sshll.u32 [#allocation8], 4
      %s61 = int_to_ptr.vmem [resolvable:$true] %s60
      %63 = dma.hbm_to_vmem [thread:$0]  %s4, 128, %s61, [#allocation9]
    $region21: #{tpu_custom_call.1} parent=1 // pred_fallthru
      _
    // Predicated region
    $region22: #{tpu_custom_call.1} parent=1 // pred_check
      _
    $region23: #{tpu_custom_call.1} parent=1 // pred_check_branch
      %65 = sbr.rel (0) target = $region25
    $region24: #{tpu_custom_call.1} parent=1 // pred_region
      %s67 = ssub.s32 32768, 32768
      %68 = vsyncadd [#allocation9], %s67
      %s69 = sshll.u32 [#allocation10], 4
      %s70 = int_to_ptr.vmem [resolvable:$true] %s69
      %75 = dma.hbm_to_vmem [thread:$0]  %s5, 32768, %s70, [#allocation9], 256, 256, 16
    $region25: #{tpu_custom_call.1} parent=1 // pred_fallthru
      _
    // Predicated region
    $region26: #{tpu_custom_call.1} parent=1 // pred_check
      _
    $region27: #{tpu_custom_call.1} parent=1 // pred_check_branch
      %77 = sbr.rel (0) target = $region29
    $region28: #{tpu_custom_call.1} parent=1 // pred_region
      %s79 = ssub.s32 64, 64
      %80 = vsyncadd [#allocation12], %s79
      %s82 = sshll.u32 [#allocation11], 4
      %s83 = int_to_ptr.vmem [resolvable:$true] %s82
      %85 = dma.hbm_to_vmem [thread:$0]  %s6, 64, %s83, [#allocation12]
    $region29: #{tpu_custom_call.1} parent=1 // pred_fallthru
      _
    // Predicated region
    $region30: #{tpu_custom_call.1} parent=1 // pred_check
      _
    $region31: #{tpu_custom_call.1} parent=1 // pred_check_branch
      %87 = sbr.rel (0) target = $region33
    $region32: #{tpu_custom_call.1} parent=1 // pred_region
      %s89 = ssub.s32 4096, 4096
      %90 = vsyncadd [#allocation12], %s89
      %s91 = sshll.u32 [#allocation13], 4
      %s92 = int_to_ptr.vmem [resolvable:$true] %s91
      %97 = dma.hbm_to_vmem [thread:$0]  %s7, 4096, %s92, [#allocation12], 64, 64, 4
    $region33: #{tpu_custom_call.1} parent=1 // pred_fallthru
      _
    // Predicated region
    $region34: #{tpu_custom_call.1} parent=1 // pred_check
      _
    $region35: #{tpu_custom_call.1} parent=1 // pred_check_branch
      %99 = sbr.rel (0) target = $region37
    $region36: #{tpu_custom_call.1} parent=1 // pred_region
      %s101 = ssub.s32 16, 16
      %102 = vsyncadd [#allocation15], %s101
      %s104 = sshll.u32 [#allocation14], 4
      %s105 = int_to_ptr.vmem [resolvable:$true] %s104
      %107 = dma.hbm_to_vmem [thread:$0]  %s8, 16, %s105, [#allocation15]
    $region37: #{tpu_custom_call.1} parent=1 // pred_fallthru
      _
    // Predicated region
    $region38: #{tpu_custom_call.1} parent=1 // pred_check
      _
    $region39: #{tpu_custom_call.1} parent=1 // pred_check_branch
      %109 = sbr.rel (0) target = $region41
    $region40: #{tpu_custom_call.1} parent=1 // pred_region
      %110 = dma.done [#allocation3], 112
    $region41: #{tpu_custom_call.1} parent=1 // pred_fallthru
      _
    // Predicated region
    $region42: #{tpu_custom_call.1} parent=1 // pred_check
      _
    $region43: #{tpu_custom_call.1} parent=1 // pred_check_branch
      %112 = sbr.rel (0) target = $region45
    $region44: #{tpu_custom_call.1} parent=1 // pred_region
      %113 = dma.done [#allocation6], 112
    $region45: #{tpu_custom_call.1} parent=1 // pred_fallthru
      _
    // Predicated region
    $region46: #{tpu_custom_call.1} parent=1 // pred_check
      _
    $region47: #{tpu_custom_call.1} parent=1 // pred_check_branch
      %115 = sbr.rel (0) target = $region49
    $region48: #{tpu_custom_call.1} parent=1 // pred_region
      %116 = dma.done [#allocation6], 50176
    $region49: #{tpu_custom_call.1} parent=1 // pred_fallthru
      _
    // Predicated region
    $region50: #{tpu_custom_call.1} parent=1 // pred_check
      _
    $region51: #{tpu_custom_call.1} parent=1 // pred_check_branch
      %118 = sbr.rel (0) target = $region53
    $region52: #{tpu_custom_call.1} parent=1 // pred_region
      %119 = dma.done [#allocation9], 128
    $region53: #{tpu_custom_call.1} parent=1 // pred_fallthru
      _
    // Predicated region
    $region54: #{tpu_custom_call.1} parent=1 // pred_check
      _
    $region55: #{tpu_custom_call.1} parent=1 // pred_check_branch
      %121 = sbr.rel (0) target = $region57
    $region56: #{tpu_custom_call.1} parent=1 // pred_region
      %122 = dma.done [#allocation9], 32768
    $region57: #{tpu_custom_call.1} parent=1 // pred_fallthru
      _
    // Predicated region
    $region58: #{tpu_custom_call.1} parent=1 // pred_check
      _
    $region59: #{tpu_custom_call.1} parent=1 // pred_check_branch
      %124 = sbr.rel (0) target = $region61
    $region60: #{tpu_custom_call.1} parent=1 // pred_region
      %125 = dma.done [#allocation12], 64
    $region61: #{tpu_custom_call.1} parent=1 // pred_fallthru
      _
    // Predicated region
    $region62: #{tpu_custom_call.1} parent=1 // pred_check
      _
    $region63: #{tpu_custom_call.1} parent=1 // pred_check_branch
      %127 = sbr.rel (0) target = $region65
    $region64: #{tpu_custom_call.1} parent=1 // pred_region
      %128 = dma.done [#allocation12], 4096
    $region65: #{tpu_custom_call.1} parent=1 // pred_fallthru
      _
    // Predicated region
    $region66: #{tpu_custom_call.1} parent=1 // pred_check
      _
    $region67: #{tpu_custom_call.1} parent=1 // pred_check_branch
      %130 = sbr.rel (0) target = $region69
    $region68: #{tpu_custom_call.1} parent=1 // pred_region
      %131 = dma.done [#allocation15], 16
    $region69: #{tpu_custom_call.1} parent=1 // pred_fallthru
      _
    %v133 = vld [vmem:[%s0] sm:$0xff]
    %v134 = vld [vmem:[%s0 + $0x8] sm:$0xff]
    %v135 = vld [vmem:[%s0 + $0x10] sm:$0xff]
    %v136 = vld [vmem:[%s0 + $0x18] sm:$0xf]
    %v137 = vld [vmem:[%s0 + $0x1c] sm:$0xff]
    %v138 = vld [vmem:[%s0 + $0x24] sm:$0xff]
    %v139 = vld [vmem:[%s0 + $0x2c] sm:$0xff]
    %v140 = vld [vmem:[%s0 + $0x34] sm:$0xf]
    %v141 = vld [vmem:[%s0 + $0x38] sm:$0xff]
    %v142 = vld [vmem:[%s0 + $0x40] sm:$0xff]
    %v143 = vld [vmem:[%s0 + $0x48] sm:$0xff]
    %v144 = vld [vmem:[%s0 + $0x50] sm:$0xf]
    %v145 = vld [vmem:[%s0 + $0x54] sm:$0xff]
    %v146 = vld [vmem:[%s0 + $0x5c] sm:$0xff]
    %v147 = vld [vmem:[%s0 + $0x64] sm:$0xff]
    %v148 = vld [vmem:[%s0 + $0x6c] sm:$0xf]
    %v149 = vld [vmem:[%s0 + $0x70] sm:$0xff]
    %v150 = vld [vmem:[%s0 + $0x78] sm:$0xff]
    %v151 = vld [vmem:[%s0 + $0x80] sm:$0xff]
    %v152 = vld [vmem:[%s0 + $0x88] sm:$0xf]
    %v153 = vld [vmem:[%s0 + $0x8c] sm:$0xff]
    %v154 = vld [vmem:[%s0 + $0x94] sm:$0xff]
    %v155 = vld [vmem:[%s0 + $0x9c] sm:$0xff]
    %v156 = vld [vmem:[%s0 + $0xa4] sm:$0xf]
    %v157 = vld [vmem:[%s0 + $0xa8] sm:$0xff]
    %v158 = vld [vmem:[%s0 + $0xb0] sm:$0xff]
    %v159 = vld [vmem:[%s0 + $0xb8] sm:$0xff]
    %v160 = vld [vmem:[%s0 + $0xc0] sm:$0xf]
    %v161 = vld [vmem:[%s0 + $0xc4] sm:$0xff]
    %v162 = vld [vmem:[%s0 + $0xcc] sm:$0xff]
    %v163 = vld [vmem:[%s0 + $0xd4] sm:$0xff]
    %v164 = vld [vmem:[%s0 + $0xdc] sm:$0xf]
    %v165 = vld [vmem:[%s0 + $0xe0] sm:$0xff]
    %v166 = vld [vmem:[%s0 + $0xe8] sm:$0xff]
    %v167 = vld [vmem:[%s0 + $0xf0] sm:$0xff]
    %v168 = vld [vmem:[%s0 + $0xf8] sm:$0xf]
    %v169 = vld [vmem:[%s0 + $0xfc] sm:$0xff]
    %v170 = vld [vmem:[%s0 + $0x104] sm:$0xff]
    %v171 = vld [vmem:[%s0 + $0x10c] sm:$0xff]
    %v172 = vld [vmem:[%s0 + $0x114] sm:$0xf]
    %v173 = vld [vmem:[%s0 + $0x118] sm:$0xff]
    %v174 = vld [vmem:[%s0 + $0x120] sm:$0xff]
    %v175 = vld [vmem:[%s0 + $0x128] sm:$0xff]
    %v176 = vld [vmem:[%s0 + $0x130] sm:$0xf]
    %v177 = vld [vmem:[%s0 + $0x134] sm:$0xff]
    %v178 = vld [vmem:[%s0 + $0x13c] sm:$0xff]
    %v179 = vld [vmem:[%s0 + $0x144] sm:$0xff]
    %v180 = vld [vmem:[%s0 + $0x14c] sm:$0xf]
    %v181 = vld [vmem:[%s0 + $0x150] sm:$0xff]
    %v182 = vld [vmem:[%s0 + $0x158] sm:$0xff]
    %v183 = vld [vmem:[%s0 + $0x160] sm:$0xff]
    %v184 = vld [vmem:[%s0 + $0x168] sm:$0xf]
    %v185 = vld [vmem:[%s0 + $0x16c] sm:$0xff]
    %v186 = vld [vmem:[%s0 + $0x174] sm:$0xff]
    %v187 = vld [vmem:[%s0 + $0x17c] sm:$0xff]
    %v188 = vld [vmem:[%s0 + $0x184] sm:$0xf]
    %v189 = vld [vmem:[%s0 + $0x188] sm:$0xff]
    %v190 = vld [vmem:[%s0 + $0x190] sm:$0xff]
    %v191 = vld [vmem:[%s0 + $0x198] sm:$0xff]
    %v192 = vld [vmem:[%s0 + $0x1a0] sm:$0xf]
    %v193 = vld [vmem:[%s0 + $0x1a4] sm:$0xff]
    %v194 = vld [vmem:[%s0 + $0x1ac] sm:$0xff]
    %v195 = vld [vmem:[%s0 + $0x1b4] sm:$0xff]
    %v196 = vld [vmem:[%s0 + $0x1bc] sm:$0xf]
    %v197 = vunpack.c.l.bf16 %v133
    %v198 = vunpack.c.h.bf16 %v133
    %v199 = vunpack.c.l.bf16 %v134
    %v200 = vunpack.c.h.bf16 %v134
    %v201 = vunpack.c.l.bf16 %v135
    %v202 = vunpack.c.h.bf16 %v135
    %v203 = vunpack.c.l.bf16 %v136
    %v204 = vunpack.c.l.bf16 %v137
    %v205 = vunpack.c.h.bf16 %v137
    %v206 = vunpack.c.l.bf16 %v138
    %v207 = vunpack.c.h.bf16 %v138
    %v208 = vunpack.c.l.bf16 %v139
    %v209 = vunpack.c.h.bf16 %v139
    %v210 = vunpack.c.l.bf16 %v140
    %v211 = vunpack.c.l.bf16 %v141
    %v212 = vunpack.c.h.bf16 %v141
    %v213 = vunpack.c.l.bf16 %v142
    %v214 = vunpack.c.h.bf16 %v142
    %v215 = vunpack.c.l.bf16 %v143
    %v216 = vunpack.c.h.bf16 %v143
    %v217 = vunpack.c.l.bf16 %v144
    %v218 = vunpack.c.l.bf16 %v145
    %v219 = vunpack.c.h.bf16 %v145
    %v220 = vunpack.c.l.bf16 %v146
    %v221 = vunpack.c.h.bf16 %v146
    %v222 = vunpack.c.l.bf16 %v147
    %v223 = vunpack.c.h.bf16 %v147
    %v224 = vunpack.c.l.bf16 %v148
    %v225 = vunpack.c.l.bf16 %v149
    %v226 = vunpack.c.h.bf16 %v149
    %v227 = vunpack.c.l.bf16 %v150
    %v228 = vunpack.c.h.bf16 %v150
    %v229 = vunpack.c.l.bf16 %v151
    %v230 = vunpack.c.h.bf16 %v151
    %v231 = vunpack.c.l.bf16 %v152
    %v232 = vunpack.c.l.bf16 %v153
    %v233 = vunpack.c.h.bf16 %v153
    %v234 = vunpack.c.l.bf16 %v154
    %v235 = vunpack.c.h.bf16 %v154
    %v236 = vunpack.c.l.bf16 %v155
    %v237 = vunpack.c.h.bf16 %v155
    %v238 = vunpack.c.l.bf16 %v156
    %v239 = vunpack.c.l.bf16 %v157
    %v240 = vunpack.c.h.bf16 %v157
    %v241 = vunpack.c.l.bf16 %v158
    %v242 = vunpack.c.h.bf16 %v158
    %v243 = vunpack.c.l.bf16 %v159
    %v244 = vunpack.c.h.bf16 %v159
    %v245 = vunpack.c.l.bf16 %v160
    %v246 = vunpack.c.l.bf16 %v161
    %v247 = vunpack.c.h.bf16 %v161
    %v248 = vunpack.c.l.bf16 %v162
    %v249 = vunpack.c.h.bf16 %v162
    %v250 = vunpack.c.l.bf16 %v163
    %v251 = vunpack.c.h.bf16 %v163
    %v252 = vunpack.c.l.bf16 %v164
    %v253 = vunpack.c.l.bf16 %v165
    %v254 = vunpack.c.h.bf16 %v165
    %v255 = vunpack.c.l.bf16 %v166
    %v256 = vunpack.c.h.bf16 %v166
    %v257 = vunpack.c.l.bf16 %v167
    %v258 = vunpack.c.h.bf16 %v167
    %v259 = vunpack.c.l.bf16 %v168
    %v260 = vunpack.c.l.bf16 %v169
    %v261 = vunpack.c.h.bf16 %v169
    %v262 = vunpack.c.l.bf16 %v170
    %v263 = vunpack.c.h.bf16 %v170
    %v264 = vunpack.c.l.bf16 %v171
    %v265 = vunpack.c.h.bf16 %v171
    %v266 = vunpack.c.l.bf16 %v172
    %v267 = vunpack.c.l.bf16 %v173
    %v268 = vunpack.c.h.bf16 %v173
    %v269 = vunpack.c.l.bf16 %v174
    %v270 = vunpack.c.h.bf16 %v174
    %v271 = vunpack.c.l.bf16 %v175
    %v272 = vunpack.c.h.bf16 %v175
    %v273 = vunpack.c.l.bf16 %v176
    %v274 = vunpack.c.l.bf16 %v177
    %v275 = vunpack.c.h.bf16 %v177
    %v276 = vunpack.c.l.bf16 %v178
    %v277 = vunpack.c.h.bf16 %v178
    %v278 = vunpack.c.l.bf16 %v179
    %v279 = vunpack.c.h.bf16 %v179
    %v280 = vunpack.c.l.bf16 %v180
    %v281 = vunpack.c.l.bf16 %v181
    %v282 = vunpack.c.h.bf16 %v181
    %v283 = vunpack.c.l.bf16 %v182
    %v284 = vunpack.c.h.bf16 %v182
    %v285 = vunpack.c.l.bf16 %v183
    %v286 = vunpack.c.h.bf16 %v183
    %v287 = vunpack.c.l.bf16 %v184
    %v288 = vunpack.c.l.bf16 %v185
    %v289 = vunpack.c.h.bf16 %v185
    %v290 = vunpack.c.l.bf16 %v186
    %v291 = vunpack.c.h.bf16 %v186
    %v292 = vunpack.c.l.bf16 %v187
    %v293 = vunpack.c.h.bf16 %v187
    %v294 = vunpack.c.l.bf16 %v188
    %v295 = vunpack.c.l.bf16 %v189
    %v296 = vunpack.c.h.bf16 %v189
    %v297 = vunpack.c.l.bf16 %v190
    %v298 = vunpack.c.h.bf16 %v190
    %v299 = vunpack.c.l.bf16 %v191
    %v300 = vunpack.c.h.bf16 %v191
    %v301 = vunpack.c.l.bf16 %v192
    %v302 = vunpack.c.l.bf16 %v193
    %v303 = vunpack.c.h.bf16 %v193
    %v304 = vunpack.c.l.bf16 %v194
    %v305 = vunpack.c.h.bf16 %v194
    %v306 = vunpack.c.l.bf16 %v195
    %v307 = vunpack.c.h.bf16 %v195
    %v308 = vunpack.c.l.bf16 %v196
    %v309 = vld [vmem:[#allocation2] sm:$0x7f]
    %v311 = vlaneseq
    %v312 = vshrl.u32 %v311, 7
    %v313 = vsub.s32 0, %v312
    %v314 = vrot.slane %v309, %v313
    %v315 = vlaneseq
    %v316 = vshrl.u32 %v315, 7
    %v317 = vsub.s32 1, %v316
    %v318 = vrot.slane %v309, %v317
    %v319 = vlaneseq
    %v320 = vshrl.u32 %v319, 7
    %v321 = vsub.s32 2, %v320
    %v322 = vrot.slane %v309, %v321
    %v323 = vlaneseq
    %v324 = vshrl.u32 %v323, 7
    %v325 = vsub.s32 3, %v324
    %v326 = vrot.slane %v309, %v325
    %v327 = vlaneseq
    %v328 = vshrl.u32 %v327, 7
    %v329 = vsub.s32 4, %v328
    %v330 = vrot.slane %v309, %v329
    %v331 = vlaneseq
    %v332 = vshrl.u32 %v331, 7
    %v333 = vsub.s32 5, %v332
    %v334 = vrot.slane %v309, %v333
    %v335 = vlaneseq
    %v336 = vshrl.u32 %v335, 7
    %v337 = vsub.s32 6, %v336
    %v338 = vrot.slane %v309, %v337
    %v346 = vmul.f32 %v197, %v314
    %v347 = vmul.f32 %v198, %v318
    %v348 = vmul.f32 %v199, %v322
    %v349 = vmul.f32 %v200, %v326
    %v350 = vmul.f32 %v201, %v330
    %v351 = vmul.f32 %v202, %v334
    %v352 = vmul.f32 %v203, %v338
    %v353 = vmul.f32 %v204, %v314
    %v354 = vmul.f32 %v205, %v318
    %v355 = vmul.f32 %v206, %v322
    %v356 = vmul.f32 %v207, %v326
    %v357 = vmul.f32 %v208, %v330
    %v358 = vmul.f32 %v209, %v334
    %v359 = vmul.f32 %v210, %v338
    %v360 = vmul.f32 %v211, %v314
    %v361 = vmul.f32 %v212, %v318
    %v362 = vmul.f32 %v213, %v322
    %v363 = vmul.f32 %v214, %v326
    %v364 = vmul.f32 %v215, %v330
    %v365 = vmul.f32 %v216, %v334
    %v366 = vmul.f32 %v217, %v338
    %v367 = vmul.f32 %v218, %v314
    %v368 = vmul.f32 %v219, %v318
    %v369 = vmul.f32 %v220, %v322
    %v370 = vmul.f32 %v221, %v326
    %v371 = vmul.f32 %v222, %v330
    %v372 = vmul.f32 %v223, %v334
    %v373 = vmul.f32 %v224, %v338
    %v374 = vmul.f32 %v225, %v314
    %v375 = vmul.f32 %v226, %v318
    %v376 = vmul.f32 %v227, %v322
    %v377 = vmul.f32 %v228, %v326
    %v378 = vmul.f32 %v229, %v330
    %v379 = vmul.f32 %v230, %v334
    %v380 = vmul.f32 %v231, %v338
    %v381 = vmul.f32 %v232, %v314
    %v382 = vmul.f32 %v233, %v318
    %v383 = vmul.f32 %v234, %v322
    %v384 = vmul.f32 %v235, %v326
    %v385 = vmul.f32 %v236, %v330
    %v386 = vmul.f32 %v237, %v334
    %v387 = vmul.f32 %v238, %v338
    %v388 = vmul.f32 %v239, %v314
    %v389 = vmul.f32 %v240, %v318
    %v390 = vmul.f32 %v241, %v322
    %v391 = vmul.f32 %v242, %v326
    %v392 = vmul.f32 %v243, %v330
    %v393 = vmul.f32 %v244, %v334
    %v394 = vmul.f32 %v245, %v338
    %v395 = vmul.f32 %v246, %v314
    %v396 = vmul.f32 %v247, %v318
    %v397 = vmul.f32 %v248, %v322
    %v398 = vmul.f32 %v249, %v326
    %v399 = vmul.f32 %v250, %v330
    %v400 = vmul.f32 %v251, %v334
    %v401 = vmul.f32 %v252, %v338
    %v402 = vmul.f32 %v253, %v314
    %v403 = vmul.f32 %v254, %v318
    %v404 = vmul.f32 %v255, %v322
    %v405 = vmul.f32 %v256, %v326
    %v406 = vmul.f32 %v257, %v330
    %v407 = vmul.f32 %v258, %v334
    %v408 = vmul.f32 %v259, %v338
    %v409 = vmul.f32 %v260, %v314
    %v410 = vmul.f32 %v261, %v318
    %v411 = vmul.f32 %v262, %v322
    %v412 = vmul.f32 %v263, %v326
    %v413 = vmul.f32 %v264, %v330
    %v414 = vmul.f32 %v265, %v334
    %v415 = vmul.f32 %v266, %v338
    %v416 = vmul.f32 %v267, %v314
    %v417 = vmul.f32 %v268, %v318
    %v418 = vmul.f32 %v269, %v322
    %v419 = vmul.f32 %v270, %v326
    %v420 = vmul.f32 %v271, %v330
    %v421 = vmul.f32 %v272, %v334
    %v422 = vmul.f32 %v273, %v338
    %v423 = vmul.f32 %v274, %v314
    %v424 = vmul.f32 %v275, %v318
    %v425 = vmul.f32 %v276, %v322
    %v426 = vmul.f32 %v277, %v326
    %v427 = vmul.f32 %v278, %v330
    %v428 = vmul.f32 %v279, %v334
    %v429 = vmul.f32 %v280, %v338
    %v430 = vmul.f32 %v281, %v314
    %v431 = vmul.f32 %v282, %v318
    %v432 = vmul.f32 %v283, %v322
    %v433 = vmul.f32 %v284, %v326
    %v434 = vmul.f32 %v285, %v330
    %v435 = vmul.f32 %v286, %v334
    %v436 = vmul.f32 %v287, %v338
    %v437 = vmul.f32 %v288, %v314
    %v438 = vmul.f32 %v289, %v318
    %v439 = vmul.f32 %v290, %v322
    %v440 = vmul.f32 %v291, %v326
    %v441 = vmul.f32 %v292, %v330
    %v442 = vmul.f32 %v293, %v334
    %v443 = vmul.f32 %v294, %v338
    %v444 = vmul.f32 %v295, %v314
    %v445 = vmul.f32 %v296, %v318
    %v446 = vmul.f32 %v297, %v322
    %v447 = vmul.f32 %v298, %v326
    %v448 = vmul.f32 %v299, %v330
    %v449 = vmul.f32 %v300, %v334
    %v450 = vmul.f32 %v301, %v338
    %v451 = vmul.f32 %v302, %v314
    %v452 = vmul.f32 %v303, %v318
    %v453 = vmul.f32 %v304, %v322
    %v454 = vmul.f32 %v305, %v326
    %v455 = vmul.f32 %v306, %v330
    %v456 = vmul.f32 %v307, %v334
    %v457 = vmul.f32 %v308, %v338
    %v458 = vld [vmem:[#allocation5] sm:$0x7f]
    %v460 = vlaneseq
    %v461 = vshrl.u32 %v460, 7
    %v462 = vsub.s32 0, %v461
    %v463 = vrot.slane %v458, %v462
    %v464 = vlaneseq
    %v465 = vshrl.u32 %v464, 7
    %v466 = vsub.s32 1, %v465
    %v467 = vrot.slane %v458, %v466
    %v468 = vlaneseq
    %v469 = vshrl.u32 %v468, 7
    %v470 = vsub.s32 2, %v469
    %v471 = vrot.slane %v458, %v470
    %v472 = vlaneseq
    %v473 = vshrl.u32 %v472, 7
    %v474 = vsub.s32 3, %v473
    %v475 = vrot.slane %v458, %v474
    %v476 = vlaneseq
    %v477 = vshrl.u32 %v476, 7
    %v478 = vsub.s32 4, %v477
    %v479 = vrot.slane %v458, %v478
    %v480 = vlaneseq
    %v481 = vshrl.u32 %v480, 7
    %v482 = vsub.s32 5, %v481
    %v483 = vrot.slane %v458, %v482
    %v484 = vlaneseq
    %v485 = vshrl.u32 %v484, 7
    %v486 = vsub.s32 6, %v485
    %v487 = vrot.slane %v458, %v486
    %v495 = vadd.f32 %v346, %v463
    %v496 = vadd.f32 %v347, %v467
    %v497 = vadd.f32 %v348, %v471
    %v498 = vadd.f32 %v349, %v475
    %v499 = vadd.f32 %v350, %v479
    %v500 = vadd.f32 %v351, %v483
    %v501 = vadd.f32 %v352, %v487
    %v502 = vadd.f32 %v353, %v463
    %v503 = vadd.f32 %v354, %v467
    %v504 = vadd.f32 %v355, %v471
    %v505 = vadd.f32 %v356, %v475
    %v506 = vadd.f32 %v357, %v479
    %v507 = vadd.f32 %v358, %v483
    %v508 = vadd.f32 %v359, %v487
    %v509 = vadd.f32 %v360, %v463
    %v510 = vadd.f32 %v361, %v467
    %v511 = vadd.f32 %v362, %v471
    %v512 = vadd.f32 %v363, %v475
    %v513 = vadd.f32 %v364, %v479
    %v514 = vadd.f32 %v365, %v483
    %v515 = vadd.f32 %v366, %v487
    %v516 = vadd.f32 %v367, %v463
    %v517 = vadd.f32 %v368, %v467
    %v518 = vadd.f32 %v369, %v471
    %v519 = vadd.f32 %v370, %v475
    %v520 = vadd.f32 %v371, %v479
    %v521 = vadd.f32 %v372, %v483
    %v522 = vadd.f32 %v373, %v487
    %v523 = vadd.f32 %v374, %v463
    %v524 = vadd.f32 %v375, %v467
    %v525 = vadd.f32 %v376, %v471
    %v526 = vadd.f32 %v377, %v475
    %v527 = vadd.f32 %v378, %v479
    %v528 = vadd.f32 %v379, %v483
    %v529 = vadd.f32 %v380, %v487
    %v530 = vadd.f32 %v381, %v463
    %v531 = vadd.f32 %v382, %v467
    %v532 = vadd.f32 %v383, %v471
    %v533 = vadd.f32 %v384, %v475
    %v534 = vadd.f32 %v385, %v479
    %v535 = vadd.f32 %v386, %v483
    %v536 = vadd.f32 %v387, %v487
    %v537 = vadd.f32 %v388, %v463
    %v538 = vadd.f32 %v389, %v467
    %v539 = vadd.f32 %v390, %v471
    %v540 = vadd.f32 %v391, %v475
    %v541 = vadd.f32 %v392, %v479
    %v542 = vadd.f32 %v393, %v483
    %v543 = vadd.f32 %v394, %v487
    %v544 = vadd.f32 %v395, %v463
    %v545 = vadd.f32 %v396, %v467
    %v546 = vadd.f32 %v397, %v471
    %v547 = vadd.f32 %v398, %v475
    %v548 = vadd.f32 %v399, %v479
    %v549 = vadd.f32 %v400, %v483
    %v550 = vadd.f32 %v401, %v487
    %v551 = vadd.f32 %v402, %v463
    %v552 = vadd.f32 %v403, %v467
    %v553 = vadd.f32 %v404, %v471
    %v554 = vadd.f32 %v405, %v475
    %v555 = vadd.f32 %v406, %v479
    %v556 = vadd.f32 %v407, %v483
    %v557 = vadd.f32 %v408, %v487
    %v558 = vadd.f32 %v409, %v463
    %v559 = vadd.f32 %v410, %v467
    %v560 = vadd.f32 %v411, %v471
    %v561 = vadd.f32 %v412, %v475
    %v562 = vadd.f32 %v413, %v479
    %v563 = vadd.f32 %v414, %v483
    %v564 = vadd.f32 %v415, %v487
    %v565 = vadd.f32 %v416, %v463
    %v566 = vadd.f32 %v417, %v467
    %v567 = vadd.f32 %v418, %v471
    %v568 = vadd.f32 %v419, %v475
    %v569 = vadd.f32 %v420, %v479
    %v570 = vadd.f32 %v421, %v483
    %v571 = vadd.f32 %v422, %v487
    %v572 = vadd.f32 %v423, %v463
    %v573 = vadd.f32 %v424, %v467
    %v574 = vadd.f32 %v425, %v471
    %v575 = vadd.f32 %v426, %v475
    %v576 = vadd.f32 %v427, %v479
    %v577 = vadd.f32 %v428, %v483
    %v578 = vadd.f32 %v429, %v487
    %v579 = vadd.f32 %v430, %v463
    %v580 = vadd.f32 %v431, %v467
    %v581 = vadd.f32 %v432, %v471
    %v582 = vadd.f32 %v433, %v475
    %v583 = vadd.f32 %v434, %v479
    %v584 = vadd.f32 %v435, %v483
    %v585 = vadd.f32 %v436, %v487
    %v586 = vadd.f32 %v437, %v463
    %v587 = vadd.f32 %v438, %v467
    %v588 = vadd.f32 %v439, %v471
    %v589 = vadd.f32 %v440, %v475
    %v590 = vadd.f32 %v441, %v479
    %v591 = vadd.f32 %v442, %v483
    %v592 = vadd.f32 %v443, %v487
    %v593 = vadd.f32 %v444, %v463
    %v594 = vadd.f32 %v445, %v467
    %v595 = vadd.f32 %v446, %v471
    %v596 = vadd.f32 %v447, %v475
    %v597 = vadd.f32 %v448, %v479
    %v598 = vadd.f32 %v449, %v483
    %v599 = vadd.f32 %v450, %v487
    %v600 = vadd.f32 %v451, %v463
    %v601 = vadd.f32 %v452, %v467
    %v602 = vadd.f32 %v453, %v471
    %v603 = vadd.f32 %v454, %v475
    %v604 = vadd.f32 %v455, %v479
    %v605 = vadd.f32 %v456, %v483
    %v606 = vadd.f32 %v457, %v487
    %v607 = vpack.c.bf16 %v502, %v495
    %v608 = vpack.c.bf16 %v503, %v496
    %v609 = vpack.c.bf16 %v504, %v497
    %v610 = vpack.c.bf16 %v505, %v498
    %v611 = vpack.c.bf16 %v506, %v499
    %v612 = vpack.c.bf16 %v507, %v500
    %v613 = vpack.c.bf16 %v508, %v501
    %v614 = vpack.c.bf16 %v516, %v509
    %v615 = vpack.c.bf16 %v517, %v510
    %v616 = vpack.c.bf16 %v518, %v511
    %v617 = vpack.c.bf16 %v519, %v512
    %v618 = vpack.c.bf16 %v520, %v513
    %v619 = vpack.c.bf16 %v521, %v514
    %v620 = vpack.c.bf16 %v522, %v515
    %v621 = vpack.c.bf16 %v530, %v523
    %v622 = vpack.c.bf16 %v531, %v524
    %v623 = vpack.c.bf16 %v532, %v525
    %v624 = vpack.c.bf16 %v533, %v526
    %v625 = vpack.c.bf16 %v534, %v527
    %v626 = vpack.c.bf16 %v535, %v528
    %v627 = vpack.c.bf16 %v536, %v529
    %v628 = vpack.c.bf16 %v544, %v537
    %v629 = vpack.c.bf16 %v545, %v538
    %v630 = vpack.c.bf16 %v546, %v539
    %v631 = vpack.c.bf16 %v547, %v540
    %v632 = vpack.c.bf16 %v548, %v541
    %v633 = vpack.c.bf16 %v549, %v542
    %v634 = vpack.c.bf16 %v550, %v543
    %v635 = vpack.c.bf16 %v558, %v551
    %v636 = vpack.c.bf16 %v559, %v552
    %v637 = vpack.c.bf16 %v560, %v553
    %v638 = vpack.c.bf16 %v561, %v554
    %v639 = vpack.c.bf16 %v562, %v555
    %v640 = vpack.c.bf16 %v563, %v556
    %v641 = vpack.c.bf16 %v564, %v557
    %v642 = vpack.c.bf16 %v572, %v565
    %v643 = vpack.c.bf16 %v573, %v566
    %v644 = vpack.c.bf16 %v574, %v567
    %v645 = vpack.c.bf16 %v575, %v568
    %v646 = vpack.c.bf16 %v576, %v569
    %v647 = vpack.c.bf16 %v577, %v570
    %v648 = vpack.c.bf16 %v578, %v571
    %v649 = vpack.c.bf16 %v586, %v579
    %v650 = vpack.c.bf16 %v587, %v580
    %v651 = vpack.c.bf16 %v588, %v581
    %v652 = vpack.c.bf16 %v589, %v582
    %v653 = vpack.c.bf16 %v590, %v583
    %v654 = vpack.c.bf16 %v591, %v584
    %v655 = vpack.c.bf16 %v592, %v585
    %v656 = vpack.c.bf16 %v600, %v593
    %v657 = vpack.c.bf16 %v601, %v594
    %v658 = vpack.c.bf16 %v602, %v595
    %v659 = vpack.c.bf16 %v603, %v596
    %v660 = vpack.c.bf16 %v604, %v597
    %v661 = vpack.c.bf16 %v605, %v598
    %v662 = vpack.c.bf16 %v606, %v599
    %v663 = vld [vmem:[#allocation7] sm:$0xff]
    %v664 = vld [vmem:[#allocation7 + $0x8] sm:$0xff]
    %v665 = vld [vmem:[#allocation7 + $0x10] sm:$0xff]
    %v666 = vld [vmem:[#allocation7 + $0x18] sm:$0xff]
    %v667 = vld [vmem:[#allocation7 + $0x20] sm:$0xff]
    %v668 = vld [vmem:[#allocation7 + $0x28] sm:$0xff]
    %v669 = vld [vmem:[#allocation7 + $0x30] sm:$0xff]
    %v670 = vld [vmem:[#allocation7 + $0x38] sm:$0xff]
    %v671 = vld [vmem:[#allocation7 + $0x40] sm:$0xff]
    %v672 = vld [vmem:[#allocation7 + $0x48] sm:$0xff]
    %v673 = vld [vmem:[#allocation7 + $0x50] sm:$0xff]
    %v674 = vld [vmem:[#allocation7 + $0x58] sm:$0xff]
    %v675 = vld [vmem:[#allocation7 + $0x60] sm:$0xff]
    %v676 = vld [vmem:[#allocation7 + $0x68] sm:$0xff]
    %v677 = vld [vmem:[#allocation7 + $0x70] sm:$0xff]
    %v678 = vld [vmem:[#allocation7 + $0x78] sm:$0xff]
    %v679 = vld [vmem:[#allocation7 + $0x80] sm:$0xff]
    %v680 = vld [vmem:[#allocation7 + $0x88] sm:$0xff]
    %v681 = vld [vmem:[#allocation7 + $0x90] sm:$0xff]
    %v682 = vld [vmem:[#allocation7 + $0x98] sm:$0xff]
    %v683 = vld [vmem:[#allocation7 + $0xa0] sm:$0xff]
    %v684 = vld [vmem:[#allocation7 + $0xa8] sm:$0xff]
    %v685 = vld [vmem:[#allocation7 + $0xb0] sm:$0xff]
    %v686 = vld [vmem:[#allocation7 + $0xb8] sm:$0xff]
    %v687 = vld [vmem:[#allocation7 + $0xc0] sm:$0xff]
    %v688 = vld [vmem:[#allocation7 + $0xc8] sm:$0xff]
    %v689 = vld [vmem:[#allocation7 + $0xd0] sm:$0xff]
    %v690 = vld [vmem:[#allocation7 + $0xd8] sm:$0xff]
    %v691 = vld [vmem:[#allocation7 + $0xe0] sm:$0xff]
    %v692 = vld [vmem:[#allocation7 + $0xe8] sm:$0xff]
    %v693 = vld [vmem:[#allocation7 + $0xf0] sm:$0xff]
    %v694 = vld [vmem:[#allocation7 + $0xf8] sm:$0xff]
    %v695 = vld [vmem:[#allocation7 + $0x100] sm:$0xff]
    %v696 = vld [vmem:[#allocation7 + $0x108] sm:$0xff]
    %v697 = vld [vmem:[#allocation7 + $0x110] sm:$0xff]
    %v698 = vld [vmem:[#allocation7 + $0x118] sm:$0xff]
    %v699 = vld [vmem:[#allocation7 + $0x120] sm:$0xff]
    %v700 = vld [vmem:[#allocation7 + $0x128] sm:$0xff]
    %v701 = vld [vmem:[#allocation7 + $0x130] sm:$0xff]
    %v702 = vld [vmem:[#allocation7 + $0x138] sm:$0xff]
    %v703 = vld [vmem:[#allocation7 + $0x140] sm:$0xff]
    %v704 = vld [vmem:[#allocation7 + $0x148] sm:$0xff]
    %v705 = vld [vmem:[#allocation7 + $0x150] sm:$0xff]
    %v706 = vld [vmem:[#allocation7 + $0x158] sm:$0xff]
    %v707 = vld [vmem:[#allocation7 + $0x160] sm:$0xff]
    %v708 = vld [vmem:[#allocation7 + $0x168] sm:$0xff]
    %v709 = vld [vmem:[#allocation7 + $0x170] sm:$0xff]
    %v710 = vld [vmem:[#allocation7 + $0x178] sm:$0xff]
    %v711 = vld [vmem:[#allocation7 + $0x180] sm:$0xff]
    %v712 = vld [vmem:[#allocation7 + $0x188] sm:$0xff]
    %v713 = vld [vmem:[#allocation7 + $0x190] sm:$0xff]
    %v714 = vld [vmem:[#allocation7 + $0x198] sm:$0xff]
    %v715 = vld [vmem:[#allocation7 + $0x1a0] sm:$0xff]
    %v716 = vld [vmem:[#allocation7 + $0x1a8] sm:$0xff]
    %v717 = vld [vmem:[#allocation7 + $0x1b0] sm:$0xff]
    %v718 = vld [vmem:[#allocation7 + $0x1b8] sm:$0xff]
    %v719 = vld [vmem:[#allocation7 + $0x1c0] sm:$0xff]
    %v720 = vld [vmem:[#allocation7 + $0x1c8] sm:$0xff]
    %v721 = vld [vmem:[#allocation7 + $0x1d0] sm:$0xff]
    %v722 = vld [vmem:[#allocation7 + $0x1d8] sm:$0xff]
    %v723 = vld [vmem:[#allocation7 + $0x1e0] sm:$0xff]
    %v724 = vld [vmem:[#allocation7 + $0x1e8] sm:$0xff]
    %v725 = vld [vmem:[#allocation7 + $0x1f0] sm:$0xff]
    %v726 = vld [vmem:[#allocation7 + $0x1f8] sm:$0xff]
    %v727 = vld [vmem:[#allocation7 + $0x200] sm:$0xff]
    %v728 = vld [vmem:[#allocation7 + $0x208] sm:$0xff]
    %v729 = vld [vmem:[#allocation7 + $0x210] sm:$0xff]
    %v730 = vld [vmem:[#allocation7 + $0x218] sm:$0xff]
    %v731 = vld [vmem:[#allocation7 + $0x220] sm:$0xff]
    %v732 = vld [vmem:[#allocation7 + $0x228] sm:$0xff]
    %v733 = vld [vmem:[#allocation7 + $0x230] sm:$0xff]
    %v734 = vld [vmem:[#allocation7 + $0x238] sm:$0xff]
    %v735 = vld [vmem:[#allocation7 + $0x240] sm:$0xff]
    %v736 = vld [vmem:[#allocation7 + $0x248] sm:$0xff]
    %v737 = vld [vmem:[#allocation7 + $0x250] sm:$0xff]
    %v738 = vld [vmem:[#allocation7 + $0x258] sm:$0xff]
    %v739 = vld [vmem:[#allocation7 + $0x260] sm:$0xff]
    %v740 = vld [vmem:[#allocation7 + $0x268] sm:$0xff]
    %v741 = vld [vmem:[#allocation7 + $0x270] sm:$0xff]
    %v742 = vld [vmem:[#allocation7 + $0x278] sm:$0xff]
    %v743 = vld [vmem:[#allocation7 + $0x280] sm:$0xff]
    %v744 = vld [vmem:[#allocation7 + $0x288] sm:$0xff]
    %v745 = vld [vmem:[#allocation7 + $0x290] sm:$0xff]
    %v746 = vld [vmem:[#allocation7 + $0x298] sm:$0xff]
    %v747 = vld [vmem:[#allocation7 + $0x2a0] sm:$0xff]
    %v748 = vld [vmem:[#allocation7 + $0x2a8] sm:$0xff]
    %v749 = vld [vmem:[#allocation7 + $0x2b0] sm:$0xff]
    %v750 = vld [vmem:[#allocation7 + $0x2b8] sm:$0xff]
    %v751 = vld [vmem:[#allocation7 + $0x2c0] sm:$0xff]
    %v752 = vld [vmem:[#allocation7 + $0x2c8] sm:$0xff]
    %v753 = vld [vmem:[#allocation7 + $0x2d0] sm:$0xff]
    %v754 = vld [vmem:[#allocation7 + $0x2d8] sm:$0xff]
    %v755 = vld [vmem:[#allocation7 + $0x2e0] sm:$0xff]
    %v756 = vld [vmem:[#allocation7 + $0x2e8] sm:$0xff]
    %v757 = vld [vmem:[#allocation7 + $0x2f0] sm:$0xff]
    %v758 = vld [vmem:[#allocation7 + $0x2f8] sm:$0xff]
    %v759 = vld [vmem:[#allocation7 + $0x300] sm:$0xff]
    %v760 = vld [vmem:[#allocation7 + $0x308] sm:$0xff]
    %v761 = vld [vmem:[#allocation7 + $0x310] sm:$0xff]
    %v762 = vld [vmem:[#allocation7 + $0x318] sm:$0xff]
    %v763 = vld [vmem:[#allocation7 + $0x320] sm:$0xff]
    %v764 = vld [vmem:[#allocation7 + $0x328] sm:$0xff]
    %v765 = vld [vmem:[#allocation7 + $0x330] sm:$0xff]
    %v766 = vld [vmem:[#allocation7 + $0x338] sm:$0xff]
    %v767 = vld [vmem:[#allocation7 + $0x340] sm:$0xff]
    %v768 = vld [vmem:[#allocation7 + $0x348] sm:$0xff]
    %v769 = vld [vmem:[#allocation7 + $0x350] sm:$0xff]
    %v770 = vld [vmem:[#allocation7 + $0x358] sm:$0xff]
    %v771 = vld [vmem:[#allocation7 + $0x360] sm:$0xff]
    %v772 = vld [vmem:[#allocation7 + $0x368] sm:$0xff]
    %v773 = vld [vmem:[#allocation7 + $0x370] sm:$0xff]
    %v774 = vld [vmem:[#allocation7 + $0x378] sm:$0xff]
    %v775 = vld [vmem:[#allocation7 + $0x380] sm:$0xff]
    %v776 = vld [vmem:[#allocation7 + $0x388] sm:$0xff]
    %v777 = vld [vmem:[#allocation7 + $0x390] sm:$0xff]
    %v778 = vld [vmem:[#allocation7 + $0x398] sm:$0xff]
    %v779 = vld [vmem:[#allocation7 + $0x3a0] sm:$0xff]
    %v780 = vld [vmem:[#allocation7 + $0x3a8] sm:$0xff]
    %v781 = vld [vmem:[#allocation7 + $0x3b0] sm:$0xff]
    %v782 = vld [vmem:[#allocation7 + $0x3b8] sm:$0xff]
    %v783 = vld [vmem:[#allocation7 + $0x3c0] sm:$0xff]
    %v784 = vld [vmem:[#allocation7 + $0x3c8] sm:$0xff]
    %v785 = vld [vmem:[#allocation7 + $0x3d0] sm:$0xff]
    %v786 = vld [vmem:[#allocation7 + $0x3d8] sm:$0xff]
    %v787 = vld [vmem:[#allocation7 + $0x3e0] sm:$0xff]
    %v788 = vld [vmem:[#allocation7 + $0x3e8] sm:$0xff]
    %v789 = vld [vmem:[#allocation7 + $0x3f0] sm:$0xff]
    %v790 = vld [vmem:[#allocation7 + $0x3f8] sm:$0xff]
    %v791 = vld [vmem:[#allocation7 + $0x400] sm:$0xff]
    %v792 = vld [vmem:[#allocation7 + $0x408] sm:$0xff]
    %v793 = vld [vmem:[#allocation7 + $0x410] sm:$0xff]
    %v794 = vld [vmem:[#allocation7 + $0x418] sm:$0xff]
    %v795 = vld [vmem:[#allocation7 + $0x420] sm:$0xff]
    %v796 = vld [vmem:[#allocation7 + $0x428] sm:$0xff]
    %v797 = vld [vmem:[#allocation7 + $0x430] sm:$0xff]
    %v798 = vld [vmem:[#allocation7 + $0x438] sm:$0xff]
    %v799 = vld [vmem:[#allocation7 + $0x440] sm:$0xff]
    %v800 = vld [vmem:[#allocation7 + $0x448] sm:$0xff]
    %v801 = vld [vmem:[#allocation7 + $0x450] sm:$0xff]
    %v802 = vld [vmem:[#allocation7 + $0x458] sm:$0xff]
    %v803 = vld [vmem:[#allocation7 + $0x460] sm:$0xff]
    %v804 = vld [vmem:[#allocation7 + $0x468] sm:$0xff]
    %v805 = vld [vmem:[#allocation7 + $0x470] sm:$0xff]
    %v806 = vld [vmem:[#allocation7 + $0x478] sm:$0xff]
    %v807 = vld [vmem:[#allocation7 + $0x480] sm:$0xff]
    %v808 = vld [vmem:[#allocation7 + $0x488] sm:$0xff]
    %v809 = vld [vmem:[#allocation7 + $0x490] sm:$0xff]
    %v810 = vld [vmem:[#allocation7 + $0x498] sm:$0xff]
    %v811 = vld [vmem:[#allocation7 + $0x4a0] sm:$0xff]
    %v812 = vld [vmem:[#allocation7 + $0x4a8] sm:$0xff]
    %v813 = vld [vmem:[#allocation7 + $0x4b0] sm:$0xff]
    %v814 = vld [vmem:[#allocation7 + $0x4b8] sm:$0xff]
    %v815 = vld [vmem:[#allocation7 + $0x4c0] sm:$0xff]
    %v816 = vld [vmem:[#allocation7 + $0x4c8] sm:$0xff]
    %v817 = vld [vmem:[#allocation7 + $0x4d0] sm:$0xff]
    %v818 = vld [vmem:[#allocation7 + $0x4d8] sm:$0xff]
    %v819 = vld [vmem:[#allocation7 + $0x4e0] sm:$0xff]
    %v820 = vld [vmem:[#allocation7 + $0x4e8] sm:$0xff]
    %v821 = vld [vmem:[#allocation7 + $0x4f0] sm:$0xff]
    %v822 = vld [vmem:[#allocation7 + $0x4f8] sm:$0xff]
    %v823 = vld [vmem:[#allocation7 + $0x500] sm:$0xff]
    %v824 = vld [vmem:[#allocation7 + $0x508] sm:$0xff]
    %v825 = vld [vmem:[#allocation7 + $0x510] sm:$0xff]
    %v826 = vld [vmem:[#allocation7 + $0x518] sm:$0xff]
    %v827 = vld [vmem:[#allocation7 + $0x520] sm:$0xff]
    %v828 = vld [vmem:[#allocation7 + $0x528] sm:$0xff]
    %v829 = vld [vmem:[#allocation7 + $0x530] sm:$0xff]
    %v830 = vld [vmem:[#allocation7 + $0x538] sm:$0xff]
    %v831 = vld [vmem:[#allocation7 + $0x540] sm:$0xff]
    %v832 = vld [vmem:[#allocation7 + $0x548] sm:$0xff]
    %v833 = vld [vmem:[#allocation7 + $0x550] sm:$0xff]
    %v834 = vld [vmem:[#allocation7 + $0x558] sm:$0xff]
    %v835 = vld [vmem:[#allocation7 + $0x560] sm:$0xff]
    %v836 = vld [vmem:[#allocation7 + $0x568] sm:$0xff]
    %v837 = vld [vmem:[#allocation7 + $0x570] sm:$0xff]
    %v838 = vld [vmem:[#allocation7 + $0x578] sm:$0xff]
    %v839 = vld [vmem:[#allocation7 + $0x580] sm:$0xff]
    %v840 = vld [vmem:[#allocation7 + $0x588] sm:$0xff]
    %v841 = vld [vmem:[#allocation7 + $0x590] sm:$0xff]
    %v842 = vld [vmem:[#allocation7 + $0x598] sm:$0xff]
    %v843 = vld [vmem:[#allocation7 + $0x5a0] sm:$0xff]
    %v844 = vld [vmem:[#allocation7 + $0x5a8] sm:$0xff]
    %v845 = vld [vmem:[#allocation7 + $0x5b0] sm:$0xff]
    %v846 = vld [vmem:[#allocation7 + $0x5b8] sm:$0xff]
    %v847 = vld [vmem:[#allocation7 + $0x5c0] sm:$0xff]
    %v848 = vld [vmem:[#allocation7 + $0x5c8] sm:$0xff]
    %v849 = vld [vmem:[#allocation7 + $0x5d0] sm:$0xff]
    %v850 = vld [vmem:[#allocation7 + $0x5d8] sm:$0xff]
    %v851 = vld [vmem:[#allocation7 + $0x5e0] sm:$0xff]
    %v852 = vld [vmem:[#allocation7 + $0x5e8] sm:$0xff]
    %v853 = vld [vmem:[#allocation7 + $0x5f0] sm:$0xff]
    %v854 = vld [vmem:[#allocation7 + $0x5f8] sm:$0xff]
    %v855 = vld [vmem:[#allocation7 + $0x600] sm:$0xff]
    %v856 = vld [vmem:[#allocation7 + $0x608] sm:$0xff]
    %v857 = vld [vmem:[#allocation7 + $0x610] sm:$0xff]
    %v858 = vld [vmem:[#allocation7 + $0x618] sm:$0xff]
    %v859 = vld [vmem:[#allocation7 + $0x620] sm:$0xff]
    %v860 = vld [vmem:[#allocation7 + $0x628] sm:$0xff]
    %v861 = vld [vmem:[#allocation7 + $0x630] sm:$0xff]
    %v862 = vld [vmem:[#allocation7 + $0x638] sm:$0xff]
    %v863 = vld [vmem:[#allocation7 + $0x640] sm:$0xff]
    %v864 = vld [vmem:[#allocation7 + $0x648] sm:$0xff]
    %v865 = vld [vmem:[#allocation7 + $0x650] sm:$0xff]
    %v866 = vld [vmem:[#allocation7 + $0x658] sm:$0xff]
    %v867 = vld [vmem:[#allocation7 + $0x660] sm:$0xff]
    %v868 = vld [vmem:[#allocation7 + $0x668] sm:$0xff]
    %v869 = vld [vmem:[#allocation7 + $0x670] sm:$0xff]
    %v870 = vld [vmem:[#allocation7 + $0x678] sm:$0xff]
    %v871 = vld [vmem:[#allocation7 + $0x680] sm:$0xff]
    %v872 = vld [vmem:[#allocation7 + $0x688] sm:$0xff]
    %v873 = vld [vmem:[#allocation7 + $0x690] sm:$0xff]
    %v874 = vld [vmem:[#allocation7 + $0x698] sm:$0xff]
    %v875 = vld [vmem:[#allocation7 + $0x6a0] sm:$0xff]
    %v876 = vld [vmem:[#allocation7 + $0x6a8] sm:$0xff]
    %v877 = vld [vmem:[#allocation7 + $0x6b0] sm:$0xff]
    %v878 = vld [vmem:[#allocation7 + $0x6b8] sm:$0xff]
    %v879 = vld [vmem:[#allocation7 + $0x6c0] sm:$0xff]
    %v880 = vld [vmem:[#allocation7 + $0x6c8] sm:$0xff]
    %v881 = vld [vmem:[#allocation7 + $0x6d0] sm:$0xff]
    %v882 = vld [vmem:[#allocation7 + $0x6d8] sm:$0xff]
    %v883 = vld [vmem:[#allocation7 + $0x6e0] sm:$0xff]
    %v884 = vld [vmem:[#allocation7 + $0x6e8] sm:$0xff]
    %v885 = vld [vmem:[#allocation7 + $0x6f0] sm:$0xff]
    %v886 = vld [vmem:[#allocation7 + $0x6f8] sm:$0xff]
    %v887 = vld [vmem:[#allocation7 + $0x700] sm:$0xff]
    %v888 = vld [vmem:[#allocation7 + $0x708] sm:$0xff]
    %v889 = vld [vmem:[#allocation7 + $0x710] sm:$0xff]
    %v890 = vld [vmem:[#allocation7 + $0x718] sm:$0xff]
    %v891 = vld [vmem:[#allocation7 + $0x720] sm:$0xff]
    %v892 = vld [vmem:[#allocation7 + $0x728] sm:$0xff]
    %v893 = vld [vmem:[#allocation7 + $0x730] sm:$0xff]
    %v894 = vld [vmem:[#allocation7 + $0x738] sm:$0xff]
    %v895 = vld [vmem:[#allocation7 + $0x740] sm:$0xff]
    %v896 = vld [vmem:[#allocation7 + $0x748] sm:$0xff]
    %v897 = vld [vmem:[#allocation7 + $0x750] sm:$0xff]
    %v898 = vld [vmem:[#allocation7 + $0x758] sm:$0xff]
    %v899 = vld [vmem:[#allocation7 + $0x760] sm:$0xff]
    %v900 = vld [vmem:[#allocation7 + $0x768] sm:$0xff]
    %v901 = vld [vmem:[#allocation7 + $0x770] sm:$0xff]
    %v902 = vld [vmem:[#allocation7 + $0x778] sm:$0xff]
    %v903 = vld [vmem:[#allocation7 + $0x780] sm:$0xff]
    %v904 = vld [vmem:[#allocation7 + $0x788] sm:$0xff]
    %v905 = vld [vmem:[#allocation7 + $0x790] sm:$0xff]
    %v906 = vld [vmem:[#allocation7 + $0x798] sm:$0xff]
    %v907 = vld [vmem:[#allocation7 + $0x7a0] sm:$0xff]
    %v908 = vld [vmem:[#allocation7 + $0x7a8] sm:$0xff]
    %v909 = vld [vmem:[#allocation7 + $0x7b0] sm:$0xff]
    %v910 = vld [vmem:[#allocation7 + $0x7b8] sm:$0xff]
    %v911 = vld [vmem:[#allocation7 + $0x7c0] sm:$0xff]
    %v912 = vld [vmem:[#allocation7 + $0x7c8] sm:$0xff]
    %v913 = vld [vmem:[#allocation7 + $0x7d0] sm:$0xff]
    %v914 = vld [vmem:[#allocation7 + $0x7d8] sm:$0xff]
    %v915 = vld [vmem:[#allocation7 + $0x7e0] sm:$0xff]
    %v916 = vld [vmem:[#allocation7 + $0x7e8] sm:$0xff]
    %v917 = vld [vmem:[#allocation7 + $0x7f0] sm:$0xff]
    %v918 = vld [vmem:[#allocation7 + $0x7f8] sm:$0xff]
    %v919 = vld [vmem:[#allocation7 + $0x800] sm:$0xff]
    %v920 = vld [vmem:[#allocation7 + $0x808] sm:$0xff]
    %v921 = vld [vmem:[#allocation7 + $0x810] sm:$0xff]
    %v922 = vld [vmem:[#allocation7 + $0x818] sm:$0xff]
    %v923 = vld [vmem:[#allocation7 + $0x820] sm:$0xff]
    %v924 = vld [vmem:[#allocation7 + $0x828] sm:$0xff]
    %v925 = vld [vmem:[#allocation7 + $0x830] sm:$0xff]
    %v926 = vld [vmem:[#allocation7 + $0x838] sm:$0xff]
    %v927 = vld [vmem:[#allocation7 + $0x840] sm:$0xff]
    %v928 = vld [vmem:[#allocation7 + $0x848] sm:$0xff]
    %v929 = vld [vmem:[#allocation7 + $0x850] sm:$0xff]
    %v930 = vld [vmem:[#allocation7 + $0x858] sm:$0xff]
    %v931 = vld [vmem:[#allocation7 + $0x860] sm:$0xff]
    %v932 = vld [vmem:[#allocation7 + $0x868] sm:$0xff]
    %v933 = vld [vmem:[#allocation7 + $0x870] sm:$0xff]
    %v934 = vld [vmem:[#allocation7 + $0x878] sm:$0xff]
    %v935 = vld [vmem:[#allocation7 + $0x880] sm:$0xff]
    %v936 = vld [vmem:[#allocation7 + $0x888] sm:$0xff]
    %v937 = vld [vmem:[#allocation7 + $0x890] sm:$0xff]
    %v938 = vld [vmem:[#allocation7 + $0x898] sm:$0xff]
    %v939 = vld [vmem:[#allocation7 + $0x8a0] sm:$0xff]
    %v940 = vld [vmem:[#allocation7 + $0x8a8] sm:$0xff]
    %v941 = vld [vmem:[#allocation7 + $0x8b0] sm:$0xff]
    %v942 = vld [vmem:[#allocation7 + $0x8b8] sm:$0xff]
    %v943 = vld [vmem:[#allocation7 + $0x8c0] sm:$0xff]
    %v944 = vld [vmem:[#allocation7 + $0x8c8] sm:$0xff]
    %v945 = vld [vmem:[#allocation7 + $0x8d0] sm:$0xff]
    %v946 = vld [vmem:[#allocation7 + $0x8d8] sm:$0xff]
    %v947 = vld [vmem:[#allocation7 + $0x8e0] sm:$0xff]
    %v948 = vld [vmem:[#allocation7 + $0x8e8] sm:$0xff]
    %v949 = vld [vmem:[#allocation7 + $0x8f0] sm:$0xff]
    %v950 = vld [vmem:[#allocation7 + $0x8f8] sm:$0xff]
    %v951 = vld [vmem:[#allocation7 + $0x900] sm:$0xff]
    %v952 = vld [vmem:[#allocation7 + $0x908] sm:$0xff]
    %v953 = vld [vmem:[#allocation7 + $0x910] sm:$0xff]
    %v954 = vld [vmem:[#allocation7 + $0x918] sm:$0xff]
    %v955 = vld [vmem:[#allocation7 + $0x920] sm:$0xff]
    %v956 = vld [vmem:[#allocation7 + $0x928] sm:$0xff]
    %v957 = vld [vmem:[#allocation7 + $0x930] sm:$0xff]
    %v958 = vld [vmem:[#allocation7 + $0x938] sm:$0xff]
    %v959 = vld [vmem:[#allocation7 + $0x940] sm:$0xff]
    %v960 = vld [vmem:[#allocation7 + $0x948] sm:$0xff]
    %v961 = vld [vmem:[#allocation7 + $0x950] sm:$0xff]
    %v962 = vld [vmem:[#allocation7 + $0x958] sm:$0xff]
    %v963 = vld [vmem:[#allocation7 + $0x960] sm:$0xff]
    %v964 = vld [vmem:[#allocation7 + $0x968] sm:$0xff]
    %v965 = vld [vmem:[#allocation7 + $0x970] sm:$0xff]
    %v966 = vld [vmem:[#allocation7 + $0x978] sm:$0xff]
    %v967 = vld [vmem:[#allocation7 + $0x980] sm:$0xff]
    %v968 = vld [vmem:[#allocation7 + $0x988] sm:$0xff]
    %v969 = vld [vmem:[#allocation7 + $0x990] sm:$0xff]
    %v970 = vld [vmem:[#allocation7 + $0x998] sm:$0xff]
    %v971 = vld [vmem:[#allocation7 + $0x9a0] sm:$0xff]
    %v972 = vld [vmem:[#allocation7 + $0x9a8] sm:$0xff]
    %v973 = vld [vmem:[#allocation7 + $0x9b0] sm:$0xff]
    %v974 = vld [vmem:[#allocation7 + $0x9b8] sm:$0xff]
    %v975 = vld [vmem:[#allocation7 + $0x9c0] sm:$0xff]
    %v976 = vld [vmem:[#allocation7 + $0x9c8] sm:$0xff]
    %v977 = vld [vmem:[#allocation7 + $0x9d0] sm:$0xff]
    %v978 = vld [vmem:[#allocation7 + $0x9d8] sm:$0xff]
    %v979 = vld [vmem:[#allocation7 + $0x9e0] sm:$0xff]
    %v980 = vld [vmem:[#allocation7 + $0x9e8] sm:$0xff]
    %v981 = vld [vmem:[#allocation7 + $0x9f0] sm:$0xff]
    %v982 = vld [vmem:[#allocation7 + $0x9f8] sm:$0xff]
    %v983 = vld [vmem:[#allocation7 + $0xa00] sm:$0xff]
    %v984 = vld [vmem:[#allocation7 + $0xa08] sm:$0xff]
    %v985 = vld [vmem:[#allocation7 + $0xa10] sm:$0xff]
    %v986 = vld [vmem:[#allocation7 + $0xa18] sm:$0xff]
    %v987 = vld [vmem:[#allocation7 + $0xa20] sm:$0xff]
    %v988 = vld [vmem:[#allocation7 + $0xa28] sm:$0xff]
    %v989 = vld [vmem:[#allocation7 + $0xa30] sm:$0xff]
    %v990 = vld [vmem:[#allocation7 + $0xa38] sm:$0xff]
    %v991 = vld [vmem:[#allocation7 + $0xa40] sm:$0xff]
    %v992 = vld [vmem:[#allocation7 + $0xa48] sm:$0xff]
    %v993 = vld [vmem:[#allocation7 + $0xa50] sm:$0xff]
    %v994 = vld [vmem:[#allocation7 + $0xa58] sm:$0xff]
    %v995 = vld [vmem:[#allocation7 + $0xa60] sm:$0xff]
    %v996 = vld [vmem:[#allocation7 + $0xa68] sm:$0xff]
    %v997 = vld [vmem:[#allocation7 + $0xa70] sm:$0xff]
    %v998 = vld [vmem:[#allocation7 + $0xa78] sm:$0xff]
    %v999 = vld [vmem:[#allocation7 + $0xa80] sm:$0xff]
    %v1000 = vld [vmem:[#allocation7 + $0xa88] sm:$0xff]
    %v1001 = vld [vmem:[#allocation7 + $0xa90] sm:$0xff]
    %v1002 = vld [vmem:[#allocation7 + $0xa98] sm:$0xff]
    %v1003 = vld [vmem:[#allocation7 + $0xaa0] sm:$0xff]
    %v1004 = vld [vmem:[#allocation7 + $0xaa8] sm:$0xff]
    %v1005 = vld [vmem:[#allocation7 + $0xab0] sm:$0xff]
    %v1006 = vld [vmem:[#allocation7 + $0xab8] sm:$0xff]
    %v1007 = vld [vmem:[#allocation7 + $0xac0] sm:$0xff]
    %v1008 = vld [vmem:[#allocation7 + $0xac8] sm:$0xff]
    %v1009 = vld [vmem:[#allocation7 + $0xad0] sm:$0xff]
    %v1010 = vld [vmem:[#allocation7 + $0xad8] sm:$0xff]
    %v1011 = vld [vmem:[#allocation7 + $0xae0] sm:$0xff]
    %v1012 = vld [vmem:[#allocation7 + $0xae8] sm:$0xff]
    %v1013 = vld [vmem:[#allocation7 + $0xaf0] sm:$0xff]
    %v1014 = vld [vmem:[#allocation7 + $0xaf8] sm:$0xff]
    %v1015 = vld [vmem:[#allocation7 + $0xb00] sm:$0xff]
    %v1016 = vld [vmem:[#allocation7 + $0xb08] sm:$0xff]
    %v1017 = vld [vmem:[#allocation7 + $0xb10] sm:$0xff]
    %v1018 = vld [vmem:[#allocation7 + $0xb18] sm:$0xff]
    %v1019 = vld [vmem:[#allocation7 + $0xb20] sm:$0xff]
    %v1020 = vld [vmem:[#allocation7 + $0xb28] sm:$0xff]
    %v1021 = vld [vmem:[#allocation7 + $0xb30] sm:$0xff]
    %v1022 = vld [vmem:[#allocation7 + $0xb38] sm:$0xff]
    %v1023 = vld [vmem:[#allocation7 + $0xb40] sm:$0xff]
    %v1024 = vld [vmem:[#allocation7 + $0xb48] sm:$0xff]
    %v1025 = vld [vmem:[#allocation7 + $0xb50] sm:$0xff]
    %v1026 = vld [vmem:[#allocation7 + $0xb58] sm:$0xff]
    %v1027 = vld [vmem:[#allocation7 + $0xb60] sm:$0xff]
    %v1028 = vld [vmem:[#allocation7 + $0xb68] sm:$0xff]
    %v1029 = vld [vmem:[#allocation7 + $0xb70] sm:$0xff]
    %v1030 = vld [vmem:[#allocation7 + $0xb78] sm:$0xff]
    %v1031 = vld [vmem:[#allocation7 + $0xb80] sm:$0xff]
    %v1032 = vld [vmem:[#allocation7 + $0xb88] sm:$0xff]
    %v1033 = vld [vmem:[#allocation7 + $0xb90] sm:$0xff]
    %v1034 = vld [vmem:[#allocation7 + $0xb98] sm:$0xff]
    %v1035 = vld [vmem:[#allocation7 + $0xba0] sm:$0xff]
    %v1036 = vld [vmem:[#allocation7 + $0xba8] sm:$0xff]
    %v1037 = vld [vmem:[#allocation7 + $0xbb0] sm:$0xff]
    %v1038 = vld [vmem:[#allocation7 + $0xbb8] sm:$0xff]
    %v1039 = vld [vmem:[#allocation7 + $0xbc0] sm:$0xff]
    %v1040 = vld [vmem:[#allocation7 + $0xbc8] sm:$0xff]
    %v1041 = vld [vmem:[#allocation7 + $0xbd0] sm:$0xff]
    %v1042 = vld [vmem:[#allocation7 + $0xbd8] sm:$0xff]
    %v1043 = vld [vmem:[#allocation7 + $0xbe0] sm:$0xff]
    %v1044 = vld [vmem:[#allocation7 + $0xbe8] sm:$0xff]
    %v1045 = vld [vmem:[#allocation7 + $0xbf0] sm:$0xff]
    %v1046 = vld [vmem:[#allocation7 + $0xbf8] sm:$0xff]
    %v1047 = vld [vmem:[#allocation7 + $0xc00] sm:$0xff]
    %v1048 = vld [vmem:[#allocation7 + $0xc08] sm:$0xff]
    %v1049 = vld [vmem:[#allocation7 + $0xc10] sm:$0xff]
    %v1050 = vld [vmem:[#allocation7 + $0xc18] sm:$0xff]
    %v1051 = vld [vmem:[#allocation7 + $0xc20] sm:$0xff]
    %v1052 = vld [vmem:[#allocation7 + $0xc28] sm:$0xff]
    %v1053 = vld [vmem:[#allocation7 + $0xc30] sm:$0xff]
    %v1054 = vld [vmem:[#allocation7 + $0xc38] sm:$0xff]
    %v1055 = vld [vmem:[#allocation8] sm:$0xff]
    %v1057 = vlaneseq
    %v1058 = vshrl.u32 %v1057, 7
    %v1059 = vsub.s32 0, %v1058
    %v1060 = vrot.slane %v1055, %v1059
    %v1061 = vlaneseq
    %v1062 = vshrl.u32 %v1061, 7
    %v1063 = vsub.s32 1, %v1062
    %v1064 = vrot.slane %v1055, %v1063
    %v1065 = vlaneseq
    %v1066 = vshrl.u32 %v1065, 7
    %v1067 = vsub.s32 2, %v1066
    %v1068 = vrot.slane %v1055, %v1067
    %v1069 = vlaneseq
    %v1070 = vshrl.u32 %v1069, 7
    %v1071 = vsub.s32 3, %v1070
    %v1072 = vrot.slane %v1055, %v1071
    %v1073 = vlaneseq
    %v1074 = vshrl.u32 %v1073, 7
    %v1075 = vsub.s32 4, %v1074
    %v1076 = vrot.slane %v1055, %v1075
    %v1077 = vlaneseq
    %v1078 = vshrl.u32 %v1077, 7
    %v1079 = vsub.s32 5, %v1078
    %v1080 = vrot.slane %v1055, %v1079
    %v1081 = vlaneseq
    %v1082 = vshrl.u32 %v1081, 7
    %v1083 = vsub.s32 6, %v1082
    %v1084 = vrot.slane %v1055, %v1083
    %v1085 = vlaneseq
    %v1086 = vshrl.u32 %v1085, 7
    %v1087 = vsub.s32 7, %v1086
    %v1088 = vrot.slane %v1055, %v1087
    %v1489 = vunpack.c.l.b16 %v663
    %v1490 = vunpack.c.h.b16 %v663
    %v1491 = vunpack.c.l.b16 %v664
    %v1492 = vunpack.c.h.b16 %v664
    %v1493 = vunpack.c.l.b16 %v665
    %v1494 = vunpack.c.h.b16 %v665
    %v1495 = vunpack.c.l.b16 %v666
    %v1496 = vunpack.c.h.b16 %v666
    %v1497 = vunpack.c.l.b16 %v667
    %v1498 = vunpack.c.h.b16 %v667
    %v1499 = vunpack.c.l.b16 %v668
    %v1500 = vunpack.c.h.b16 %v668
    %v1501 = vunpack.c.l.b16 %v669
    %v1502 = vunpack.c.h.b16 %v669
    %v1503 = vunpack.c.l.b16 %v670
    %v1504 = vunpack.c.h.b16 %v670
    %v1505 = vunpack.c.l.b16 %v671
    %v1506 = vunpack.c.h.b16 %v671
    %v1507 = vunpack.c.l.b16 %v672
    %v1508 = vunpack.c.h.b16 %v672
    %v1509 = vunpack.c.l.b16 %v673
    %v1510 = vunpack.c.h.b16 %v673
    %v1511 = vunpack.c.l.b16 %v674
    %v1512 = vunpack.c.h.b16 %v674
    %v1513 = vunpack.c.l.b16 %v675
    %v1514 = vunpack.c.h.b16 %v675
    %v1515 = vunpack.c.l.b16 %v676
    %v1516 = vunpack.c.h.b16 %v676
    %v1517 = vunpack.c.l.b16 %v677
    %v1518 = vunpack.c.h.b16 %v677
    %v1519 = vunpack.c.l.b16 %v678
    %v1520 = vunpack.c.h.b16 %v678
    %v1521 = vunpack.c.l.b16 %v679
    %v1522 = vunpack.c.h.b16 %v679
    %v1523 = vunpack.c.l.b16 %v680
    %v1524 = vunpack.c.h.b16 %v680
    %v1525 = vunpack.c.l.b16 %v681
    %v1526 = vunpack.c.h.b16 %v681
    %v1527 = vunpack.c.l.b16 %v682
    %v1528 = vunpack.c.h.b16 %v682
    %v1529 = vunpack.c.l.b16 %v683
    %v1530 = vunpack.c.h.b16 %v683
    %v1531 = vunpack.c.l.b16 %v684
    %v1532 = vunpack.c.h.b16 %v684
    %v1533 = vunpack.c.l.b16 %v685
    %v1534 = vunpack.c.h.b16 %v685
    %v1535 = vunpack.c.l.b16 %v686
    %v1536 = vunpack.c.h.b16 %v686
    %v1537 = vunpack.c.l.b16 %v687
    %v1538 = vunpack.c.h.b16 %v687
    %v1539 = vunpack.c.l.b16 %v688
    %v1540 = vunpack.c.h.b16 %v688
    %v1541 = vunpack.c.l.b16 %v689
    %v1542 = vunpack.c.h.b16 %v689
    %v1543 = vunpack.c.l.b16 %v690
    %v1544 = vunpack.c.h.b16 %v690
    %v1545 = vunpack.c.l.b16 %v691
    %v1546 = vunpack.c.h.b16 %v691
    %v1547 = vunpack.c.l.b16 %v692
    %v1548 = vunpack.c.h.b16 %v692
    %v1549 = vunpack.c.l.b16 %v693
    %v1550 = vunpack.c.h.b16 %v693
    %v1551 = vunpack.c.l.b16 %v694
    %v1552 = vunpack.c.h.b16 %v694
    %v1553 = vunpack.c.l.b16 %v695
    %v1554 = vunpack.c.h.b16 %v695
    %v1555 = vunpack.c.l.b16 %v696
    %v1556 = vunpack.c.h.b16 %v696
    %v1557 = vunpack.c.l.b16 %v697
    %v1558 = vunpack.c.h.b16 %v697
    %v1559 = vunpack.c.l.b16 %v698
    %v1560 = vunpack.c.h.b16 %v698
    %v1561 = vunpack.c.l.b16 %v699
    %v1562 = vunpack.c.h.b16 %v699
    %v1563 = vunpack.c.l.b16 %v700
    %v1564 = vunpack.c.h.b16 %v700
    %v1565 = vunpack.c.l.b16 %v701
    %v1566 = vunpack.c.h.b16 %v701
    %v1567 = vunpack.c.l.b16 %v702
    %v1568 = vunpack.c.h.b16 %v702
    %v1569 = vunpack.c.l.b16 %v703
    %v1570 = vunpack.c.h.b16 %v703
    %v1571 = vunpack.c.l.b16 %v704
    %v1572 = vunpack.c.h.b16 %v704
    %v1573 = vunpack.c.l.b16 %v705
    %v1574 = vunpack.c.h.b16 %v705
    %v1575 = vunpack.c.l.b16 %v706
    %v1576 = vunpack.c.h.b16 %v706
    %v1577 = vunpack.c.l.b16 %v707
    %v1578 = vunpack.c.h.b16 %v707
    %v1579 = vunpack.c.l.b16 %v708
    %v1580 = vunpack.c.h.b16 %v708
    %v1581 = vunpack.c.l.b16 %v709
    %v1582 = vunpack.c.h.b16 %v709
    %v1583 = vunpack.c.l.b16 %v710
    %v1584 = vunpack.c.h.b16 %v710
    %v1585 = vunpack.c.l.b16 %v711
    %v1586 = vunpack.c.h.b16 %v711
    %v1587 = vunpack.c.l.b16 %v712
    %v1588 = vunpack.c.h.b16 %v712
    %v1589 = vunpack.c.l.b16 %v713
    %v1590 = vunpack.c.h.b16 %v713
    %v1591 = vunpack.c.l.b16 %v714
    %v1592 = vunpack.c.h.b16 %v714
    %v1593 = vunpack.c.l.b16 %v715
    %v1594 = vunpack.c.h.b16 %v715
    %v1595 = vunpack.c.l.b16 %v716
    %v1596 = vunpack.c.h.b16 %v716
    %v1597 = vunpack.c.l.b16 %v717
    %v1598 = vunpack.c.h.b16 %v717
    %v1599 = vunpack.c.l.b16 %v718
    %v1600 = vunpack.c.h.b16 %v718
    %v1601 = vunpack.c.l.b16 %v719
    %v1602 = vunpack.c.h.b16 %v719
    %v1603 = vunpack.c.l.b16 %v720
    %v1604 = vunpack.c.h.b16 %v720
    %v1605 = vunpack.c.l.b16 %v721
    %v1606 = vunpack.c.h.b16 %v721
    %v1607 = vunpack.c.l.b16 %v722
    %v1608 = vunpack.c.h.b16 %v722
    %v1609 = vunpack.c.l.b16 %v723
    %v1610 = vunpack.c.h.b16 %v723
    %v1611 = vunpack.c.l.b16 %v724
    %v1612 = vunpack.c.h.b16 %v724
    %v1613 = vunpack.c.l.b16 %v725
    %v1614 = vunpack.c.h.b16 %v725
    %v1615 = vunpack.c.l.b16 %v726
    %v1616 = vunpack.c.h.b16 %v726
    %v1617 = vunpack.c.l.b16 %v727
    %v1618 = vunpack.c.h.b16 %v727
    %v1619 = vunpack.c.l.b16 %v728
    %v1620 = vunpack.c.h.b16 %v728
    %v1621 = vunpack.c.l.b16 %v729
    %v1622 = vunpack.c.h.b16 %v729
    %v1623 = vunpack.c.l.b16 %v730
    %v1624 = vunpack.c.h.b16 %v730
    %v1625 = vunpack.c.l.b16 %v731
    %v1626 = vunpack.c.h.b16 %v731
    %v1627 = vunpack.c.l.b16 %v732
    %v1628 = vunpack.c.h.b16 %v732
    %v1629 = vunpack.c.l.b16 %v733
    %v1630 = vunpack.c.h.b16 %v733
    %v1631 = vunpack.c.l.b16 %v734
    %v1632 = vunpack.c.h.b16 %v734
    %v1633 = vunpack.c.l.b16 %v735
    %v1634 = vunpack.c.h.b16 %v735
    %v1635 = vunpack.c.l.b16 %v736
    %v1636 = vunpack.c.h.b16 %v736
    %v1637 = vunpack.c.l.b16 %v737
    %v1638 = vunpack.c.h.b16 %v737
    %v1639 = vunpack.c.l.b16 %v738
    %v1640 = vunpack.c.h.b16 %v738
    %v1641 = vunpack.c.l.b16 %v739
    %v1642 = vunpack.c.h.b16 %v739
    %v1643 = vunpack.c.l.b16 %v740
    %v1644 = vunpack.c.h.b16 %v740
    %v1645 = vunpack.c.l.b16 %v741
    %v1646 = vunpack.c.h.b16 %v741
    %v1647 = vunpack.c.l.b16 %v742
    %v1648 = vunpack.c.h.b16 %v742
    %v1649 = vunpack.c.l.b16 %v743
    %v1650 = vunpack.c.h.b16 %v743
    %v1651 = vunpack.c.l.b16 %v744
    %v1652 = vunpack.c.h.b16 %v744
    %v1653 = vunpack.c.l.b16 %v745
    %v1654 = vunpack.c.h.b16 %v745
    %v1655 = vunpack.c.l.b16 %v746
    %v1656 = vunpack.c.h.b16 %v746
    %v1657 = vunpack.c.l.b16 %v747
    %v1658 = vunpack.c.h.b16 %v747
    %v1659 = vunpack.c.l.b16 %v748
    %v1660 = vunpack.c.h.b16 %v748
    %v1661 = vunpack.c.l.b16 %v749
    %v1662 = vunpack.c.h.b16 %v749
    %v1663 = vunpack.c.l.b16 %v750
    %v1664 = vunpack.c.h.b16 %v750
    %v1665 = vunpack.c.l.b16 %v751
    %v1666 = vunpack.c.h.b16 %v751
    %v1667 = vunpack.c.l.b16 %v752
    %v1668 = vunpack.c.h.b16 %v752
    %v1669 = vunpack.c.l.b16 %v753
    %v1670 = vunpack.c.h.b16 %v753
    %v1671 = vunpack.c.l.b16 %v754
    %v1672 = vunpack.c.h.b16 %v754
    %v1673 = vunpack.c.l.b16 %v755
    %v1674 = vunpack.c.h.b16 %v755
    %v1675 = vunpack.c.l.b16 %v756
    %v1676 = vunpack.c.h.b16 %v756
    %v1677 = vunpack.c.l.b16 %v757
    %v1678 = vunpack.c.h.b16 %v757
    %v1679 = vunpack.c.l.b16 %v758
    %v1680 = vunpack.c.h.b16 %v758
    %v1681 = vunpack.c.l.b16 %v759
    %v1682 = vunpack.c.h.b16 %v759
    %v1683 = vunpack.c.l.b16 %v760
    %v1684 = vunpack.c.h.b16 %v760
    %v1685 = vunpack.c.l.b16 %v761
    %v1686 = vunpack.c.h.b16 %v761
    %v1687 = vunpack.c.l.b16 %v762
    %v1688 = vunpack.c.h.b16 %v762
    %v1689 = vunpack.c.l.b16 %v763
    %v1690 = vunpack.c.h.b16 %v763
    %v1691 = vunpack.c.l.b16 %v764
    %v1692 = vunpack.c.h.b16 %v764
    %v1693 = vunpack.c.l.b16 %v765
    %v1694 = vunpack.c.h.b16 %v765
    %v1695 = vunpack.c.l.b16 %v766
    %v1696 = vunpack.c.h.b16 %v766
    %v1697 = vunpack.c.l.b16 %v767
    %v1698 = vunpack.c.h.b16 %v767
    %v1699 = vunpack.c.l.b16 %v768
    %v1700 = vunpack.c.h.b16 %v768
    %v1701 = vunpack.c.l.b16 %v769
    %v1702 = vunpack.c.h.b16 %v769
    %v1703 = vunpack.c.l.b16 %v770
    %v1704 = vunpack.c.h.b16 %v770
    %v1705 = vunpack.c.l.b16 %v771
    %v1706 = vunpack.c.h.b16 %v771
    %v1707 = vunpack.c.l.b16 %v772
    %v1708 = vunpack.c.h.b16 %v772
    %v1709 = vunpack.c.l.b16 %v773
    %v1710 = vunpack.c.h.b16 %v773
    %v1711 = vunpack.c.l.b16 %v774
    %v1712 = vunpack.c.h.b16 %v774
    %v1713 = vunpack.c.l.b16 %v775
    %v1714 = vunpack.c.h.b16 %v775
    %v1715 = vunpack.c.l.b16 %v776
    %v1716 = vunpack.c.h.b16 %v776
    %v1717 = vunpack.c.l.b16 %v777
    %v1718 = vunpack.c.h.b16 %v777
    %v1719 = vunpack.c.l.b16 %v778
    %v1720 = vunpack.c.h.b16 %v778
    %v1721 = vunpack.c.l.b16 %v779
    %v1722 = vunpack.c.h.b16 %v779
    %v1723 = vunpack.c.l.b16 %v780
    %v1724 = vunpack.c.h.b16 %v780
    %v1725 = vunpack.c.l.b16 %v781
    %v1726 = vunpack.c.h.b16 %v781
    %v1727 = vunpack.c.l.b16 %v782
    %v1728 = vunpack.c.h.b16 %v782
    %v1729 = vunpack.c.l.b16 %v783
    %v1730 = vunpack.c.h.b16 %v783
    %v1731 = vunpack.c.l.b16 %v784
    %v1732 = vunpack.c.h.b16 %v784
    %v1733 = vunpack.c.l.b16 %v785
    %v1734 = vunpack.c.h.b16 %v785
    %v1735 = vunpack.c.l.b16 %v786
    %v1736 = vunpack.c.h.b16 %v786
    %v1737 = vunpack.c.l.b16 %v787
    %v1738 = vunpack.c.h.b16 %v787
    %v1739 = vunpack.c.l.b16 %v788
    %v1740 = vunpack.c.h.b16 %v788
    %v1741 = vunpack.c.l.b16 %v789
    %v1742 = vunpack.c.h.b16 %v789
    %v1743 = vunpack.c.l.b16 %v790
    %v1744 = vunpack.c.h.b16 %v790
    %v1745 = vunpack.c.l.b16 %v791
    %v1746 = vunpack.c.h.b16 %v791
    %v1747 = vunpack.c.l.b16 %v792
    %v1748 = vunpack.c.h.b16 %v792
    %v1749 = vunpack.c.l.b16 %v793
    %v1750 = vunpack.c.h.b16 %v793
    %v1751 = vunpack.c.l.b16 %v794
    %v1752 = vunpack.c.h.b16 %v794
    %v1753 = vunpack.c.l.b16 %v795
    %v1754 = vunpack.c.h.b16 %v795
    %v1755 = vunpack.c.l.b16 %v796
    %v1756 = vunpack.c.h.b16 %v796
    %v1757 = vunpack.c.l.b16 %v797
    %v1758 = vunpack.c.h.b16 %v797
    %v1759 = vunpack.c.l.b16 %v798
    %v1760 = vunpack.c.h.b16 %v798
    %v1761 = vunpack.c.l.b16 %v799
    %v1762 = vunpack.c.h.b16 %v799
    %v1763 = vunpack.c.l.b16 %v800
    %v1764 = vunpack.c.h.b16 %v800
    %v1765 = vunpack.c.l.b16 %v801
    %v1766 = vunpack.c.h.b16 %v801
    %v1767 = vunpack.c.l.b16 %v802
    %v1768 = vunpack.c.h.b16 %v802
    %v1769 = vunpack.c.l.b16 %v803
    %v1770 = vunpack.c.h.b16 %v803
    %v1771 = vunpack.c.l.b16 %v804
    %v1772 = vunpack.c.h.b16 %v804
    %v1773 = vunpack.c.l.b16 %v805
    %v1774 = vunpack.c.h.b16 %v805
    %v1775 = vunpack.c.l.b16 %v806
    %v1776 = vunpack.c.h.b16 %v806
    %v1777 = vunpack.c.l.b16 %v807
    %v1778 = vunpack.c.h.b16 %v807
    %v1779 = vunpack.c.l.b16 %v808
    %v1780 = vunpack.c.h.b16 %v808
    %v1781 = vunpack.c.l.b16 %v809
    %v1782 = vunpack.c.h.b16 %v809
    %v1783 = vunpack.c.l.b16 %v810
    %v1784 = vunpack.c.h.b16 %v810
    %v1785 = vunpack.c.l.b16 %v811
    %v1786 = vunpack.c.h.b16 %v811
    %v1787 = vunpack.c.l.b16 %v812
    %v1788 = vunpack.c.h.b16 %v812
    %v1789 = vunpack.c.l.b16 %v813
    %v1790 = vunpack.c.h.b16 %v813
    %v1791 = vunpack.c.l.b16 %v814
    %v1792 = vunpack.c.h.b16 %v814
    %v1793 = vunpack.c.l.b16 %v815
    %v1794 = vunpack.c.h.b16 %v815
    %v1795 = vunpack.c.l.b16 %v816
    %v1796 = vunpack.c.h.b16 %v816
    %v1797 = vunpack.c.l.b16 %v817
    %v1798 = vunpack.c.h.b16 %v817
    %v1799 = vunpack.c.l.b16 %v818
    %v1800 = vunpack.c.h.b16 %v818
    %v1801 = vunpack.c.l.b16 %v819
    %v1802 = vunpack.c.h.b16 %v819
    %v1803 = vunpack.c.l.b16 %v820
    %v1804 = vunpack.c.h.b16 %v820
    %v1805 = vunpack.c.l.b16 %v821
    %v1806 = vunpack.c.h.b16 %v821
    %v1807 = vunpack.c.l.b16 %v822
    %v1808 = vunpack.c.h.b16 %v822
    %v1809 = vunpack.c.l.b16 %v823
    %v1810 = vunpack.c.h.b16 %v823
    %v1811 = vunpack.c.l.b16 %v824
    %v1812 = vunpack.c.h.b16 %v824
    %v1813 = vunpack.c.l.b16 %v825
    %v1814 = vunpack.c.h.b16 %v825
    %v1815 = vunpack.c.l.b16 %v826
    %v1816 = vunpack.c.h.b16 %v826
    %v1817 = vunpack.c.l.b16 %v827
    %v1818 = vunpack.c.h.b16 %v827
    %v1819 = vunpack.c.l.b16 %v828
    %v1820 = vunpack.c.h.b16 %v828
    %v1821 = vunpack.c.l.b16 %v829
    %v1822 = vunpack.c.h.b16 %v829
    %v1823 = vunpack.c.l.b16 %v830
    %v1824 = vunpack.c.h.b16 %v830
    %v1825 = vunpack.c.l.b16 %v831
    %v1826 = vunpack.c.h.b16 %v831
    %v1827 = vunpack.c.l.b16 %v832
    %v1828 = vunpack.c.h.b16 %v832
    %v1829 = vunpack.c.l.b16 %v833
    %v1830 = vunpack.c.h.b16 %v833
    %v1831 = vunpack.c.l.b16 %v834
    %v1832 = vunpack.c.h.b16 %v834
    %v1833 = vunpack.c.l.b16 %v835
    %v1834 = vunpack.c.h.b16 %v835
    %v1835 = vunpack.c.l.b16 %v836
    %v1836 = vunpack.c.h.b16 %v836
    %v1837 = vunpack.c.l.b16 %v837
    %v1838 = vunpack.c.h.b16 %v837
    %v1839 = vunpack.c.l.b16 %v838
    %v1840 = vunpack.c.h.b16 %v838
    %v1841 = vunpack.c.l.b16 %v839
    %v1842 = vunpack.c.h.b16 %v839
    %v1843 = vunpack.c.l.b16 %v840
    %v1844 = vunpack.c.h.b16 %v840
    %v1845 = vunpack.c.l.b16 %v841
    %v1846 = vunpack.c.h.b16 %v841
    %v1847 = vunpack.c.l.b16 %v842
    %v1848 = vunpack.c.h.b16 %v842
    %v1849 = vunpack.c.l.b16 %v843
    %v1850 = vunpack.c.h.b16 %v843
    %v1851 = vunpack.c.l.b16 %v844
    %v1852 = vunpack.c.h.b16 %v844
    %v1853 = vunpack.c.l.b16 %v845
    %v1854 = vunpack.c.h.b16 %v845
    %v1855 = vunpack.c.l.b16 %v846
    %v1856 = vunpack.c.h.b16 %v846
    %v1857 = vunpack.c.l.b16 %v847
    %v1858 = vunpack.c.h.b16 %v847
    %v1859 = vunpack.c.l.b16 %v848
    %v1860 = vunpack.c.h.b16 %v848
    %v1861 = vunpack.c.l.b16 %v849
    %v1862 = vunpack.c.h.b16 %v849
    %v1863 = vunpack.c.l.b16 %v850
    %v1864 = vunpack.c.h.b16 %v850
    %v1865 = vunpack.c.l.b16 %v851
    %v1866 = vunpack.c.h.b16 %v851
    %v1867 = vunpack.c.l.b16 %v852
    %v1868 = vunpack.c.h.b16 %v852
    %v1869 = vunpack.c.l.b16 %v853
    %v1870 = vunpack.c.h.b16 %v853
    %v1871 = vunpack.c.l.b16 %v854
    %v1872 = vunpack.c.h.b16 %v854
    %v1873 = vunpack.c.l.b16 %v855
    %v1874 = vunpack.c.h.b16 %v855
    %v1875 = vunpack.c.l.b16 %v856
    %v1876 = vunpack.c.h.b16 %v856
    %v1877 = vunpack.c.l.b16 %v857
    %v1878 = vunpack.c.h.b16 %v857
    %v1879 = vunpack.c.l.b16 %v858
    %v1880 = vunpack.c.h.b16 %v858
    %v1881 = vunpack.c.l.b16 %v859
    %v1882 = vunpack.c.h.b16 %v859
    %v1883 = vunpack.c.l.b16 %v860
    %v1884 = vunpack.c.h.b16 %v860
    %v1885 = vunpack.c.l.b16 %v861
    %v1886 = vunpack.c.h.b16 %v861
    %v1887 = vunpack.c.l.b16 %v862
    %v1888 = vunpack.c.h.b16 %v862
    %v1889 = vunpack.c.l.b16 %v863
    %v1890 = vunpack.c.h.b16 %v863
    %v1891 = vunpack.c.l.b16 %v864
    %v1892 = vunpack.c.h.b16 %v864
    %v1893 = vunpack.c.l.b16 %v865
    %v1894 = vunpack.c.h.b16 %v865
    %v1895 = vunpack.c.l.b16 %v866
    %v1896 = vunpack.c.h.b16 %v866
    %v1897 = vunpack.c.l.b16 %v867
    %v1898 = vunpack.c.h.b16 %v867
    %v1899 = vunpack.c.l.b16 %v868
    %v1900 = vunpack.c.h.b16 %v868
    %v1901 = vunpack.c.l.b16 %v869
    %v1902 = vunpack.c.h.b16 %v869
    %v1903 = vunpack.c.l.b16 %v870
    %v1904 = vunpack.c.h.b16 %v870
    %v1905 = vunpack.c.l.b16 %v871
    %v1906 = vunpack.c.h.b16 %v871
    %v1907 = vunpack.c.l.b16 %v872
    %v1908 = vunpack.c.h.b16 %v872
    %v1909 = vunpack.c.l.b16 %v873
    %v1910 = vunpack.c.h.b16 %v873
    %v1911 = vunpack.c.l.b16 %v874
    %v1912 = vunpack.c.h.b16 %v874
    %v1913 = vunpack.c.l.b16 %v875
    %v1914 = vunpack.c.h.b16 %v875
    %v1915 = vunpack.c.l.b16 %v876
    %v1916 = vunpack.c.h.b16 %v876
    %v1917 = vunpack.c.l.b16 %v877
    %v1918 = vunpack.c.h.b16 %v877
    %v1919 = vunpack.c.l.b16 %v878
    %v1920 = vunpack.c.h.b16 %v878
    %v1921 = vunpack.c.l.b16 %v879
    %v1922 = vunpack.c.h.b16 %v879
    %v1923 = vunpack.c.l.b16 %v880
    %v1924 = vunpack.c.h.b16 %v880
    %v1925 = vunpack.c.l.b16 %v881
    %v1926 = vunpack.c.h.b16 %v881
    %v1927 = vunpack.c.l.b16 %v882
    %v1928 = vunpack.c.h.b16 %v882
    %v1929 = vunpack.c.l.b16 %v883
    %v1930 = vunpack.c.h.b16 %v883
    %v1931 = vunpack.c.l.b16 %v884
    %v1932 = vunpack.c.h.b16 %v884
    %v1933 = vunpack.c.l.b16 %v885
    %v1934 = vunpack.c.h.b16 %v885
    %v1935 = vunpack.c.l.b16 %v886
    %v1936 = vunpack.c.h.b16 %v886
    %v1937 = vunpack.c.l.b16 %v887
    %v1938 = vunpack.c.h.b16 %v887
    %v1939 = vunpack.c.l.b16 %v888
    %v1940 = vunpack.c.h.b16 %v888
    %v1941 = vunpack.c.l.b16 %v889
    %v1942 = vunpack.c.h.b16 %v889
    %v1943 = vunpack.c.l.b16 %v890
    %v1944 = vunpack.c.h.b16 %v890
    %v1945 = vunpack.c.l.b16 %v891
    %v1946 = vunpack.c.h.b16 %v891
    %v1947 = vunpack.c.l.b16 %v892
    %v1948 = vunpack.c.h.b16 %v892
    %v1949 = vunpack.c.l.b16 %v893
    %v1950 = vunpack.c.h.b16 %v893
    %v1951 = vunpack.c.l.b16 %v894
    %v1952 = vunpack.c.h.b16 %v894
    %v1953 = vunpack.c.l.b16 %v895
    %v1954 = vunpack.c.h.b16 %v895
    %v1955 = vunpack.c.l.b16 %v896
    %v1956 = vunpack.c.h.b16 %v896
    %v1957 = vunpack.c.l.b16 %v897
    %v1958 = vunpack.c.h.b16 %v897
    %v1959 = vunpack.c.l.b16 %v898
    %v1960 = vunpack.c.h.b16 %v898
    %v1961 = vunpack.c.l.b16 %v899
    %v1962 = vunpack.c.h.b16 %v899
    %v1963 = vunpack.c.l.b16 %v900
    %v1964 = vunpack.c.h.b16 %v900
    %v1965 = vunpack.c.l.b16 %v901
    %v1966 = vunpack.c.h.b16 %v901
    %v1967 = vunpack.c.l.b16 %v902
    %v1968 = vunpack.c.h.b16 %v902
    %v1969 = vunpack.c.l.b16 %v903
    %v1970 = vunpack.c.h.b16 %v903
    %v1971 = vunpack.c.l.b16 %v904
    %v1972 = vunpack.c.h.b16 %v904
    %v1973 = vunpack.c.l.b16 %v905
    %v1974 = vunpack.c.h.b16 %v905
    %v1975 = vunpack.c.l.b16 %v906
    %v1976 = vunpack.c.h.b16 %v906
    %v1977 = vunpack.c.l.b16 %v907
    %v1978 = vunpack.c.h.b16 %v907
    %v1979 = vunpack.c.l.b16 %v908
    %v1980 = vunpack.c.h.b16 %v908
    %v1981 = vunpack.c.l.b16 %v909
    %v1982 = vunpack.c.h.b16 %v909
    %v1983 = vunpack.c.l.b16 %v910
    %v1984 = vunpack.c.h.b16 %v910
    %v1985 = vunpack.c.l.b16 %v911
    %v1986 = vunpack.c.h.b16 %v911
    %v1987 = vunpack.c.l.b16 %v912
    %v1988 = vunpack.c.h.b16 %v912
    %v1989 = vunpack.c.l.b16 %v913
    %v1990 = vunpack.c.h.b16 %v913
    %v1991 = vunpack.c.l.b16 %v914
    %v1992 = vunpack.c.h.b16 %v914
    %v1993 = vunpack.c.l.b16 %v915
    %v1994 = vunpack.c.h.b16 %v915
    %v1995 = vunpack.c.l.b16 %v916
    %v1996 = vunpack.c.h.b16 %v916
    %v1997 = vunpack.c.l.b16 %v917
    %v1998 = vunpack.c.h.b16 %v917
    %v1999 = vunpack.c.l.b16 %v918
    %v2000 = vunpack.c.h.b16 %v918
    %v2001 = vunpack.c.l.b16 %v919
    %v2002 = vunpack.c.h.b16 %v919
    %v2003 = vunpack.c.l.b16 %v920
    %v2004 = vunpack.c.h.b16 %v920
    %v2005 = vunpack.c.l.b16 %v921
    %v2006 = vunpack.c.h.b16 %v921
    %v2007 = vunpack.c.l.b16 %v922
    %v2008 = vunpack.c.h.b16 %v922
    %v2009 = vunpack.c.l.b16 %v923
    %v2010 = vunpack.c.h.b16 %v923
    %v2011 = vunpack.c.l.b16 %v924
    %v2012 = vunpack.c.h.b16 %v924
    %v2013 = vunpack.c.l.b16 %v925
    %v2014 = vunpack.c.h.b16 %v925
    %v2015 = vunpack.c.l.b16 %v926
    %v2016 = vunpack.c.h.b16 %v926
    %v2017 = vunpack.c.l.b16 %v927
    %v2018 = vunpack.c.h.b16 %v927
    %v2019 = vunpack.c.l.b16 %v928
    %v2020 = vunpack.c.h.b16 %v928
    %v2021 = vunpack.c.l.b16 %v929
    %v2022 = vunpack.c.h.b16 %v929
    %v2023 = vunpack.c.l.b16 %v930
    %v2024 = vunpack.c.h.b16 %v930
    %v2025 = vunpack.c.l.b16 %v931
    %v2026 = vunpack.c.h.b16 %v931
    %v2027 = vunpack.c.l.b16 %v932
    %v2028 = vunpack.c.h.b16 %v932
    %v2029 = vunpack.c.l.b16 %v933
    %v2030 = vunpack.c.h.b16 %v933
    %v2031 = vunpack.c.l.b16 %v934
    %v2032 = vunpack.c.h.b16 %v934
    %v2033 = vunpack.c.l.b16 %v935
    %v2034 = vunpack.c.h.b16 %v935
    %v2035 = vunpack.c.l.b16 %v936
    %v2036 = vunpack.c.h.b16 %v936
    %v2037 = vunpack.c.l.b16 %v937
    %v2038 = vunpack.c.h.b16 %v937
    %v2039 = vunpack.c.l.b16 %v938
    %v2040 = vunpack.c.h.b16 %v938
    %v2041 = vunpack.c.l.b16 %v939
    %v2042 = vunpack.c.h.b16 %v939
    %v2043 = vunpack.c.l.b16 %v940
    %v2044 = vunpack.c.h.b16 %v940
    %v2045 = vunpack.c.l.b16 %v941
    %v2046 = vunpack.c.h.b16 %v941
    %v2047 = vunpack.c.l.b16 %v942
    %v2048 = vunpack.c.h.b16 %v942
    %v2049 = vunpack.c.l.b16 %v943
    %v2050 = vunpack.c.h.b16 %v943
    %v2051 = vunpack.c.l.b16 %v944
    %v2052 = vunpack.c.h.b16 %v944
    %v2053 = vunpack.c.l.b16 %v945
    %v2054 = vunpack.c.h.b16 %v945
    %v2055 = vunpack.c.l.b16 %v946
    %v2056 = vunpack.c.h.b16 %v946
    %v2057 = vunpack.c.l.b16 %v947
    %v2058 = vunpack.c.h.b16 %v947
    %v2059 = vunpack.c.l.b16 %v948
    %v2060 = vunpack.c.h.b16 %v948
    %v2061 = vunpack.c.l.b16 %v949
    %v2062 = vunpack.c.h.b16 %v949
    %v2063 = vunpack.c.l.b16 %v950
    %v2064 = vunpack.c.h.b16 %v950
    %v2065 = vunpack.c.l.b16 %v951
    %v2066 = vunpack.c.h.b16 %v951
    %v2067 = vunpack.c.l.b16 %v952
    %v2068 = vunpack.c.h.b16 %v952
    %v2069 = vunpack.c.l.b16 %v953
    %v2070 = vunpack.c.h.b16 %v953
    %v2071 = vunpack.c.l.b16 %v954
    %v2072 = vunpack.c.h.b16 %v954
    %v2073 = vunpack.c.l.b16 %v955
    %v2074 = vunpack.c.h.b16 %v955
    %v2075 = vunpack.c.l.b16 %v956
    %v2076 = vunpack.c.h.b16 %v956
    %v2077 = vunpack.c.l.b16 %v957
    %v2078 = vunpack.c.h.b16 %v957
    %v2079 = vunpack.c.l.b16 %v958
    %v2080 = vunpack.c.h.b16 %v958
    %v2081 = vunpack.c.l.b16 %v959
    %v2082 = vunpack.c.h.b16 %v959
    %v2083 = vunpack.c.l.b16 %v960
    %v2084 = vunpack.c.h.b16 %v960
    %v2085 = vunpack.c.l.b16 %v961
    %v2086 = vunpack.c.h.b16 %v961
    %v2087 = vunpack.c.l.b16 %v962
    %v2088 = vunpack.c.h.b16 %v962
    %v2089 = vunpack.c.l.b16 %v963
    %v2090 = vunpack.c.h.b16 %v963
    %v2091 = vunpack.c.l.b16 %v964
    %v2092 = vunpack.c.h.b16 %v964
    %v2093 = vunpack.c.l.b16 %v965
    %v2094 = vunpack.c.h.b16 %v965
    %v2095 = vunpack.c.l.b16 %v966
    %v2096 = vunpack.c.h.b16 %v966
    %v2097 = vunpack.c.l.b16 %v967
    %v2098 = vunpack.c.h.b16 %v967
    %v2099 = vunpack.c.l.b16 %v968
    %v2100 = vunpack.c.h.b16 %v968
    %v2101 = vunpack.c.l.b16 %v969
    %v2102 = vunpack.c.h.b16 %v969
    %v2103 = vunpack.c.l.b16 %v970
    %v2104 = vunpack.c.h.b16 %v970
    %v2105 = vunpack.c.l.b16 %v971
    %v2106 = vunpack.c.h.b16 %v971
    %v2107 = vunpack.c.l.b16 %v972
    %v2108 = vunpack.c.h.b16 %v972
    %v2109 = vunpack.c.l.b16 %v973
    %v2110 = vunpack.c.h.b16 %v973
    %v2111 = vunpack.c.l.b16 %v974
    %v2112 = vunpack.c.h.b16 %v974
    %v2113 = vunpack.c.l.b16 %v975
    %v2114 = vunpack.c.h.b16 %v975
    %v2115 = vunpack.c.l.b16 %v976
    %v2116 = vunpack.c.h.b16 %v976
    %v2117 = vunpack.c.l.b16 %v977
    %v2118 = vunpack.c.h.b16 %v977
    %v2119 = vunpack.c.l.b16 %v978
    %v2120 = vunpack.c.h.b16 %v978
    %v2121 = vunpack.c.l.b16 %v979
    %v2122 = vunpack.c.h.b16 %v979
    %v2123 = vunpack.c.l.b16 %v980
    %v2124 = vunpack.c.h.b16 %v980
    %v2125 = vunpack.c.l.b16 %v981
    %v2126 = vunpack.c.h.b16 %v981
    %v2127 = vunpack.c.l.b16 %v982
    %v2128 = vunpack.c.h.b16 %v982
    %v2129 = vunpack.c.l.b16 %v983
    %v2130 = vunpack.c.h.b16 %v983
    %v2131 = vunpack.c.l.b16 %v984
    %v2132 = vunpack.c.h.b16 %v984
    %v2133 = vunpack.c.l.b16 %v985
    %v2134 = vunpack.c.h.b16 %v985
    %v2135 = vunpack.c.l.b16 %v986
    %v2136 = vunpack.c.h.b16 %v986
    %v2137 = vunpack.c.l.b16 %v987
    %v2138 = vunpack.c.h.b16 %v987
    %v2139 = vunpack.c.l.b16 %v988
    %v2140 = vunpack.c.h.b16 %v988
    %v2141 = vunpack.c.l.b16 %v989
    %v2142 = vunpack.c.h.b16 %v989
    %v2143 = vunpack.c.l.b16 %v990
    %v2144 = vunpack.c.h.b16 %v990
    %v2145 = vunpack.c.l.b16 %v991
    %v2146 = vunpack.c.h.b16 %v991
    %v2147 = vunpack.c.l.b16 %v992
    %v2148 = vunpack.c.h.b16 %v992
    %v2149 = vunpack.c.l.b16 %v993
    %v2150 = vunpack.c.h.b16 %v993
    %v2151 = vunpack.c.l.b16 %v994
    %v2152 = vunpack.c.h.b16 %v994
    %v2153 = vunpack.c.l.b16 %v995
    %v2154 = vunpack.c.h.b16 %v995
    %v2155 = vunpack.c.l.b16 %v996
    %v2156 = vunpack.c.h.b16 %v996
    %v2157 = vunpack.c.l.b16 %v997
    %v2158 = vunpack.c.h.b16 %v997
    %v2159 = vunpack.c.l.b16 %v998
    %v2160 = vunpack.c.h.b16 %v998
    %v2161 = vunpack.c.l.b16 %v999
    %v2162 = vunpack.c.h.b16 %v999
    %v2163 = vunpack.c.l.b16 %v1000
    %v2164 = vunpack.c.h.b16 %v1000
    %v2165 = vunpack.c.l.b16 %v1001
    %v2166 = vunpack.c.h.b16 %v1001
    %v2167 = vunpack.c.l.b16 %v1002
    %v2168 = vunpack.c.h.b16 %v1002
    %v2169 = vunpack.c.l.b16 %v1003
    %v2170 = vunpack.c.h.b16 %v1003
    %v2171 = vunpack.c.l.b16 %v1004
    %v2172 = vunpack.c.h.b16 %v1004
    %v2173 = vunpack.c.l.b16 %v1005
    %v2174 = vunpack.c.h.b16 %v1005
    %v2175 = vunpack.c.l.b16 %v1006
    %v2176 = vunpack.c.h.b16 %v1006
    %v2177 = vunpack.c.l.b16 %v1007
    %v2178 = vunpack.c.h.b16 %v1007
    %v2179 = vunpack.c.l.b16 %v1008
    %v2180 = vunpack.c.h.b16 %v1008
    %v2181 = vunpack.c.l.b16 %v1009
    %v2182 = vunpack.c.h.b16 %v1009
    %v2183 = vunpack.c.l.b16 %v1010
    %v2184 = vunpack.c.h.b16 %v1010
    %v2185 = vunpack.c.l.b16 %v1011
    %v2186 = vunpack.c.h.b16 %v1011
    %v2187 = vunpack.c.l.b16 %v1012
    %v2188 = vunpack.c.h.b16 %v1012
    %v2189 = vunpack.c.l.b16 %v1013
    %v2190 = vunpack.c.h.b16 %v1013
    %v2191 = vunpack.c.l.b16 %v1014
    %v2192 = vunpack.c.h.b16 %v1014
    %v2193 = vunpack.c.l.b16 %v1015
    %v2194 = vunpack.c.h.b16 %v1015
    %v2195 = vunpack.c.l.b16 %v1016
    %v2196 = vunpack.c.h.b16 %v1016
    %v2197 = vunpack.c.l.b16 %v1017
    %v2198 = vunpack.c.h.b16 %v1017
    %v2199 = vunpack.c.l.b16 %v1018
    %v2200 = vunpack.c.h.b16 %v1018
    %v2201 = vunpack.c.l.b16 %v1019
    %v2202 = vunpack.c.h.b16 %v1019
    %v2203 = vunpack.c.l.b16 %v1020
    %v2204 = vunpack.c.h.b16 %v1020
    %v2205 = vunpack.c.l.b16 %v1021
    %v2206 = vunpack.c.h.b16 %v1021
    %v2207 = vunpack.c.l.b16 %v1022
    %v2208 = vunpack.c.h.b16 %v1022
    %v2209 = vunpack.c.l.b16 %v1023
    %v2210 = vunpack.c.h.b16 %v1023
    %v2211 = vunpack.c.l.b16 %v1024
    %v2212 = vunpack.c.h.b16 %v1024
    %v2213 = vunpack.c.l.b16 %v1025
    %v2214 = vunpack.c.h.b16 %v1025
    %v2215 = vunpack.c.l.b16 %v1026
    %v2216 = vunpack.c.h.b16 %v1026
    %v2217 = vunpack.c.l.b16 %v1027
    %v2218 = vunpack.c.h.b16 %v1027
    %v2219 = vunpack.c.l.b16 %v1028
    %v2220 = vunpack.c.h.b16 %v1028
    %v2221 = vunpack.c.l.b16 %v1029
    %v2222 = vunpack.c.h.b16 %v1029
    %v2223 = vunpack.c.l.b16 %v1030
    %v2224 = vunpack.c.h.b16 %v1030
    %v2225 = vunpack.c.l.b16 %v1031
    %v2226 = vunpack.c.h.b16 %v1031
    %v2227 = vunpack.c.l.b16 %v1032
    %v2228 = vunpack.c.h.b16 %v1032
    %v2229 = vunpack.c.l.b16 %v1033
    %v2230 = vunpack.c.h.b16 %v1033
    %v2231 = vunpack.c.l.b16 %v1034
    %v2232 = vunpack.c.h.b16 %v1034
    %v2233 = vunpack.c.l.b16 %v1035
    %v2234 = vunpack.c.h.b16 %v1035
    %v2235 = vunpack.c.l.b16 %v1036
    %v2236 = vunpack.c.h.b16 %v1036
    %v2237 = vunpack.c.l.b16 %v1037
    %v2238 = vunpack.c.h.b16 %v1037
    %v2239 = vunpack.c.l.b16 %v1038
    %v2240 = vunpack.c.h.b16 %v1038
    %v2241 = vunpack.c.l.b16 %v1039
    %v2242 = vunpack.c.h.b16 %v1039
    %v2243 = vunpack.c.l.b16 %v1040
    %v2244 = vunpack.c.h.b16 %v1040
    %v2245 = vunpack.c.l.b16 %v1041
    %v2246 = vunpack.c.h.b16 %v1041
    %v2247 = vunpack.c.l.b16 %v1042
    %v2248 = vunpack.c.h.b16 %v1042
    %v2249 = vunpack.c.l.b16 %v1043
    %v2250 = vunpack.c.h.b16 %v1043
    %v2251 = vunpack.c.l.b16 %v1044
    %v2252 = vunpack.c.h.b16 %v1044
    %v2253 = vunpack.c.l.b16 %v1045
    %v2254 = vunpack.c.h.b16 %v1045
    %v2255 = vunpack.c.l.b16 %v1046
    %v2256 = vunpack.c.h.b16 %v1046
    %v2257 = vunpack.c.l.b16 %v1047
    %v2258 = vunpack.c.h.b16 %v1047
    %v2259 = vunpack.c.l.b16 %v1048
    %v2260 = vunpack.c.h.b16 %v1048
    %v2261 = vunpack.c.l.b16 %v1049
    %v2262 = vunpack.c.h.b16 %v1049
    %v2263 = vunpack.c.l.b16 %v1050
    %v2264 = vunpack.c.h.b16 %v1050
    %v2265 = vunpack.c.l.b16 %v1051
    %v2266 = vunpack.c.h.b16 %v1051
    %v2267 = vunpack.c.l.b16 %v1052
    %v2268 = vunpack.c.h.b16 %v1052
    %v2269 = vunpack.c.l.b16 %v1053
    %v2270 = vunpack.c.h.b16 %v1053
    %v2271 = vunpack.c.l.b16 %v1054
    %v2272 = vunpack.c.h.b16 %v1054
    %v2273 = vpack.c.b16 %v1497, %v1489
    %v2274 = vpack.c.b16 %v1498, %v1490
    %v2275 = vpack.c.b16 %v1499, %v1491
    %v2276 = vpack.c.b16 %v1500, %v1492
    %v2277 = vpack.c.b16 %v1501, %v1493
    %v2278 = vpack.c.b16 %v1502, %v1494
    %v2279 = vpack.c.b16 %v1503, %v1495
    %v2280 = vpack.c.b16 %v1504, %v1496
    %v2281 = vpack.c.b16 %v1513, %v1505
    %v2282 = vpack.c.b16 %v1514, %v1506
    %v2283 = vpack.c.b16 %v1515, %v1507
    %v2284 = vpack.c.b16 %v1516, %v1508
    %v2285 = vpack.c.b16 %v1517, %v1509
    %v2286 = vpack.c.b16 %v1518, %v1510
    %v2287 = vpack.c.b16 %v1519, %v1511
    %v2288 = vpack.c.b16 %v1520, %v1512
    %v2289 = vpack.c.b16 %v1529, %v1521
    %v2290 = vpack.c.b16 %v1530, %v1522
    %v2291 = vpack.c.b16 %v1531, %v1523
    %v2292 = vpack.c.b16 %v1532, %v1524
    %v2293 = vpack.c.b16 %v1533, %v1525
    %v2294 = vpack.c.b16 %v1534, %v1526
    %v2295 = vpack.c.b16 %v1535, %v1527
    %v2296 = vpack.c.b16 %v1536, %v1528
    %v2297 = vpack.c.b16 %v1545, %v1537
    %v2298 = vpack.c.b16 %v1546, %v1538
    %v2299 = vpack.c.b16 %v1547, %v1539
    %v2300 = vpack.c.b16 %v1548, %v1540
    %v2301 = vpack.c.b16 %v1549, %v1541
    %v2302 = vpack.c.b16 %v1550, %v1542
    %v2303 = vpack.c.b16 %v1551, %v1543
    %v2304 = vpack.c.b16 %v1552, %v1544
    %v2305 = vpack.c.b16 %v1561, %v1553
    %v2306 = vpack.c.b16 %v1562, %v1554
    %v2307 = vpack.c.b16 %v1563, %v1555
    %v2308 = vpack.c.b16 %v1564, %v1556
    %v2309 = vpack.c.b16 %v1565, %v1557
    %v2310 = vpack.c.b16 %v1566, %v1558
    %v2311 = vpack.c.b16 %v1567, %v1559
    %v2312 = vpack.c.b16 %v1568, %v1560
    %v2313 = vpack.c.b16 %v1577, %v1569
    %v2314 = vpack.c.b16 %v1578, %v1570
    %v2315 = vpack.c.b16 %v1579, %v1571
    %v2316 = vpack.c.b16 %v1580, %v1572
    %v2317 = vpack.c.b16 %v1581, %v1573
    %v2318 = vpack.c.b16 %v1582, %v1574
    %v2319 = vpack.c.b16 %v1583, %v1575
    %v2320 = vpack.c.b16 %v1584, %v1576
    %v2321 = vpack.c.b16 %v1593, %v1585
    %v2322 = vpack.c.b16 %v1594, %v1586
    %v2323 = vpack.c.b16 %v1595, %v1587
    %v2324 = vpack.c.b16 %v1596, %v1588
    %v2325 = vpack.c.b16 %v1597, %v1589
    %v2326 = vpack.c.b16 %v1598, %v1590
    %v2327 = vpack.c.b16 %v1599, %v1591
    %v2328 = vpack.c.b16 %v1600, %v1592
    %v2329 = vpack.c.b16 %v1609, %v1601
    %v2330 = vpack.c.b16 %v1610, %v1602
    %v2331 = vpack.c.b16 %v1611, %v1603
    %v2332 = vpack.c.b16 %v1612, %v1604
    %v2333 = vpack.c.b16 %v1613, %v1605
    %v2334 = vpack.c.b16 %v1614, %v1606
    %v2335 = vpack.c.b16 %v1615, %v1607
    %v2336 = vpack.c.b16 %v1616, %v1608
    %v2337 = vpack.c.b16 %v1625, %v1617
    %v2338 = vpack.c.b16 %v1626, %v1618
    %v2339 = vpack.c.b16 %v1627, %v1619
    %v2340 = vpack.c.b16 %v1628, %v1620
    %v2341 = vpack.c.b16 %v1629, %v1621
    %v2342 = vpack.c.b16 %v1630, %v1622
    %v2343 = vpack.c.b16 %v1631, %v1623
    %v2344 = vpack.c.b16 %v1632, %v1624
    %v2345 = vpack.c.b16 %v1641, %v1633
    %v2346 = vpack.c.b16 %v1642, %v1634
    %v2347 = vpack.c.b16 %v1643, %v1635
    %v2348 = vpack.c.b16 %v1644, %v1636
    %v2349 = vpack.c.b16 %v1645, %v1637
    %v2350 = vpack.c.b16 %v1646, %v1638
    %v2351 = vpack.c.b16 %v1647, %v1639
    %v2352 = vpack.c.b16 %v1648, %v1640
    %v2353 = vpack.c.b16 %v1657, %v1649
    %v2354 = vpack.c.b16 %v1658, %v1650
    %v2355 = vpack.c.b16 %v1659, %v1651
    %v2356 = vpack.c.b16 %v1660, %v1652
    %v2357 = vpack.c.b16 %v1661, %v1653
    %v2358 = vpack.c.b16 %v1662, %v1654
    %v2359 = vpack.c.b16 %v1663, %v1655
    %v2360 = vpack.c.b16 %v1664, %v1656
    %v2361 = vpack.c.b16 %v1673, %v1665
    %v2362 = vpack.c.b16 %v1674, %v1666
    %v2363 = vpack.c.b16 %v1675, %v1667
    %v2364 = vpack.c.b16 %v1676, %v1668
    %v2365 = vpack.c.b16 %v1677, %v1669
    %v2366 = vpack.c.b16 %v1678, %v1670
    %v2367 = vpack.c.b16 %v1679, %v1671
    %v2368 = vpack.c.b16 %v1680, %v1672
    %v2369 = vpack.c.b16 %v1689, %v1681
    %v2370 = vpack.c.b16 %v1690, %v1682
    %v2371 = vpack.c.b16 %v1691, %v1683
    %v2372 = vpack.c.b16 %v1692, %v1684
    %v2373 = vpack.c.b16 %v1693, %v1685
    %v2374 = vpack.c.b16 %v1694, %v1686
    %v2375 = vpack.c.b16 %v1695, %v1687
    %v2376 = vpack.c.b16 %v1696, %v1688
    %v2377 = vpack.c.b16 %v1705, %v1697
    %v2378 = vpack.c.b16 %v1706, %v1698
    %v2379 = vpack.c.b16 %v1707, %v1699
    %v2380 = vpack.c.b16 %v1708, %v1700
    %v2381 = vpack.c.b16 %v1709, %v1701
    %v2382 = vpack.c.b16 %v1710, %v1702
    %v2383 = vpack.c.b16 %v1711, %v1703
    %v2384 = vpack.c.b16 %v1712, %v1704
    %v2385 = vpack.c.b16 %v1721, %v1713
    %v2386 = vpack.c.b16 %v1722, %v1714
    %v2387 = vpack.c.b16 %v1723, %v1715
    %v2388 = vpack.c.b16 %v1724, %v1716
    %v2389 = vpack.c.b16 %v1725, %v1717
    %v2390 = vpack.c.b16 %v1726, %v1718
    %v2391 = vpack.c.b16 %v1727, %v1719
    %v2392 = vpack.c.b16 %v1728, %v1720
    %v2393 = vpack.c.b16 %v1737, %v1729
    %v2394 = vpack.c.b16 %v1738, %v1730
    %v2395 = vpack.c.b16 %v1739, %v1731
    %v2396 = vpack.c.b16 %v1740, %v1732
    %v2397 = vpack.c.b16 %v1741, %v1733
    %v2398 = vpack.c.b16 %v1742, %v1734
    %v2399 = vpack.c.b16 %v1743, %v1735
    %v2400 = vpack.c.b16 %v1744, %v1736
    %v2401 = vpack.c.b16 %v1753, %v1745
    %v2402 = vpack.c.b16 %v1754, %v1746
    %v2403 = vpack.c.b16 %v1755, %v1747
    %v2404 = vpack.c.b16 %v1756, %v1748
    %v2405 = vpack.c.b16 %v1757, %v1749
    %v2406 = vpack.c.b16 %v1758, %v1750
    %v2407 = vpack.c.b16 %v1759, %v1751
    %v2408 = vpack.c.b16 %v1760, %v1752
    %v2409 = vpack.c.b16 %v1769, %v1761
    %v2410 = vpack.c.b16 %v1770, %v1762
    %v2411 = vpack.c.b16 %v1771, %v1763
    %v2412 = vpack.c.b16 %v1772, %v1764
    %v2413 = vpack.c.b16 %v1773, %v1765
    %v2414 = vpack.c.b16 %v1774, %v1766
    %v2415 = vpack.c.b16 %v1775, %v1767
    %v2416 = vpack.c.b16 %v1776, %v1768
    %v2417 = vpack.c.b16 %v1785, %v1777
    %v2418 = vpack.c.b16 %v1786, %v1778
    %v2419 = vpack.c.b16 %v1787, %v1779
    %v2420 = vpack.c.b16 %v1788, %v1780
    %v2421 = vpack.c.b16 %v1789, %v1781
    %v2422 = vpack.c.b16 %v1790, %v1782
    %v2423 = vpack.c.b16 %v1791, %v1783
    %v2424 = vpack.c.b16 %v1792, %v1784
    %v2425 = vpack.c.b16 %v1801, %v1793
    %v2426 = vpack.c.b16 %v1802, %v1794
    %v2427 = vpack.c.b16 %v1803, %v1795
    %v2428 = vpack.c.b16 %v1804, %v1796
    %v2429 = vpack.c.b16 %v1805, %v1797
    %v2430 = vpack.c.b16 %v1806, %v1798
    %v2431 = vpack.c.b16 %v1807, %v1799
    %v2432 = vpack.c.b16 %v1808, %v1800
    %v2433 = vpack.c.b16 %v1817, %v1809
    %v2434 = vpack.c.b16 %v1818, %v1810
    %v2435 = vpack.c.b16 %v1819, %v1811
    %v2436 = vpack.c.b16 %v1820, %v1812
    %v2437 = vpack.c.b16 %v1821, %v1813
    %v2438 = vpack.c.b16 %v1822, %v1814
    %v2439 = vpack.c.b16 %v1823, %v1815
    %v2440 = vpack.c.b16 %v1824, %v1816
    %v2441 = vpack.c.b16 %v1833, %v1825
    %v2442 = vpack.c.b16 %v1834, %v1826
    %v2443 = vpack.c.b16 %v1835, %v1827
    %v2444 = vpack.c.b16 %v1836, %v1828
    %v2445 = vpack.c.b16 %v1837, %v1829
    %v2446 = vpack.c.b16 %v1838, %v1830
    %v2447 = vpack.c.b16 %v1839, %v1831
    %v2448 = vpack.c.b16 %v1840, %v1832
    %v2449 = vpack.c.b16 %v1849, %v1841
    %v2450 = vpack.c.b16 %v1850, %v1842
    %v2451 = vpack.c.b16 %v1851, %v1843
    %v2452 = vpack.c.b16 %v1852, %v1844
    %v2453 = vpack.c.b16 %v1853, %v1845
    %v2454 = vpack.c.b16 %v1854, %v1846
    %v2455 = vpack.c.b16 %v1855, %v1847
    %v2456 = vpack.c.b16 %v1856, %v1848
    %v2457 = vpack.c.b16 %v1865, %v1857
    %v2458 = vpack.c.b16 %v1866, %v1858
    %v2459 = vpack.c.b16 %v1867, %v1859
    %v2460 = vpack.c.b16 %v1868, %v1860
    %v2461 = vpack.c.b16 %v1869, %v1861
    %v2462 = vpack.c.b16 %v1870, %v1862
    %v2463 = vpack.c.b16 %v1871, %v1863
    %v2464 = vpack.c.b16 %v1872, %v1864
    %v2465 = vpack.c.b16 %v1881, %v1873
    %v2466 = vpack.c.b16 %v1882, %v1874
    %v2467 = vpack.c.b16 %v1883, %v1875
    %v2468 = vpack.c.b16 %v1884, %v1876
    %v2469 = vpack.c.b16 %v1885, %v1877
    %v2470 = vpack.c.b16 %v1886, %v1878
    %v2471 = vpack.c.b16 %v1887, %v1879
    %v2472 = vpack.c.b16 %v1888, %v1880
    %v2473 = vpack.c.b16 %v1897, %v1889
    %v2474 = vpack.c.b16 %v1898, %v1890
    %v2475 = vpack.c.b16 %v1899, %v1891
    %v2476 = vpack.c.b16 %v1900, %v1892
    %v2477 = vpack.c.b16 %v1901, %v1893
    %v2478 = vpack.c.b16 %v1902, %v1894
    %v2479 = vpack.c.b16 %v1903, %v1895
    %v2480 = vpack.c.b16 %v1904, %v1896
    %v2481 = vpack.c.b16 %v1913, %v1905
    %v2482 = vpack.c.b16 %v1914, %v1906
    %v2483 = vpack.c.b16 %v1915, %v1907
    %v2484 = vpack.c.b16 %v1916, %v1908
    %v2485 = vpack.c.b16 %v1917, %v1909
    %v2486 = vpack.c.b16 %v1918, %v1910
    %v2487 = vpack.c.b16 %v1919, %v1911
    %v2488 = vpack.c.b16 %v1920, %v1912
    %v2489 = vpack.c.b16 %v1929, %v1921
    %v2490 = vpack.c.b16 %v1930, %v1922
    %v2491 = vpack.c.b16 %v1931, %v1923
    %v2492 = vpack.c.b16 %v1932, %v1924
    %v2493 = vpack.c.b16 %v1933, %v1925
    %v2494 = vpack.c.b16 %v1934, %v1926
    %v2495 = vpack.c.b16 %v1935, %v1927
    %v2496 = vpack.c.b16 %v1936, %v1928
    %v2497 = vpack.c.b16 %v1945, %v1937
    %v2498 = vpack.c.b16 %v1946, %v1938
    %v2499 = vpack.c.b16 %v1947, %v1939
    %v2500 = vpack.c.b16 %v1948, %v1940
    %v2501 = vpack.c.b16 %v1949, %v1941
    %v2502 = vpack.c.b16 %v1950, %v1942
    %v2503 = vpack.c.b16 %v1951, %v1943
    %v2504 = vpack.c.b16 %v1952, %v1944
    %v2505 = vpack.c.b16 %v1961, %v1953
    %v2506 = vpack.c.b16 %v1962, %v1954
    %v2507 = vpack.c.b16 %v1963, %v1955
    %v2508 = vpack.c.b16 %v1964, %v1956
    %v2509 = vpack.c.b16 %v1965, %v1957
    %v2510 = vpack.c.b16 %v1966, %v1958
    %v2511 = vpack.c.b16 %v1967, %v1959
    %v2512 = vpack.c.b16 %v1968, %v1960
    %v2513 = vpack.c.b16 %v1977, %v1969
    %v2514 = vpack.c.b16 %v1978, %v1970
    %v2515 = vpack.c.b16 %v1979, %v1971
    %v2516 = vpack.c.b16 %v1980, %v1972
    %v2517 = vpack.c.b16 %v1981, %v1973
    %v2518 = vpack.c.b16 %v1982, %v1974
    %v2519 = vpack.c.b16 %v1983, %v1975
    %v2520 = vpack.c.b16 %v1984, %v1976
    %v2521 = vpack.c.b16 %v1993, %v1985
    %v2522 = vpack.c.b16 %v1994, %v1986
    %v2523 = vpack.c.b16 %v1995, %v1987
    %v2524 = vpack.c.b16 %v1996, %v1988
    %v2525 = vpack.c.b16 %v1997, %v1989
    %v2526 = vpack.c.b16 %v1998, %v1990
    %v2527 = vpack.c.b16 %v1999, %v1991
    %v2528 = vpack.c.b16 %v2000, %v1992
    %v2529 = vpack.c.b16 %v2009, %v2001
    %v2530 = vpack.c.b16 %v2010, %v2002
    %v2531 = vpack.c.b16 %v2011, %v2003
    %v2532 = vpack.c.b16 %v2012, %v2004
    %v2533 = vpack.c.b16 %v2013, %v2005
    %v2534 = vpack.c.b16 %v2014, %v2006
    %v2535 = vpack.c.b16 %v2015, %v2007
    %v2536 = vpack.c.b16 %v2016, %v2008
    %v2537 = vpack.c.b16 %v2025, %v2017
    %v2538 = vpack.c.b16 %v2026, %v2018
    %v2539 = vpack.c.b16 %v2027, %v2019
    %v2540 = vpack.c.b16 %v2028, %v2020
    %v2541 = vpack.c.b16 %v2029, %v2021
    %v2542 = vpack.c.b16 %v2030, %v2022
    %v2543 = vpack.c.b16 %v2031, %v2023
    %v2544 = vpack.c.b16 %v2032, %v2024
    %v2545 = vpack.c.b16 %v2041, %v2033
    %v2546 = vpack.c.b16 %v2042, %v2034
    %v2547 = vpack.c.b16 %v2043, %v2035
    %v2548 = vpack.c.b16 %v2044, %v2036
    %v2549 = vpack.c.b16 %v2045, %v2037
    %v2550 = vpack.c.b16 %v2046, %v2038
    %v2551 = vpack.c.b16 %v2047, %v2039
    %v2552 = vpack.c.b16 %v2048, %v2040
    %v2553 = vpack.c.b16 %v2057, %v2049
    %v2554 = vpack.c.b16 %v2058, %v2050
    %v2555 = vpack.c.b16 %v2059, %v2051
    %v2556 = vpack.c.b16 %v2060, %v2052
    %v2557 = vpack.c.b16 %v2061, %v2053
    %v2558 = vpack.c.b16 %v2062, %v2054
    %v2559 = vpack.c.b16 %v2063, %v2055
    %v2560 = vpack.c.b16 %v2064, %v2056
    %v2561 = vpack.c.b16 %v2073, %v2065
    %v2562 = vpack.c.b16 %v2074, %v2066
    %v2563 = vpack.c.b16 %v2075, %v2067
    %v2564 = vpack.c.b16 %v2076, %v2068
    %v2565 = vpack.c.b16 %v2077, %v2069
    %v2566 = vpack.c.b16 %v2078, %v2070
    %v2567 = vpack.c.b16 %v2079, %v2071
    %v2568 = vpack.c.b16 %v2080, %v2072
    %v2569 = vpack.c.b16 %v2089, %v2081
    %v2570 = vpack.c.b16 %v2090, %v2082
    %v2571 = vpack.c.b16 %v2091, %v2083
    %v2572 = vpack.c.b16 %v2092, %v2084
    %v2573 = vpack.c.b16 %v2093, %v2085
    %v2574 = vpack.c.b16 %v2094, %v2086
    %v2575 = vpack.c.b16 %v2095, %v2087
    %v2576 = vpack.c.b16 %v2096, %v2088
    %v2577 = vpack.c.b16 %v2105, %v2097
    %v2578 = vpack.c.b16 %v2106, %v2098
    %v2579 = vpack.c.b16 %v2107, %v2099
    %v2580 = vpack.c.b16 %v2108, %v2100
    %v2581 = vpack.c.b16 %v2109, %v2101
    %v2582 = vpack.c.b16 %v2110, %v2102
    %v2583 = vpack.c.b16 %v2111, %v2103
    %v2584 = vpack.c.b16 %v2112, %v2104
    %v2585 = vpack.c.b16 %v2121, %v2113
    %v2586 = vpack.c.b16 %v2122, %v2114
    %v2587 = vpack.c.b16 %v2123, %v2115
    %v2588 = vpack.c.b16 %v2124, %v2116
    %v2589 = vpack.c.b16 %v2125, %v2117
    %v2590 = vpack.c.b16 %v2126, %v2118
    %v2591 = vpack.c.b16 %v2127, %v2119
    %v2592 = vpack.c.b16 %v2128, %v2120
    %v2593 = vpack.c.b16 %v2137, %v2129
    %v2594 = vpack.c.b16 %v2138, %v2130
    %v2595 = vpack.c.b16 %v2139, %v2131
    %v2596 = vpack.c.b16 %v2140, %v2132
    %v2597 = vpack.c.b16 %v2141, %v2133
    %v2598 = vpack.c.b16 %v2142, %v2134
    %v2599 = vpack.c.b16 %v2143, %v2135
    %v2600 = vpack.c.b16 %v2144, %v2136
    %v2601 = vpack.c.b16 %v2153, %v2145
    %v2602 = vpack.c.b16 %v2154, %v2146
    %v2603 = vpack.c.b16 %v2155, %v2147
    %v2604 = vpack.c.b16 %v2156, %v2148
    %v2605 = vpack.c.b16 %v2157, %v2149
    %v2606 = vpack.c.b16 %v2158, %v2150
    %v2607 = vpack.c.b16 %v2159, %v2151
    %v2608 = vpack.c.b16 %v2160, %v2152
    %v2609 = vpack.c.b16 %v2169, %v2161
    %v2610 = vpack.c.b16 %v2170, %v2162
    %v2611 = vpack.c.b16 %v2171, %v2163
    %v2612 = vpack.c.b16 %v2172, %v2164
    %v2613 = vpack.c.b16 %v2173, %v2165
    %v2614 = vpack.c.b16 %v2174, %v2166
    %v2615 = vpack.c.b16 %v2175, %v2167
    %v2616 = vpack.c.b16 %v2176, %v2168
    %v2617 = vpack.c.b16 %v2185, %v2177
    %v2618 = vpack.c.b16 %v2186, %v2178
    %v2619 = vpack.c.b16 %v2187, %v2179
    %v2620 = vpack.c.b16 %v2188, %v2180
    %v2621 = vpack.c.b16 %v2189, %v2181
    %v2622 = vpack.c.b16 %v2190, %v2182
    %v2623 = vpack.c.b16 %v2191, %v2183
    %v2624 = vpack.c.b16 %v2192, %v2184
    %v2625 = vpack.c.b16 %v2201, %v2193
    %v2626 = vpack.c.b16 %v2202, %v2194
    %v2627 = vpack.c.b16 %v2203, %v2195
    %v2628 = vpack.c.b16 %v2204, %v2196
    %v2629 = vpack.c.b16 %v2205, %v2197
    %v2630 = vpack.c.b16 %v2206, %v2198
    %v2631 = vpack.c.b16 %v2207, %v2199
    %v2632 = vpack.c.b16 %v2208, %v2200
    %v2633 = vpack.c.b16 %v2217, %v2209
    %v2634 = vpack.c.b16 %v2218, %v2210
    %v2635 = vpack.c.b16 %v2219, %v2211
    %v2636 = vpack.c.b16 %v2220, %v2212
    %v2637 = vpack.c.b16 %v2221, %v2213
    %v2638 = vpack.c.b16 %v2222, %v2214
    %v2639 = vpack.c.b16 %v2223, %v2215
    %v2640 = vpack.c.b16 %v2224, %v2216
    %v2641 = vpack.c.b16 %v2233, %v2225
    %v2642 = vpack.c.b16 %v2234, %v2226
    %v2643 = vpack.c.b16 %v2235, %v2227
    %v2644 = vpack.c.b16 %v2236, %v2228
    %v2645 = vpack.c.b16 %v2237, %v2229
    %v2646 = vpack.c.b16 %v2238, %v2230
    %v2647 = vpack.c.b16 %v2239, %v2231
    %v2648 = vpack.c.b16 %v2240, %v2232
    %v2649 = vpack.c.b16 %v2249, %v2241
    %v2650 = vpack.c.b16 %v2250, %v2242
    %v2651 = vpack.c.b16 %v2251, %v2243
    %v2652 = vpack.c.b16 %v2252, %v2244
    %v2653 = vpack.c.b16 %v2253, %v2245
    %v2654 = vpack.c.b16 %v2254, %v2246
    %v2655 = vpack.c.b16 %v2255, %v2247
    %v2656 = vpack.c.b16 %v2256, %v2248
    %v2657 = vpack.c.b16 %v2265, %v2257
    %v2658 = vpack.c.b16 %v2266, %v2258
    %v2659 = vpack.c.b16 %v2267, %v2259
    %v2660 = vpack.c.b16 %v2268, %v2260
    %v2661 = vpack.c.b16 %v2269, %v2261
    %v2662 = vpack.c.b16 %v2270, %v2262
    %v2663 = vpack.c.b16 %v2271, %v2263
    %v2664 = vpack.c.b16 %v2272, %v2264
    %vm3057 = vcmask 130048
    %v3059 = vsel %vm3057, %v613, 0
    %v3062 = vsel %vm3057, %v620, 0
    %v3065 = vsel %vm3057, %v627, 0
    %v3068 = vsel %vm3057, %v634, 0
    %v3071 = vsel %vm3057, %v641, 0
    %v3074 = vsel %vm3057, %v648, 0
    %v3077 = vsel %vm3057, %v655, 0
    %v3080 = vsel %vm3057, %v662, 0
    %3082 = vmatprep.subr.bf16.mxu0 %v2330
    %3083 = vmatpush1.bf16.msra.mxu0 %v2329
    %3084 = vmatprep.subr.bf16.mxu0 %v2322
    %3085 = vmatpush1.bf16.msra.mxu0 %v2321
    %3086 = vmatprep.subr.bf16.mxu0 %v2314
    %3087 = vmatpush1.bf16.msra.mxu0 %v2313
    %3088 = vmatprep.subr.bf16.mxu0 %v2306
    %3089 = vmatpush1.bf16.msra.mxu0 %v2305
    %3090 = vmatprep.subr.bf16.mxu0 %v2298
    %3091 = vmatpush1.bf16.msra.mxu0 %v2297
    %3092 = vmatprep.subr.bf16.mxu0 %v2290
    %3093 = vmatpush1.bf16.msra.mxu0 %v2289
    %3094 = vmatprep.subr.bf16.mxu0 %v2282
    %3095 = vmatpush1.bf16.msra.mxu0 %v2281
    %3096 = vmatprep.subr.bf16.mxu0 %v2274
    %3097 = vmatpush1.bf16.msra.mxu0 %v2273
    %3098 = vmatprep.subr.bf16.mxu0 %v2394
    %3099 = vmatpush2.bf16.msra.mxu0 %v2393
    %3100 = vmatprep.subr.bf16.mxu0 %v2386
    %3101 = vmatpush2.bf16.msra.mxu0 %v2385
    %3102 = vmatprep.subr.bf16.mxu0 %v2378
    %3103 = vmatpush2.bf16.msra.mxu0 %v2377
    %3104 = vmatprep.subr.bf16.mxu0 %v2370
    %3105 = vmatpush2.bf16.msra.mxu0 %v2369
    %3106 = vmatprep.subr.bf16.mxu0 %v2362
    %3107 = vmatpush2.bf16.msra.mxu0 %v2361
    %3108 = vmatprep.subr.bf16.mxu0 %v2354
    %3109 = vmatpush2.bf16.msra.mxu0 %v2353
    %3110 = vmatprep.subr.bf16.mxu0 %v2346
    %3111 = vmatpush2.bf16.msra.mxu0 %v2345
    %3112 = vmatprep.subr.bf16.mxu0 %v2338
    %3113 = vmatpush2.bf16.msra.mxu0 %v2337
    %3114 = vmatprep.mubr.bf16.mxu0 %v608
    %3115 = vmatmul.mubr.bf16.gmra.mxu0 %v607
    %v3116 = vpop.f32.mrf.mxu0
    %v3117 = vadd.f32 %v1060, %v3116
    %v3118 = vpop.f32.mrf.mxu0
    %v3119 = vadd.f32 %v1064, %v3118
    %v3120 = vpop.f32.mrf.mxu0
    %v3121 = vadd.f32 %v1060, %v3120
    %v3122 = vpop.f32.mrf.mxu0
    %v3123 = vadd.f32 %v1064, %v3122
    %3124 = vmatprep.mubr.bf16.mxu0 %v615
    %3125 = vmatmul.mubr.bf16.gmra.mxu0 %v614
    %v3126 = vpop.f32.mrf.mxu0
    %v3127 = vadd.f32 %v1060, %v3126
    %v3128 = vpop.f32.mrf.mxu0
    %v3129 = vadd.f32 %v1064, %v3128
    %v3130 = vpop.f32.mrf.mxu0
    %v3131 = vadd.f32 %v1060, %v3130
    %v3132 = vpop.f32.mrf.mxu0
    %v3133 = vadd.f32 %v1064, %v3132
    %3134 = vmatprep.mubr.bf16.mxu0 %v622
    %3135 = vmatmul.mubr.bf16.gmra.mxu0 %v621
    %v3136 = vpop.f32.mrf.mxu0
    %v3137 = vadd.f32 %v1060, %v3136
    %v3138 = vpop.f32.mrf.mxu0
    %v3139 = vadd.f32 %v1064, %v3138
    %v3140 = vpop.f32.mrf.mxu0
    %v3141 = vadd.f32 %v1060, %v3140
    %v3142 = vpop.f32.mrf.mxu0
    %v3143 = vadd.f32 %v1064, %v3142
    %3144 = vmatprep.mubr.bf16.mxu0 %v629
    %3145 = vmatmul.mubr.bf16.gmra.mxu0 %v628
    %v3146 = vpop.f32.mrf.mxu0
    %v3147 = vadd.f32 %v1060, %v3146
    %v3148 = vpop.f32.mrf.mxu0
    %v3149 = vadd.f32 %v1064, %v3148
    %v3150 = vpop.f32.mrf.mxu0
    %v3151 = vadd.f32 %v1060, %v3150
    %v3152 = vpop.f32.mrf.mxu0
    %v3153 = vadd.f32 %v1064, %v3152
    %3154 = vmatprep.mubr.bf16.mxu0 %v636
    %3155 = vmatmul.mubr.bf16.gmra.mxu0 %v635
    %v3156 = vpop.f32.mrf.mxu0
    %v3157 = vadd.f32 %v1060, %v3156
    %v3158 = vpop.f32.mrf.mxu0
    %v3159 = vadd.f32 %v1064, %v3158
    %v3160 = vpop.f32.mrf.mxu0
    %v3161 = vadd.f32 %v1060, %v3160
    %v3162 = vpop.f32.mrf.mxu0
    %v3163 = vadd.f32 %v1064, %v3162
    %3164 = vmatprep.mubr.bf16.mxu0 %v643
    %3165 = vmatmul.mubr.bf16.gmra.mxu0 %v642
    %v3166 = vpop.f32.mrf.mxu0
    %v3167 = vadd.f32 %v1060, %v3166
    %v3168 = vpop.f32.mrf.mxu0
    %v3169 = vadd.f32 %v1064, %v3168
    %v3170 = vpop.f32.mrf.mxu0
    %v3171 = vadd.f32 %v1060, %v3170
    %v3172 = vpop.f32.mrf.mxu0
    %v3173 = vadd.f32 %v1064, %v3172
    %3174 = vmatprep.mubr.bf16.mxu0 %v650
    %3175 = vmatmul.mubr.bf16.gmra.mxu0 %v649
    %v3176 = vpop.f32.mrf.mxu0
    %v3177 = vadd.f32 %v1060, %v3176
    %v3178 = vpop.f32.mrf.mxu0
    %v3179 = vadd.f32 %v1064, %v3178
    %v3180 = vpop.f32.mrf.mxu0
    %v3181 = vadd.f32 %v1060, %v3180
    %v3182 = vpop.f32.mrf.mxu0
    %v3183 = vadd.f32 %v1064, %v3182
    %3184 = vmatprep.mubr.bf16.mxu0 %v657
    %3185 = vmatmul.mubr.bf16.gmra.mxu0 %v656
    %v3186 = vpop.f32.mrf.mxu0
    %v3187 = vadd.f32 %v1060, %v3186
    %v3188 = vpop.f32.mrf.mxu0
    %v3189 = vadd.f32 %v1064, %v3188
    %v3190 = vpop.f32.mrf.mxu0
    %v3191 = vadd.f32 %v1060, %v3190
    %v3192 = vpop.f32.mrf.mxu0
    %v3193 = vadd.f32 %v1064, %v3192
    %3194 = vdwg.mxu0
    %3195 = vmatprep.subr.bf16.mxu0 %v2458
    %3196 = vmatpush1.bf16.msra.mxu0 %v2457
    %3197 = vmatprep.subr.bf16.mxu0 %v2450
    %3198 = vmatpush1.bf16.msra.mxu0 %v2449
    %3199 = vmatprep.subr.bf16.mxu0 %v2442
    %3200 = vmatpush1.bf16.msra.mxu0 %v2441
    %3201 = vmatprep.subr.bf16.mxu0 %v2434
    %3202 = vmatpush1.bf16.msra.mxu0 %v2433
    %3203 = vmatprep.subr.bf16.mxu0 %v2426
    %3204 = vmatpush1.bf16.msra.mxu0 %v2425
    %3205 = vmatprep.subr.bf16.mxu0 %v2418
    %3206 = vmatpush1.bf16.msra.mxu0 %v2417
    %3207 = vmatprep.subr.bf16.mxu0 %v2410
    %3208 = vmatpush1.bf16.msra.mxu0 %v2409
    %3209 = vmatprep.subr.bf16.mxu0 %v2402
    %3210 = vmatpush1.bf16.msra.mxu0 %v2401
    %3211 = vmatprep.subr.bf16.mxu0 %v2522
    %3212 = vmatpush2.bf16.msra.mxu0 %v2521
    %3213 = vmatprep.subr.bf16.mxu0 %v2514
    %3214 = vmatpush2.bf16.msra.mxu0 %v2513
    %3215 = vmatprep.subr.bf16.mxu0 %v2506
    %3216 = vmatpush2.bf16.msra.mxu0 %v2505
    %3217 = vmatprep.subr.bf16.mxu0 %v2498
    %3218 = vmatpush2.bf16.msra.mxu0 %v2497
    %3219 = vmatprep.subr.bf16.mxu0 %v2490
    %3220 = vmatpush2.bf16.msra.mxu0 %v2489
    %3221 = vmatprep.subr.bf16.mxu0 %v2482
    %3222 = vmatpush2.bf16.msra.mxu0 %v2481
    %3223 = vmatprep.subr.bf16.mxu0 %v2474
    %3224 = vmatpush2.bf16.msra.mxu0 %v2473
    %3225 = vmatprep.subr.bf16.mxu0 %v2466
    %3226 = vmatpush2.bf16.msra.mxu0 %v2465
    %3227 = vmatprep.mubr.bf16.mxu0 %v610
    %3228 = vmatmul.mubr.bf16.gmra.mxu0 %v609
    %v3229 = vpop.f32.mrf.mxu0
    %v3230 = vadd.f32 %v3117, %v3229
    %v3231 = vpop.f32.mrf.mxu0
    %v3232 = vadd.f32 %v3119, %v3231
    %v3233 = vpop.f32.mrf.mxu0
    %v3234 = vadd.f32 %v3121, %v3233
    %v3235 = vpop.f32.mrf.mxu0
    %v3236 = vadd.f32 %v3123, %v3235
    %3237 = vmatprep.mubr.bf16.mxu0 %v617
    %3238 = vmatmul.mubr.bf16.gmra.mxu0 %v616
    %v3239 = vpop.f32.mrf.mxu0
    %v3240 = vadd.f32 %v3127, %v3239
    %v3241 = vpop.f32.mrf.mxu0
    %v3242 = vadd.f32 %v3129, %v3241
    %v3243 = vpop.f32.mrf.mxu0
    %v3244 = vadd.f32 %v3131, %v3243
    %v3245 = vpop.f32.mrf.mxu0
    %v3246 = vadd.f32 %v3133, %v3245
    %3247 = vmatprep.mubr.bf16.mxu0 %v624
    %3248 = vmatmul.mubr.bf16.gmra.mxu0 %v623
    %v3249 = vpop.f32.mrf.mxu0
    %v3250 = vadd.f32 %v3137, %v3249
    %v3251 = vpop.f32.mrf.mxu0
    %v3252 = vadd.f32 %v3139, %v3251
    %v3253 = vpop.f32.mrf.mxu0
    %v3254 = vadd.f32 %v3141, %v3253
    %v3255 = vpop.f32.mrf.mxu0
    %v3256 = vadd.f32 %v3143, %v3255
    %3257 = vmatprep.mubr.bf16.mxu0 %v631
    %3258 = vmatmul.mubr.bf16.gmra.mxu0 %v630
    %v3259 = vpop.f32.mrf.mxu0
    %v3260 = vadd.f32 %v3147, %v3259
    %v3261 = vpop.f32.mrf.mxu0
    %v3262 = vadd.f32 %v3149, %v3261
    %v3263 = vpop.f32.mrf.mxu0
    %v3264 = vadd.f32 %v3151, %v3263
    %v3265 = vpop.f32.mrf.mxu0
    %v3266 = vadd.f32 %v3153, %v3265
    %3267 = vmatprep.mubr.bf16.mxu0 %v638
    %3268 = vmatmul.mubr.bf16.gmra.mxu0 %v637
    %v3269 = vpop.f32.mrf.mxu0
    %v3270 = vadd.f32 %v3157, %v3269
    %v3271 = vpop.f32.mrf.mxu0
    %v3272 = vadd.f32 %v3159, %v3271
    %v3273 = vpop.f32.mrf.mxu0
    %v3274 = vadd.f32 %v3161, %v3273
    %v3275 = vpop.f32.mrf.mxu0
    %v3276 = vadd.f32 %v3163, %v3275
    %3277 = vmatprep.mubr.bf16.mxu0 %v645
    %3278 = vmatmul.mubr.bf16.gmra.mxu0 %v644
    %v3279 = vpop.f32.mrf.mxu0
    %v3280 = vadd.f32 %v3167, %v3279
    %v3281 = vpop.f32.mrf.mxu0
    %v3282 = vadd.f32 %v3169, %v3281
    %v3283 = vpop.f32.mrf.mxu0
    %v3284 = vadd.f32 %v3171, %v3283
    %v3285 = vpop.f32.mrf.mxu0
    %v3286 = vadd.f32 %v3173, %v3285
    %3287 = vmatprep.mubr.bf16.mxu0 %v652
    %3288 = vmatmul.mubr.bf16.gmra.mxu0 %v651
    %v3289 = vpop.f32.mrf.mxu0
    %v3290 = vadd.f32 %v3177, %v3289
    %v3291 = vpop.f32.mrf.mxu0
    %v3292 = vadd.f32 %v3179, %v3291
    %v3293 = vpop.f32.mrf.mxu0
    %v3294 = vadd.f32 %v3181, %v3293
    %v3295 = vpop.f32.mrf.mxu0
    %v3296 = vadd.f32 %v3183, %v3295
    %3297 = vmatprep.mubr.bf16.mxu0 %v659
    %3298 = vmatmul.mubr.bf16.gmra.mxu0 %v658
    %v3299 = vpop.f32.mrf.mxu0
    %v3300 = vadd.f32 %v3187, %v3299
    %v3301 = vpop.f32.mrf.mxu0
    %v3302 = vadd.f32 %v3189, %v3301
    %v3303 = vpop.f32.mrf.mxu0
    %v3304 = vadd.f32 %v3191, %v3303
    %v3305 = vpop.f32.mrf.mxu0
    %v3306 = vadd.f32 %v3193, %v3305
    %3307 = vdwg.mxu0
    %3308 = vmatprep.subr.bf16.mxu0 %v2586
    %3309 = vmatpush1.bf16.msra.mxu0 %v2585
    %3310 = vmatprep.subr.bf16.mxu0 %v2578
    %3311 = vmatpush1.bf16.msra.mxu0 %v2577
    %3312 = vmatprep.subr.bf16.mxu0 %v2570
    %3313 = vmatpush1.bf16.msra.mxu0 %v2569
    %3314 = vmatprep.subr.bf16.mxu0 %v2562
    %3315 = vmatpush1.bf16.msra.mxu0 %v2561
    %3316 = vmatprep.subr.bf16.mxu0 %v2554
    %3317 = vmatpush1.bf16.msra.mxu0 %v2553
    %3318 = vmatprep.subr.bf16.mxu0 %v2546
    %3319 = vmatpush1.bf16.msra.mxu0 %v2545
    %3320 = vmatprep.subr.bf16.mxu0 %v2538
    %3321 = vmatpush1.bf16.msra.mxu0 %v2537
    %3322 = vmatprep.subr.bf16.mxu0 %v2530
    %3323 = vmatpush1.bf16.msra.mxu0 %v2529
    %3324 = vmatprep.subr.bf16.mxu0 %v2650
    %3325 = vmatpush2.bf16.msra.mxu0 %v2649
    %3326 = vmatprep.subr.bf16.mxu0 %v2642
    %3327 = vmatpush2.bf16.msra.mxu0 %v2641
    %3328 = vmatprep.subr.bf16.mxu0 %v2634
    %3329 = vmatpush2.bf16.msra.mxu0 %v2633
    %3330 = vmatprep.subr.bf16.mxu0 %v2626
    %3331 = vmatpush2.bf16.msra.mxu0 %v2625
    %3332 = vmatprep.subr.bf16.mxu0 %v2618
    %3333 = vmatpush2.bf16.msra.mxu0 %v2617
    %3334 = vmatprep.subr.bf16.mxu0 %v2610
    %3335 = vmatpush2.bf16.msra.mxu0 %v2609
    %3336 = vmatprep.subr.bf16.mxu0 %v2602
    %3337 = vmatpush2.bf16.msra.mxu0 %v2601
    %3338 = vmatprep.subr.bf16.mxu0 %v2594
    %3339 = vmatpush2.bf16.msra.mxu0 %v2593
    %3340 = vmatprep.mubr.bf16.mxu0 %v612
    %3341 = vmatmul.mubr.bf16.gmra.mxu0 %v611
    %v3342 = vpop.f32.mrf.mxu0
    %v3343 = vadd.f32 %v3230, %v3342
    %v3344 = vpop.f32.mrf.mxu0
    %v3345 = vadd.f32 %v3232, %v3344
    %v3346 = vpop.f32.mrf.mxu0
    %v3347 = vadd.f32 %v3234, %v3346
    %v3348 = vpop.f32.mrf.mxu0
    %v3349 = vadd.f32 %v3236, %v3348
    %3350 = vmatprep.mubr.bf16.mxu0 %v619
    %3351 = vmatmul.mubr.bf16.gmra.mxu0 %v618
    %v3352 = vpop.f32.mrf.mxu0
    %v3353 = vadd.f32 %v3240, %v3352
    %v3354 = vpop.f32.mrf.mxu0
    %v3355 = vadd.f32 %v3242, %v3354
    %v3356 = vpop.f32.mrf.mxu0
    %v3357 = vadd.f32 %v3244, %v3356
    %v3358 = vpop.f32.mrf.mxu0
    %v3359 = vadd.f32 %v3246, %v3358
    %3360 = vmatprep.mubr.bf16.mxu0 %v626
    %3361 = vmatmul.mubr.bf16.gmra.mxu0 %v625
    %v3362 = vpop.f32.mrf.mxu0
    %v3363 = vadd.f32 %v3250, %v3362
    %v3364 = vpop.f32.mrf.mxu0
    %v3365 = vadd.f32 %v3252, %v3364
    %v3366 = vpop.f32.mrf.mxu0
    %v3367 = vadd.f32 %v3254, %v3366
    %v3368 = vpop.f32.mrf.mxu0
    %v3369 = vadd.f32 %v3256, %v3368
    %3370 = vmatprep.mubr.bf16.mxu0 %v633
    %3371 = vmatmul.mubr.bf16.gmra.mxu0 %v632
    %v3372 = vpop.f32.mrf.mxu0
    %v3373 = vadd.f32 %v3260, %v3372
    %v3374 = vpop.f32.mrf.mxu0
    %v3375 = vadd.f32 %v3262, %v3374
    %v3376 = vpop.f32.mrf.mxu0
    %v3377 = vadd.f32 %v3264, %v3376
    %v3378 = vpop.f32.mrf.mxu0
    %v3379 = vadd.f32 %v3266, %v3378
    %3380 = vmatprep.mubr.bf16.mxu0 %v640
    %3381 = vmatmul.mubr.bf16.gmra.mxu0 %v639
    %v3382 = vpop.f32.mrf.mxu0
    %v3383 = vadd.f32 %v3270, %v3382
    %v3384 = vpop.f32.mrf.mxu0
    %v3385 = vadd.f32 %v3272, %v3384
    %v3386 = vpop.f32.mrf.mxu0
    %v3387 = vadd.f32 %v3274, %v3386
    %v3388 = vpop.f32.mrf.mxu0
    %v3389 = vadd.f32 %v3276, %v3388
    %3390 = vmatprep.mubr.bf16.mxu0 %v647
    %3391 = vmatmul.mubr.bf16.gmra.mxu0 %v646
    %v3392 = vpop.f32.mrf.mxu0
    %v3393 = vadd.f32 %v3280, %v3392
    %v3394 = vpop.f32.mrf.mxu0
    %v3395 = vadd.f32 %v3282, %v3394
    %v3396 = vpop.f32.mrf.mxu0
    %v3397 = vadd.f32 %v3284, %v3396
    %v3398 = vpop.f32.mrf.mxu0
    %v3399 = vadd.f32 %v3286, %v3398
    %3400 = vmatprep.mubr.bf16.mxu0 %v654
    %3401 = vmatmul.mubr.bf16.gmra.mxu0 %v653
    %v3402 = vpop.f32.mrf.mxu0
    %v3403 = vadd.f32 %v3290, %v3402
    %v3404 = vpop.f32.mrf.mxu0
    %v3405 = vadd.f32 %v3292, %v3404
    %v3406 = vpop.f32.mrf.mxu0
    %v3407 = vadd.f32 %v3294, %v3406
    %v3408 = vpop.f32.mrf.mxu0
    %v3409 = vadd.f32 %v3296, %v3408
    %3410 = vmatprep.mubr.bf16.mxu0 %v661
    %3411 = vmatmul.mubr.bf16.gmra.mxu0 %v660
    %v3412 = vpop.f32.mrf.mxu0
    %v3413 = vadd.f32 %v3300, %v3412
    %v3414 = vpop.f32.mrf.mxu0
    %v3415 = vadd.f32 %v3302, %v3414
    %v3416 = vpop.f32.mrf.mxu0
    %v3417 = vadd.f32 %v3304, %v3416
    %v3418 = vpop.f32.mrf.mxu0
    %v3419 = vadd.f32 %v3306, %v3418
    %3420 = vdwg.mxu0
    %3421 = vmatprep.subr.bf16.mxu0 0
    %3422 = vmatpush1.bf16.msra.mxu0 0
    %3423 = vmatprep.subr.bf16.mxu0 0
    %3424 = vmatpush1.bf16.msra.mxu0 0
    %3425 = vmatprep.subr.bf16.mxu0 0
    %3426 = vmatpush1.bf16.msra.mxu0 0
    %3427 = vmatprep.subr.bf16.mxu0 0
    %3428 = vmatpush1.bf16.msra.mxu0 0
    %3429 = vmatprep.subr.bf16.mxu0 0
    %3430 = vmatpush1.bf16.msra.mxu0 0
    %3431 = vmatprep.subr.bf16.mxu0 0
    %3432 = vmatpush1.bf16.msra.mxu0 0
    %3433 = vmatprep.subr.bf16.mxu0 0
    %3434 = vmatpush1.bf16.msra.mxu0 0
    %3435 = vmatprep.subr.bf16.mxu0 %v2658
    %3436 = vmatpush1.bf16.msra.mxu0 %v2657
    %3437 = vmatprep.subr.bf16.mxu0 0
    %3438 = vmatpush2.bf16.msra.mxu0 0
    %3439 = vmatprep.subr.bf16.mxu0 0
    %3440 = vmatpush2.bf16.msra.mxu0 0
    %3441 = vmatprep.subr.bf16.mxu0 0
    %3442 = vmatpush2.bf16.msra.mxu0 0
    %3443 = vmatprep.subr.bf16.mxu0 0
    %3444 = vmatpush2.bf16.msra.mxu0 0
    %3445 = vmatprep.subr.bf16.mxu0 0
    %3446 = vmatpush2.bf16.msra.mxu0 0
    %3447 = vmatprep.subr.bf16.mxu0 0
    %3448 = vmatpush2.bf16.msra.mxu0 0
    %3449 = vmatprep.subr.bf16.mxu0 0
    %3450 = vmatpush2.bf16.msra.mxu0 0
    %3451 = vmatprep.subr.bf16.mxu0 0
    %3452 = vmatpush2.bf16.msra.mxu0 0
    %3453 = vmatprep.mubr.bf16.mxu0 0
    %3454 = vmatmul.mubr.bf16.gmra.mxu0 %v3059
    %v3455 = vpop.f32.mrf.mxu0
    %v3456 = vadd.f32 %v3343, %v3455
    %v3457 = vpop.f32.mrf.mxu0
    %v3458 = vadd.f32 %v3345, %v3457
    %v3459 = vpop.f32.mrf.mxu0
    %v3460 = vadd.f32 %v3347, %v3459
    %v3461 = vpop.f32.mrf.mxu0
    %v3462 = vadd.f32 %v3349, %v3461
    %3463 = vmatprep.mubr.bf16.mxu0 0
    %3464 = vmatmul.mubr.bf16.gmra.mxu0 %v3062
    %v3465 = vpop.f32.mrf.mxu0
    %v3466 = vadd.f32 %v3353, %v3465
    %v3467 = vpop.f32.mrf.mxu0
    %v3468 = vadd.f32 %v3355, %v3467
    %v3469 = vpop.f32.mrf.mxu0
    %v3470 = vadd.f32 %v3357, %v3469
    %v3471 = vpop.f32.mrf.mxu0
    %v3472 = vadd.f32 %v3359, %v3471
    %3473 = vmatprep.mubr.bf16.mxu0 0
    %3474 = vmatmul.mubr.bf16.gmra.mxu0 %v3065
    %v3475 = vpop.f32.mrf.mxu0
    %v3476 = vadd.f32 %v3363, %v3475
    %v3477 = vpop.f32.mrf.mxu0
    %v3478 = vadd.f32 %v3365, %v3477
    %v3479 = vpop.f32.mrf.mxu0
    %v3480 = vadd.f32 %v3367, %v3479
    %v3481 = vpop.f32.mrf.mxu0
    %v3482 = vadd.f32 %v3369, %v3481
    %3483 = vmatprep.mubr.bf16.mxu0 0
    %3484 = vmatmul.mubr.bf16.gmra.mxu0 %v3068
    %v3485 = vpop.f32.mrf.mxu0
    %v3486 = vadd.f32 %v3373, %v3485
    %v3487 = vpop.f32.mrf.mxu0
    %v3488 = vadd.f32 %v3375, %v3487
    %v3489 = vpop.f32.mrf.mxu0
    %v3490 = vadd.f32 %v3377, %v3489
    %v3491 = vpop.f32.mrf.mxu0
    %v3492 = vadd.f32 %v3379, %v3491
    %3493 = vmatprep.mubr.bf16.mxu0 0
    %3494 = vmatmul.mubr.bf16.gmra.mxu0 %v3071
    %v3495 = vpop.f32.mrf.mxu0
    %v3496 = vadd.f32 %v3383, %v3495
    %v3497 = vpop.f32.mrf.mxu0
    %v3498 = vadd.f32 %v3385, %v3497
    %v3499 = vpop.f32.mrf.mxu0
    %v3500 = vadd.f32 %v3387, %v3499
    %v3501 = vpop.f32.mrf.mxu0
    %v3502 = vadd.f32 %v3389, %v3501
    %3503 = vmatprep.mubr.bf16.mxu0 0
    %3504 = vmatmul.mubr.bf16.gmra.mxu0 %v3074
    %v3505 = vpop.f32.mrf.mxu0
    %v3506 = vadd.f32 %v3393, %v3505
    %v3507 = vpop.f32.mrf.mxu0
    %v3508 = vadd.f32 %v3395, %v3507
    %v3509 = vpop.f32.mrf.mxu0
    %v3510 = vadd.f32 %v3397, %v3509
    %v3511 = vpop.f32.mrf.mxu0
    %v3512 = vadd.f32 %v3399, %v3511
    %3513 = vmatprep.mubr.bf16.mxu0 0
    %3514 = vmatmul.mubr.bf16.gmra.mxu0 %v3077
    %v3515 = vpop.f32.mrf.mxu0
    %v3516 = vadd.f32 %v3403, %v3515
    %v3517 = vpop.f32.mrf.mxu0
    %v3518 = vadd.f32 %v3405, %v3517
    %v3519 = vpop.f32.mrf.mxu0
    %v3520 = vadd.f32 %v3407, %v3519
    %v3521 = vpop.f32.mrf.mxu0
    %v3522 = vadd.f32 %v3409, %v3521
    %3523 = vmatprep.mubr.bf16.mxu0 0
    %3524 = vmatmul.mubr.bf16.gmra.mxu0 %v3080
    %v3525 = vpop.f32.mrf.mxu0
    %v3526 = vadd.f32 %v3413, %v3525
    %v3527 = vpop.f32.mrf.mxu0
    %v3528 = vadd.f32 %v3415, %v3527
    %v3529 = vpop.f32.mrf.mxu0
    %v3530 = vadd.f32 %v3417, %v3529
    %v3531 = vpop.f32.mrf.mxu0
    %v3532 = vadd.f32 %v3419, %v3531
    %3533 = vdwg.mxu0
    %3534 = vmatprep.subr.bf16.mxu0 %v2332
    %3535 = vmatpush1.bf16.msra.mxu0 %v2331
    %3536 = vmatprep.subr.bf16.mxu0 %v2324
    %3537 = vmatpush1.bf16.msra.mxu0 %v2323
    %3538 = vmatprep.subr.bf16.mxu0 %v2316
    %3539 = vmatpush1.bf16.msra.mxu0 %v2315
    %3540 = vmatprep.subr.bf16.mxu0 %v2308
    %3541 = vmatpush1.bf16.msra.mxu0 %v2307
    %3542 = vmatprep.subr.bf16.mxu0 %v2300
    %3543 = vmatpush1.bf16.msra.mxu0 %v2299
    %3544 = vmatprep.subr.bf16.mxu0 %v2292
    %3545 = vmatpush1.bf16.msra.mxu0 %v2291
    %3546 = vmatprep.subr.bf16.mxu0 %v2284
    %3547 = vmatpush1.bf16.msra.mxu0 %v2283
    %3548 = vmatprep.subr.bf16.mxu0 %v2276
    %3549 = vmatpush1.bf16.msra.mxu0 %v2275
    %3550 = vmatprep.subr.bf16.mxu0 %v2396
    %3551 = vmatpush2.bf16.msra.mxu0 %v2395
    %3552 = vmatprep.subr.bf16.mxu0 %v2388
    %3553 = vmatpush2.bf16.msra.mxu0 %v2387
    %3554 = vmatprep.subr.bf16.mxu0 %v2380
    %3555 = vmatpush2.bf16.msra.mxu0 %v2379
    %3556 = vmatprep.subr.bf16.mxu0 %v2372
    %3557 = vmatpush2.bf16.msra.mxu0 %v2371
    %3558 = vmatprep.subr.bf16.mxu0 %v2364
    %3559 = vmatpush2.bf16.msra.mxu0 %v2363
    %3560 = vmatprep.subr.bf16.mxu0 %v2356
    %3561 = vmatpush2.bf16.msra.mxu0 %v2355
    %3562 = vmatprep.subr.bf16.mxu0 %v2348
    %3563 = vmatpush2.bf16.msra.mxu0 %v2347
    %3564 = vmatprep.subr.bf16.mxu0 %v2340
    %3565 = vmatpush2.bf16.msra.mxu0 %v2339
    %3566 = vmatprep.mubr.bf16.mxu0 %v608
    %3567 = vmatmul.mubr.bf16.gmra.mxu0 %v607
    %v3568 = vpop.f32.mrf.mxu0
    %v3569 = vadd.f32 %v1068, %v3568
    %v3570 = vpop.f32.mrf.mxu0
    %v3571 = vadd.f32 %v1072, %v3570
    %v3572 = vpop.f32.mrf.mxu0
    %v3573 = vadd.f32 %v1068, %v3572
    %v3574 = vpop.f32.mrf.mxu0
    %v3575 = vadd.f32 %v1072, %v3574
    %3576 = vmatprep.mubr.bf16.mxu0 %v615
    %3577 = vmatmul.mubr.bf16.gmra.mxu0 %v614
    %v3578 = vpop.f32.mrf.mxu0
    %v3579 = vadd.f32 %v1068, %v3578
    %v3580 = vpop.f32.mrf.mxu0
    %v3581 = vadd.f32 %v1072, %v3580
    %v3582 = vpop.f32.mrf.mxu0
    %v3583 = vadd.f32 %v1068, %v3582
    %v3584 = vpop.f32.mrf.mxu0
    %v3585 = vadd.f32 %v1072, %v3584
    %3586 = vmatprep.mubr.bf16.mxu0 %v622
    %3587 = vmatmul.mubr.bf16.gmra.mxu0 %v621
    %v3588 = vpop.f32.mrf.mxu0
    %v3589 = vadd.f32 %v1068, %v3588
    %v3590 = vpop.f32.mrf.mxu0
    %v3591 = vadd.f32 %v1072, %v3590
    %v3592 = vpop.f32.mrf.mxu0
    %v3593 = vadd.f32 %v1068, %v3592
    %v3594 = vpop.f32.mrf.mxu0
    %v3595 = vadd.f32 %v1072, %v3594
    %3596 = vmatprep.mubr.bf16.mxu0 %v629
    %3597 = vmatmul.mubr.bf16.gmra.mxu0 %v628
    %v3598 = vpop.f32.mrf.mxu0
    %v3599 = vadd.f32 %v1068, %v3598
    %v3600 = vpop.f32.mrf.mxu0
    %v3601 = vadd.f32 %v1072, %v3600
    %v3602 = vpop.f32.mrf.mxu0
    %v3603 = vadd.f32 %v1068, %v3602
    %v3604 = vpop.f32.mrf.mxu0
    %v3605 = vadd.f32 %v1072, %v3604
    %3606 = vmatprep.mubr.bf16.mxu0 %v636
    %3607 = vmatmul.mubr.bf16.gmra.mxu0 %v635
    %v3608 = vpop.f32.mrf.mxu0
    %v3609 = vadd.f32 %v1068, %v3608
    %v3610 = vpop.f32.mrf.mxu0
    %v3611 = vadd.f32 %v1072, %v3610
    %v3612 = vpop.f32.mrf.mxu0
    %v3613 = vadd.f32 %v1068, %v3612
    %v3614 = vpop.f32.mrf.mxu0
    %v3615 = vadd.f32 %v1072, %v3614
    %3616 = vmatprep.mubr.bf16.mxu0 %v643
    %3617 = vmatmul.mubr.bf16.gmra.mxu0 %v642
    %v3618 = vpop.f32.mrf.mxu0
    %v3619 = vadd.f32 %v1068, %v3618
    %v3620 = vpop.f32.mrf.mxu0
    %v3621 = vadd.f32 %v1072, %v3620
    %v3622 = vpop.f32.mrf.mxu0
    %v3623 = vadd.f32 %v1068, %v3622
    %v3624 = vpop.f32.mrf.mxu0
    %v3625 = vadd.f32 %v1072, %v3624
    %3626 = vmatprep.mubr.bf16.mxu0 %v650
    %3627 = vmatmul.mubr.bf16.gmra.mxu0 %v649
    %v3628 = vpop.f32.mrf.mxu0
    %v3629 = vadd.f32 %v1068, %v3628
    %v3630 = vpop.f32.mrf.mxu0
    %v3631 = vadd.f32 %v1072, %v3630
    %v3632 = vpop.f32.mrf.mxu0
    %v3633 = vadd.f32 %v1068, %v3632
    %v3634 = vpop.f32.mrf.mxu0
    %v3635 = vadd.f32 %v1072, %v3634
    %3636 = vmatprep.mubr.bf16.mxu0 %v657
    %3637 = vmatmul.mubr.bf16.gmra.mxu0 %v656
    %v3638 = vpop.f32.mrf.mxu0
    %v3639 = vadd.f32 %v1068, %v3638
    %v3640 = vpop.f32.mrf.mxu0
    %v3641 = vadd.f32 %v1072, %v3640
    %v3642 = vpop.f32.mrf.mxu0
    %v3643 = vadd.f32 %v1068, %v3642
    %v3644 = vpop.f32.mrf.mxu0
    %v3645 = vadd.f32 %v1072, %v3644
    %3646 = vdwg.mxu0
    %3647 = vmatprep.subr.bf16.mxu0 %v2460
    %3648 = vmatpush1.bf16.msra.mxu0 %v2459
    %3649 = vmatprep.subr.bf16.mxu0 %v2452
    %3650 = vmatpush1.bf16.msra.mxu0 %v2451
    %3651 = vmatprep.subr.bf16.mxu0 %v2444
    %3652 = vmatpush1.bf16.msra.mxu0 %v2443
    %3653 = vmatprep.subr.bf16.mxu0 %v2436
    %3654 = vmatpush1.bf16.msra.mxu0 %v2435
    %3655 = vmatprep.subr.bf16.mxu0 %v2428
    %3656 = vmatpush1.bf16.msra.mxu0 %v2427
    %3657 = vmatprep.subr.bf16.mxu0 %v2420
    %3658 = vmatpush1.bf16.msra.mxu0 %v2419
    %3659 = vmatprep.subr.bf16.mxu0 %v2412
    %3660 = vmatpush1.bf16.msra.mxu0 %v2411
    %3661 = vmatprep.subr.bf16.mxu0 %v2404
    %3662 = vmatpush1.bf16.msra.mxu0 %v2403
    %3663 = vmatprep.subr.bf16.mxu0 %v2524
    %3664 = vmatpush2.bf16.msra.mxu0 %v2523
    %3665 = vmatprep.subr.bf16.mxu0 %v2516
    %3666 = vmatpush2.bf16.msra.mxu0 %v2515
    %3667 = vmatprep.subr.bf16.mxu0 %v2508
    %3668 = vmatpush2.bf16.msra.mxu0 %v2507
    %3669 = vmatprep.subr.bf16.mxu0 %v2500
    %3670 = vmatpush2.bf16.msra.mxu0 %v2499
    %3671 = vmatprep.subr.bf16.mxu0 %v2492
    %3672 = vmatpush2.bf16.msra.mxu0 %v2491
    %3673 = vmatprep.subr.bf16.mxu0 %v2484
    %3674 = vmatpush2.bf16.msra.mxu0 %v2483
    %3675 = vmatprep.subr.bf16.mxu0 %v2476
    %3676 = vmatpush2.bf16.msra.mxu0 %v2475
    %3677 = vmatprep.subr.bf16.mxu0 %v2468
    %3678 = vmatpush2.bf16.msra.mxu0 %v2467
    %3679 = vmatprep.mubr.bf16.mxu0 %v610
    %3680 = vmatmul.mubr.bf16.gmra.mxu0 %v609
    %v3681 = vpop.f32.mrf.mxu0
    %v3682 = vadd.f32 %v3569, %v3681
    %v3683 = vpop.f32.mrf.mxu0
    %v3684 = vadd.f32 %v3571, %v3683
    %v3685 = vpop.f32.mrf.mxu0
    %v3686 = vadd.f32 %v3573, %v3685
    %v3687 = vpop.f32.mrf.mxu0
    %v3688 = vadd.f32 %v3575, %v3687
    %3689 = vmatprep.mubr.bf16.mxu0 %v617
    %3690 = vmatmul.mubr.bf16.gmra.mxu0 %v616
    %v3691 = vpop.f32.mrf.mxu0
    %v3692 = vadd.f32 %v3579, %v3691
    %v3693 = vpop.f32.mrf.mxu0
    %v3694 = vadd.f32 %v3581, %v3693
    %v3695 = vpop.f32.mrf.mxu0
    %v3696 = vadd.f32 %v3583, %v3695
    %v3697 = vpop.f32.mrf.mxu0
    %v3698 = vadd.f32 %v3585, %v3697
    %3699 = vmatprep.mubr.bf16.mxu0 %v624
    %3700 = vmatmul.mubr.bf16.gmra.mxu0 %v623
    %v3701 = vpop.f32.mrf.mxu0
    %v3702 = vadd.f32 %v3589, %v3701
    %v3703 = vpop.f32.mrf.mxu0
    %v3704 = vadd.f32 %v3591, %v3703
    %v3705 = vpop.f32.mrf.mxu0
    %v3706 = vadd.f32 %v3593, %v3705
    %v3707 = vpop.f32.mrf.mxu0
    %v3708 = vadd.f32 %v3595, %v3707
    %3709 = vmatprep.mubr.bf16.mxu0 %v631
    %3710 = vmatmul.mubr.bf16.gmra.mxu0 %v630
    %v3711 = vpop.f32.mrf.mxu0
    %v3712 = vadd.f32 %v3599, %v3711
    %v3713 = vpop.f32.mrf.mxu0
    %v3714 = vadd.f32 %v3601, %v3713
    %v3715 = vpop.f32.mrf.mxu0
    %v3716 = vadd.f32 %v3603, %v3715
    %v3717 = vpop.f32.mrf.mxu0
    %v3718 = vadd.f32 %v3605, %v3717
    %3719 = vmatprep.mubr.bf16.mxu0 %v638
    %3720 = vmatmul.mubr.bf16.gmra.mxu0 %v637
    %v3721 = vpop.f32.mrf.mxu0
    %v3722 = vadd.f32 %v3609, %v3721
    %v3723 = vpop.f32.mrf.mxu0
    %v3724 = vadd.f32 %v3611, %v3723
    %v3725 = vpop.f32.mrf.mxu0
    %v3726 = vadd.f32 %v3613, %v3725
    %v3727 = vpop.f32.mrf.mxu0
    %v3728 = vadd.f32 %v3615, %v3727
    %3729 = vmatprep.mubr.bf16.mxu0 %v645
    %3730 = vmatmul.mubr.bf16.gmra.mxu0 %v644
    %v3731 = vpop.f32.mrf.mxu0
    %v3732 = vadd.f32 %v3619, %v3731
    %v3733 = vpop.f32.mrf.mxu0
    %v3734 = vadd.f32 %v3621, %v3733
    %v3735 = vpop.f32.mrf.mxu0
    %v3736 = vadd.f32 %v3623, %v3735
    %v3737 = vpop.f32.mrf.mxu0
    %v3738 = vadd.f32 %v3625, %v3737
    %3739 = vmatprep.mubr.bf16.mxu0 %v652
    %3740 = vmatmul.mubr.bf16.gmra.mxu0 %v651
    %v3741 = vpop.f32.mrf.mxu0
    %v3742 = vadd.f32 %v3629, %v3741
    %v3743 = vpop.f32.mrf.mxu0
    %v3744 = vadd.f32 %v3631, %v3743
    %v3745 = vpop.f32.mrf.mxu0
    %v3746 = vadd.f32 %v3633, %v3745
    %v3747 = vpop.f32.mrf.mxu0
    %v3748 = vadd.f32 %v3635, %v3747
    %3749 = vmatprep.mubr.bf16.mxu0 %v659
    %3750 = vmatmul.mubr.bf16.gmra.mxu0 %v658
    %v3751 = vpop.f32.mrf.mxu0
    %v3752 = vadd.f32 %v3639, %v3751
    %v3753 = vpop.f32.mrf.mxu0
    %v3754 = vadd.f32 %v3641, %v3753
    %v3755 = vpop.f32.mrf.mxu0
    %v3756 = vadd.f32 %v3643, %v3755
    %v3757 = vpop.f32.mrf.mxu0
    %v3758 = vadd.f32 %v3645, %v3757
    %3759 = vdwg.mxu0
    %3760 = vmatprep.subr.bf16.mxu0 %v2588
    %3761 = vmatpush1.bf16.msra.mxu0 %v2587
    %3762 = vmatprep.subr.bf16.mxu0 %v2580
    %3763 = vmatpush1.bf16.msra.mxu0 %v2579
    %3764 = vmatprep.subr.bf16.mxu0 %v2572
    %3765 = vmatpush1.bf16.msra.mxu0 %v2571
    %3766 = vmatprep.subr.bf16.mxu0 %v2564
    %3767 = vmatpush1.bf16.msra.mxu0 %v2563
    %3768 = vmatprep.subr.bf16.mxu0 %v2556
    %3769 = vmatpush1.bf16.msra.mxu0 %v2555
    %3770 = vmatprep.subr.bf16.mxu0 %v2548
    %3771 = vmatpush1.bf16.msra.mxu0 %v2547
    %3772 = vmatprep.subr.bf16.mxu0 %v2540
    %3773 = vmatpush1.bf16.msra.mxu0 %v2539
    %3774 = vmatprep.subr.bf16.mxu0 %v2532
    %3775 = vmatpush1.bf16.msra.mxu0 %v2531
    %3776 = vmatprep.subr.bf16.mxu0 %v2652
    %3777 = vmatpush2.bf16.msra.mxu0 %v2651
    %3778 = vmatprep.subr.bf16.mxu0 %v2644
    %3779 = vmatpush2.bf16.msra.mxu0 %v2643
    %3780 = vmatprep.subr.bf16.mxu0 %v2636
    %3781 = vmatpush2.bf16.msra.mxu0 %v2635
    %3782 = vmatprep.subr.bf16.mxu0 %v2628
    %3783 = vmatpush2.bf16.msra.mxu0 %v2627
    %3784 = vmatprep.subr.bf16.mxu0 %v2620
    %3785 = vmatpush2.bf16.msra.mxu0 %v2619
    %3786 = vmatprep.subr.bf16.mxu0 %v2612
    %3787 = vmatpush2.bf16.msra.mxu0 %v2611
    %3788 = vmatprep.subr.bf16.mxu0 %v2604
    %3789 = vmatpush2.bf16.msra.mxu0 %v2603
    %3790 = vmatprep.subr.bf16.mxu0 %v2596
    %3791 = vmatpush2.bf16.msra.mxu0 %v2595
    %3792 = vmatprep.mubr.bf16.mxu0 %v612
    %3793 = vmatmul.mubr.bf16.gmra.mxu0 %v611
    %v3794 = vpop.f32.mrf.mxu0
    %v3795 = vadd.f32 %v3682, %v3794
    %v3796 = vpop.f32.mrf.mxu0
    %v3797 = vadd.f32 %v3684, %v3796
    %v3798 = vpop.f32.mrf.mxu0
    %v3799 = vadd.f32 %v3686, %v3798
    %v3800 = vpop.f32.mrf.mxu0
    %v3801 = vadd.f32 %v3688, %v3800
    %3802 = vmatprep.mubr.bf16.mxu0 %v619
    %3803 = vmatmul.mubr.bf16.gmra.mxu0 %v618
    %v3804 = vpop.f32.mrf.mxu0
    %v3805 = vadd.f32 %v3692, %v3804
    %v3806 = vpop.f32.mrf.mxu0
    %v3807 = vadd.f32 %v3694, %v3806
    %v3808 = vpop.f32.mrf.mxu0
    %v3809 = vadd.f32 %v3696, %v3808
    %v3810 = vpop.f32.mrf.mxu0
    %v3811 = vadd.f32 %v3698, %v3810
    %3812 = vmatprep.mubr.bf16.mxu0 %v626
    %3813 = vmatmul.mubr.bf16.gmra.mxu0 %v625
    %v3814 = vpop.f32.mrf.mxu0
    %v3815 = vadd.f32 %v3702, %v3814
    %v3816 = vpop.f32.mrf.mxu0
    %v3817 = vadd.f32 %v3704, %v3816
    %v3818 = vpop.f32.mrf.mxu0
    %v3819 = vadd.f32 %v3706, %v3818
    %v3820 = vpop.f32.mrf.mxu0
    %v3821 = vadd.f32 %v3708, %v3820
    %3822 = vmatprep.mubr.bf16.mxu0 %v633
    %3823 = vmatmul.mubr.bf16.gmra.mxu0 %v632
    %v3824 = vpop.f32.mrf.mxu0
    %v3825 = vadd.f32 %v3712, %v3824
    %v3826 = vpop.f32.mrf.mxu0
    %v3827 = vadd.f32 %v3714, %v3826
    %v3828 = vpop.f32.mrf.mxu0
    %v3829 = vadd.f32 %v3716, %v3828
    %v3830 = vpop.f32.mrf.mxu0
    %v3831 = vadd.f32 %v3718, %v3830
    %3832 = vmatprep.mubr.bf16.mxu0 %v640
    %3833 = vmatmul.mubr.bf16.gmra.mxu0 %v639
    %v3834 = vpop.f32.mrf.mxu0
    %v3835 = vadd.f32 %v3722, %v3834
    %v3836 = vpop.f32.mrf.mxu0
    %v3837 = vadd.f32 %v3724, %v3836
    %v3838 = vpop.f32.mrf.mxu0
    %v3839 = vadd.f32 %v3726, %v3838
    %v3840 = vpop.f32.mrf.mxu0
    %v3841 = vadd.f32 %v3728, %v3840
    %3842 = vmatprep.mubr.bf16.mxu0 %v647
    %3843 = vmatmul.mubr.bf16.gmra.mxu0 %v646
    %v3844 = vpop.f32.mrf.mxu0
    %v3845 = vadd.f32 %v3732, %v3844
    %v3846 = vpop.f32.mrf.mxu0
    %v3847 = vadd.f32 %v3734, %v3846
    %v3848 = vpop.f32.mrf.mxu0
    %v3849 = vadd.f32 %v3736, %v3848
    %v3850 = vpop.f32.mrf.mxu0
    %v3851 = vadd.f32 %v3738, %v3850
    %3852 = vmatprep.mubr.bf16.mxu0 %v654
    %3853 = vmatmul.mubr.bf16.gmra.mxu0 %v653
    %v3854 = vpop.f32.mrf.mxu0
    %v3855 = vadd.f32 %v3742, %v3854
    %v3856 = vpop.f32.mrf.mxu0
    %v3857 = vadd.f32 %v3744, %v3856
    %v3858 = vpop.f32.mrf.mxu0
    %v3859 = vadd.f32 %v3746, %v3858
    %v3860 = vpop.f32.mrf.mxu0
    %v3861 = vadd.f32 %v3748, %v3860
    %3862 = vmatprep.mubr.bf16.mxu0 %v661
    %3863 = vmatmul.mubr.bf16.gmra.mxu0 %v660
    %v3864 = vpop.f32.mrf.mxu0
    %v3865 = vadd.f32 %v3752, %v3864
    %v3866 = vpop.f32.mrf.mxu0
    %v3867 = vadd.f32 %v3754, %v3866
    %v3868 = vpop.f32.mrf.mxu0
    %v3869 = vadd.f32 %v3756, %v3868
    %v3870 = vpop.f32.mrf.mxu0
    %v3871 = vadd.f32 %v3758, %v3870
    %3872 = vdwg.mxu0
    %3873 = vmatprep.subr.bf16.mxu0 0
    %3874 = vmatpush1.bf16.msra.mxu0 0
    %3875 = vmatprep.subr.bf16.mxu0 0
    %3876 = vmatpush1.bf16.msra.mxu0 0
    %3877 = vmatprep.subr.bf16.mxu0 0
    %3878 = vmatpush1.bf16.msra.mxu0 0
    %3879 = vmatprep.subr.bf16.mxu0 0
    %3880 = vmatpush1.bf16.msra.mxu0 0
    %3881 = vmatprep.subr.bf16.mxu0 0
    %3882 = vmatpush1.bf16.msra.mxu0 0
    %3883 = vmatprep.subr.bf16.mxu0 0
    %3884 = vmatpush1.bf16.msra.mxu0 0
    %3885 = vmatprep.subr.bf16.mxu0 0
    %3886 = vmatpush1.bf16.msra.mxu0 0
    %3887 = vmatprep.subr.bf16.mxu0 %v2660
    %3888 = vmatpush1.bf16.msra.mxu0 %v2659
    %3889 = vmatprep.subr.bf16.mxu0 0
    %3890 = vmatpush2.bf16.msra.mxu0 0
    %3891 = vmatprep.subr.bf16.mxu0 0
    %3892 = vmatpush2.bf16.msra.mxu0 0
    %3893 = vmatprep.subr.bf16.mxu0 0
    %3894 = vmatpush2.bf16.msra.mxu0 0
    %3895 = vmatprep.subr.bf16.mxu0 0
    %3896 = vmatpush2.bf16.msra.mxu0 0
    %3897 = vmatprep.subr.bf16.mxu0 0
    %3898 = vmatpush2.bf16.msra.mxu0 0
    %3899 = vmatprep.subr.bf16.mxu0 0
    %3900 = vmatpush2.bf16.msra.mxu0 0
    %3901 = vmatprep.subr.bf16.mxu0 0
    %3902 = vmatpush2.bf16.msra.mxu0 0
    %3903 = vmatprep.subr.bf16.mxu0 0
    %3904 = vmatpush2.bf16.msra.mxu0 0
    %3905 = vmatprep.mubr.bf16.mxu0 0
    %3906 = vmatmul.mubr.bf16.gmra.mxu0 %v3059
    %v3907 = vpop.f32.mrf.mxu0
    %v3908 = vadd.f32 %v3795, %v3907
    %v3909 = vpop.f32.mrf.mxu0
    %v3910 = vadd.f32 %v3797, %v3909
    %v3911 = vpop.f32.mrf.mxu0
    %v3912 = vadd.f32 %v3799, %v3911
    %v3913 = vpop.f32.mrf.mxu0
    %v3914 = vadd.f32 %v3801, %v3913
    %3915 = vmatprep.mubr.bf16.mxu0 0
    %3916 = vmatmul.mubr.bf16.gmra.mxu0 %v3062
    %v3917 = vpop.f32.mrf.mxu0
    %v3918 = vadd.f32 %v3805, %v3917
    %v3919 = vpop.f32.mrf.mxu0
    %v3920 = vadd.f32 %v3807, %v3919
    %v3921 = vpop.f32.mrf.mxu0
    %v3922 = vadd.f32 %v3809, %v3921
    %v3923 = vpop.f32.mrf.mxu0
    %v3924 = vadd.f32 %v3811, %v3923
    %3925 = vmatprep.mubr.bf16.mxu0 0
    %3926 = vmatmul.mubr.bf16.gmra.mxu0 %v3065
    %v3927 = vpop.f32.mrf.mxu0
    %v3928 = vadd.f32 %v3815, %v3927
    %v3929 = vpop.f32.mrf.mxu0
    %v3930 = vadd.f32 %v3817, %v3929
    %v3931 = vpop.f32.mrf.mxu0
    %v3932 = vadd.f32 %v3819, %v3931
    %v3933 = vpop.f32.mrf.mxu0
    %v3934 = vadd.f32 %v3821, %v3933
    %3935 = vmatprep.mubr.bf16.mxu0 0
    %3936 = vmatmul.mubr.bf16.gmra.mxu0 %v3068
    %v3937 = vpop.f32.mrf.mxu0
    %v3938 = vadd.f32 %v3825, %v3937
    %v3939 = vpop.f32.mrf.mxu0
    %v3940 = vadd.f32 %v3827, %v3939
    %v3941 = vpop.f32.mrf.mxu0
    %v3942 = vadd.f32 %v3829, %v3941
    %v3943 = vpop.f32.mrf.mxu0
    %v3944 = vadd.f32 %v3831, %v3943
    %3945 = vmatprep.mubr.bf16.mxu0 0
    %3946 = vmatmul.mubr.bf16.gmra.mxu0 %v3071
    %v3947 = vpop.f32.mrf.mxu0
    %v3948 = vadd.f32 %v3835, %v3947
    %v3949 = vpop.f32.mrf.mxu0
    %v3950 = vadd.f32 %v3837, %v3949
    %v3951 = vpop.f32.mrf.mxu0
    %v3952 = vadd.f32 %v3839, %v3951
    %v3953 = vpop.f32.mrf.mxu0
    %v3954 = vadd.f32 %v3841, %v3953
    %3955 = vmatprep.mubr.bf16.mxu0 0
    %3956 = vmatmul.mubr.bf16.gmra.mxu0 %v3074
    %v3957 = vpop.f32.mrf.mxu0
    %v3958 = vadd.f32 %v3845, %v3957
    %v3959 = vpop.f32.mrf.mxu0
    %v3960 = vadd.f32 %v3847, %v3959
    %v3961 = vpop.f32.mrf.mxu0
    %v3962 = vadd.f32 %v3849, %v3961
    %v3963 = vpop.f32.mrf.mxu0
    %v3964 = vadd.f32 %v3851, %v3963
    %3965 = vmatprep.mubr.bf16.mxu0 0
    %3966 = vmatmul.mubr.bf16.gmra.mxu0 %v3077
    %v3967 = vpop.f32.mrf.mxu0
    %v3968 = vadd.f32 %v3855, %v3967
    %v3969 = vpop.f32.mrf.mxu0
    %v3970 = vadd.f32 %v3857, %v3969
    %v3971 = vpop.f32.mrf.mxu0
    %v3972 = vadd.f32 %v3859, %v3971
    %v3973 = vpop.f32.mrf.mxu0
    %v3974 = vadd.f32 %v3861, %v3973
    %3975 = vmatprep.mubr.bf16.mxu0 0
    %3976 = vmatmul.mubr.bf16.gmra.mxu0 %v3080
    %v3977 = vpop.f32.mrf.mxu0
    %v3978 = vadd.f32 %v3865, %v3977
    %v3979 = vpop.f32.mrf.mxu0
    %v3980 = vadd.f32 %v3867, %v3979
    %v3981 = vpop.f32.mrf.mxu0
    %v3982 = vadd.f32 %v3869, %v3981
    %v3983 = vpop.f32.mrf.mxu0
    %v3984 = vadd.f32 %v3871, %v3983
    %3985 = vdwg.mxu0
    %3986 = vmatprep.subr.bf16.mxu0 %v2334
    %3987 = vmatpush1.bf16.msra.mxu0 %v2333
    %3988 = vmatprep.subr.bf16.mxu0 %v2326
    %3989 = vmatpush1.bf16.msra.mxu0 %v2325
    %3990 = vmatprep.subr.bf16.mxu0 %v2318
    %3991 = vmatpush1.bf16.msra.mxu0 %v2317
    %3992 = vmatprep.subr.bf16.mxu0 %v2310
    %3993 = vmatpush1.bf16.msra.mxu0 %v2309
    %3994 = vmatprep.subr.bf16.mxu0 %v2302
    %3995 = vmatpush1.bf16.msra.mxu0 %v2301
    %3996 = vmatprep.subr.bf16.mxu0 %v2294
    %3997 = vmatpush1.bf16.msra.mxu0 %v2293
    %3998 = vmatprep.subr.bf16.mxu0 %v2286
    %3999 = vmatpush1.bf16.msra.mxu0 %v2285
    %4000 = vmatprep.subr.bf16.mxu0 %v2278
    %4001 = vmatpush1.bf16.msra.mxu0 %v2277
    %4002 = vmatprep.subr.bf16.mxu0 %v2398
    %4003 = vmatpush2.bf16.msra.mxu0 %v2397
    %4004 = vmatprep.subr.bf16.mxu0 %v2390
    %4005 = vmatpush2.bf16.msra.mxu0 %v2389
    %4006 = vmatprep.subr.bf16.mxu0 %v2382
    %4007 = vmatpush2.bf16.msra.mxu0 %v2381
    %4008 = vmatprep.subr.bf16.mxu0 %v2374
    %4009 = vmatpush2.bf16.msra.mxu0 %v2373
    %4010 = vmatprep.subr.bf16.mxu0 %v2366
    %4011 = vmatpush2.bf16.msra.mxu0 %v2365
    %4012 = vmatprep.subr.bf16.mxu0 %v2358
    %4013 = vmatpush2.bf16.msra.mxu0 %v2357
    %4014 = vmatprep.subr.bf16.mxu0 %v2350
    %4015 = vmatpush2.bf16.msra.mxu0 %v2349
    %4016 = vmatprep.subr.bf16.mxu0 %v2342
    %4017 = vmatpush2.bf16.msra.mxu0 %v2341
    %4018 = vmatprep.mubr.bf16.mxu0 %v608
    %4019 = vmatmul.mubr.bf16.gmra.mxu0 %v607
    %v4020 = vpop.f32.mrf.mxu0
    %v4021 = vadd.f32 %v1076, %v4020
    %v4022 = vpop.f32.mrf.mxu0
    %v4023 = vadd.f32 %v1080, %v4022
    %v4024 = vpop.f32.mrf.mxu0
    %v4025 = vadd.f32 %v1076, %v4024
    %v4026 = vpop.f32.mrf.mxu0
    %v4027 = vadd.f32 %v1080, %v4026
    %4028 = vmatprep.mubr.bf16.mxu0 %v615
    %4029 = vmatmul.mubr.bf16.gmra.mxu0 %v614
    %v4030 = vpop.f32.mrf.mxu0
    %v4031 = vadd.f32 %v1076, %v4030
    %v4032 = vpop.f32.mrf.mxu0
    %v4033 = vadd.f32 %v1080, %v4032
    %v4034 = vpop.f32.mrf.mxu0
    %v4035 = vadd.f32 %v1076, %v4034
    %v4036 = vpop.f32.mrf.mxu0
    %v4037 = vadd.f32 %v1080, %v4036
    %4038 = vmatprep.mubr.bf16.mxu0 %v622
    %4039 = vmatmul.mubr.bf16.gmra.mxu0 %v621
    %v4040 = vpop.f32.mrf.mxu0
    %v4041 = vadd.f32 %v1076, %v4040
    %v4042 = vpop.f32.mrf.mxu0
    %v4043 = vadd.f32 %v1080, %v4042
    %v4044 = vpop.f32.mrf.mxu0
    %v4045 = vadd.f32 %v1076, %v4044
    %v4046 = vpop.f32.mrf.mxu0
    %v4047 = vadd.f32 %v1080, %v4046
    %4048 = vmatprep.mubr.bf16.mxu0 %v629
    %4049 = vmatmul.mubr.bf16.gmra.mxu0 %v628
    %v4050 = vpop.f32.mrf.mxu0
    %v4051 = vadd.f32 %v1076, %v4050
    %v4052 = vpop.f32.mrf.mxu0
    %v4053 = vadd.f32 %v1080, %v4052
    %v4054 = vpop.f32.mrf.mxu0
    %v4055 = vadd.f32 %v1076, %v4054
    %v4056 = vpop.f32.mrf.mxu0
    %v4057 = vadd.f32 %v1080, %v4056
    %4058 = vmatprep.mubr.bf16.mxu0 %v636
    %4059 = vmatmul.mubr.bf16.gmra.mxu0 %v635
    %v4060 = vpop.f32.mrf.mxu0
    %v4061 = vadd.f32 %v1076, %v4060
    %v4062 = vpop.f32.mrf.mxu0
    %v4063 = vadd.f32 %v1080, %v4062
    %v4064 = vpop.f32.mrf.mxu0
    %v4065 = vadd.f32 %v1076, %v4064
    %v4066 = vpop.f32.mrf.mxu0
    %v4067 = vadd.f32 %v1080, %v4066
    %4068 = vmatprep.mubr.bf16.mxu0 %v643
    %4069 = vmatmul.mubr.bf16.gmra.mxu0 %v642
    %v4070 = vpop.f32.mrf.mxu0
    %v4071 = vadd.f32 %v1076, %v4070
    %v4072 = vpop.f32.mrf.mxu0
    %v4073 = vadd.f32 %v1080, %v4072
    %v4074 = vpop.f32.mrf.mxu0
    %v4075 = vadd.f32 %v1076, %v4074
    %v4076 = vpop.f32.mrf.mxu0
    %v4077 = vadd.f32 %v1080, %v4076
    %4078 = vmatprep.mubr.bf16.mxu0 %v650
    %4079 = vmatmul.mubr.bf16.gmra.mxu0 %v649
    %v4080 = vpop.f32.mrf.mxu0
    %v4081 = vadd.f32 %v1076, %v4080
    %v4082 = vpop.f32.mrf.mxu0
    %v4083 = vadd.f32 %v1080, %v4082
    %v4084 = vpop.f32.mrf.mxu0
    %v4085 = vadd.f32 %v1076, %v4084
    %v4086 = vpop.f32.mrf.mxu0
    %v4087 = vadd.f32 %v1080, %v4086
    %4088 = vmatprep.mubr.bf16.mxu0 %v657
    %4089 = vmatmul.mubr.bf16.gmra.mxu0 %v656
    %v4090 = vpop.f32.mrf.mxu0
    %v4091 = vadd.f32 %v1076, %v4090
    %v4092 = vpop.f32.mrf.mxu0
    %v4093 = vadd.f32 %v1080, %v4092
    %v4094 = vpop.f32.mrf.mxu0
    %v4095 = vadd.f32 %v1076, %v4094
    %v4096 = vpop.f32.mrf.mxu0
    %v4097 = vadd.f32 %v1080, %v4096
    %4098 = vdwg.mxu0
    %4099 = vmatprep.subr.bf16.mxu0 %v2462
    %4100 = vmatpush1.bf16.msra.mxu0 %v2461
    %4101 = vmatprep.subr.bf16.mxu0 %v2454
    %4102 = vmatpush1.bf16.msra.mxu0 %v2453
    %4103 = vmatprep.subr.bf16.mxu0 %v2446
    %4104 = vmatpush1.bf16.msra.mxu0 %v2445
    %4105 = vmatprep.subr.bf16.mxu0 %v2438
    %4106 = vmatpush1.bf16.msra.mxu0 %v2437
    %4107 = vmatprep.subr.bf16.mxu0 %v2430
    %4108 = vmatpush1.bf16.msra.mxu0 %v2429
    %4109 = vmatprep.subr.bf16.mxu0 %v2422
    %4110 = vmatpush1.bf16.msra.mxu0 %v2421
    %4111 = vmatprep.subr.bf16.mxu0 %v2414
    %4112 = vmatpush1.bf16.msra.mxu0 %v2413
    %4113 = vmatprep.subr.bf16.mxu0 %v2406
    %4114 = vmatpush1.bf16.msra.mxu0 %v2405
    %4115 = vmatprep.subr.bf16.mxu0 %v2526
    %4116 = vmatpush2.bf16.msra.mxu0 %v2525
    %4117 = vmatprep.subr.bf16.mxu0 %v2518
    %4118 = vmatpush2.bf16.msra.mxu0 %v2517
    %4119 = vmatprep.subr.bf16.mxu0 %v2510
    %4120 = vmatpush2.bf16.msra.mxu0 %v2509
    %4121 = vmatprep.subr.bf16.mxu0 %v2502
    %4122 = vmatpush2.bf16.msra.mxu0 %v2501
    %4123 = vmatprep.subr.bf16.mxu0 %v2494
    %4124 = vmatpush2.bf16.msra.mxu0 %v2493
    %4125 = vmatprep.subr.bf16.mxu0 %v2486
    %4126 = vmatpush2.bf16.msra.mxu0 %v2485
    %4127 = vmatprep.subr.bf16.mxu0 %v2478
    %4128 = vmatpush2.bf16.msra.mxu0 %v2477
    %4129 = vmatprep.subr.bf16.mxu0 %v2470
    %4130 = vmatpush2.bf16.msra.mxu0 %v2469
    %4131 = vmatprep.mubr.bf16.mxu0 %v610
    %4132 = vmatmul.mubr.bf16.gmra.mxu0 %v609
    %v4133 = vpop.f32.mrf.mxu0
    %v4134 = vadd.f32 %v4021, %v4133
    %v4135 = vpop.f32.mrf.mxu0
    %v4136 = vadd.f32 %v4023, %v4135
    %v4137 = vpop.f32.mrf.mxu0
    %v4138 = vadd.f32 %v4025, %v4137
    %v4139 = vpop.f32.mrf.mxu0
    %v4140 = vadd.f32 %v4027, %v4139
    %4141 = vmatprep.mubr.bf16.mxu0 %v617
    %4142 = vmatmul.mubr.bf16.gmra.mxu0 %v616
    %v4143 = vpop.f32.mrf.mxu0
    %v4144 = vadd.f32 %v4031, %v4143
    %v4145 = vpop.f32.mrf.mxu0
    %v4146 = vadd.f32 %v4033, %v4145
    %v4147 = vpop.f32.mrf.mxu0
    %v4148 = vadd.f32 %v4035, %v4147
    %v4149 = vpop.f32.mrf.mxu0
    %v4150 = vadd.f32 %v4037, %v4149
    %4151 = vmatprep.mubr.bf16.mxu0 %v624
    %4152 = vmatmul.mubr.bf16.gmra.mxu0 %v623
    %v4153 = vpop.f32.mrf.mxu0
    %v4154 = vadd.f32 %v4041, %v4153
    %v4155 = vpop.f32.mrf.mxu0
    %v4156 = vadd.f32 %v4043, %v4155
    %v4157 = vpop.f32.mrf.mxu0
    %v4158 = vadd.f32 %v4045, %v4157
    %v4159 = vpop.f32.mrf.mxu0
    %v4160 = vadd.f32 %v4047, %v4159
    %4161 = vmatprep.mubr.bf16.mxu0 %v631
    %4162 = vmatmul.mubr.bf16.gmra.mxu0 %v630
    %v4163 = vpop.f32.mrf.mxu0
    %v4164 = vadd.f32 %v4051, %v4163
    %v4165 = vpop.f32.mrf.mxu0
    %v4166 = vadd.f32 %v4053, %v4165
    %v4167 = vpop.f32.mrf.mxu0
    %v4168 = vadd.f32 %v4055, %v4167
    %v4169 = vpop.f32.mrf.mxu0
    %v4170 = vadd.f32 %v4057, %v4169
    %4171 = vmatprep.mubr.bf16.mxu0 %v638
    %4172 = vmatmul.mubr.bf16.gmra.mxu0 %v637
    %v4173 = vpop.f32.mrf.mxu0
    %v4174 = vadd.f32 %v4061, %v4173
    %v4175 = vpop.f32.mrf.mxu0
    %v4176 = vadd.f32 %v4063, %v4175
    %v4177 = vpop.f32.mrf.mxu0
    %v4178 = vadd.f32 %v4065, %v4177
    %v4179 = vpop.f32.mrf.mxu0
    %v4180 = vadd.f32 %v4067, %v4179
    %4181 = vmatprep.mubr.bf16.mxu0 %v645
    %4182 = vmatmul.mubr.bf16.gmra.mxu0 %v644
    %v4183 = vpop.f32.mrf.mxu0
    %v4184 = vadd.f32 %v4071, %v4183
    %v4185 = vpop.f32.mrf.mxu0
    %v4186 = vadd.f32 %v4073, %v4185
    %v4187 = vpop.f32.mrf.mxu0
    %v4188 = vadd.f32 %v4075, %v4187
    %v4189 = vpop.f32.mrf.mxu0
    %v4190 = vadd.f32 %v4077, %v4189
    %4191 = vmatprep.mubr.bf16.mxu0 %v652
    %4192 = vmatmul.mubr.bf16.gmra.mxu0 %v651
    %v4193 = vpop.f32.mrf.mxu0
    %v4194 = vadd.f32 %v4081, %v4193
    %v4195 = vpop.f32.mrf.mxu0
    %v4196 = vadd.f32 %v4083, %v4195
    %v4197 = vpop.f32.mrf.mxu0
    %v4198 = vadd.f32 %v4085, %v4197
    %v4199 = vpop.f32.mrf.mxu0
    %v4200 = vadd.f32 %v4087, %v4199
    %4201 = vmatprep.mubr.bf16.mxu0 %v659
    %4202 = vmatmul.mubr.bf16.gmra.mxu0 %v658
    %v4203 = vpop.f32.mrf.mxu0
    %v4204 = vadd.f32 %v4091, %v4203
    %v4205 = vpop.f32.mrf.mxu0
    %v4206 = vadd.f32 %v4093, %v4205
    %v4207 = vpop.f32.mrf.mxu0
    %v4208 = vadd.f32 %v4095, %v4207
    %v4209 = vpop.f32.mrf.mxu0
    %v4210 = vadd.f32 %v4097, %v4209
    %4211 = vdwg.mxu0
    %4212 = vmatprep.subr.bf16.mxu0 %v2590
    %4213 = vmatpush1.bf16.msra.mxu0 %v2589
    %4214 = vmatprep.subr.bf16.mxu0 %v2582
    %4215 = vmatpush1.bf16.msra.mxu0 %v2581
    %4216 = vmatprep.subr.bf16.mxu0 %v2574
    %4217 = vmatpush1.bf16.msra.mxu0 %v2573
    %4218 = vmatprep.subr.bf16.mxu0 %v2566
    %4219 = vmatpush1.bf16.msra.mxu0 %v2565
    %4220 = vmatprep.subr.bf16.mxu0 %v2558
    %4221 = vmatpush1.bf16.msra.mxu0 %v2557
    %4222 = vmatprep.subr.bf16.mxu0 %v2550
    %4223 = vmatpush1.bf16.msra.mxu0 %v2549
    %4224 = vmatprep.subr.bf16.mxu0 %v2542
    %4225 = vmatpush1.bf16.msra.mxu0 %v2541
    %4226 = vmatprep.subr.bf16.mxu0 %v2534
    %4227 = vmatpush1.bf16.msra.mxu0 %v2533
    %4228 = vmatprep.subr.bf16.mxu0 %v2654
    %4229 = vmatpush2.bf16.msra.mxu0 %v2653
    %4230 = vmatprep.subr.bf16.mxu0 %v2646
    %4231 = vmatpush2.bf16.msra.mxu0 %v2645
    %4232 = vmatprep.subr.bf16.mxu0 %v2638
    %4233 = vmatpush2.bf16.msra.mxu0 %v2637
    %4234 = vmatprep.subr.bf16.mxu0 %v2630
    %4235 = vmatpush2.bf16.msra.mxu0 %v2629
    %4236 = vmatprep.subr.bf16.mxu0 %v2622
    %4237 = vmatpush2.bf16.msra.mxu0 %v2621
    %4238 = vmatprep.subr.bf16.mxu0 %v2614
    %4239 = vmatpush2.bf16.msra.mxu0 %v2613
    %4240 = vmatprep.subr.bf16.mxu0 %v2606
    %4241 = vmatpush2.bf16.msra.mxu0 %v2605
    %4242 = vmatprep.subr.bf16.mxu0 %v2598
    %4243 = vmatpush2.bf16.msra.mxu0 %v2597
    %4244 = vmatprep.mubr.bf16.mxu0 %v612
    %4245 = vmatmul.mubr.bf16.gmra.mxu0 %v611
    %v4246 = vpop.f32.mrf.mxu0
    %v4247 = vadd.f32 %v4134, %v4246
    %v4248 = vpop.f32.mrf.mxu0
    %v4249 = vadd.f32 %v4136, %v4248
    %v4250 = vpop.f32.mrf.mxu0
    %v4251 = vadd.f32 %v4138, %v4250
    %v4252 = vpop.f32.mrf.mxu0
    %v4253 = vadd.f32 %v4140, %v4252
    %4254 = vmatprep.mubr.bf16.mxu0 %v619
    %4255 = vmatmul.mubr.bf16.gmra.mxu0 %v618
    %v4256 = vpop.f32.mrf.mxu0
    %v4257 = vadd.f32 %v4144, %v4256
    %v4258 = vpop.f32.mrf.mxu0
    %v4259 = vadd.f32 %v4146, %v4258
    %v4260 = vpop.f32.mrf.mxu0
    %v4261 = vadd.f32 %v4148, %v4260
    %v4262 = vpop.f32.mrf.mxu0
    %v4263 = vadd.f32 %v4150, %v4262
    %4264 = vmatprep.mubr.bf16.mxu0 %v626
    %4265 = vmatmul.mubr.bf16.gmra.mxu0 %v625
    %v4266 = vpop.f32.mrf.mxu0
    %v4267 = vadd.f32 %v4154, %v4266
    %v4268 = vpop.f32.mrf.mxu0
    %v4269 = vadd.f32 %v4156, %v4268
    %v4270 = vpop.f32.mrf.mxu0
    %v4271 = vadd.f32 %v4158, %v4270
    %v4272 = vpop.f32.mrf.mxu0
    %v4273 = vadd.f32 %v4160, %v4272
    %4274 = vmatprep.mubr.bf16.mxu0 %v633
    %4275 = vmatmul.mubr.bf16.gmra.mxu0 %v632
    %v4276 = vpop.f32.mrf.mxu0
    %v4277 = vadd.f32 %v4164, %v4276
    %v4278 = vpop.f32.mrf.mxu0
    %v4279 = vadd.f32 %v4166, %v4278
    %v4280 = vpop.f32.mrf.mxu0
    %v4281 = vadd.f32 %v4168, %v4280
    %v4282 = vpop.f32.mrf.mxu0
    %v4283 = vadd.f32 %v4170, %v4282
    %4284 = vmatprep.mubr.bf16.mxu0 %v640
    %4285 = vmatmul.mubr.bf16.gmra.mxu0 %v639
    %v4286 = vpop.f32.mrf.mxu0
    %v4287 = vadd.f32 %v4174, %v4286
    %v4288 = vpop.f32.mrf.mxu0
    %v4289 = vadd.f32 %v4176, %v4288
    %v4290 = vpop.f32.mrf.mxu0
    %v4291 = vadd.f32 %v4178, %v4290
    %v4292 = vpop.f32.mrf.mxu0
    %v4293 = vadd.f32 %v4180, %v4292
    %4294 = vmatprep.mubr.bf16.mxu0 %v647
    %4295 = vmatmul.mubr.bf16.gmra.mxu0 %v646
    %v4296 = vpop.f32.mrf.mxu0
    %v4297 = vadd.f32 %v4184, %v4296
    %v4298 = vpop.f32.mrf.mxu0
    %v4299 = vadd.f32 %v4186, %v4298
    %v4300 = vpop.f32.mrf.mxu0
    %v4301 = vadd.f32 %v4188, %v4300
    %v4302 = vpop.f32.mrf.mxu0
    %v4303 = vadd.f32 %v4190, %v4302
    %4304 = vmatprep.mubr.bf16.mxu0 %v654
    %4305 = vmatmul.mubr.bf16.gmra.mxu0 %v653
    %v4306 = vpop.f32.mrf.mxu0
    %v4307 = vadd.f32 %v4194, %v4306
    %v4308 = vpop.f32.mrf.mxu0
    %v4309 = vadd.f32 %v4196, %v4308
    %v4310 = vpop.f32.mrf.mxu0
    %v4311 = vadd.f32 %v4198, %v4310
    %v4312 = vpop.f32.mrf.mxu0
    %v4313 = vadd.f32 %v4200, %v4312
    %4314 = vmatprep.mubr.bf16.mxu0 %v661
    %4315 = vmatmul.mubr.bf16.gmra.mxu0 %v660
    %v4316 = vpop.f32.mrf.mxu0
    %v4317 = vadd.f32 %v4204, %v4316
    %v4318 = vpop.f32.mrf.mxu0
    %v4319 = vadd.f32 %v4206, %v4318
    %v4320 = vpop.f32.mrf.mxu0
    %v4321 = vadd.f32 %v4208, %v4320
    %v4322 = vpop.f32.mrf.mxu0
    %v4323 = vadd.f32 %v4210, %v4322
    %4324 = vdwg.mxu0
    %4325 = vmatprep.subr.bf16.mxu0 0
    %4326 = vmatpush1.bf16.msra.mxu0 0
    %4327 = vmatprep.subr.bf16.mxu0 0
    %4328 = vmatpush1.bf16.msra.mxu0 0
    %4329 = vmatprep.subr.bf16.mxu0 0
    %4330 = vmatpush1.bf16.msra.mxu0 0
    %4331 = vmatprep.subr.bf16.mxu0 0
    %4332 = vmatpush1.bf16.msra.mxu0 0
    %4333 = vmatprep.subr.bf16.mxu0 0
    %4334 = vmatpush1.bf16.msra.mxu0 0
    %4335 = vmatprep.subr.bf16.mxu0 0
    %4336 = vmatpush1.bf16.msra.mxu0 0
    %4337 = vmatprep.subr.bf16.mxu0 0
    %4338 = vmatpush1.bf16.msra.mxu0 0
    %4339 = vmatprep.subr.bf16.mxu0 %v2662
    %4340 = vmatpush1.bf16.msra.mxu0 %v2661
    %4341 = vmatprep.subr.bf16.mxu0 0
    %4342 = vmatpush2.bf16.msra.mxu0 0
    %4343 = vmatprep.subr.bf16.mxu0 0
    %4344 = vmatpush2.bf16.msra.mxu0 0
    %4345 = vmatprep.subr.bf16.mxu0 0
    %4346 = vmatpush2.bf16.msra.mxu0 0
    %4347 = vmatprep.subr.bf16.mxu0 0
    %4348 = vmatpush2.bf16.msra.mxu0 0
    %4349 = vmatprep.subr.bf16.mxu0 0
    %4350 = vmatpush2.bf16.msra.mxu0 0
    %4351 = vmatprep.subr.bf16.mxu0 0
    %4352 = vmatpush2.bf16.msra.mxu0 0
    %4353 = vmatprep.subr.bf16.mxu0 0
    %4354 = vmatpush2.bf16.msra.mxu0 0
    %4355 = vmatprep.subr.bf16.mxu0 0
    %4356 = vmatpush2.bf16.msra.mxu0 0
    %4357 = vmatprep.mubr.bf16.mxu0 0
    %4358 = vmatmul.mubr.bf16.gmra.mxu0 %v3059
    %v4359 = vpop.f32.mrf.mxu0
    %v4360 = vadd.f32 %v4247, %v4359
    %v4361 = vpop.f32.mrf.mxu0
    %v4362 = vadd.f32 %v4249, %v4361
    %v4363 = vpop.f32.mrf.mxu0
    %v4364 = vadd.f32 %v4251, %v4363
    %v4365 = vpop.f32.mrf.mxu0
    %v4366 = vadd.f32 %v4253, %v4365
    %4367 = vmatprep.mubr.bf16.mxu0 0
    %4368 = vmatmul.mubr.bf16.gmra.mxu0 %v3062
    %v4369 = vpop.f32.mrf.mxu0
    %v4370 = vadd.f32 %v4257, %v4369
    %v4371 = vpop.f32.mrf.mxu0
    %v4372 = vadd.f32 %v4259, %v4371
    %v4373 = vpop.f32.mrf.mxu0
    %v4374 = vadd.f32 %v4261, %v4373
    %v4375 = vpop.f32.mrf.mxu0
    %v4376 = vadd.f32 %v4263, %v4375
    %4377 = vmatprep.mubr.bf16.mxu0 0
    %4378 = vmatmul.mubr.bf16.gmra.mxu0 %v3065
    %v4379 = vpop.f32.mrf.mxu0
    %v4380 = vadd.f32 %v4267, %v4379
    %v4381 = vpop.f32.mrf.mxu0
    %v4382 = vadd.f32 %v4269, %v4381
    %v4383 = vpop.f32.mrf.mxu0
    %v4384 = vadd.f32 %v4271, %v4383
    %v4385 = vpop.f32.mrf.mxu0
    %v4386 = vadd.f32 %v4273, %v4385
    %4387 = vmatprep.mubr.bf16.mxu0 0
    %4388 = vmatmul.mubr.bf16.gmra.mxu0 %v3068
    %v4389 = vpop.f32.mrf.mxu0
    %v4390 = vadd.f32 %v4277, %v4389
    %v4391 = vpop.f32.mrf.mxu0
    %v4392 = vadd.f32 %v4279, %v4391
    %v4393 = vpop.f32.mrf.mxu0
    %v4394 = vadd.f32 %v4281, %v4393
    %v4395 = vpop.f32.mrf.mxu0
    %v4396 = vadd.f32 %v4283, %v4395
    %4397 = vmatprep.mubr.bf16.mxu0 0
    %4398 = vmatmul.mubr.bf16.gmra.mxu0 %v3071
    %v4399 = vpop.f32.mrf.mxu0
    %v4400 = vadd.f32 %v4287, %v4399
    %v4401 = vpop.f32.mrf.mxu0
    %v4402 = vadd.f32 %v4289, %v4401
    %v4403 = vpop.f32.mrf.mxu0
    %v4404 = vadd.f32 %v4291, %v4403
    %v4405 = vpop.f32.mrf.mxu0
    %v4406 = vadd.f32 %v4293, %v4405
    %4407 = vmatprep.mubr.bf16.mxu0 0
    %4408 = vmatmul.mubr.bf16.gmra.mxu0 %v3074
    %v4409 = vpop.f32.mrf.mxu0
    %v4410 = vadd.f32 %v4297, %v4409
    %v4411 = vpop.f32.mrf.mxu0
    %v4412 = vadd.f32 %v4299, %v4411
    %v4413 = vpop.f32.mrf.mxu0
    %v4414 = vadd.f32 %v4301, %v4413
    %v4415 = vpop.f32.mrf.mxu0
    %v4416 = vadd.f32 %v4303, %v4415
    %4417 = vmatprep.mubr.bf16.mxu0 0
    %4418 = vmatmul.mubr.bf16.gmra.mxu0 %v3077
    %v4419 = vpop.f32.mrf.mxu0
    %v4420 = vadd.f32 %v4307, %v4419
    %v4421 = vpop.f32.mrf.mxu0
    %v4422 = vadd.f32 %v4309, %v4421
    %v4423 = vpop.f32.mrf.mxu0
    %v4424 = vadd.f32 %v4311, %v4423
    %v4425 = vpop.f32.mrf.mxu0
    %v4426 = vadd.f32 %v4313, %v4425
    %4427 = vmatprep.mubr.bf16.mxu0 0
    %4428 = vmatmul.mubr.bf16.gmra.mxu0 %v3080
    %v4429 = vpop.f32.mrf.mxu0
    %v4430 = vadd.f32 %v4317, %v4429
    %v4431 = vpop.f32.mrf.mxu0
    %v4432 = vadd.f32 %v4319, %v4431
    %v4433 = vpop.f32.mrf.mxu0
    %v4434 = vadd.f32 %v4321, %v4433
    %v4435 = vpop.f32.mrf.mxu0
    %v4436 = vadd.f32 %v4323, %v4435
    %4437 = vdwg.mxu0
    %4438 = vmatprep.subr.bf16.mxu0 %v2336
    %4439 = vmatpush1.bf16.msra.mxu0 %v2335
    %4440 = vmatprep.subr.bf16.mxu0 %v2328
    %4441 = vmatpush1.bf16.msra.mxu0 %v2327
    %4442 = vmatprep.subr.bf16.mxu0 %v2320
    %4443 = vmatpush1.bf16.msra.mxu0 %v2319
    %4444 = vmatprep.subr.bf16.mxu0 %v2312
    %4445 = vmatpush1.bf16.msra.mxu0 %v2311
    %4446 = vmatprep.subr.bf16.mxu0 %v2304
    %4447 = vmatpush1.bf16.msra.mxu0 %v2303
    %4448 = vmatprep.subr.bf16.mxu0 %v2296
    %4449 = vmatpush1.bf16.msra.mxu0 %v2295
    %4450 = vmatprep.subr.bf16.mxu0 %v2288
    %4451 = vmatpush1.bf16.msra.mxu0 %v2287
    %4452 = vmatprep.subr.bf16.mxu0 %v2280
    %4453 = vmatpush1.bf16.msra.mxu0 %v2279
    %4454 = vmatprep.subr.bf16.mxu0 %v2400
    %4455 = vmatpush2.bf16.msra.mxu0 %v2399
    %4456 = vmatprep.subr.bf16.mxu0 %v2392
    %4457 = vmatpush2.bf16.msra.mxu0 %v2391
    %4458 = vmatprep.subr.bf16.mxu0 %v2384
    %4459 = vmatpush2.bf16.msra.mxu0 %v2383
    %4460 = vmatprep.subr.bf16.mxu0 %v2376
    %4461 = vmatpush2.bf16.msra.mxu0 %v2375
    %4462 = vmatprep.subr.bf16.mxu0 %v2368
    %4463 = vmatpush2.bf16.msra.mxu0 %v2367
    %4464 = vmatprep.subr.bf16.mxu0 %v2360
    %4465 = vmatpush2.bf16.msra.mxu0 %v2359
    %4466 = vmatprep.subr.bf16.mxu0 %v2352
    %4467 = vmatpush2.bf16.msra.mxu0 %v2351
    %4468 = vmatprep.subr.bf16.mxu0 %v2344
    %4469 = vmatpush2.bf16.msra.mxu0 %v2343
    %4470 = vmatprep.mubr.bf16.mxu0 %v608
    %4471 = vmatmul.mubr.bf16.gmra.mxu0 %v607
    %v4472 = vpop.f32.mrf.mxu0
    %v4473 = vadd.f32 %v1084, %v4472
    %v4474 = vpop.f32.mrf.mxu0
    %v4475 = vadd.f32 %v1088, %v4474
    %v4476 = vpop.f32.mrf.mxu0
    %v4477 = vadd.f32 %v1084, %v4476
    %v4478 = vpop.f32.mrf.mxu0
    %v4479 = vadd.f32 %v1088, %v4478
    %4480 = vmatprep.mubr.bf16.mxu0 %v615
    %4481 = vmatmul.mubr.bf16.gmra.mxu0 %v614
    %v4482 = vpop.f32.mrf.mxu0
    %v4483 = vadd.f32 %v1084, %v4482
    %v4484 = vpop.f32.mrf.mxu0
    %v4485 = vadd.f32 %v1088, %v4484
    %v4486 = vpop.f32.mrf.mxu0
    %v4487 = vadd.f32 %v1084, %v4486
    %v4488 = vpop.f32.mrf.mxu0
    %v4489 = vadd.f32 %v1088, %v4488
    %4490 = vmatprep.mubr.bf16.mxu0 %v622
    %4491 = vmatmul.mubr.bf16.gmra.mxu0 %v621
    %v4492 = vpop.f32.mrf.mxu0
    %v4493 = vadd.f32 %v1084, %v4492
    %v4494 = vpop.f32.mrf.mxu0
    %v4495 = vadd.f32 %v1088, %v4494
    %v4496 = vpop.f32.mrf.mxu0
    %v4497 = vadd.f32 %v1084, %v4496
    %v4498 = vpop.f32.mrf.mxu0
    %v4499 = vadd.f32 %v1088, %v4498
    %4500 = vmatprep.mubr.bf16.mxu0 %v629
    %4501 = vmatmul.mubr.bf16.gmra.mxu0 %v628
    %v4502 = vpop.f32.mrf.mxu0
    %v4503 = vadd.f32 %v1084, %v4502
    %v4504 = vpop.f32.mrf.mxu0
    %v4505 = vadd.f32 %v1088, %v4504
    %v4506 = vpop.f32.mrf.mxu0
    %v4507 = vadd.f32 %v1084, %v4506
    %v4508 = vpop.f32.mrf.mxu0
    %v4509 = vadd.f32 %v1088, %v4508
    %4510 = vmatprep.mubr.bf16.mxu0 %v636
    %4511 = vmatmul.mubr.bf16.gmra.mxu0 %v635
    %v4512 = vpop.f32.mrf.mxu0
    %v4513 = vadd.f32 %v1084, %v4512
    %v4514 = vpop.f32.mrf.mxu0
    %v4515 = vadd.f32 %v1088, %v4514
    %v4516 = vpop.f32.mrf.mxu0
    %v4517 = vadd.f32 %v1084, %v4516
    %v4518 = vpop.f32.mrf.mxu0
    %v4519 = vadd.f32 %v1088, %v4518
    %4520 = vmatprep.mubr.bf16.mxu0 %v643
    %4521 = vmatmul.mubr.bf16.gmra.mxu0 %v642
    %v4522 = vpop.f32.mrf.mxu0
    %v4523 = vadd.f32 %v1084, %v4522
    %v4524 = vpop.f32.mrf.mxu0
    %v4525 = vadd.f32 %v1088, %v4524
    %v4526 = vpop.f32.mrf.mxu0
    %v4527 = vadd.f32 %v1084, %v4526
    %v4528 = vpop.f32.mrf.mxu0
    %v4529 = vadd.f32 %v1088, %v4528
    %4530 = vmatprep.mubr.bf16.mxu0 %v650
    %4531 = vmatmul.mubr.bf16.gmra.mxu0 %v649
    %v4532 = vpop.f32.mrf.mxu0
    %v4533 = vadd.f32 %v1084, %v4532
    %v4534 = vpop.f32.mrf.mxu0
    %v4535 = vadd.f32 %v1088, %v4534
    %v4536 = vpop.f32.mrf.mxu0
    %v4537 = vadd.f32 %v1084, %v4536
    %v4538 = vpop.f32.mrf.mxu0
    %v4539 = vadd.f32 %v1088, %v4538
    %4540 = vmatprep.mubr.bf16.mxu0 %v657
    %4541 = vmatmul.mubr.bf16.gmra.mxu0 %v656
    %v4542 = vpop.f32.mrf.mxu0
    %v4543 = vadd.f32 %v1084, %v4542
    %v4544 = vpop.f32.mrf.mxu0
    %v4545 = vadd.f32 %v1088, %v4544
    %v4546 = vpop.f32.mrf.mxu0
    %v4547 = vadd.f32 %v1084, %v4546
    %v4548 = vpop.f32.mrf.mxu0
    %v4549 = vadd.f32 %v1088, %v4548
    %4550 = vdwg.mxu0
    %4551 = vmatprep.subr.bf16.mxu0 %v2464
    %4552 = vmatpush1.bf16.msra.mxu0 %v2463
    %4553 = vmatprep.subr.bf16.mxu0 %v2456
    %4554 = vmatpush1.bf16.msra.mxu0 %v2455
    %4555 = vmatprep.subr.bf16.mxu0 %v2448
    %4556 = vmatpush1.bf16.msra.mxu0 %v2447
    %4557 = vmatprep.subr.bf16.mxu0 %v2440
    %4558 = vmatpush1.bf16.msra.mxu0 %v2439
    %4559 = vmatprep.subr.bf16.mxu0 %v2432
    %4560 = vmatpush1.bf16.msra.mxu0 %v2431
    %4561 = vmatprep.subr.bf16.mxu0 %v2424
    %4562 = vmatpush1.bf16.msra.mxu0 %v2423
    %4563 = vmatprep.subr.bf16.mxu0 %v2416
    %4564 = vmatpush1.bf16.msra.mxu0 %v2415
    %4565 = vmatprep.subr.bf16.mxu0 %v2408
    %4566 = vmatpush1.bf16.msra.mxu0 %v2407
    %4567 = vmatprep.subr.bf16.mxu0 %v2528
    %4568 = vmatpush2.bf16.msra.mxu0 %v2527
    %4569 = vmatprep.subr.bf16.mxu0 %v2520
    %4570 = vmatpush2.bf16.msra.mxu0 %v2519
    %4571 = vmatprep.subr.bf16.mxu0 %v2512
    %4572 = vmatpush2.bf16.msra.mxu0 %v2511
    %4573 = vmatprep.subr.bf16.mxu0 %v2504
    %4574 = vmatpush2.bf16.msra.mxu0 %v2503
    %4575 = vmatprep.subr.bf16.mxu0 %v2496
    %4576 = vmatpush2.bf16.msra.mxu0 %v2495
    %4577 = vmatprep.subr.bf16.mxu0 %v2488
    %4578 = vmatpush2.bf16.msra.mxu0 %v2487
    %4579 = vmatprep.subr.bf16.mxu0 %v2480
    %4580 = vmatpush2.bf16.msra.mxu0 %v2479
    %4581 = vmatprep.subr.bf16.mxu0 %v2472
    %4582 = vmatpush2.bf16.msra.mxu0 %v2471
    %4583 = vmatprep.mubr.bf16.mxu0 %v610
    %4584 = vmatmul.mubr.bf16.gmra.mxu0 %v609
    %v4585 = vpop.f32.mrf.mxu0
    %v4586 = vadd.f32 %v4473, %v4585
    %v4587 = vpop.f32.mrf.mxu0
    %v4588 = vadd.f32 %v4475, %v4587
    %v4589 = vpop.f32.mrf.mxu0
    %v4590 = vadd.f32 %v4477, %v4589
    %v4591 = vpop.f32.mrf.mxu0
    %v4592 = vadd.f32 %v4479, %v4591
    %4593 = vmatprep.mubr.bf16.mxu0 %v617
    %4594 = vmatmul.mubr.bf16.gmra.mxu0 %v616
    %v4595 = vpop.f32.mrf.mxu0
    %v4596 = vadd.f32 %v4483, %v4595
    %v4597 = vpop.f32.mrf.mxu0
    %v4598 = vadd.f32 %v4485, %v4597
    %v4599 = vpop.f32.mrf.mxu0
    %v4600 = vadd.f32 %v4487, %v4599
    %v4601 = vpop.f32.mrf.mxu0
    %v4602 = vadd.f32 %v4489, %v4601
    %4603 = vmatprep.mubr.bf16.mxu0 %v624
    %4604 = vmatmul.mubr.bf16.gmra.mxu0 %v623
    %v4605 = vpop.f32.mrf.mxu0
    %v4606 = vadd.f32 %v4493, %v4605
    %v4607 = vpop.f32.mrf.mxu0
    %v4608 = vadd.f32 %v4495, %v4607
    %v4609 = vpop.f32.mrf.mxu0
    %v4610 = vadd.f32 %v4497, %v4609
    %v4611 = vpop.f32.mrf.mxu0
    %v4612 = vadd.f32 %v4499, %v4611
    %4613 = vmatprep.mubr.bf16.mxu0 %v631
    %4614 = vmatmul.mubr.bf16.gmra.mxu0 %v630
    %v4615 = vpop.f32.mrf.mxu0
    %v4616 = vadd.f32 %v4503, %v4615
    %v4617 = vpop.f32.mrf.mxu0
    %v4618 = vadd.f32 %v4505, %v4617
    %v4619 = vpop.f32.mrf.mxu0
    %v4620 = vadd.f32 %v4507, %v4619
    %v4621 = vpop.f32.mrf.mxu0
    %v4622 = vadd.f32 %v4509, %v4621
    %4623 = vmatprep.mubr.bf16.mxu0 %v638
    %4624 = vmatmul.mubr.bf16.gmra.mxu0 %v637
    %v4625 = vpop.f32.mrf.mxu0
    %v4626 = vadd.f32 %v4513, %v4625
    %v4627 = vpop.f32.mrf.mxu0
    %v4628 = vadd.f32 %v4515, %v4627
    %v4629 = vpop.f32.mrf.mxu0
    %v4630 = vadd.f32 %v4517, %v4629
    %v4631 = vpop.f32.mrf.mxu0
    %v4632 = vadd.f32 %v4519, %v4631
    %4633 = vmatprep.mubr.bf16.mxu0 %v645
    %4634 = vmatmul.mubr.bf16.gmra.mxu0 %v644
    %v4635 = vpop.f32.mrf.mxu0
    %v4636 = vadd.f32 %v4523, %v4635
    %v4637 = vpop.f32.mrf.mxu0
    %v4638 = vadd.f32 %v4525, %v4637
    %v4639 = vpop.f32.mrf.mxu0
    %v4640 = vadd.f32 %v4527, %v4639
    %v4641 = vpop.f32.mrf.mxu0
    %v4642 = vadd.f32 %v4529, %v4641
    %4643 = vmatprep.mubr.bf16.mxu0 %v652
    %4644 = vmatmul.mubr.bf16.gmra.mxu0 %v651
    %v4645 = vpop.f32.mrf.mxu0
    %v4646 = vadd.f32 %v4533, %v4645
    %v4647 = vpop.f32.mrf.mxu0
    %v4648 = vadd.f32 %v4535, %v4647
    %v4649 = vpop.f32.mrf.mxu0
    %v4650 = vadd.f32 %v4537, %v4649
    %v4651 = vpop.f32.mrf.mxu0
    %v4652 = vadd.f32 %v4539, %v4651
    %4653 = vmatprep.mubr.bf16.mxu0 %v659
    %4654 = vmatmul.mubr.bf16.gmra.mxu0 %v658
    %v4655 = vpop.f32.mrf.mxu0
    %v4656 = vadd.f32 %v4543, %v4655
    %v4657 = vpop.f32.mrf.mxu0
    %v4658 = vadd.f32 %v4545, %v4657
    %v4659 = vpop.f32.mrf.mxu0
    %v4660 = vadd.f32 %v4547, %v4659
    %v4661 = vpop.f32.mrf.mxu0
    %v4662 = vadd.f32 %v4549, %v4661
    %4663 = vdwg.mxu0
    %4664 = vmatprep.subr.bf16.mxu0 %v2592
    %4665 = vmatpush1.bf16.msra.mxu0 %v2591
    %4666 = vmatprep.subr.bf16.mxu0 %v2584
    %4667 = vmatpush1.bf16.msra.mxu0 %v2583
    %4668 = vmatprep.subr.bf16.mxu0 %v2576
    %4669 = vmatpush1.bf16.msra.mxu0 %v2575
    %4670 = vmatprep.subr.bf16.mxu0 %v2568
    %4671 = vmatpush1.bf16.msra.mxu0 %v2567
    %4672 = vmatprep.subr.bf16.mxu0 %v2560
    %4673 = vmatpush1.bf16.msra.mxu0 %v2559
    %4674 = vmatprep.subr.bf16.mxu0 %v2552
    %4675 = vmatpush1.bf16.msra.mxu0 %v2551
    %4676 = vmatprep.subr.bf16.mxu0 %v2544
    %4677 = vmatpush1.bf16.msra.mxu0 %v2543
    %4678 = vmatprep.subr.bf16.mxu0 %v2536
    %4679 = vmatpush1.bf16.msra.mxu0 %v2535
    %4680 = vmatprep.subr.bf16.mxu0 %v2656
    %4681 = vmatpush2.bf16.msra.mxu0 %v2655
    %4682 = vmatprep.subr.bf16.mxu0 %v2648
    %4683 = vmatpush2.bf16.msra.mxu0 %v2647
    %4684 = vmatprep.subr.bf16.mxu0 %v2640
    %4685 = vmatpush2.bf16.msra.mxu0 %v2639
    %4686 = vmatprep.subr.bf16.mxu0 %v2632
    %4687 = vmatpush2.bf16.msra.mxu0 %v2631
    %4688 = vmatprep.subr.bf16.mxu0 %v2624
    %4689 = vmatpush2.bf16.msra.mxu0 %v2623
    %4690 = vmatprep.subr.bf16.mxu0 %v2616
    %4691 = vmatpush2.bf16.msra.mxu0 %v2615
    %4692 = vmatprep.subr.bf16.mxu0 %v2608
    %4693 = vmatpush2.bf16.msra.mxu0 %v2607
    %4694 = vmatprep.subr.bf16.mxu0 %v2600
    %4695 = vmatpush2.bf16.msra.mxu0 %v2599
    %4696 = vmatprep.mubr.bf16.mxu0 %v612
    %4697 = vmatmul.mubr.bf16.gmra.mxu0 %v611
    %v4698 = vpop.f32.mrf.mxu0
    %v4699 = vadd.f32 %v4586, %v4698
    %v4700 = vpop.f32.mrf.mxu0
    %v4701 = vadd.f32 %v4588, %v4700
    %v4702 = vpop.f32.mrf.mxu0
    %v4703 = vadd.f32 %v4590, %v4702
    %v4704 = vpop.f32.mrf.mxu0
    %v4705 = vadd.f32 %v4592, %v4704
    %4706 = vmatprep.mubr.bf16.mxu0 %v619
    %4707 = vmatmul.mubr.bf16.gmra.mxu0 %v618
    %v4708 = vpop.f32.mrf.mxu0
    %v4709 = vadd.f32 %v4596, %v4708
    %v4710 = vpop.f32.mrf.mxu0
    %v4711 = vadd.f32 %v4598, %v4710
    %v4712 = vpop.f32.mrf.mxu0
    %v4713 = vadd.f32 %v4600, %v4712
    %v4714 = vpop.f32.mrf.mxu0
    %v4715 = vadd.f32 %v4602, %v4714
    %4716 = vmatprep.mubr.bf16.mxu0 %v626
    %4717 = vmatmul.mubr.bf16.gmra.mxu0 %v625
    %v4718 = vpop.f32.mrf.mxu0
    %v4719 = vadd.f32 %v4606, %v4718
    %v4720 = vpop.f32.mrf.mxu0
    %v4721 = vadd.f32 %v4608, %v4720
    %v4722 = vpop.f32.mrf.mxu0
    %v4723 = vadd.f32 %v4610, %v4722
    %v4724 = vpop.f32.mrf.mxu0
    %v4725 = vadd.f32 %v4612, %v4724
    %4726 = vmatprep.mubr.bf16.mxu0 %v633
    %4727 = vmatmul.mubr.bf16.gmra.mxu0 %v632
    %v4728 = vpop.f32.mrf.mxu0
    %v4729 = vadd.f32 %v4616, %v4728
    %v4730 = vpop.f32.mrf.mxu0
    %v4731 = vadd.f32 %v4618, %v4730
    %v4732 = vpop.f32.mrf.mxu0
    %v4733 = vadd.f32 %v4620, %v4732
    %v4734 = vpop.f32.mrf.mxu0
    %v4735 = vadd.f32 %v4622, %v4734
    %4736 = vmatprep.mubr.bf16.mxu0 %v640
    %4737 = vmatmul.mubr.bf16.gmra.mxu0 %v639
    %v4738 = vpop.f32.mrf.mxu0
    %v4739 = vadd.f32 %v4626, %v4738
    %v4740 = vpop.f32.mrf.mxu0
    %v4741 = vadd.f32 %v4628, %v4740
    %v4742 = vpop.f32.mrf.mxu0
    %v4743 = vadd.f32 %v4630, %v4742
    %v4744 = vpop.f32.mrf.mxu0
    %v4745 = vadd.f32 %v4632, %v4744
    %4746 = vmatprep.mubr.bf16.mxu0 %v647
    %4747 = vmatmul.mubr.bf16.gmra.mxu0 %v646
    %v4748 = vpop.f32.mrf.mxu0
    %v4749 = vadd.f32 %v4636, %v4748
    %v4750 = vpop.f32.mrf.mxu0
    %v4751 = vadd.f32 %v4638, %v4750
    %v4752 = vpop.f32.mrf.mxu0
    %v4753 = vadd.f32 %v4640, %v4752
    %v4754 = vpop.f32.mrf.mxu0
    %v4755 = vadd.f32 %v4642, %v4754
    %4756 = vmatprep.mubr.bf16.mxu0 %v654
    %4757 = vmatmul.mubr.bf16.gmra.mxu0 %v653
    %v4758 = vpop.f32.mrf.mxu0
    %v4759 = vadd.f32 %v4646, %v4758
    %v4760 = vpop.f32.mrf.mxu0
    %v4761 = vadd.f32 %v4648, %v4760
    %v4762 = vpop.f32.mrf.mxu0
    %v4763 = vadd.f32 %v4650, %v4762
    %v4764 = vpop.f32.mrf.mxu0
    %v4765 = vadd.f32 %v4652, %v4764
    %4766 = vmatprep.mubr.bf16.mxu0 %v661
    %4767 = vmatmul.mubr.bf16.gmra.mxu0 %v660
    %v4768 = vpop.f32.mrf.mxu0
    %v4769 = vadd.f32 %v4656, %v4768
    %v4770 = vpop.f32.mrf.mxu0
    %v4771 = vadd.f32 %v4658, %v4770
    %v4772 = vpop.f32.mrf.mxu0
    %v4773 = vadd.f32 %v4660, %v4772
    %v4774 = vpop.f32.mrf.mxu0
    %v4775 = vadd.f32 %v4662, %v4774
    %4776 = vdwg.mxu0
    %4777 = vmatprep.subr.bf16.mxu0 0
    %4778 = vmatpush1.bf16.msra.mxu0 0
    %4779 = vmatprep.subr.bf16.mxu0 0
    %4780 = vmatpush1.bf16.msra.mxu0 0
    %4781 = vmatprep.subr.bf16.mxu0 0
    %4782 = vmatpush1.bf16.msra.mxu0 0
    %4783 = vmatprep.subr.bf16.mxu0 0
    %4784 = vmatpush1.bf16.msra.mxu0 0
    %4785 = vmatprep.subr.bf16.mxu0 0
    %4786 = vmatpush1.bf16.msra.mxu0 0
    %4787 = vmatprep.subr.bf16.mxu0 0
    %4788 = vmatpush1.bf16.msra.mxu0 0
    %4789 = vmatprep.subr.bf16.mxu0 0
    %4790 = vmatpush1.bf16.msra.mxu0 0
    %4791 = vmatprep.subr.bf16.mxu0 %v2664
    %4792 = vmatpush1.bf16.msra.mxu0 %v2663
    %4793 = vmatprep.subr.bf16.mxu0 0
    %4794 = vmatpush2.bf16.msra.mxu0 0
    %4795 = vmatprep.subr.bf16.mxu0 0
    %4796 = vmatpush2.bf16.msra.mxu0 0
    %4797 = vmatprep.subr.bf16.mxu0 0
    %4798 = vmatpush2.bf16.msra.mxu0 0
    %4799 = vmatprep.subr.bf16.mxu0 0
    %4800 = vmatpush2.bf16.msra.mxu0 0
    %4801 = vmatprep.subr.bf16.mxu0 0
    %4802 = vmatpush2.bf16.msra.mxu0 0
    %4803 = vmatprep.subr.bf16.mxu0 0
    %4804 = vmatpush2.bf16.msra.mxu0 0
    %4805 = vmatprep.subr.bf16.mxu0 0
    %4806 = vmatpush2.bf16.msra.mxu0 0
    %4807 = vmatprep.subr.bf16.mxu0 0
    %4808 = vmatpush2.bf16.msra.mxu0 0
    %4809 = vmatprep.mubr.bf16.mxu0 0
    %4810 = vmatmul.mubr.bf16.gmra.mxu0 %v3059
    %v4811 = vpop.f32.mrf.mxu0
    %v4812 = vadd.f32 %v4699, %v4811
    %v4813 = vpop.f32.mrf.mxu0
    %v4814 = vadd.f32 %v4701, %v4813
    %v4815 = vpop.f32.mrf.mxu0
    %v4816 = vadd.f32 %v4703, %v4815
    %v4817 = vpop.f32.mrf.mxu0
    %v4818 = vadd.f32 %v4705, %v4817
    %4819 = vmatprep.mubr.bf16.mxu0 0
    %4820 = vmatmul.mubr.bf16.gmra.mxu0 %v3062
    %v4821 = vpop.f32.mrf.mxu0
    %v4822 = vadd.f32 %v4709, %v4821
    %v4823 = vpop.f32.mrf.mxu0
    %v4824 = vadd.f32 %v4711, %v4823
    %v4825 = vpop.f32.mrf.mxu0
    %v4826 = vadd.f32 %v4713, %v4825
    %v4827 = vpop.f32.mrf.mxu0
    %v4828 = vadd.f32 %v4715, %v4827
    %4829 = vmatprep.mubr.bf16.mxu0 0
    %4830 = vmatmul.mubr.bf16.gmra.mxu0 %v3065
    %v4831 = vpop.f32.mrf.mxu0
    %v4832 = vadd.f32 %v4719, %v4831
    %v4833 = vpop.f32.mrf.mxu0
    %v4834 = vadd.f32 %v4721, %v4833
    %v4835 = vpop.f32.mrf.mxu0
    %v4836 = vadd.f32 %v4723, %v4835
    %v4837 = vpop.f32.mrf.mxu0
    %v4838 = vadd.f32 %v4725, %v4837
    %4839 = vmatprep.mubr.bf16.mxu0 0
    %4840 = vmatmul.mubr.bf16.gmra.mxu0 %v3068
    %v4841 = vpop.f32.mrf.mxu0
    %v4842 = vadd.f32 %v4729, %v4841
    %v4843 = vpop.f32.mrf.mxu0
    %v4844 = vadd.f32 %v4731, %v4843
    %v4845 = vpop.f32.mrf.mxu0
    %v4846 = vadd.f32 %v4733, %v4845
    %v4847 = vpop.f32.mrf.mxu0
    %v4848 = vadd.f32 %v4735, %v4847
    %4849 = vmatprep.mubr.bf16.mxu0 0
    %4850 = vmatmul.mubr.bf16.gmra.mxu0 %v3071
    %v4851 = vpop.f32.mrf.mxu0
    %v4852 = vadd.f32 %v4739, %v4851
    %v4853 = vpop.f32.mrf.mxu0
    %v4854 = vadd.f32 %v4741, %v4853
    %v4855 = vpop.f32.mrf.mxu0
    %v4856 = vadd.f32 %v4743, %v4855
    %v4857 = vpop.f32.mrf.mxu0
    %v4858 = vadd.f32 %v4745, %v4857
    %4859 = vmatprep.mubr.bf16.mxu0 0
    %4860 = vmatmul.mubr.bf16.gmra.mxu0 %v3074
    %v4861 = vpop.f32.mrf.mxu0
    %v4862 = vadd.f32 %v4749, %v4861
    %v4863 = vpop.f32.mrf.mxu0
    %v4864 = vadd.f32 %v4751, %v4863
    %v4865 = vpop.f32.mrf.mxu0
    %v4866 = vadd.f32 %v4753, %v4865
    %v4867 = vpop.f32.mrf.mxu0
    %v4868 = vadd.f32 %v4755, %v4867
    %4869 = vmatprep.mubr.bf16.mxu0 0
    %4870 = vmatmul.mubr.bf16.gmra.mxu0 %v3077
    %v4871 = vpop.f32.mrf.mxu0
    %v4872 = vadd.f32 %v4759, %v4871
    %v4873 = vpop.f32.mrf.mxu0
    %v4874 = vadd.f32 %v4761, %v4873
    %v4875 = vpop.f32.mrf.mxu0
    %v4876 = vadd.f32 %v4763, %v4875
    %v4877 = vpop.f32.mrf.mxu0
    %v4878 = vadd.f32 %v4765, %v4877
    %4879 = vmatprep.mubr.bf16.mxu0 0
    %4880 = vmatmul.mubr.bf16.gmra.mxu0 %v3080
    %v4881 = vpop.f32.mrf.mxu0
    %v4882 = vadd.f32 %v4769, %v4881
    %v4883 = vpop.f32.mrf.mxu0
    %v4884 = vadd.f32 %v4771, %v4883
    %v4885 = vpop.f32.mrf.mxu0
    %v4886 = vadd.f32 %v4773, %v4885
    %v4887 = vpop.f32.mrf.mxu0
    %v4888 = vadd.f32 %v4775, %v4887
    %4889 = vdwg.mxu0
    %v4890 = vmax.f32 %v3456, 0.0
    %v4891 = vmax.f32 %v3458, 0.0
    %v4892 = vmax.f32 %v3908, 0.0
    %v4893 = vmax.f32 %v3910, 0.0
    %v4894 = vmax.f32 %v4360, 0.0
    %v4895 = vmax.f32 %v4362, 0.0
    %v4896 = vmax.f32 %v4812, 0.0
    %v4897 = vmax.f32 %v4814, 0.0
    %v4898 = vmax.f32 %v3460, 0.0
    %v4899 = vmax.f32 %v3462, 0.0
    %v4900 = vmax.f32 %v3912, 0.0
    %v4901 = vmax.f32 %v3914, 0.0
    %v4902 = vmax.f32 %v4364, 0.0
    %v4903 = vmax.f32 %v4366, 0.0
    %v4904 = vmax.f32 %v4816, 0.0
    %v4905 = vmax.f32 %v4818, 0.0
    %v4906 = vmax.f32 %v3466, 0.0
    %v4907 = vmax.f32 %v3468, 0.0
    %v4908 = vmax.f32 %v3918, 0.0
    %v4909 = vmax.f32 %v3920, 0.0
    %v4910 = vmax.f32 %v4370, 0.0
    %v4911 = vmax.f32 %v4372, 0.0
    %v4912 = vmax.f32 %v4822, 0.0
    %v4913 = vmax.f32 %v4824, 0.0
    %v4914 = vmax.f32 %v3470, 0.0
    %v4915 = vmax.f32 %v3472, 0.0
    %v4916 = vmax.f32 %v3922, 0.0
    %v4917 = vmax.f32 %v3924, 0.0
    %v4918 = vmax.f32 %v4374, 0.0
    %v4919 = vmax.f32 %v4376, 0.0
    %v4920 = vmax.f32 %v4826, 0.0
    %v4921 = vmax.f32 %v4828, 0.0
    %v4922 = vmax.f32 %v3476, 0.0
    %v4923 = vmax.f32 %v3478, 0.0
    %v4924 = vmax.f32 %v3928, 0.0
    %v4925 = vmax.f32 %v3930, 0.0
    %v4926 = vmax.f32 %v4380, 0.0
    %v4927 = vmax.f32 %v4382, 0.0
    %v4928 = vmax.f32 %v4832, 0.0
    %v4929 = vmax.f32 %v4834, 0.0
    %v4930 = vmax.f32 %v3480, 0.0
    %v4931 = vmax.f32 %v3482, 0.0
    %v4932 = vmax.f32 %v3932, 0.0
    %v4933 = vmax.f32 %v3934, 0.0
    %v4934 = vmax.f32 %v4384, 0.0
    %v4935 = vmax.f32 %v4386, 0.0
    %v4936 = vmax.f32 %v4836, 0.0
    %v4937 = vmax.f32 %v4838, 0.0
    %v4938 = vmax.f32 %v3486, 0.0
    %v4939 = vmax.f32 %v3488, 0.0
    %v4940 = vmax.f32 %v3938, 0.0
    %v4941 = vmax.f32 %v3940, 0.0
    %v4942 = vmax.f32 %v4390, 0.0
    %v4943 = vmax.f32 %v4392, 0.0
    %v4944 = vmax.f32 %v4842, 0.0
    %v4945 = vmax.f32 %v4844, 0.0
    %v4946 = vmax.f32 %v3490, 0.0
    %v4947 = vmax.f32 %v3492, 0.0
    %v4948 = vmax.f32 %v3942, 0.0
    %v4949 = vmax.f32 %v3944, 0.0
    %v4950 = vmax.f32 %v4394, 0.0
    %v4951 = vmax.f32 %v4396, 0.0
    %v4952 = vmax.f32 %v4846, 0.0
    %v4953 = vmax.f32 %v4848, 0.0
    %v4954 = vmax.f32 %v3496, 0.0
    %v4955 = vmax.f32 %v3498, 0.0
    %v4956 = vmax.f32 %v3948, 0.0
    %v4957 = vmax.f32 %v3950, 0.0
    %v4958 = vmax.f32 %v4400, 0.0
    %v4959 = vmax.f32 %v4402, 0.0
    %v4960 = vmax.f32 %v4852, 0.0
    %v4961 = vmax.f32 %v4854, 0.0
    %v4962 = vmax.f32 %v3500, 0.0
    %v4963 = vmax.f32 %v3502, 0.0
    %v4964 = vmax.f32 %v3952, 0.0
    %v4965 = vmax.f32 %v3954, 0.0
    %v4966 = vmax.f32 %v4404, 0.0
    %v4967 = vmax.f32 %v4406, 0.0
    %v4968 = vmax.f32 %v4856, 0.0
    %v4969 = vmax.f32 %v4858, 0.0
    %v4970 = vmax.f32 %v3506, 0.0
    %v4971 = vmax.f32 %v3508, 0.0
    %v4972 = vmax.f32 %v3958, 0.0
    %v4973 = vmax.f32 %v3960, 0.0
    %v4974 = vmax.f32 %v4410, 0.0
    %v4975 = vmax.f32 %v4412, 0.0
    %v4976 = vmax.f32 %v4862, 0.0
    %v4977 = vmax.f32 %v4864, 0.0
    %v4978 = vmax.f32 %v3510, 0.0
    %v4979 = vmax.f32 %v3512, 0.0
    %v4980 = vmax.f32 %v3962, 0.0
    %v4981 = vmax.f32 %v3964, 0.0
    %v4982 = vmax.f32 %v4414, 0.0
    %v4983 = vmax.f32 %v4416, 0.0
    %v4984 = vmax.f32 %v4866, 0.0
    %v4985 = vmax.f32 %v4868, 0.0
    %v4986 = vmax.f32 %v3516, 0.0
    %v4987 = vmax.f32 %v3518, 0.0
    %v4988 = vmax.f32 %v3968, 0.0
    %v4989 = vmax.f32 %v3970, 0.0
    %v4990 = vmax.f32 %v4420, 0.0
    %v4991 = vmax.f32 %v4422, 0.0
    %v4992 = vmax.f32 %v4872, 0.0
    %v4993 = vmax.f32 %v4874, 0.0
    %v4994 = vmax.f32 %v3520, 0.0
    %v4995 = vmax.f32 %v3522, 0.0
    %v4996 = vmax.f32 %v3972, 0.0
    %v4997 = vmax.f32 %v3974, 0.0
    %v4998 = vmax.f32 %v4424, 0.0
    %v4999 = vmax.f32 %v4426, 0.0
    %v5000 = vmax.f32 %v4876, 0.0
    %v5001 = vmax.f32 %v4878, 0.0
    %v5002 = vmax.f32 %v3526, 0.0
    %v5003 = vmax.f32 %v3528, 0.0
    %v5004 = vmax.f32 %v3978, 0.0
    %v5005 = vmax.f32 %v3980, 0.0
    %v5006 = vmax.f32 %v4430, 0.0
    %v5007 = vmax.f32 %v4432, 0.0
    %v5008 = vmax.f32 %v4882, 0.0
    %v5009 = vmax.f32 %v4884, 0.0
    %v5010 = vmax.f32 %v3530, 0.0
    %v5011 = vmax.f32 %v3532, 0.0
    %v5012 = vmax.f32 %v3982, 0.0
    %v5013 = vmax.f32 %v3984, 0.0
    %v5014 = vmax.f32 %v4434, 0.0
    %v5015 = vmax.f32 %v4436, 0.0
    %v5016 = vmax.f32 %v4886, 0.0
    %v5017 = vmax.f32 %v4888, 0.0
    %v5018 = vpack.c.bf16 %v4898, %v4890
    %v5019 = vpack.c.bf16 %v4899, %v4891
    %v5020 = vpack.c.bf16 %v4900, %v4892
    %v5021 = vpack.c.bf16 %v4901, %v4893
    %v5022 = vpack.c.bf16 %v4902, %v4894
    %v5023 = vpack.c.bf16 %v4903, %v4895
    %v5024 = vpack.c.bf16 %v4904, %v4896
    %v5025 = vpack.c.bf16 %v4905, %v4897
    %v5026 = vpack.c.bf16 %v4914, %v4906
    %v5027 = vpack.c.bf16 %v4915, %v4907
    %v5028 = vpack.c.bf16 %v4916, %v4908
    %v5029 = vpack.c.bf16 %v4917, %v4909
    %v5030 = vpack.c.bf16 %v4918, %v4910
    %v5031 = vpack.c.bf16 %v4919, %v4911
    %v5032 = vpack.c.bf16 %v4920, %v4912
    %v5033 = vpack.c.bf16 %v4921, %v4913
    %v5034 = vpack.c.bf16 %v4930, %v4922
    %v5035 = vpack.c.bf16 %v4931, %v4923
    %v5036 = vpack.c.bf16 %v4932, %v4924
    %v5037 = vpack.c.bf16 %v4933, %v4925
    %v5038 = vpack.c.bf16 %v4934, %v4926
    %v5039 = vpack.c.bf16 %v4935, %v4927
    %v5040 = vpack.c.bf16 %v4936, %v4928
    %v5041 = vpack.c.bf16 %v4937, %v4929
    %v5042 = vpack.c.bf16 %v4946, %v4938
    %v5043 = vpack.c.bf16 %v4947, %v4939
    %v5044 = vpack.c.bf16 %v4948, %v4940
    %v5045 = vpack.c.bf16 %v4949, %v4941
    %v5046 = vpack.c.bf16 %v4950, %v4942
    %v5047 = vpack.c.bf16 %v4951, %v4943
    %v5048 = vpack.c.bf16 %v4952, %v4944
    %v5049 = vpack.c.bf16 %v4953, %v4945
    %v5050 = vpack.c.bf16 %v4962, %v4954
    %v5051 = vpack.c.bf16 %v4963, %v4955
    %v5052 = vpack.c.bf16 %v4964, %v4956
    %v5053 = vpack.c.bf16 %v4965, %v4957
    %v5054 = vpack.c.bf16 %v4966, %v4958
    %v5055 = vpack.c.bf16 %v4967, %v4959
    %v5056 = vpack.c.bf16 %v4968, %v4960
    %v5057 = vpack.c.bf16 %v4969, %v4961
    %v5058 = vpack.c.bf16 %v4978, %v4970
    %v5059 = vpack.c.bf16 %v4979, %v4971
    %v5060 = vpack.c.bf16 %v4980, %v4972
    %v5061 = vpack.c.bf16 %v4981, %v4973
    %v5062 = vpack.c.bf16 %v4982, %v4974
    %v5063 = vpack.c.bf16 %v4983, %v4975
    %v5064 = vpack.c.bf16 %v4984, %v4976
    %v5065 = vpack.c.bf16 %v4985, %v4977
    %v5066 = vpack.c.bf16 %v4994, %v4986
    %v5067 = vpack.c.bf16 %v4995, %v4987
    %v5068 = vpack.c.bf16 %v4996, %v4988
    %v5069 = vpack.c.bf16 %v4997, %v4989
    %v5070 = vpack.c.bf16 %v4998, %v4990
    %v5071 = vpack.c.bf16 %v4999, %v4991
    %v5072 = vpack.c.bf16 %v5000, %v4992
    %v5073 = vpack.c.bf16 %v5001, %v4993
    %v5074 = vpack.c.bf16 %v5010, %v5002
    %v5075 = vpack.c.bf16 %v5011, %v5003
    %v5076 = vpack.c.bf16 %v5012, %v5004
    %v5077 = vpack.c.bf16 %v5013, %v5005
    %v5078 = vpack.c.bf16 %v5014, %v5006
    %v5079 = vpack.c.bf16 %v5015, %v5007
    %v5080 = vpack.c.bf16 %v5016, %v5008
    %v5081 = vpack.c.bf16 %v5017, %v5009
    %v5082 = vld [vmem:[#allocation10] sm:$0xff]
    %v5083 = vld [vmem:[#allocation10 + $0x8] sm:$0xff]
    %v5084 = vld [vmem:[#allocation10 + $0x10] sm:$0xff]
    %v5085 = vld [vmem:[#allocation10 + $0x18] sm:$0xff]
    %v5086 = vld [vmem:[#allocation10 + $0x20] sm:$0xff]
    %v5087 = vld [vmem:[#allocation10 + $0x28] sm:$0xff]
    %v5088 = vld [vmem:[#allocation10 + $0x30] sm:$0xff]
    %v5089 = vld [vmem:[#allocation10 + $0x38] sm:$0xff]
    %v5090 = vld [vmem:[#allocation10 + $0x40] sm:$0xff]
    %v5091 = vld [vmem:[#allocation10 + $0x48] sm:$0xff]
    %v5092 = vld [vmem:[#allocation10 + $0x50] sm:$0xff]
    %v5093 = vld [vmem:[#allocation10 + $0x58] sm:$0xff]
    %v5094 = vld [vmem:[#allocation10 + $0x60] sm:$0xff]
    %v5095 = vld [vmem:[#allocation10 + $0x68] sm:$0xff]
    %v5096 = vld [vmem:[#allocation10 + $0x70] sm:$0xff]
    %v5097 = vld [vmem:[#allocation10 + $0x78] sm:$0xff]
    %v5098 = vld [vmem:[#allocation10 + $0x80] sm:$0xff]
    %v5099 = vld [vmem:[#allocation10 + $0x88] sm:$0xff]
    %v5100 = vld [vmem:[#allocation10 + $0x90] sm:$0xff]
    %v5101 = vld [vmem:[#allocation10 + $0x98] sm:$0xff]
    %v5102 = vld [vmem:[#allocation10 + $0xa0] sm:$0xff]
    %v5103 = vld [vmem:[#allocation10 + $0xa8] sm:$0xff]
    %v5104 = vld [vmem:[#allocation10 + $0xb0] sm:$0xff]
    %v5105 = vld [vmem:[#allocation10 + $0xb8] sm:$0xff]
    %v5106 = vld [vmem:[#allocation10 + $0xc0] sm:$0xff]
    %v5107 = vld [vmem:[#allocation10 + $0xc8] sm:$0xff]
    %v5108 = vld [vmem:[#allocation10 + $0xd0] sm:$0xff]
    %v5109 = vld [vmem:[#allocation10 + $0xd8] sm:$0xff]
    %v5110 = vld [vmem:[#allocation10 + $0xe0] sm:$0xff]
    %v5111 = vld [vmem:[#allocation10 + $0xe8] sm:$0xff]
    %v5112 = vld [vmem:[#allocation10 + $0xf0] sm:$0xff]
    %v5113 = vld [vmem:[#allocation10 + $0xf8] sm:$0xff]
    %v5114 = vld [vmem:[#allocation10 + $0x100] sm:$0xff]
    %v5115 = vld [vmem:[#allocation10 + $0x108] sm:$0xff]
    %v5116 = vld [vmem:[#allocation10 + $0x110] sm:$0xff]
    %v5117 = vld [vmem:[#allocation10 + $0x118] sm:$0xff]
    %v5118 = vld [vmem:[#allocation10 + $0x120] sm:$0xff]
    %v5119 = vld [vmem:[#allocation10 + $0x128] sm:$0xff]
    %v5120 = vld [vmem:[#allocation10 + $0x130] sm:$0xff]
    %v5121 = vld [vmem:[#allocation10 + $0x138] sm:$0xff]
    %v5122 = vld [vmem:[#allocation10 + $0x140] sm:$0xff]
    %v5123 = vld [vmem:[#allocation10 + $0x148] sm:$0xff]
    %v5124 = vld [vmem:[#allocation10 + $0x150] sm:$0xff]
    %v5125 = vld [vmem:[#allocation10 + $0x158] sm:$0xff]
    %v5126 = vld [vmem:[#allocation10 + $0x160] sm:$0xff]
    %v5127 = vld [vmem:[#allocation10 + $0x168] sm:$0xff]
    %v5128 = vld [vmem:[#allocation10 + $0x170] sm:$0xff]
    %v5129 = vld [vmem:[#allocation10 + $0x178] sm:$0xff]
    %v5130 = vld [vmem:[#allocation10 + $0x180] sm:$0xff]
    %v5131 = vld [vmem:[#allocation10 + $0x188] sm:$0xff]
    %v5132 = vld [vmem:[#allocation10 + $0x190] sm:$0xff]
    %v5133 = vld [vmem:[#allocation10 + $0x198] sm:$0xff]
    %v5134 = vld [vmem:[#allocation10 + $0x1a0] sm:$0xff]
    %v5135 = vld [vmem:[#allocation10 + $0x1a8] sm:$0xff]
    %v5136 = vld [vmem:[#allocation10 + $0x1b0] sm:$0xff]
    %v5137 = vld [vmem:[#allocation10 + $0x1b8] sm:$0xff]
    %v5138 = vld [vmem:[#allocation10 + $0x1c0] sm:$0xff]
    %v5139 = vld [vmem:[#allocation10 + $0x1c8] sm:$0xff]
    %v5140 = vld [vmem:[#allocation10 + $0x1d0] sm:$0xff]
    %v5141 = vld [vmem:[#allocation10 + $0x1d8] sm:$0xff]
    %v5142 = vld [vmem:[#allocation10 + $0x1e0] sm:$0xff]
    %v5143 = vld [vmem:[#allocation10 + $0x1e8] sm:$0xff]
    %v5144 = vld [vmem:[#allocation10 + $0x1f0] sm:$0xff]
    %v5145 = vld [vmem:[#allocation10 + $0x1f8] sm:$0xff]
    %v5146 = vld [vmem:[#allocation10 + $0x200] sm:$0xff]
    %v5147 = vld [vmem:[#allocation10 + $0x208] sm:$0xff]
    %v5148 = vld [vmem:[#allocation10 + $0x210] sm:$0xff]
    %v5149 = vld [vmem:[#allocation10 + $0x218] sm:$0xff]
    %v5150 = vld [vmem:[#allocation10 + $0x220] sm:$0xff]
    %v5151 = vld [vmem:[#allocation10 + $0x228] sm:$0xff]
    %v5152 = vld [vmem:[#allocation10 + $0x230] sm:$0xff]
    %v5153 = vld [vmem:[#allocation10 + $0x238] sm:$0xff]
    %v5154 = vld [vmem:[#allocation10 + $0x240] sm:$0xff]
    %v5155 = vld [vmem:[#allocation10 + $0x248] sm:$0xff]
    %v5156 = vld [vmem:[#allocation10 + $0x250] sm:$0xff]
    %v5157 = vld [vmem:[#allocation10 + $0x258] sm:$0xff]
    %v5158 = vld [vmem:[#allocation10 + $0x260] sm:$0xff]
    %v5159 = vld [vmem:[#allocation10 + $0x268] sm:$0xff]
    %v5160 = vld [vmem:[#allocation10 + $0x270] sm:$0xff]
    %v5161 = vld [vmem:[#allocation10 + $0x278] sm:$0xff]
    %v5162 = vld [vmem:[#allocation10 + $0x280] sm:$0xff]
    %v5163 = vld [vmem:[#allocation10 + $0x288] sm:$0xff]
    %v5164 = vld [vmem:[#allocation10 + $0x290] sm:$0xff]
    %v5165 = vld [vmem:[#allocation10 + $0x298] sm:$0xff]
    %v5166 = vld [vmem:[#allocation10 + $0x2a0] sm:$0xff]
    %v5167 = vld [vmem:[#allocation10 + $0x2a8] sm:$0xff]
    %v5168 = vld [vmem:[#allocation10 + $0x2b0] sm:$0xff]
    %v5169 = vld [vmem:[#allocation10 + $0x2b8] sm:$0xff]
    %v5170 = vld [vmem:[#allocation10 + $0x2c0] sm:$0xff]
    %v5171 = vld [vmem:[#allocation10 + $0x2c8] sm:$0xff]
    %v5172 = vld [vmem:[#allocation10 + $0x2d0] sm:$0xff]
    %v5173 = vld [vmem:[#allocation10 + $0x2d8] sm:$0xff]
    %v5174 = vld [vmem:[#allocation10 + $0x2e0] sm:$0xff]
    %v5175 = vld [vmem:[#allocation10 + $0x2e8] sm:$0xff]
    %v5176 = vld [vmem:[#allocation10 + $0x2f0] sm:$0xff]
    %v5177 = vld [vmem:[#allocation10 + $0x2f8] sm:$0xff]
    %v5178 = vld [vmem:[#allocation10 + $0x300] sm:$0xff]
    %v5179 = vld [vmem:[#allocation10 + $0x308] sm:$0xff]
    %v5180 = vld [vmem:[#allocation10 + $0x310] sm:$0xff]
    %v5181 = vld [vmem:[#allocation10 + $0x318] sm:$0xff]
    %v5182 = vld [vmem:[#allocation10 + $0x320] sm:$0xff]
    %v5183 = vld [vmem:[#allocation10 + $0x328] sm:$0xff]
    %v5184 = vld [vmem:[#allocation10 + $0x330] sm:$0xff]
    %v5185 = vld [vmem:[#allocation10 + $0x338] sm:$0xff]
    %v5186 = vld [vmem:[#allocation10 + $0x340] sm:$0xff]
    %v5187 = vld [vmem:[#allocation10 + $0x348] sm:$0xff]
    %v5188 = vld [vmem:[#allocation10 + $0x350] sm:$0xff]
    %v5189 = vld [vmem:[#allocation10 + $0x358] sm:$0xff]
    %v5190 = vld [vmem:[#allocation10 + $0x360] sm:$0xff]
    %v5191 = vld [vmem:[#allocation10 + $0x368] sm:$0xff]
    %v5192 = vld [vmem:[#allocation10 + $0x370] sm:$0xff]
    %v5193 = vld [vmem:[#allocation10 + $0x378] sm:$0xff]
    %v5194 = vld [vmem:[#allocation10 + $0x380] sm:$0xff]
    %v5195 = vld [vmem:[#allocation10 + $0x388] sm:$0xff]
    %v5196 = vld [vmem:[#allocation10 + $0x390] sm:$0xff]
    %v5197 = vld [vmem:[#allocation10 + $0x398] sm:$0xff]
    %v5198 = vld [vmem:[#allocation10 + $0x3a0] sm:$0xff]
    %v5199 = vld [vmem:[#allocation10 + $0x3a8] sm:$0xff]
    %v5200 = vld [vmem:[#allocation10 + $0x3b0] sm:$0xff]
    %v5201 = vld [vmem:[#allocation10 + $0x3b8] sm:$0xff]
    %v5202 = vld [vmem:[#allocation10 + $0x3c0] sm:$0xff]
    %v5203 = vld [vmem:[#allocation10 + $0x3c8] sm:$0xff]
    %v5204 = vld [vmem:[#allocation10 + $0x3d0] sm:$0xff]
    %v5205 = vld [vmem:[#allocation10 + $0x3d8] sm:$0xff]
    %v5206 = vld [vmem:[#allocation10 + $0x3e0] sm:$0xff]
    %v5207 = vld [vmem:[#allocation10 + $0x3e8] sm:$0xff]
    %v5208 = vld [vmem:[#allocation10 + $0x3f0] sm:$0xff]
    %v5209 = vld [vmem:[#allocation10 + $0x3f8] sm:$0xff]
    %v5210 = vld [vmem:[#allocation10 + $0x400] sm:$0xff]
    %v5211 = vld [vmem:[#allocation10 + $0x408] sm:$0xff]
    %v5212 = vld [vmem:[#allocation10 + $0x410] sm:$0xff]
    %v5213 = vld [vmem:[#allocation10 + $0x418] sm:$0xff]
    %v5214 = vld [vmem:[#allocation10 + $0x420] sm:$0xff]
    %v5215 = vld [vmem:[#allocation10 + $0x428] sm:$0xff]
    %v5216 = vld [vmem:[#allocation10 + $0x430] sm:$0xff]
    %v5217 = vld [vmem:[#allocation10 + $0x438] sm:$0xff]
    %v5218 = vld [vmem:[#allocation10 + $0x440] sm:$0xff]
    %v5219 = vld [vmem:[#allocation10 + $0x448] sm:$0xff]
    %v5220 = vld [vmem:[#allocation10 + $0x450] sm:$0xff]
    %v5221 = vld [vmem:[#allocation10 + $0x458] sm:$0xff]
    %v5222 = vld [vmem:[#allocation10 + $0x460] sm:$0xff]
    %v5223 = vld [vmem:[#allocation10 + $0x468] sm:$0xff]
    %v5224 = vld [vmem:[#allocation10 + $0x470] sm:$0xff]
    %v5225 = vld [vmem:[#allocation10 + $0x478] sm:$0xff]
    %v5226 = vld [vmem:[#allocation10 + $0x480] sm:$0xff]
    %v5227 = vld [vmem:[#allocation10 + $0x488] sm:$0xff]
    %v5228 = vld [vmem:[#allocation10 + $0x490] sm:$0xff]
    %v5229 = vld [vmem:[#allocation10 + $0x498] sm:$0xff]
    %v5230 = vld [vmem:[#allocation10 + $0x4a0] sm:$0xff]
    %v5231 = vld [vmem:[#allocation10 + $0x4a8] sm:$0xff]
    %v5232 = vld [vmem:[#allocation10 + $0x4b0] sm:$0xff]
    %v5233 = vld [vmem:[#allocation10 + $0x4b8] sm:$0xff]
    %v5234 = vld [vmem:[#allocation10 + $0x4c0] sm:$0xff]
    %v5235 = vld [vmem:[#allocation10 + $0x4c8] sm:$0xff]
    %v5236 = vld [vmem:[#allocation10 + $0x4d0] sm:$0xff]
    %v5237 = vld [vmem:[#allocation10 + $0x4d8] sm:$0xff]
    %v5238 = vld [vmem:[#allocation10 + $0x4e0] sm:$0xff]
    %v5239 = vld [vmem:[#allocation10 + $0x4e8] sm:$0xff]
    %v5240 = vld [vmem:[#allocation10 + $0x4f0] sm:$0xff]
    %v5241 = vld [vmem:[#allocation10 + $0x4f8] sm:$0xff]
    %v5242 = vld [vmem:[#allocation10 + $0x500] sm:$0xff]
    %v5243 = vld [vmem:[#allocation10 + $0x508] sm:$0xff]
    %v5244 = vld [vmem:[#allocation10 + $0x510] sm:$0xff]
    %v5245 = vld [vmem:[#allocation10 + $0x518] sm:$0xff]
    %v5246 = vld [vmem:[#allocation10 + $0x520] sm:$0xff]
    %v5247 = vld [vmem:[#allocation10 + $0x528] sm:$0xff]
    %v5248 = vld [vmem:[#allocation10 + $0x530] sm:$0xff]
    %v5249 = vld [vmem:[#allocation10 + $0x538] sm:$0xff]
    %v5250 = vld [vmem:[#allocation10 + $0x540] sm:$0xff]
    %v5251 = vld [vmem:[#allocation10 + $0x548] sm:$0xff]
    %v5252 = vld [vmem:[#allocation10 + $0x550] sm:$0xff]
    %v5253 = vld [vmem:[#allocation10 + $0x558] sm:$0xff]
    %v5254 = vld [vmem:[#allocation10 + $0x560] sm:$0xff]
    %v5255 = vld [vmem:[#allocation10 + $0x568] sm:$0xff]
    %v5256 = vld [vmem:[#allocation10 + $0x570] sm:$0xff]
    %v5257 = vld [vmem:[#allocation10 + $0x578] sm:$0xff]
    %v5258 = vld [vmem:[#allocation10 + $0x580] sm:$0xff]
    %v5259 = vld [vmem:[#allocation10 + $0x588] sm:$0xff]
    %v5260 = vld [vmem:[#allocation10 + $0x590] sm:$0xff]
    %v5261 = vld [vmem:[#allocation10 + $0x598] sm:$0xff]
    %v5262 = vld [vmem:[#allocation10 + $0x5a0] sm:$0xff]
    %v5263 = vld [vmem:[#allocation10 + $0x5a8] sm:$0xff]
    %v5264 = vld [vmem:[#allocation10 + $0x5b0] sm:$0xff]
    %v5265 = vld [vmem:[#allocation10 + $0x5b8] sm:$0xff]
    %v5266 = vld [vmem:[#allocation10 + $0x5c0] sm:$0xff]
    %v5267 = vld [vmem:[#allocation10 + $0x5c8] sm:$0xff]
    %v5268 = vld [vmem:[#allocation10 + $0x5d0] sm:$0xff]
    %v5269 = vld [vmem:[#allocation10 + $0x5d8] sm:$0xff]
    %v5270 = vld [vmem:[#allocation10 + $0x5e0] sm:$0xff]
    %v5271 = vld [vmem:[#allocation10 + $0x5e8] sm:$0xff]
    %v5272 = vld [vmem:[#allocation10 + $0x5f0] sm:$0xff]
    %v5273 = vld [vmem:[#allocation10 + $0x5f8] sm:$0xff]
    %v5274 = vld [vmem:[#allocation10 + $0x600] sm:$0xff]
    %v5275 = vld [vmem:[#allocation10 + $0x608] sm:$0xff]
    %v5276 = vld [vmem:[#allocation10 + $0x610] sm:$0xff]
    %v5277 = vld [vmem:[#allocation10 + $0x618] sm:$0xff]
    %v5278 = vld [vmem:[#allocation10 + $0x620] sm:$0xff]
    %v5279 = vld [vmem:[#allocation10 + $0x628] sm:$0xff]
    %v5280 = vld [vmem:[#allocation10 + $0x630] sm:$0xff]
    %v5281 = vld [vmem:[#allocation10 + $0x638] sm:$0xff]
    %v5282 = vld [vmem:[#allocation10 + $0x640] sm:$0xff]
    %v5283 = vld [vmem:[#allocation10 + $0x648] sm:$0xff]
    %v5284 = vld [vmem:[#allocation10 + $0x650] sm:$0xff]
    %v5285 = vld [vmem:[#allocation10 + $0x658] sm:$0xff]
    %v5286 = vld [vmem:[#allocation10 + $0x660] sm:$0xff]
    %v5287 = vld [vmem:[#allocation10 + $0x668] sm:$0xff]
    %v5288 = vld [vmem:[#allocation10 + $0x670] sm:$0xff]
    %v5289 = vld [vmem:[#allocation10 + $0x678] sm:$0xff]
    %v5290 = vld [vmem:[#allocation10 + $0x680] sm:$0xff]
    %v5291 = vld [vmem:[#allocation10 + $0x688] sm:$0xff]
    %v5292 = vld [vmem:[#allocation10 + $0x690] sm:$0xff]
    %v5293 = vld [vmem:[#allocation10 + $0x698] sm:$0xff]
    %v5294 = vld [vmem:[#allocation10 + $0x6a0] sm:$0xff]
    %v5295 = vld [vmem:[#allocation10 + $0x6a8] sm:$0xff]
    %v5296 = vld [vmem:[#allocation10 + $0x6b0] sm:$0xff]
    %v5297 = vld [vmem:[#allocation10 + $0x6b8] sm:$0xff]
    %v5298 = vld [vmem:[#allocation10 + $0x6c0] sm:$0xff]
    %v5299 = vld [vmem:[#allocation10 + $0x6c8] sm:$0xff]
    %v5300 = vld [vmem:[#allocation10 + $0x6d0] sm:$0xff]
    %v5301 = vld [vmem:[#allocation10 + $0x6d8] sm:$0xff]
    %v5302 = vld [vmem:[#allocation10 + $0x6e0] sm:$0xff]
    %v5303 = vld [vmem:[#allocation10 + $0x6e8] sm:$0xff]
    %v5304 = vld [vmem:[#allocation10 + $0x6f0] sm:$0xff]
    %v5305 = vld [vmem:[#allocation10 + $0x6f8] sm:$0xff]
    %v5306 = vld [vmem:[#allocation10 + $0x700] sm:$0xff]
    %v5307 = vld [vmem:[#allocation10 + $0x708] sm:$0xff]
    %v5308 = vld [vmem:[#allocation10 + $0x710] sm:$0xff]
    %v5309 = vld [vmem:[#allocation10 + $0x718] sm:$0xff]
    %v5310 = vld [vmem:[#allocation10 + $0x720] sm:$0xff]
    %v5311 = vld [vmem:[#allocation10 + $0x728] sm:$0xff]
    %v5312 = vld [vmem:[#allocation10 + $0x730] sm:$0xff]
    %v5313 = vld [vmem:[#allocation10 + $0x738] sm:$0xff]
    %v5314 = vld [vmem:[#allocation10 + $0x740] sm:$0xff]
    %v5315 = vld [vmem:[#allocation10 + $0x748] sm:$0xff]
    %v5316 = vld [vmem:[#allocation10 + $0x750] sm:$0xff]
    %v5317 = vld [vmem:[#allocation10 + $0x758] sm:$0xff]
    %v5318 = vld [vmem:[#allocation10 + $0x760] sm:$0xff]
    %v5319 = vld [vmem:[#allocation10 + $0x768] sm:$0xff]
    %v5320 = vld [vmem:[#allocation10 + $0x770] sm:$0xff]
    %v5321 = vld [vmem:[#allocation10 + $0x778] sm:$0xff]
    %v5322 = vld [vmem:[#allocation10 + $0x780] sm:$0xff]
    %v5323 = vld [vmem:[#allocation10 + $0x788] sm:$0xff]
    %v5324 = vld [vmem:[#allocation10 + $0x790] sm:$0xff]
    %v5325 = vld [vmem:[#allocation10 + $0x798] sm:$0xff]
    %v5326 = vld [vmem:[#allocation10 + $0x7a0] sm:$0xff]
    %v5327 = vld [vmem:[#allocation10 + $0x7a8] sm:$0xff]
    %v5328 = vld [vmem:[#allocation10 + $0x7b0] sm:$0xff]
    %v5329 = vld [vmem:[#allocation10 + $0x7b8] sm:$0xff]
    %v5330 = vld [vmem:[#allocation10 + $0x7c0] sm:$0xff]
    %v5331 = vld [vmem:[#allocation10 + $0x7c8] sm:$0xff]
    %v5332 = vld [vmem:[#allocation10 + $0x7d0] sm:$0xff]
    %v5333 = vld [vmem:[#allocation10 + $0x7d8] sm:$0xff]
    %v5334 = vld [vmem:[#allocation10 + $0x7e0] sm:$0xff]
    %v5335 = vld [vmem:[#allocation10 + $0x7e8] sm:$0xff]
    %v5336 = vld [vmem:[#allocation10 + $0x7f0] sm:$0xff]
    %v5337 = vld [vmem:[#allocation10 + $0x7f8] sm:$0xff]
    %v5338 = vld [vmem:[#allocation11] sm:$0xf]
    %v5340 = vlaneseq
    %v5341 = vshrl.u32 %v5340, 7
    %v5342 = vsub.s32 0, %v5341
    %v5343 = vrot.slane %v5338, %v5342
    %v5344 = vlaneseq
    %v5345 = vshrl.u32 %v5344, 7
    %v5346 = vsub.s32 1, %v5345
    %v5347 = vrot.slane %v5338, %v5346
    %v5348 = vlaneseq
    %v5349 = vshrl.u32 %v5348, 7
    %v5350 = vsub.s32 2, %v5349
    %v5351 = vrot.slane %v5338, %v5350
    %v5352 = vlaneseq
    %v5353 = vshrl.u32 %v5352, 7
    %v5354 = vsub.s32 3, %v5353
    %v5355 = vrot.slane %v5338, %v5354
    %v5616 = vunpack.c.l.b16 %v5082
    %v5617 = vunpack.c.h.b16 %v5082
    %v5618 = vunpack.c.l.b16 %v5083
    %v5619 = vunpack.c.h.b16 %v5083
    %v5620 = vunpack.c.l.b16 %v5084
    %v5621 = vunpack.c.h.b16 %v5084
    %v5622 = vunpack.c.l.b16 %v5085
    %v5623 = vunpack.c.h.b16 %v5085
    %v5624 = vunpack.c.l.b16 %v5086
    %v5625 = vunpack.c.h.b16 %v5086
    %v5626 = vunpack.c.l.b16 %v5087
    %v5627 = vunpack.c.h.b16 %v5087
    %v5628 = vunpack.c.l.b16 %v5088
    %v5629 = vunpack.c.h.b16 %v5088
    %v5630 = vunpack.c.l.b16 %v5089
    %v5631 = vunpack.c.h.b16 %v5089
    %v5632 = vunpack.c.l.b16 %v5090
    %v5633 = vunpack.c.h.b16 %v5090
    %v5634 = vunpack.c.l.b16 %v5091
    %v5635 = vunpack.c.h.b16 %v5091
    %v5636 = vunpack.c.l.b16 %v5092
    %v5637 = vunpack.c.h.b16 %v5092
    %v5638 = vunpack.c.l.b16 %v5093
    %v5639 = vunpack.c.h.b16 %v5093
    %v5640 = vunpack.c.l.b16 %v5094
    %v5641 = vunpack.c.h.b16 %v5094
    %v5642 = vunpack.c.l.b16 %v5095
    %v5643 = vunpack.c.h.b16 %v5095
    %v5644 = vunpack.c.l.b16 %v5096
    %v5645 = vunpack.c.h.b16 %v5096
    %v5646 = vunpack.c.l.b16 %v5097
    %v5647 = vunpack.c.h.b16 %v5097
    %v5648 = vunpack.c.l.b16 %v5098
    %v5649 = vunpack.c.h.b16 %v5098
    %v5650 = vunpack.c.l.b16 %v5099
    %v5651 = vunpack.c.h.b16 %v5099
    %v5652 = vunpack.c.l.b16 %v5100
    %v5653 = vunpack.c.h.b16 %v5100
    %v5654 = vunpack.c.l.b16 %v5101
    %v5655 = vunpack.c.h.b16 %v5101
    %v5656 = vunpack.c.l.b16 %v5102
    %v5657 = vunpack.c.h.b16 %v5102
    %v5658 = vunpack.c.l.b16 %v5103
    %v5659 = vunpack.c.h.b16 %v5103
    %v5660 = vunpack.c.l.b16 %v5104
    %v5661 = vunpack.c.h.b16 %v5104
    %v5662 = vunpack.c.l.b16 %v5105
    %v5663 = vunpack.c.h.b16 %v5105
    %v5664 = vunpack.c.l.b16 %v5106
    %v5665 = vunpack.c.h.b16 %v5106
    %v5666 = vunpack.c.l.b16 %v5107
    %v5667 = vunpack.c.h.b16 %v5107
    %v5668 = vunpack.c.l.b16 %v5108
    %v5669 = vunpack.c.h.b16 %v5108
    %v5670 = vunpack.c.l.b16 %v5109
    %v5671 = vunpack.c.h.b16 %v5109
    %v5672 = vunpack.c.l.b16 %v5110
    %v5673 = vunpack.c.h.b16 %v5110
    %v5674 = vunpack.c.l.b16 %v5111
    %v5675 = vunpack.c.h.b16 %v5111
    %v5676 = vunpack.c.l.b16 %v5112
    %v5677 = vunpack.c.h.b16 %v5112
    %v5678 = vunpack.c.l.b16 %v5113
    %v5679 = vunpack.c.h.b16 %v5113
    %v5680 = vunpack.c.l.b16 %v5114
    %v5681 = vunpack.c.h.b16 %v5114
    %v5682 = vunpack.c.l.b16 %v5115
    %v5683 = vunpack.c.h.b16 %v5115
    %v5684 = vunpack.c.l.b16 %v5116
    %v5685 = vunpack.c.h.b16 %v5116
    %v5686 = vunpack.c.l.b16 %v5117
    %v5687 = vunpack.c.h.b16 %v5117
    %v5688 = vunpack.c.l.b16 %v5118
    %v5689 = vunpack.c.h.b16 %v5118
    %v5690 = vunpack.c.l.b16 %v5119
    %v5691 = vunpack.c.h.b16 %v5119
    %v5692 = vunpack.c.l.b16 %v5120
    %v5693 = vunpack.c.h.b16 %v5120
    %v5694 = vunpack.c.l.b16 %v5121
    %v5695 = vunpack.c.h.b16 %v5121
    %v5696 = vunpack.c.l.b16 %v5122
    %v5697 = vunpack.c.h.b16 %v5122
    %v5698 = vunpack.c.l.b16 %v5123
    %v5699 = vunpack.c.h.b16 %v5123
    %v5700 = vunpack.c.l.b16 %v5124
    %v5701 = vunpack.c.h.b16 %v5124
    %v5702 = vunpack.c.l.b16 %v5125
    %v5703 = vunpack.c.h.b16 %v5125
    %v5704 = vunpack.c.l.b16 %v5126
    %v5705 = vunpack.c.h.b16 %v5126
    %v5706 = vunpack.c.l.b16 %v5127
    %v5707 = vunpack.c.h.b16 %v5127
    %v5708 = vunpack.c.l.b16 %v5128
    %v5709 = vunpack.c.h.b16 %v5128
    %v5710 = vunpack.c.l.b16 %v5129
    %v5711 = vunpack.c.h.b16 %v5129
    %v5712 = vunpack.c.l.b16 %v5130
    %v5713 = vunpack.c.h.b16 %v5130
    %v5714 = vunpack.c.l.b16 %v5131
    %v5715 = vunpack.c.h.b16 %v5131
    %v5716 = vunpack.c.l.b16 %v5132
    %v5717 = vunpack.c.h.b16 %v5132
    %v5718 = vunpack.c.l.b16 %v5133
    %v5719 = vunpack.c.h.b16 %v5133
    %v5720 = vunpack.c.l.b16 %v5134
    %v5721 = vunpack.c.h.b16 %v5134
    %v5722 = vunpack.c.l.b16 %v5135
    %v5723 = vunpack.c.h.b16 %v5135
    %v5724 = vunpack.c.l.b16 %v5136
    %v5725 = vunpack.c.h.b16 %v5136
    %v5726 = vunpack.c.l.b16 %v5137
    %v5727 = vunpack.c.h.b16 %v5137
    %v5728 = vunpack.c.l.b16 %v5138
    %v5729 = vunpack.c.h.b16 %v5138
    %v5730 = vunpack.c.l.b16 %v5139
    %v5731 = vunpack.c.h.b16 %v5139
    %v5732 = vunpack.c.l.b16 %v5140
    %v5733 = vunpack.c.h.b16 %v5140
    %v5734 = vunpack.c.l.b16 %v5141
    %v5735 = vunpack.c.h.b16 %v5141
    %v5736 = vunpack.c.l.b16 %v5142
    %v5737 = vunpack.c.h.b16 %v5142
    %v5738 = vunpack.c.l.b16 %v5143
    %v5739 = vunpack.c.h.b16 %v5143
    %v5740 = vunpack.c.l.b16 %v5144
    %v5741 = vunpack.c.h.b16 %v5144
    %v5742 = vunpack.c.l.b16 %v5145
    %v5743 = vunpack.c.h.b16 %v5145
    %v5744 = vunpack.c.l.b16 %v5146
    %v5745 = vunpack.c.h.b16 %v5146
    %v5746 = vunpack.c.l.b16 %v5147
    %v5747 = vunpack.c.h.b16 %v5147
    %v5748 = vunpack.c.l.b16 %v5148
    %v5749 = vunpack.c.h.b16 %v5148
    %v5750 = vunpack.c.l.b16 %v5149
    %v5751 = vunpack.c.h.b16 %v5149
    %v5752 = vunpack.c.l.b16 %v5150
    %v5753 = vunpack.c.h.b16 %v5150
    %v5754 = vunpack.c.l.b16 %v5151
    %v5755 = vunpack.c.h.b16 %v5151
    %v5756 = vunpack.c.l.b16 %v5152
    %v5757 = vunpack.c.h.b16 %v5152
    %v5758 = vunpack.c.l.b16 %v5153
    %v5759 = vunpack.c.h.b16 %v5153
    %v5760 = vunpack.c.l.b16 %v5154
    %v5761 = vunpack.c.h.b16 %v5154
    %v5762 = vunpack.c.l.b16 %v5155
    %v5763 = vunpack.c.h.b16 %v5155
    %v5764 = vunpack.c.l.b16 %v5156
    %v5765 = vunpack.c.h.b16 %v5156
    %v5766 = vunpack.c.l.b16 %v5157
    %v5767 = vunpack.c.h.b16 %v5157
    %v5768 = vunpack.c.l.b16 %v5158
    %v5769 = vunpack.c.h.b16 %v5158
    %v5770 = vunpack.c.l.b16 %v5159
    %v5771 = vunpack.c.h.b16 %v5159
    %v5772 = vunpack.c.l.b16 %v5160
    %v5773 = vunpack.c.h.b16 %v5160
    %v5774 = vunpack.c.l.b16 %v5161
    %v5775 = vunpack.c.h.b16 %v5161
    %v5776 = vunpack.c.l.b16 %v5162
    %v5777 = vunpack.c.h.b16 %v5162
    %v5778 = vunpack.c.l.b16 %v5163
    %v5779 = vunpack.c.h.b16 %v5163
    %v5780 = vunpack.c.l.b16 %v5164
    %v5781 = vunpack.c.h.b16 %v5164
    %v5782 = vunpack.c.l.b16 %v5165
    %v5783 = vunpack.c.h.b16 %v5165
    %v5784 = vunpack.c.l.b16 %v5166
    %v5785 = vunpack.c.h.b16 %v5166
    %v5786 = vunpack.c.l.b16 %v5167
    %v5787 = vunpack.c.h.b16 %v5167
    %v5788 = vunpack.c.l.b16 %v5168
    %v5789 = vunpack.c.h.b16 %v5168
    %v5790 = vunpack.c.l.b16 %v5169
    %v5791 = vunpack.c.h.b16 %v5169
    %v5792 = vunpack.c.l.b16 %v5170
    %v5793 = vunpack.c.h.b16 %v5170
    %v5794 = vunpack.c.l.b16 %v5171
    %v5795 = vunpack.c.h.b16 %v5171
    %v5796 = vunpack.c.l.b16 %v5172
    %v5797 = vunpack.c.h.b16 %v5172
    %v5798 = vunpack.c.l.b16 %v5173
    %v5799 = vunpack.c.h.b16 %v5173
    %v5800 = vunpack.c.l.b16 %v5174
    %v5801 = vunpack.c.h.b16 %v5174
    %v5802 = vunpack.c.l.b16 %v5175
    %v5803 = vunpack.c.h.b16 %v5175
    %v5804 = vunpack.c.l.b16 %v5176
    %v5805 = vunpack.c.h.b16 %v5176
    %v5806 = vunpack.c.l.b16 %v5177
    %v5807 = vunpack.c.h.b16 %v5177
    %v5808 = vunpack.c.l.b16 %v5178
    %v5809 = vunpack.c.h.b16 %v5178
    %v5810 = vunpack.c.l.b16 %v5179
    %v5811 = vunpack.c.h.b16 %v5179
    %v5812 = vunpack.c.l.b16 %v5180
    %v5813 = vunpack.c.h.b16 %v5180
    %v5814 = vunpack.c.l.b16 %v5181
    %v5815 = vunpack.c.h.b16 %v5181
    %v5816 = vunpack.c.l.b16 %v5182
    %v5817 = vunpack.c.h.b16 %v5182
    %v5818 = vunpack.c.l.b16 %v5183
    %v5819 = vunpack.c.h.b16 %v5183
    %v5820 = vunpack.c.l.b16 %v5184
    %v5821 = vunpack.c.h.b16 %v5184
    %v5822 = vunpack.c.l.b16 %v5185
    %v5823 = vunpack.c.h.b16 %v5185
    %v5824 = vunpack.c.l.b16 %v5186
    %v5825 = vunpack.c.h.b16 %v5186
    %v5826 = vunpack.c.l.b16 %v5187
    %v5827 = vunpack.c.h.b16 %v5187
    %v5828 = vunpack.c.l.b16 %v5188
    %v5829 = vunpack.c.h.b16 %v5188
    %v5830 = vunpack.c.l.b16 %v5189
    %v5831 = vunpack.c.h.b16 %v5189
    %v5832 = vunpack.c.l.b16 %v5190
    %v5833 = vunpack.c.h.b16 %v5190
    %v5834 = vunpack.c.l.b16 %v5191
    %v5835 = vunpack.c.h.b16 %v5191
    %v5836 = vunpack.c.l.b16 %v5192
    %v5837 = vunpack.c.h.b16 %v5192
    %v5838 = vunpack.c.l.b16 %v5193
    %v5839 = vunpack.c.h.b16 %v5193
    %v5840 = vunpack.c.l.b16 %v5194
    %v5841 = vunpack.c.h.b16 %v5194
    %v5842 = vunpack.c.l.b16 %v5195
    %v5843 = vunpack.c.h.b16 %v5195
    %v5844 = vunpack.c.l.b16 %v5196
    %v5845 = vunpack.c.h.b16 %v5196
    %v5846 = vunpack.c.l.b16 %v5197
    %v5847 = vunpack.c.h.b16 %v5197
    %v5848 = vunpack.c.l.b16 %v5198
    %v5849 = vunpack.c.h.b16 %v5198
    %v5850 = vunpack.c.l.b16 %v5199
    %v5851 = vunpack.c.h.b16 %v5199
    %v5852 = vunpack.c.l.b16 %v5200
    %v5853 = vunpack.c.h.b16 %v5200
    %v5854 = vunpack.c.l.b16 %v5201
    %v5855 = vunpack.c.h.b16 %v5201
    %v5856 = vunpack.c.l.b16 %v5202
    %v5857 = vunpack.c.h.b16 %v5202
    %v5858 = vunpack.c.l.b16 %v5203
    %v5859 = vunpack.c.h.b16 %v5203
    %v5860 = vunpack.c.l.b16 %v5204
    %v5861 = vunpack.c.h.b16 %v5204
    %v5862 = vunpack.c.l.b16 %v5205
    %v5863 = vunpack.c.h.b16 %v5205
    %v5864 = vunpack.c.l.b16 %v5206
    %v5865 = vunpack.c.h.b16 %v5206
    %v5866 = vunpack.c.l.b16 %v5207
    %v5867 = vunpack.c.h.b16 %v5207
    %v5868 = vunpack.c.l.b16 %v5208
    %v5869 = vunpack.c.h.b16 %v5208
    %v5870 = vunpack.c.l.b16 %v5209
    %v5871 = vunpack.c.h.b16 %v5209
    %v5872 = vunpack.c.l.b16 %v5210
    %v5873 = vunpack.c.h.b16 %v5210
    %v5874 = vunpack.c.l.b16 %v5211
    %v5875 = vunpack.c.h.b16 %v5211
    %v5876 = vunpack.c.l.b16 %v5212
    %v5877 = vunpack.c.h.b16 %v5212
    %v5878 = vunpack.c.l.b16 %v5213
    %v5879 = vunpack.c.h.b16 %v5213
    %v5880 = vunpack.c.l.b16 %v5214
    %v5881 = vunpack.c.h.b16 %v5214
    %v5882 = vunpack.c.l.b16 %v5215
    %v5883 = vunpack.c.h.b16 %v5215
    %v5884 = vunpack.c.l.b16 %v5216
    %v5885 = vunpack.c.h.b16 %v5216
    %v5886 = vunpack.c.l.b16 %v5217
    %v5887 = vunpack.c.h.b16 %v5217
    %v5888 = vunpack.c.l.b16 %v5218
    %v5889 = vunpack.c.h.b16 %v5218
    %v5890 = vunpack.c.l.b16 %v5219
    %v5891 = vunpack.c.h.b16 %v5219
    %v5892 = vunpack.c.l.b16 %v5220
    %v5893 = vunpack.c.h.b16 %v5220
    %v5894 = vunpack.c.l.b16 %v5221
    %v5895 = vunpack.c.h.b16 %v5221
    %v5896 = vunpack.c.l.b16 %v5222
    %v5897 = vunpack.c.h.b16 %v5222
    %v5898 = vunpack.c.l.b16 %v5223
    %v5899 = vunpack.c.h.b16 %v5223
    %v5900 = vunpack.c.l.b16 %v5224
    %v5901 = vunpack.c.h.b16 %v5224
    %v5902 = vunpack.c.l.b16 %v5225
    %v5903 = vunpack.c.h.b16 %v5225
    %v5904 = vunpack.c.l.b16 %v5226
    %v5905 = vunpack.c.h.b16 %v5226
    %v5906 = vunpack.c.l.b16 %v5227
    %v5907 = vunpack.c.h.b16 %v5227
    %v5908 = vunpack.c.l.b16 %v5228
    %v5909 = vunpack.c.h.b16 %v5228
    %v5910 = vunpack.c.l.b16 %v5229
    %v5911 = vunpack.c.h.b16 %v5229
    %v5912 = vunpack.c.l.b16 %v5230
    %v5913 = vunpack.c.h.b16 %v5230
    %v5914 = vunpack.c.l.b16 %v5231
    %v5915 = vunpack.c.h.b16 %v5231
    %v5916 = vunpack.c.l.b16 %v5232
    %v5917 = vunpack.c.h.b16 %v5232
    %v5918 = vunpack.c.l.b16 %v5233
    %v5919 = vunpack.c.h.b16 %v5233
    %v5920 = vunpack.c.l.b16 %v5234
    %v5921 = vunpack.c.h.b16 %v5234
    %v5922 = vunpack.c.l.b16 %v5235
    %v5923 = vunpack.c.h.b16 %v5235
    %v5924 = vunpack.c.l.b16 %v5236
    %v5925 = vunpack.c.h.b16 %v5236
    %v5926 = vunpack.c.l.b16 %v5237
    %v5927 = vunpack.c.h.b16 %v5237
    %v5928 = vunpack.c.l.b16 %v5238
    %v5929 = vunpack.c.h.b16 %v5238
    %v5930 = vunpack.c.l.b16 %v5239
    %v5931 = vunpack.c.h.b16 %v5239
    %v5932 = vunpack.c.l.b16 %v5240
    %v5933 = vunpack.c.h.b16 %v5240
    %v5934 = vunpack.c.l.b16 %v5241
    %v5935 = vunpack.c.h.b16 %v5241
    %v5936 = vunpack.c.l.b16 %v5242
    %v5937 = vunpack.c.h.b16 %v5242
    %v5938 = vunpack.c.l.b16 %v5243
    %v5939 = vunpack.c.h.b16 %v5243
    %v5940 = vunpack.c.l.b16 %v5244
    %v5941 = vunpack.c.h.b16 %v5244
    %v5942 = vunpack.c.l.b16 %v5245
    %v5943 = vunpack.c.h.b16 %v5245
    %v5944 = vunpack.c.l.b16 %v5246
    %v5945 = vunpack.c.h.b16 %v5246
    %v5946 = vunpack.c.l.b16 %v5247
    %v5947 = vunpack.c.h.b16 %v5247
    %v5948 = vunpack.c.l.b16 %v5248
    %v5949 = vunpack.c.h.b16 %v5248
    %v5950 = vunpack.c.l.b16 %v5249
    %v5951 = vunpack.c.h.b16 %v5249
    %v5952 = vunpack.c.l.b16 %v5250
    %v5953 = vunpack.c.h.b16 %v5250
    %v5954 = vunpack.c.l.b16 %v5251
    %v5955 = vunpack.c.h.b16 %v5251
    %v5956 = vunpack.c.l.b16 %v5252
    %v5957 = vunpack.c.h.b16 %v5252
    %v5958 = vunpack.c.l.b16 %v5253
    %v5959 = vunpack.c.h.b16 %v5253
    %v5960 = vunpack.c.l.b16 %v5254
    %v5961 = vunpack.c.h.b16 %v5254
    %v5962 = vunpack.c.l.b16 %v5255
    %v5963 = vunpack.c.h.b16 %v5255
    %v5964 = vunpack.c.l.b16 %v5256
    %v5965 = vunpack.c.h.b16 %v5256
    %v5966 = vunpack.c.l.b16 %v5257
    %v5967 = vunpack.c.h.b16 %v5257
    %v5968 = vunpack.c.l.b16 %v5258
    %v5969 = vunpack.c.h.b16 %v5258
    %v5970 = vunpack.c.l.b16 %v5259
    %v5971 = vunpack.c.h.b16 %v5259
    %v5972 = vunpack.c.l.b16 %v5260
    %v5973 = vunpack.c.h.b16 %v5260
    %v5974 = vunpack.c.l.b16 %v5261
    %v5975 = vunpack.c.h.b16 %v5261
    %v5976 = vunpack.c.l.b16 %v5262
    %v5977 = vunpack.c.h.b16 %v5262
    %v5978 = vunpack.c.l.b16 %v5263
    %v5979 = vunpack.c.h.b16 %v5263
    %v5980 = vunpack.c.l.b16 %v5264
    %v5981 = vunpack.c.h.b16 %v5264
    %v5982 = vunpack.c.l.b16 %v5265
    %v5983 = vunpack.c.h.b16 %v5265
    %v5984 = vunpack.c.l.b16 %v5266
    %v5985 = vunpack.c.h.b16 %v5266
    %v5986 = vunpack.c.l.b16 %v5267
    %v5987 = vunpack.c.h.b16 %v5267
    %v5988 = vunpack.c.l.b16 %v5268
    %v5989 = vunpack.c.h.b16 %v5268
    %v5990 = vunpack.c.l.b16 %v5269
    %v5991 = vunpack.c.h.b16 %v5269
    %v5992 = vunpack.c.l.b16 %v5270
    %v5993 = vunpack.c.h.b16 %v5270
    %v5994 = vunpack.c.l.b16 %v5271
    %v5995 = vunpack.c.h.b16 %v5271
    %v5996 = vunpack.c.l.b16 %v5272
    %v5997 = vunpack.c.h.b16 %v5272
    %v5998 = vunpack.c.l.b16 %v5273
    %v5999 = vunpack.c.h.b16 %v5273
    %v6000 = vunpack.c.l.b16 %v5274
    %v6001 = vunpack.c.h.b16 %v5274
    %v6002 = vunpack.c.l.b16 %v5275
    %v6003 = vunpack.c.h.b16 %v5275
    %v6004 = vunpack.c.l.b16 %v5276
    %v6005 = vunpack.c.h.b16 %v5276
    %v6006 = vunpack.c.l.b16 %v5277
    %v6007 = vunpack.c.h.b16 %v5277
    %v6008 = vunpack.c.l.b16 %v5278
    %v6009 = vunpack.c.h.b16 %v5278
    %v6010 = vunpack.c.l.b16 %v5279
    %v6011 = vunpack.c.h.b16 %v5279
    %v6012 = vunpack.c.l.b16 %v5280
    %v6013 = vunpack.c.h.b16 %v5280
    %v6014 = vunpack.c.l.b16 %v5281
    %v6015 = vunpack.c.h.b16 %v5281
    %v6016 = vunpack.c.l.b16 %v5282
    %v6017 = vunpack.c.h.b16 %v5282
    %v6018 = vunpack.c.l.b16 %v5283
    %v6019 = vunpack.c.h.b16 %v5283
    %v6020 = vunpack.c.l.b16 %v5284
    %v6021 = vunpack.c.h.b16 %v5284
    %v6022 = vunpack.c.l.b16 %v5285
    %v6023 = vunpack.c.h.b16 %v5285
    %v6024 = vunpack.c.l.b16 %v5286
    %v6025 = vunpack.c.h.b16 %v5286
    %v6026 = vunpack.c.l.b16 %v5287
    %v6027 = vunpack.c.h.b16 %v5287
    %v6028 = vunpack.c.l.b16 %v5288
    %v6029 = vunpack.c.h.b16 %v5288
    %v6030 = vunpack.c.l.b16 %v5289
    %v6031 = vunpack.c.h.b16 %v5289
    %v6032 = vunpack.c.l.b16 %v5290
    %v6033 = vunpack.c.h.b16 %v5290
    %v6034 = vunpack.c.l.b16 %v5291
    %v6035 = vunpack.c.h.b16 %v5291
    %v6036 = vunpack.c.l.b16 %v5292
    %v6037 = vunpack.c.h.b16 %v5292
    %v6038 = vunpack.c.l.b16 %v5293
    %v6039 = vunpack.c.h.b16 %v5293
    %v6040 = vunpack.c.l.b16 %v5294
    %v6041 = vunpack.c.h.b16 %v5294
    %v6042 = vunpack.c.l.b16 %v5295
    %v6043 = vunpack.c.h.b16 %v5295
    %v6044 = vunpack.c.l.b16 %v5296
    %v6045 = vunpack.c.h.b16 %v5296
    %v6046 = vunpack.c.l.b16 %v5297
    %v6047 = vunpack.c.h.b16 %v5297
    %v6048 = vunpack.c.l.b16 %v5298
    %v6049 = vunpack.c.h.b16 %v5298
    %v6050 = vunpack.c.l.b16 %v5299
    %v6051 = vunpack.c.h.b16 %v5299
    %v6052 = vunpack.c.l.b16 %v5300
    %v6053 = vunpack.c.h.b16 %v5300
    %v6054 = vunpack.c.l.b16 %v5301
    %v6055 = vunpack.c.h.b16 %v5301
    %v6056 = vunpack.c.l.b16 %v5302
    %v6057 = vunpack.c.h.b16 %v5302
    %v6058 = vunpack.c.l.b16 %v5303
    %v6059 = vunpack.c.h.b16 %v5303
    %v6060 = vunpack.c.l.b16 %v5304
    %v6061 = vunpack.c.h.b16 %v5304
    %v6062 = vunpack.c.l.b16 %v5305
    %v6063 = vunpack.c.h.b16 %v5305
    %v6064 = vunpack.c.l.b16 %v5306
    %v6065 = vunpack.c.h.b16 %v5306
    %v6066 = vunpack.c.l.b16 %v5307
    %v6067 = vunpack.c.h.b16 %v5307
    %v6068 = vunpack.c.l.b16 %v5308
    %v6069 = vunpack.c.h.b16 %v5308
    %v6070 = vunpack.c.l.b16 %v5309
    %v6071 = vunpack.c.h.b16 %v5309
    %v6072 = vunpack.c.l.b16 %v5310
    %v6073 = vunpack.c.h.b16 %v5310
    %v6074 = vunpack.c.l.b16 %v5311
    %v6075 = vunpack.c.h.b16 %v5311
    %v6076 = vunpack.c.l.b16 %v5312
    %v6077 = vunpack.c.h.b16 %v5312
    %v6078 = vunpack.c.l.b16 %v5313
    %v6079 = vunpack.c.h.b16 %v5313
    %v6080 = vunpack.c.l.b16 %v5314
    %v6081 = vunpack.c.h.b16 %v5314
    %v6082 = vunpack.c.l.b16 %v5315
    %v6083 = vunpack.c.h.b16 %v5315
    %v6084 = vunpack.c.l.b16 %v5316
    %v6085 = vunpack.c.h.b16 %v5316
    %v6086 = vunpack.c.l.b16 %v5317
    %v6087 = vunpack.c.h.b16 %v5317
    %v6088 = vunpack.c.l.b16 %v5318
    %v6089 = vunpack.c.h.b16 %v5318
    %v6090 = vunpack.c.l.b16 %v5319
    %v6091 = vunpack.c.h.b16 %v5319
    %v6092 = vunpack.c.l.b16 %v5320
    %v6093 = vunpack.c.h.b16 %v5320
    %v6094 = vunpack.c.l.b16 %v5321
    %v6095 = vunpack.c.h.b16 %v5321
    %v6096 = vunpack.c.l.b16 %v5322
    %v6097 = vunpack.c.h.b16 %v5322
    %v6098 = vunpack.c.l.b16 %v5323
    %v6099 = vunpack.c.h.b16 %v5323
    %v6100 = vunpack.c.l.b16 %v5324
    %v6101 = vunpack.c.h.b16 %v5324
    %v6102 = vunpack.c.l.b16 %v5325
    %v6103 = vunpack.c.h.b16 %v5325
    %v6104 = vunpack.c.l.b16 %v5326
    %v6105 = vunpack.c.h.b16 %v5326
    %v6106 = vunpack.c.l.b16 %v5327
    %v6107 = vunpack.c.h.b16 %v5327
    %v6108 = vunpack.c.l.b16 %v5328
    %v6109 = vunpack.c.h.b16 %v5328
    %v6110 = vunpack.c.l.b16 %v5329
    %v6111 = vunpack.c.h.b16 %v5329
    %v6112 = vunpack.c.l.b16 %v5330
    %v6113 = vunpack.c.h.b16 %v5330
    %v6114 = vunpack.c.l.b16 %v5331
    %v6115 = vunpack.c.h.b16 %v5331
    %v6116 = vunpack.c.l.b16 %v5332
    %v6117 = vunpack.c.h.b16 %v5332
    %v6118 = vunpack.c.l.b16 %v5333
    %v6119 = vunpack.c.h.b16 %v5333
    %v6120 = vunpack.c.l.b16 %v5334
    %v6121 = vunpack.c.h.b16 %v5334
    %v6122 = vunpack.c.l.b16 %v5335
    %v6123 = vunpack.c.h.b16 %v5335
    %v6124 = vunpack.c.l.b16 %v5336
    %v6125 = vunpack.c.h.b16 %v5336
    %v6126 = vunpack.c.l.b16 %v5337
    %v6127 = vunpack.c.h.b16 %v5337
    %v6128 = vpack.c.b16 %v5620, %v5616
    %v6129 = vpack.c.b16 %v5621, %v5617
    %v6130 = vpack.c.b16 %v5622, %v5618
    %v6131 = vpack.c.b16 %v5623, %v5619
    %v6132 = vpack.c.b16 %v5628, %v5624
    %v6133 = vpack.c.b16 %v5629, %v5625
    %v6134 = vpack.c.b16 %v5630, %v5626
    %v6135 = vpack.c.b16 %v5631, %v5627
    %v6136 = vpack.c.b16 %v5636, %v5632
    %v6137 = vpack.c.b16 %v5637, %v5633
    %v6138 = vpack.c.b16 %v5638, %v5634
    %v6139 = vpack.c.b16 %v5639, %v5635
    %v6140 = vpack.c.b16 %v5644, %v5640
    %v6141 = vpack.c.b16 %v5645, %v5641
    %v6142 = vpack.c.b16 %v5646, %v5642
    %v6143 = vpack.c.b16 %v5647, %v5643
    %v6144 = vpack.c.b16 %v5652, %v5648
    %v6145 = vpack.c.b16 %v5653, %v5649
    %v6146 = vpack.c.b16 %v5654, %v5650
    %v6147 = vpack.c.b16 %v5655, %v5651
    %v6148 = vpack.c.b16 %v5660, %v5656
    %v6149 = vpack.c.b16 %v5661, %v5657
    %v6150 = vpack.c.b16 %v5662, %v5658
    %v6151 = vpack.c.b16 %v5663, %v5659
    %v6152 = vpack.c.b16 %v5668, %v5664
    %v6153 = vpack.c.b16 %v5669, %v5665
    %v6154 = vpack.c.b16 %v5670, %v5666
    %v6155 = vpack.c.b16 %v5671, %v5667
    %v6156 = vpack.c.b16 %v5676, %v5672
    %v6157 = vpack.c.b16 %v5677, %v5673
    %v6158 = vpack.c.b16 %v5678, %v5674
    %v6159 = vpack.c.b16 %v5679, %v5675
    %v6160 = vpack.c.b16 %v5684, %v5680
    %v6161 = vpack.c.b16 %v5685, %v5681
    %v6162 = vpack.c.b16 %v5686, %v5682
    %v6163 = vpack.c.b16 %v5687, %v5683
    %v6164 = vpack.c.b16 %v5692, %v5688
    %v6165 = vpack.c.b16 %v5693, %v5689
    %v6166 = vpack.c.b16 %v5694, %v5690
    %v6167 = vpack.c.b16 %v5695, %v5691
    %v6168 = vpack.c.b16 %v5700, %v5696
    %v6169 = vpack.c.b16 %v5701, %v5697
    %v6170 = vpack.c.b16 %v5702, %v5698
    %v6171 = vpack.c.b16 %v5703, %v5699
    %v6172 = vpack.c.b16 %v5708, %v5704
    %v6173 = vpack.c.b16 %v5709, %v5705
    %v6174 = vpack.c.b16 %v5710, %v5706
    %v6175 = vpack.c.b16 %v5711, %v5707
    %v6176 = vpack.c.b16 %v5716, %v5712
    %v6177 = vpack.c.b16 %v5717, %v5713
    %v6178 = vpack.c.b16 %v5718, %v5714
    %v6179 = vpack.c.b16 %v5719, %v5715
    %v6180 = vpack.c.b16 %v5724, %v5720
    %v6181 = vpack.c.b16 %v5725, %v5721
    %v6182 = vpack.c.b16 %v5726, %v5722
    %v6183 = vpack.c.b16 %v5727, %v5723
    %v6184 = vpack.c.b16 %v5732, %v5728
    %v6185 = vpack.c.b16 %v5733, %v5729
    %v6186 = vpack.c.b16 %v5734, %v5730
    %v6187 = vpack.c.b16 %v5735, %v5731
    %v6188 = vpack.c.b16 %v5740, %v5736
    %v6189 = vpack.c.b16 %v5741, %v5737
    %v6190 = vpack.c.b16 %v5742, %v5738
    %v6191 = vpack.c.b16 %v5743, %v5739
    %v6192 = vpack.c.b16 %v5748, %v5744
    %v6193 = vpack.c.b16 %v5749, %v5745
    %v6194 = vpack.c.b16 %v5750, %v5746
    %v6195 = vpack.c.b16 %v5751, %v5747
    %v6196 = vpack.c.b16 %v5756, %v5752
    %v6197 = vpack.c.b16 %v5757, %v5753
    %v6198 = vpack.c.b16 %v5758, %v5754
    %v6199 = vpack.c.b16 %v5759, %v5755
    %v6200 = vpack.c.b16 %v5764, %v5760
    %v6201 = vpack.c.b16 %v5765, %v5761
    %v6202 = vpack.c.b16 %v5766, %v5762
    %v6203 = vpack.c.b16 %v5767, %v5763
    %v6204 = vpack.c.b16 %v5772, %v5768
    %v6205 = vpack.c.b16 %v5773, %v5769
    %v6206 = vpack.c.b16 %v5774, %v5770
    %v6207 = vpack.c.b16 %v5775, %v5771
    %v6208 = vpack.c.b16 %v5780, %v5776
    %v6209 = vpack.c.b16 %v5781, %v5777
    %v6210 = vpack.c.b16 %v5782, %v5778
    %v6211 = vpack.c.b16 %v5783, %v5779
    %v6212 = vpack.c.b16 %v5788, %v5784
    %v6213 = vpack.c.b16 %v5789, %v5785
    %v6214 = vpack.c.b16 %v5790, %v5786
    %v6215 = vpack.c.b16 %v5791, %v5787
    %v6216 = vpack.c.b16 %v5796, %v5792
    %v6217 = vpack.c.b16 %v5797, %v5793
    %v6218 = vpack.c.b16 %v5798, %v5794
    %v6219 = vpack.c.b16 %v5799, %v5795
    %v6220 = vpack.c.b16 %v5804, %v5800
    %v6221 = vpack.c.b16 %v5805, %v5801
    %v6222 = vpack.c.b16 %v5806, %v5802
    %v6223 = vpack.c.b16 %v5807, %v5803
    %v6224 = vpack.c.b16 %v5812, %v5808
    %v6225 = vpack.c.b16 %v5813, %v5809
    %v6226 = vpack.c.b16 %v5814, %v5810
    %v6227 = vpack.c.b16 %v5815, %v5811
    %v6228 = vpack.c.b16 %v5820, %v5816
    %v6229 = vpack.c.b16 %v5821, %v5817
    %v6230 = vpack.c.b16 %v5822, %v5818
    %v6231 = vpack.c.b16 %v5823, %v5819
    %v6232 = vpack.c.b16 %v5828, %v5824
    %v6233 = vpack.c.b16 %v5829, %v5825
    %v6234 = vpack.c.b16 %v5830, %v5826
    %v6235 = vpack.c.b16 %v5831, %v5827
    %v6236 = vpack.c.b16 %v5836, %v5832
    %v6237 = vpack.c.b16 %v5837, %v5833
    %v6238 = vpack.c.b16 %v5838, %v5834
    %v6239 = vpack.c.b16 %v5839, %v5835
    %v6240 = vpack.c.b16 %v5844, %v5840
    %v6241 = vpack.c.b16 %v5845, %v5841
    %v6242 = vpack.c.b16 %v5846, %v5842
    %v6243 = vpack.c.b16 %v5847, %v5843
    %v6244 = vpack.c.b16 %v5852, %v5848
    %v6245 = vpack.c.b16 %v5853, %v5849
    %v6246 = vpack.c.b16 %v5854, %v5850
    %v6247 = vpack.c.b16 %v5855, %v5851
    %v6248 = vpack.c.b16 %v5860, %v5856
    %v6249 = vpack.c.b16 %v5861, %v5857
    %v6250 = vpack.c.b16 %v5862, %v5858
    %v6251 = vpack.c.b16 %v5863, %v5859
    %v6252 = vpack.c.b16 %v5868, %v5864
    %v6253 = vpack.c.b16 %v5869, %v5865
    %v6254 = vpack.c.b16 %v5870, %v5866
    %v6255 = vpack.c.b16 %v5871, %v5867
    %v6256 = vpack.c.b16 %v5876, %v5872
    %v6257 = vpack.c.b16 %v5877, %v5873
    %v6258 = vpack.c.b16 %v5878, %v5874
    %v6259 = vpack.c.b16 %v5879, %v5875
    %v6260 = vpack.c.b16 %v5884, %v5880
    %v6261 = vpack.c.b16 %v5885, %v5881
    %v6262 = vpack.c.b16 %v5886, %v5882
    %v6263 = vpack.c.b16 %v5887, %v5883
    %v6264 = vpack.c.b16 %v5892, %v5888
    %v6265 = vpack.c.b16 %v5893, %v5889
    %v6266 = vpack.c.b16 %v5894, %v5890
    %v6267 = vpack.c.b16 %v5895, %v5891
    %v6268 = vpack.c.b16 %v5900, %v5896
    %v6269 = vpack.c.b16 %v5901, %v5897
    %v6270 = vpack.c.b16 %v5902, %v5898
    %v6271 = vpack.c.b16 %v5903, %v5899
    %v6272 = vpack.c.b16 %v5908, %v5904
    %v6273 = vpack.c.b16 %v5909, %v5905
    %v6274 = vpack.c.b16 %v5910, %v5906
    %v6275 = vpack.c.b16 %v5911, %v5907
    %v6276 = vpack.c.b16 %v5916, %v5912
    %v6277 = vpack.c.b16 %v5917, %v5913
    %v6278 = vpack.c.b16 %v5918, %v5914
    %v6279 = vpack.c.b16 %v5919, %v5915
    %v6280 = vpack.c.b16 %v5924, %v5920
    %v6281 = vpack.c.b16 %v5925, %v5921
    %v6282 = vpack.c.b16 %v5926, %v5922
    %v6283 = vpack.c.b16 %v5927, %v5923
    %v6284 = vpack.c.b16 %v5932, %v5928
    %v6285 = vpack.c.b16 %v5933, %v5929
    %v6286 = vpack.c.b16 %v5934, %v5930
    %v6287 = vpack.c.b16 %v5935, %v5931
    %v6288 = vpack.c.b16 %v5940, %v5936
    %v6289 = vpack.c.b16 %v5941, %v5937
    %v6290 = vpack.c.b16 %v5942, %v5938
    %v6291 = vpack.c.b16 %v5943, %v5939
    %v6292 = vpack.c.b16 %v5948, %v5944
    %v6293 = vpack.c.b16 %v5949, %v5945
    %v6294 = vpack.c.b16 %v5950, %v5946
    %v6295 = vpack.c.b16 %v5951, %v5947
    %v6296 = vpack.c.b16 %v5956, %v5952
    %v6297 = vpack.c.b16 %v5957, %v5953
    %v6298 = vpack.c.b16 %v5958, %v5954
    %v6299 = vpack.c.b16 %v5959, %v5955
    %v6300 = vpack.c.b16 %v5964, %v5960
    %v6301 = vpack.c.b16 %v5965, %v5961
    %v6302 = vpack.c.b16 %v5966, %v5962
    %v6303 = vpack.c.b16 %v5967, %v5963
    %v6304 = vpack.c.b16 %v5972, %v5968
    %v6305 = vpack.c.b16 %v5973, %v5969
    %v6306 = vpack.c.b16 %v5974, %v5970
    %v6307 = vpack.c.b16 %v5975, %v5971
    %v6308 = vpack.c.b16 %v5980, %v5976
    %v6309 = vpack.c.b16 %v5981, %v5977
    %v6310 = vpack.c.b16 %v5982, %v5978
    %v6311 = vpack.c.b16 %v5983, %v5979
    %v6312 = vpack.c.b16 %v5988, %v5984
    %v6313 = vpack.c.b16 %v5989, %v5985
    %v6314 = vpack.c.b16 %v5990, %v5986
    %v6315 = vpack.c.b16 %v5991, %v5987
    %v6316 = vpack.c.b16 %v5996, %v5992
    %v6317 = vpack.c.b16 %v5997, %v5993
    %v6318 = vpack.c.b16 %v5998, %v5994
    %v6319 = vpack.c.b16 %v5999, %v5995
    %v6320 = vpack.c.b16 %v6004, %v6000
    %v6321 = vpack.c.b16 %v6005, %v6001
    %v6322 = vpack.c.b16 %v6006, %v6002
    %v6323 = vpack.c.b16 %v6007, %v6003
    %v6324 = vpack.c.b16 %v6012, %v6008
    %v6325 = vpack.c.b16 %v6013, %v6009
    %v6326 = vpack.c.b16 %v6014, %v6010
    %v6327 = vpack.c.b16 %v6015, %v6011
    %v6328 = vpack.c.b16 %v6020, %v6016
    %v6329 = vpack.c.b16 %v6021, %v6017
    %v6330 = vpack.c.b16 %v6022, %v6018
    %v6331 = vpack.c.b16 %v6023, %v6019
    %v6332 = vpack.c.b16 %v6028, %v6024
    %v6333 = vpack.c.b16 %v6029, %v6025
    %v6334 = vpack.c.b16 %v6030, %v6026
    %v6335 = vpack.c.b16 %v6031, %v6027
    %v6336 = vpack.c.b16 %v6036, %v6032
    %v6337 = vpack.c.b16 %v6037, %v6033
    %v6338 = vpack.c.b16 %v6038, %v6034
    %v6339 = vpack.c.b16 %v6039, %v6035
    %v6340 = vpack.c.b16 %v6044, %v6040
    %v6341 = vpack.c.b16 %v6045, %v6041
    %v6342 = vpack.c.b16 %v6046, %v6042
    %v6343 = vpack.c.b16 %v6047, %v6043
    %v6344 = vpack.c.b16 %v6052, %v6048
    %v6345 = vpack.c.b16 %v6053, %v6049
    %v6346 = vpack.c.b16 %v6054, %v6050
    %v6347 = vpack.c.b16 %v6055, %v6051
    %v6348 = vpack.c.b16 %v6060, %v6056
    %v6349 = vpack.c.b16 %v6061, %v6057
    %v6350 = vpack.c.b16 %v6062, %v6058
    %v6351 = vpack.c.b16 %v6063, %v6059
    %v6352 = vpack.c.b16 %v6068, %v6064
    %v6353 = vpack.c.b16 %v6069, %v6065
    %v6354 = vpack.c.b16 %v6070, %v6066
    %v6355 = vpack.c.b16 %v6071, %v6067
    %v6356 = vpack.c.b16 %v6076, %v6072
    %v6357 = vpack.c.b16 %v6077, %v6073
    %v6358 = vpack.c.b16 %v6078, %v6074
    %v6359 = vpack.c.b16 %v6079, %v6075
    %v6360 = vpack.c.b16 %v6084, %v6080
    %v6361 = vpack.c.b16 %v6085, %v6081
    %v6362 = vpack.c.b16 %v6086, %v6082
    %v6363 = vpack.c.b16 %v6087, %v6083
    %v6364 = vpack.c.b16 %v6092, %v6088
    %v6365 = vpack.c.b16 %v6093, %v6089
    %v6366 = vpack.c.b16 %v6094, %v6090
    %v6367 = vpack.c.b16 %v6095, %v6091
    %v6368 = vpack.c.b16 %v6100, %v6096
    %v6369 = vpack.c.b16 %v6101, %v6097
    %v6370 = vpack.c.b16 %v6102, %v6098
    %v6371 = vpack.c.b16 %v6103, %v6099
    %v6372 = vpack.c.b16 %v6108, %v6104
    %v6373 = vpack.c.b16 %v6109, %v6105
    %v6374 = vpack.c.b16 %v6110, %v6106
    %v6375 = vpack.c.b16 %v6111, %v6107
    %v6376 = vpack.c.b16 %v6116, %v6112
    %v6377 = vpack.c.b16 %v6117, %v6113
    %v6378 = vpack.c.b16 %v6118, %v6114
    %v6379 = vpack.c.b16 %v6119, %v6115
    %v6380 = vpack.c.b16 %v6124, %v6120
    %v6381 = vpack.c.b16 %v6125, %v6121
    %v6382 = vpack.c.b16 %v6126, %v6122
    %v6383 = vpack.c.b16 %v6127, %v6123
    %6640 = vmatprep.subr.bf16.mxu0 %v6157
    %6641 = vmatpush1.bf16.msra.mxu0 %v6156
    %6642 = vmatprep.subr.bf16.mxu0 %v6153
    %6643 = vmatpush1.bf16.msra.mxu0 %v6152
    %6644 = vmatprep.subr.bf16.mxu0 %v6149
    %6645 = vmatpush1.bf16.msra.mxu0 %v6148
    %6646 = vmatprep.subr.bf16.mxu0 %v6145
    %6647 = vmatpush1.bf16.msra.mxu0 %v6144
    %6648 = vmatprep.subr.bf16.mxu0 %v6141
    %6649 = vmatpush1.bf16.msra.mxu0 %v6140
    %6650 = vmatprep.subr.bf16.mxu0 %v6137
    %6651 = vmatpush1.bf16.msra.mxu0 %v6136
    %6652 = vmatprep.subr.bf16.mxu0 %v6133
    %6653 = vmatpush1.bf16.msra.mxu0 %v6132
    %6654 = vmatprep.subr.bf16.mxu0 %v6129
    %6655 = vmatpush1.bf16.msra.mxu0 %v6128
    %6656 = vmatprep.subr.bf16.mxu0 %v6189
    %6657 = vmatpush2.bf16.msra.mxu0 %v6188
    %6658 = vmatprep.subr.bf16.mxu0 %v6185
    %6659 = vmatpush2.bf16.msra.mxu0 %v6184
    %6660 = vmatprep.subr.bf16.mxu0 %v6181
    %6661 = vmatpush2.bf16.msra.mxu0 %v6180
    %6662 = vmatprep.subr.bf16.mxu0 %v6177
    %6663 = vmatpush2.bf16.msra.mxu0 %v6176
    %6664 = vmatprep.subr.bf16.mxu0 %v6173
    %6665 = vmatpush2.bf16.msra.mxu0 %v6172
    %6666 = vmatprep.subr.bf16.mxu0 %v6169
    %6667 = vmatpush2.bf16.msra.mxu0 %v6168
    %6668 = vmatprep.subr.bf16.mxu0 %v6165
    %6669 = vmatpush2.bf16.msra.mxu0 %v6164
    %6670 = vmatprep.subr.bf16.mxu0 %v6161
    %6671 = vmatpush2.bf16.msra.mxu0 %v6160
    %6672 = vmatprep.mubr.bf16.mxu0 %v5019
    %6673 = vmatmul.mubr.bf16.gmra.mxu0 %v5018
    %v6674 = vpop.f32.mrf.mxu0
    %v6675 = vadd.f32 %v5343, %v6674
    %v6676 = vpop.f32.mrf.mxu0
    %v6677 = vadd.f32 %v5347, %v6676
    %v6678 = vpop.f32.mrf.mxu0
    %v6679 = vadd.f32 %v5343, %v6678
    %v6680 = vpop.f32.mrf.mxu0
    %v6681 = vadd.f32 %v5347, %v6680
    %6682 = vmatprep.mubr.bf16.mxu0 %v5027
    %6683 = vmatmul.mubr.bf16.gmra.mxu0 %v5026
    %v6684 = vpop.f32.mrf.mxu0
    %v6685 = vadd.f32 %v5343, %v6684
    %v6686 = vpop.f32.mrf.mxu0
    %v6687 = vadd.f32 %v5347, %v6686
    %v6688 = vpop.f32.mrf.mxu0
    %v6689 = vadd.f32 %v5343, %v6688
    %v6690 = vpop.f32.mrf.mxu0
    %v6691 = vadd.f32 %v5347, %v6690
    %6692 = vmatprep.mubr.bf16.mxu0 %v5035
    %6693 = vmatmul.mubr.bf16.gmra.mxu0 %v5034
    %v6694 = vpop.f32.mrf.mxu0
    %v6695 = vadd.f32 %v5343, %v6694
    %v6696 = vpop.f32.mrf.mxu0
    %v6697 = vadd.f32 %v5347, %v6696
    %v6698 = vpop.f32.mrf.mxu0
    %v6699 = vadd.f32 %v5343, %v6698
    %v6700 = vpop.f32.mrf.mxu0
    %v6701 = vadd.f32 %v5347, %v6700
    %6702 = vmatprep.mubr.bf16.mxu0 %v5043
    %6703 = vmatmul.mubr.bf16.gmra.mxu0 %v5042
    %v6704 = vpop.f32.mrf.mxu0
    %v6705 = vadd.f32 %v5343, %v6704
    %v6706 = vpop.f32.mrf.mxu0
    %v6707 = vadd.f32 %v5347, %v6706
    %v6708 = vpop.f32.mrf.mxu0
    %v6709 = vadd.f32 %v5343, %v6708
    %v6710 = vpop.f32.mrf.mxu0
    %v6711 = vadd.f32 %v5347, %v6710
    %6712 = vmatprep.mubr.bf16.mxu0 %v5051
    %6713 = vmatmul.mubr.bf16.gmra.mxu0 %v5050
    %v6714 = vpop.f32.mrf.mxu0
    %v6715 = vadd.f32 %v5343, %v6714
    %v6716 = vpop.f32.mrf.mxu0
    %v6717 = vadd.f32 %v5347, %v6716
    %v6718 = vpop.f32.mrf.mxu0
    %v6719 = vadd.f32 %v5343, %v6718
    %v6720 = vpop.f32.mrf.mxu0
    %v6721 = vadd.f32 %v5347, %v6720
    %6722 = vmatprep.mubr.bf16.mxu0 %v5059
    %6723 = vmatmul.mubr.bf16.gmra.mxu0 %v5058
    %v6724 = vpop.f32.mrf.mxu0
    %v6725 = vadd.f32 %v5343, %v6724
    %v6726 = vpop.f32.mrf.mxu0
    %v6727 = vadd.f32 %v5347, %v6726
    %v6728 = vpop.f32.mrf.mxu0
    %v6729 = vadd.f32 %v5343, %v6728
    %v6730 = vpop.f32.mrf.mxu0
    %v6731 = vadd.f32 %v5347, %v6730
    %6732 = vmatprep.mubr.bf16.mxu0 %v5067
    %6733 = vmatmul.mubr.bf16.gmra.mxu0 %v5066
    %v6734 = vpop.f32.mrf.mxu0
    %v6735 = vadd.f32 %v5343, %v6734
    %v6736 = vpop.f32.mrf.mxu0
    %v6737 = vadd.f32 %v5347, %v6736
    %v6738 = vpop.f32.mrf.mxu0
    %v6739 = vadd.f32 %v5343, %v6738
    %v6740 = vpop.f32.mrf.mxu0
    %v6741 = vadd.f32 %v5347, %v6740
    %6742 = vmatprep.mubr.bf16.mxu0 %v5075
    %6743 = vmatmul.mubr.bf16.gmra.mxu0 %v5074
    %v6744 = vpop.f32.mrf.mxu0
    %v6745 = vadd.f32 %v5343, %v6744
    %v6746 = vpop.f32.mrf.mxu0
    %v6747 = vadd.f32 %v5347, %v6746
    %v6748 = vpop.f32.mrf.mxu0
    %v6749 = vadd.f32 %v5343, %v6748
    %v6750 = vpop.f32.mrf.mxu0
    %v6751 = vadd.f32 %v5347, %v6750
    %6752 = vdwg.mxu0
    %6753 = vmatprep.subr.bf16.mxu0 %v6221
    %6754 = vmatpush1.bf16.msra.mxu0 %v6220
    %6755 = vmatprep.subr.bf16.mxu0 %v6217
    %6756 = vmatpush1.bf16.msra.mxu0 %v6216
    %6757 = vmatprep.subr.bf16.mxu0 %v6213
    %6758 = vmatpush1.bf16.msra.mxu0 %v6212
    %6759 = vmatprep.subr.bf16.mxu0 %v6209
    %6760 = vmatpush1.bf16.msra.mxu0 %v6208
    %6761 = vmatprep.subr.bf16.mxu0 %v6205
    %6762 = vmatpush1.bf16.msra.mxu0 %v6204
    %6763 = vmatprep.subr.bf16.mxu0 %v6201
    %6764 = vmatpush1.bf16.msra.mxu0 %v6200
    %6765 = vmatprep.subr.bf16.mxu0 %v6197
    %6766 = vmatpush1.bf16.msra.mxu0 %v6196
    %6767 = vmatprep.subr.bf16.mxu0 %v6193
    %6768 = vmatpush1.bf16.msra.mxu0 %v6192
    %6769 = vmatprep.subr.bf16.mxu0 %v6253
    %6770 = vmatpush2.bf16.msra.mxu0 %v6252
    %6771 = vmatprep.subr.bf16.mxu0 %v6249
    %6772 = vmatpush2.bf16.msra.mxu0 %v6248
    %6773 = vmatprep.subr.bf16.mxu0 %v6245
    %6774 = vmatpush2.bf16.msra.mxu0 %v6244
    %6775 = vmatprep.subr.bf16.mxu0 %v6241
    %6776 = vmatpush2.bf16.msra.mxu0 %v6240
    %6777 = vmatprep.subr.bf16.mxu0 %v6237
    %6778 = vmatpush2.bf16.msra.mxu0 %v6236
    %6779 = vmatprep.subr.bf16.mxu0 %v6233
    %6780 = vmatpush2.bf16.msra.mxu0 %v6232
    %6781 = vmatprep.subr.bf16.mxu0 %v6229
    %6782 = vmatpush2.bf16.msra.mxu0 %v6228
    %6783 = vmatprep.subr.bf16.mxu0 %v6225
    %6784 = vmatpush2.bf16.msra.mxu0 %v6224
    %6785 = vmatprep.mubr.bf16.mxu0 %v5021
    %6786 = vmatmul.mubr.bf16.gmra.mxu0 %v5020
    %v6787 = vpop.f32.mrf.mxu0
    %v6788 = vadd.f32 %v6675, %v6787
    %v6789 = vpop.f32.mrf.mxu0
    %v6790 = vadd.f32 %v6677, %v6789
    %v6791 = vpop.f32.mrf.mxu0
    %v6792 = vadd.f32 %v6679, %v6791
    %v6793 = vpop.f32.mrf.mxu0
    %v6794 = vadd.f32 %v6681, %v6793
    %6795 = vmatprep.mubr.bf16.mxu0 %v5029
    %6796 = vmatmul.mubr.bf16.gmra.mxu0 %v5028
    %v6797 = vpop.f32.mrf.mxu0
    %v6798 = vadd.f32 %v6685, %v6797
    %v6799 = vpop.f32.mrf.mxu0
    %v6800 = vadd.f32 %v6687, %v6799
    %v6801 = vpop.f32.mrf.mxu0
    %v6802 = vadd.f32 %v6689, %v6801
    %v6803 = vpop.f32.mrf.mxu0
    %v6804 = vadd.f32 %v6691, %v6803
    %6805 = vmatprep.mubr.bf16.mxu0 %v5037
    %6806 = vmatmul.mubr.bf16.gmra.mxu0 %v5036
    %v6807 = vpop.f32.mrf.mxu0
    %v6808 = vadd.f32 %v6695, %v6807
    %v6809 = vpop.f32.mrf.mxu0
    %v6810 = vadd.f32 %v6697, %v6809
    %v6811 = vpop.f32.mrf.mxu0
    %v6812 = vadd.f32 %v6699, %v6811
    %v6813 = vpop.f32.mrf.mxu0
    %v6814 = vadd.f32 %v6701, %v6813
    %6815 = vmatprep.mubr.bf16.mxu0 %v5045
    %6816 = vmatmul.mubr.bf16.gmra.mxu0 %v5044
    %v6817 = vpop.f32.mrf.mxu0
    %v6818 = vadd.f32 %v6705, %v6817
    %v6819 = vpop.f32.mrf.mxu0
    %v6820 = vadd.f32 %v6707, %v6819
    %v6821 = vpop.f32.mrf.mxu0
    %v6822 = vadd.f32 %v6709, %v6821
    %v6823 = vpop.f32.mrf.mxu0
    %v6824 = vadd.f32 %v6711, %v6823
    %6825 = vmatprep.mubr.bf16.mxu0 %v5053
    %6826 = vmatmul.mubr.bf16.gmra.mxu0 %v5052
    %v6827 = vpop.f32.mrf.mxu0
    %v6828 = vadd.f32 %v6715, %v6827
    %v6829 = vpop.f32.mrf.mxu0
    %v6830 = vadd.f32 %v6717, %v6829
    %v6831 = vpop.f32.mrf.mxu0
    %v6832 = vadd.f32 %v6719, %v6831
    %v6833 = vpop.f32.mrf.mxu0
    %v6834 = vadd.f32 %v6721, %v6833
    %6835 = vmatprep.mubr.bf16.mxu0 %v5061
    %6836 = vmatmul.mubr.bf16.gmra.mxu0 %v5060
    %v6837 = vpop.f32.mrf.mxu0
    %v6838 = vadd.f32 %v6725, %v6837
    %v6839 = vpop.f32.mrf.mxu0
    %v6840 = vadd.f32 %v6727, %v6839
    %v6841 = vpop.f32.mrf.mxu0
    %v6842 = vadd.f32 %v6729, %v6841
    %v6843 = vpop.f32.mrf.mxu0
    %v6844 = vadd.f32 %v6731, %v6843
    %6845 = vmatprep.mubr.bf16.mxu0 %v5069
    %6846 = vmatmul.mubr.bf16.gmra.mxu0 %v5068
    %v6847 = vpop.f32.mrf.mxu0
    %v6848 = vadd.f32 %v6735, %v6847
    %v6849 = vpop.f32.mrf.mxu0
    %v6850 = vadd.f32 %v6737, %v6849
    %v6851 = vpop.f32.mrf.mxu0
    %v6852 = vadd.f32 %v6739, %v6851
    %v6853 = vpop.f32.mrf.mxu0
    %v6854 = vadd.f32 %v6741, %v6853
    %6855 = vmatprep.mubr.bf16.mxu0 %v5077
    %6856 = vmatmul.mubr.bf16.gmra.mxu0 %v5076
    %v6857 = vpop.f32.mrf.mxu0
    %v6858 = vadd.f32 %v6745, %v6857
    %v6859 = vpop.f32.mrf.mxu0
    %v6860 = vadd.f32 %v6747, %v6859
    %v6861 = vpop.f32.mrf.mxu0
    %v6862 = vadd.f32 %v6749, %v6861
    %v6863 = vpop.f32.mrf.mxu0
    %v6864 = vadd.f32 %v6751, %v6863
    %6865 = vdwg.mxu0
    %6866 = vmatprep.subr.bf16.mxu0 %v6285
    %6867 = vmatpush1.bf16.msra.mxu0 %v6284
    %6868 = vmatprep.subr.bf16.mxu0 %v6281
    %6869 = vmatpush1.bf16.msra.mxu0 %v6280
    %6870 = vmatprep.subr.bf16.mxu0 %v6277
    %6871 = vmatpush1.bf16.msra.mxu0 %v6276
    %6872 = vmatprep.subr.bf16.mxu0 %v6273
    %6873 = vmatpush1.bf16.msra.mxu0 %v6272
    %6874 = vmatprep.subr.bf16.mxu0 %v6269
    %6875 = vmatpush1.bf16.msra.mxu0 %v6268
    %6876 = vmatprep.subr.bf16.mxu0 %v6265
    %6877 = vmatpush1.bf16.msra.mxu0 %v6264
    %6878 = vmatprep.subr.bf16.mxu0 %v6261
    %6879 = vmatpush1.bf16.msra.mxu0 %v6260
    %6880 = vmatprep.subr.bf16.mxu0 %v6257
    %6881 = vmatpush1.bf16.msra.mxu0 %v6256
    %6882 = vmatprep.subr.bf16.mxu0 %v6317
    %6883 = vmatpush2.bf16.msra.mxu0 %v6316
    %6884 = vmatprep.subr.bf16.mxu0 %v6313
    %6885 = vmatpush2.bf16.msra.mxu0 %v6312
    %6886 = vmatprep.subr.bf16.mxu0 %v6309
    %6887 = vmatpush2.bf16.msra.mxu0 %v6308
    %6888 = vmatprep.subr.bf16.mxu0 %v6305
    %6889 = vmatpush2.bf16.msra.mxu0 %v6304
    %6890 = vmatprep.subr.bf16.mxu0 %v6301
    %6891 = vmatpush2.bf16.msra.mxu0 %v6300
    %6892 = vmatprep.subr.bf16.mxu0 %v6297
    %6893 = vmatpush2.bf16.msra.mxu0 %v6296
    %6894 = vmatprep.subr.bf16.mxu0 %v6293
    %6895 = vmatpush2.bf16.msra.mxu0 %v6292
    %6896 = vmatprep.subr.bf16.mxu0 %v6289
    %6897 = vmatpush2.bf16.msra.mxu0 %v6288
    %6898 = vmatprep.mubr.bf16.mxu0 %v5023
    %6899 = vmatmul.mubr.bf16.gmra.mxu0 %v5022
    %v6900 = vpop.f32.mrf.mxu0
    %v6901 = vadd.f32 %v6788, %v6900
    %v6902 = vpop.f32.mrf.mxu0
    %v6903 = vadd.f32 %v6790, %v6902
    %v6904 = vpop.f32.mrf.mxu0
    %v6905 = vadd.f32 %v6792, %v6904
    %v6906 = vpop.f32.mrf.mxu0
    %v6907 = vadd.f32 %v6794, %v6906
    %6908 = vmatprep.mubr.bf16.mxu0 %v5031
    %6909 = vmatmul.mubr.bf16.gmra.mxu0 %v5030
    %v6910 = vpop.f32.mrf.mxu0
    %v6911 = vadd.f32 %v6798, %v6910
    %v6912 = vpop.f32.mrf.mxu0
    %v6913 = vadd.f32 %v6800, %v6912
    %v6914 = vpop.f32.mrf.mxu0
    %v6915 = vadd.f32 %v6802, %v6914
    %v6916 = vpop.f32.mrf.mxu0
    %v6917 = vadd.f32 %v6804, %v6916
    %6918 = vmatprep.mubr.bf16.mxu0 %v5039
    %6919 = vmatmul.mubr.bf16.gmra.mxu0 %v5038
    %v6920 = vpop.f32.mrf.mxu0
    %v6921 = vadd.f32 %v6808, %v6920
    %v6922 = vpop.f32.mrf.mxu0
    %v6923 = vadd.f32 %v6810, %v6922
    %v6924 = vpop.f32.mrf.mxu0
    %v6925 = vadd.f32 %v6812, %v6924
    %v6926 = vpop.f32.mrf.mxu0
    %v6927 = vadd.f32 %v6814, %v6926
    %6928 = vmatprep.mubr.bf16.mxu0 %v5047
    %6929 = vmatmul.mubr.bf16.gmra.mxu0 %v5046
    %v6930 = vpop.f32.mrf.mxu0
    %v6931 = vadd.f32 %v6818, %v6930
    %v6932 = vpop.f32.mrf.mxu0
    %v6933 = vadd.f32 %v6820, %v6932
    %v6934 = vpop.f32.mrf.mxu0
    %v6935 = vadd.f32 %v6822, %v6934
    %v6936 = vpop.f32.mrf.mxu0
    %v6937 = vadd.f32 %v6824, %v6936
    %6938 = vmatprep.mubr.bf16.mxu0 %v5055
    %6939 = vmatmul.mubr.bf16.gmra.mxu0 %v5054
    %v6940 = vpop.f32.mrf.mxu0
    %v6941 = vadd.f32 %v6828, %v6940
    %v6942 = vpop.f32.mrf.mxu0
    %v6943 = vadd.f32 %v6830, %v6942
    %v6944 = vpop.f32.mrf.mxu0
    %v6945 = vadd.f32 %v6832, %v6944
    %v6946 = vpop.f32.mrf.mxu0
    %v6947 = vadd.f32 %v6834, %v6946
    %6948 = vmatprep.mubr.bf16.mxu0 %v5063
    %6949 = vmatmul.mubr.bf16.gmra.mxu0 %v5062
    %v6950 = vpop.f32.mrf.mxu0
    %v6951 = vadd.f32 %v6838, %v6950
    %v6952 = vpop.f32.mrf.mxu0
    %v6953 = vadd.f32 %v6840, %v6952
    %v6954 = vpop.f32.mrf.mxu0
    %v6955 = vadd.f32 %v6842, %v6954
    %v6956 = vpop.f32.mrf.mxu0
    %v6957 = vadd.f32 %v6844, %v6956
    %6958 = vmatprep.mubr.bf16.mxu0 %v5071
    %6959 = vmatmul.mubr.bf16.gmra.mxu0 %v5070
    %v6960 = vpop.f32.mrf.mxu0
    %v6961 = vadd.f32 %v6848, %v6960
    %v6962 = vpop.f32.mrf.mxu0
    %v6963 = vadd.f32 %v6850, %v6962
    %v6964 = vpop.f32.mrf.mxu0
    %v6965 = vadd.f32 %v6852, %v6964
    %v6966 = vpop.f32.mrf.mxu0
    %v6967 = vadd.f32 %v6854, %v6966
    %6968 = vmatprep.mubr.bf16.mxu0 %v5079
    %6969 = vmatmul.mubr.bf16.gmra.mxu0 %v5078
    %v6970 = vpop.f32.mrf.mxu0
    %v6971 = vadd.f32 %v6858, %v6970
    %v6972 = vpop.f32.mrf.mxu0
    %v6973 = vadd.f32 %v6860, %v6972
    %v6974 = vpop.f32.mrf.mxu0
    %v6975 = vadd.f32 %v6862, %v6974
    %v6976 = vpop.f32.mrf.mxu0
    %v6977 = vadd.f32 %v6864, %v6976
    %6978 = vdwg.mxu0
    %6979 = vmatprep.subr.bf16.mxu0 %v6349
    %6980 = vmatpush1.bf16.msra.mxu0 %v6348
    %6981 = vmatprep.subr.bf16.mxu0 %v6345
    %6982 = vmatpush1.bf16.msra.mxu0 %v6344
    %6983 = vmatprep.subr.bf16.mxu0 %v6341
    %6984 = vmatpush1.bf16.msra.mxu0 %v6340
    %6985 = vmatprep.subr.bf16.mxu0 %v6337
    %6986 = vmatpush1.bf16.msra.mxu0 %v6336
    %6987 = vmatprep.subr.bf16.mxu0 %v6333
    %6988 = vmatpush1.bf16.msra.mxu0 %v6332
    %6989 = vmatprep.subr.bf16.mxu0 %v6329
    %6990 = vmatpush1.bf16.msra.mxu0 %v6328
    %6991 = vmatprep.subr.bf16.mxu0 %v6325
    %6992 = vmatpush1.bf16.msra.mxu0 %v6324
    %6993 = vmatprep.subr.bf16.mxu0 %v6321
    %6994 = vmatpush1.bf16.msra.mxu0 %v6320
    %6995 = vmatprep.subr.bf16.mxu0 %v6381
    %6996 = vmatpush2.bf16.msra.mxu0 %v6380
    %6997 = vmatprep.subr.bf16.mxu0 %v6377
    %6998 = vmatpush2.bf16.msra.mxu0 %v6376
    %6999 = vmatprep.subr.bf16.mxu0 %v6373
    %7000 = vmatpush2.bf16.msra.mxu0 %v6372
    %7001 = vmatprep.subr.bf16.mxu0 %v6369
    %7002 = vmatpush2.bf16.msra.mxu0 %v6368
    %7003 = vmatprep.subr.bf16.mxu0 %v6365
    %7004 = vmatpush2.bf16.msra.mxu0 %v6364
    %7005 = vmatprep.subr.bf16.mxu0 %v6361
    %7006 = vmatpush2.bf16.msra.mxu0 %v6360
    %7007 = vmatprep.subr.bf16.mxu0 %v6357
    %7008 = vmatpush2.bf16.msra.mxu0 %v6356
    %7009 = vmatprep.subr.bf16.mxu0 %v6353
    %7010 = vmatpush2.bf16.msra.mxu0 %v6352
    %7011 = vmatprep.mubr.bf16.mxu0 %v5025
    %7012 = vmatmul.mubr.bf16.gmra.mxu0 %v5024
    %v7013 = vpop.f32.mrf.mxu0
    %v7014 = vadd.f32 %v6901, %v7013
    %v7015 = vpop.f32.mrf.mxu0
    %v7016 = vadd.f32 %v6903, %v7015
    %v7017 = vpop.f32.mrf.mxu0
    %v7018 = vadd.f32 %v6905, %v7017
    %v7019 = vpop.f32.mrf.mxu0
    %v7020 = vadd.f32 %v6907, %v7019
    %7021 = vmatprep.mubr.bf16.mxu0 %v5033
    %7022 = vmatmul.mubr.bf16.gmra.mxu0 %v5032
    %v7023 = vpop.f32.mrf.mxu0
    %v7024 = vadd.f32 %v6911, %v7023
    %v7025 = vpop.f32.mrf.mxu0
    %v7026 = vadd.f32 %v6913, %v7025
    %v7027 = vpop.f32.mrf.mxu0
    %v7028 = vadd.f32 %v6915, %v7027
    %v7029 = vpop.f32.mrf.mxu0
    %v7030 = vadd.f32 %v6917, %v7029
    %7031 = vmatprep.mubr.bf16.mxu0 %v5041
    %7032 = vmatmul.mubr.bf16.gmra.mxu0 %v5040
    %v7033 = vpop.f32.mrf.mxu0
    %v7034 = vadd.f32 %v6921, %v7033
    %v7035 = vpop.f32.mrf.mxu0
    %v7036 = vadd.f32 %v6923, %v7035
    %v7037 = vpop.f32.mrf.mxu0
    %v7038 = vadd.f32 %v6925, %v7037
    %v7039 = vpop.f32.mrf.mxu0
    %v7040 = vadd.f32 %v6927, %v7039
    %7041 = vmatprep.mubr.bf16.mxu0 %v5049
    %7042 = vmatmul.mubr.bf16.gmra.mxu0 %v5048
    %v7043 = vpop.f32.mrf.mxu0
    %v7044 = vadd.f32 %v6931, %v7043
    %v7045 = vpop.f32.mrf.mxu0
    %v7046 = vadd.f32 %v6933, %v7045
    %v7047 = vpop.f32.mrf.mxu0
    %v7048 = vadd.f32 %v6935, %v7047
    %v7049 = vpop.f32.mrf.mxu0
    %v7050 = vadd.f32 %v6937, %v7049
    %7051 = vmatprep.mubr.bf16.mxu0 %v5057
    %7052 = vmatmul.mubr.bf16.gmra.mxu0 %v5056
    %v7053 = vpop.f32.mrf.mxu0
    %v7054 = vadd.f32 %v6941, %v7053
    %v7055 = vpop.f32.mrf.mxu0
    %v7056 = vadd.f32 %v6943, %v7055
    %v7057 = vpop.f32.mrf.mxu0
    %v7058 = vadd.f32 %v6945, %v7057
    %v7059 = vpop.f32.mrf.mxu0
    %v7060 = vadd.f32 %v6947, %v7059
    %7061 = vmatprep.mubr.bf16.mxu0 %v5065
    %7062 = vmatmul.mubr.bf16.gmra.mxu0 %v5064
    %v7063 = vpop.f32.mrf.mxu0
    %v7064 = vadd.f32 %v6951, %v7063
    %v7065 = vpop.f32.mrf.mxu0
    %v7066 = vadd.f32 %v6953, %v7065
    %v7067 = vpop.f32.mrf.mxu0
    %v7068 = vadd.f32 %v6955, %v7067
    %v7069 = vpop.f32.mrf.mxu0
    %v7070 = vadd.f32 %v6957, %v7069
    %7071 = vmatprep.mubr.bf16.mxu0 %v5073
    %7072 = vmatmul.mubr.bf16.gmra.mxu0 %v5072
    %v7073 = vpop.f32.mrf.mxu0
    %v7074 = vadd.f32 %v6961, %v7073
    %v7075 = vpop.f32.mrf.mxu0
    %v7076 = vadd.f32 %v6963, %v7075
    %v7077 = vpop.f32.mrf.mxu0
    %v7078 = vadd.f32 %v6965, %v7077
    %v7079 = vpop.f32.mrf.mxu0
    %v7080 = vadd.f32 %v6967, %v7079
    %7081 = vmatprep.mubr.bf16.mxu0 %v5081
    %7082 = vmatmul.mubr.bf16.gmra.mxu0 %v5080
    %v7083 = vpop.f32.mrf.mxu0
    %v7084 = vadd.f32 %v6971, %v7083
    %v7085 = vpop.f32.mrf.mxu0
    %v7086 = vadd.f32 %v6973, %v7085
    %v7087 = vpop.f32.mrf.mxu0
    %v7088 = vadd.f32 %v6975, %v7087
    %v7089 = vpop.f32.mrf.mxu0
    %v7090 = vadd.f32 %v6977, %v7089
    %7091 = vdwg.mxu0
    %7092 = vmatprep.subr.bf16.mxu0 %v6159
    %7093 = vmatpush1.bf16.msra.mxu0 %v6158
    %7094 = vmatprep.subr.bf16.mxu0 %v6155
    %7095 = vmatpush1.bf16.msra.mxu0 %v6154
    %7096 = vmatprep.subr.bf16.mxu0 %v6151
    %7097 = vmatpush1.bf16.msra.mxu0 %v6150
    %7098 = vmatprep.subr.bf16.mxu0 %v6147
    %7099 = vmatpush1.bf16.msra.mxu0 %v6146
    %7100 = vmatprep.subr.bf16.mxu0 %v6143
    %7101 = vmatpush1.bf16.msra.mxu0 %v6142
    %7102 = vmatprep.subr.bf16.mxu0 %v6139
    %7103 = vmatpush1.bf16.msra.mxu0 %v6138
    %7104 = vmatprep.subr.bf16.mxu0 %v6135
    %7105 = vmatpush1.bf16.msra.mxu0 %v6134
    %7106 = vmatprep.subr.bf16.mxu0 %v6131
    %7107 = vmatpush1.bf16.msra.mxu0 %v6130
    %7108 = vmatprep.subr.bf16.mxu0 %v6191
    %7109 = vmatpush2.bf16.msra.mxu0 %v6190
    %7110 = vmatprep.subr.bf16.mxu0 %v6187
    %7111 = vmatpush2.bf16.msra.mxu0 %v6186
    %7112 = vmatprep.subr.bf16.mxu0 %v6183
    %7113 = vmatpush2.bf16.msra.mxu0 %v6182
    %7114 = vmatprep.subr.bf16.mxu0 %v6179
    %7115 = vmatpush2.bf16.msra.mxu0 %v6178
    %7116 = vmatprep.subr.bf16.mxu0 %v6175
    %7117 = vmatpush2.bf16.msra.mxu0 %v6174
    %7118 = vmatprep.subr.bf16.mxu0 %v6171
    %7119 = vmatpush2.bf16.msra.mxu0 %v6170
    %7120 = vmatprep.subr.bf16.mxu0 %v6167
    %7121 = vmatpush2.bf16.msra.mxu0 %v6166
    %7122 = vmatprep.subr.bf16.mxu0 %v6163
    %7123 = vmatpush2.bf16.msra.mxu0 %v6162
    %7124 = vmatprep.mubr.bf16.mxu0 %v5019
    %7125 = vmatmul.mubr.bf16.gmra.mxu0 %v5018
    %v7126 = vpop.f32.mrf.mxu0
    %v7127 = vadd.f32 %v5351, %v7126
    %v7128 = vpop.f32.mrf.mxu0
    %v7129 = vadd.f32 %v5355, %v7128
    %v7130 = vpop.f32.mrf.mxu0
    %v7131 = vadd.f32 %v5351, %v7130
    %v7132 = vpop.f32.mrf.mxu0
    %v7133 = vadd.f32 %v5355, %v7132
    %7134 = vmatprep.mubr.bf16.mxu0 %v5027
    %7135 = vmatmul.mubr.bf16.gmra.mxu0 %v5026
    %v7136 = vpop.f32.mrf.mxu0
    %v7137 = vadd.f32 %v5351, %v7136
    %v7138 = vpop.f32.mrf.mxu0
    %v7139 = vadd.f32 %v5355, %v7138
    %v7140 = vpop.f32.mrf.mxu0
    %v7141 = vadd.f32 %v5351, %v7140
    %v7142 = vpop.f32.mrf.mxu0
    %v7143 = vadd.f32 %v5355, %v7142
    %7144 = vmatprep.mubr.bf16.mxu0 %v5035
    %7145 = vmatmul.mubr.bf16.gmra.mxu0 %v5034
    %v7146 = vpop.f32.mrf.mxu0
    %v7147 = vadd.f32 %v5351, %v7146
    %v7148 = vpop.f32.mrf.mxu0
    %v7149 = vadd.f32 %v5355, %v7148
    %v7150 = vpop.f32.mrf.mxu0
    %v7151 = vadd.f32 %v5351, %v7150
    %v7152 = vpop.f32.mrf.mxu0
    %v7153 = vadd.f32 %v5355, %v7152
    %7154 = vmatprep.mubr.bf16.mxu0 %v5043
    %7155 = vmatmul.mubr.bf16.gmra.mxu0 %v5042
    %v7156 = vpop.f32.mrf.mxu0
    %v7157 = vadd.f32 %v5351, %v7156
    %v7158 = vpop.f32.mrf.mxu0
    %v7159 = vadd.f32 %v5355, %v7158
    %v7160 = vpop.f32.mrf.mxu0
    %v7161 = vadd.f32 %v5351, %v7160
    %v7162 = vpop.f32.mrf.mxu0
    %v7163 = vadd.f32 %v5355, %v7162
    %7164 = vmatprep.mubr.bf16.mxu0 %v5051
    %7165 = vmatmul.mubr.bf16.gmra.mxu0 %v5050
    %v7166 = vpop.f32.mrf.mxu0
    %v7167 = vadd.f32 %v5351, %v7166
    %v7168 = vpop.f32.mrf.mxu0
    %v7169 = vadd.f32 %v5355, %v7168
    %v7170 = vpop.f32.mrf.mxu0
    %v7171 = vadd.f32 %v5351, %v7170
    %v7172 = vpop.f32.mrf.mxu0
    %v7173 = vadd.f32 %v5355, %v7172
    %7174 = vmatprep.mubr.bf16.mxu0 %v5059
    %7175 = vmatmul.mubr.bf16.gmra.mxu0 %v5058
    %v7176 = vpop.f32.mrf.mxu0
    %v7177 = vadd.f32 %v5351, %v7176
    %v7178 = vpop.f32.mrf.mxu0
    %v7179 = vadd.f32 %v5355, %v7178
    %v7180 = vpop.f32.mrf.mxu0
    %v7181 = vadd.f32 %v5351, %v7180
    %v7182 = vpop.f32.mrf.mxu0
    %v7183 = vadd.f32 %v5355, %v7182
    %7184 = vmatprep.mubr.bf16.mxu0 %v5067
    %7185 = vmatmul.mubr.bf16.gmra.mxu0 %v5066
    %v7186 = vpop.f32.mrf.mxu0
    %v7187 = vadd.f32 %v5351, %v7186
    %v7188 = vpop.f32.mrf.mxu0
    %v7189 = vadd.f32 %v5355, %v7188
    %v7190 = vpop.f32.mrf.mxu0
    %v7191 = vadd.f32 %v5351, %v7190
    %v7192 = vpop.f32.mrf.mxu0
    %v7193 = vadd.f32 %v5355, %v7192
    %7194 = vmatprep.mubr.bf16.mxu0 %v5075
    %7195 = vmatmul.mubr.bf16.gmra.mxu0 %v5074
    %v7196 = vpop.f32.mrf.mxu0
    %v7197 = vadd.f32 %v5351, %v7196
    %v7198 = vpop.f32.mrf.mxu0
    %v7199 = vadd.f32 %v5355, %v7198
    %v7200 = vpop.f32.mrf.mxu0
    %v7201 = vadd.f32 %v5351, %v7200
    %v7202 = vpop.f32.mrf.mxu0
    %v7203 = vadd.f32 %v5355, %v7202
    %7204 = vdwg.mxu0
    %7205 = vmatprep.subr.bf16.mxu0 %v6223
    %7206 = vmatpush1.bf16.msra.mxu0 %v6222
    %7207 = vmatprep.subr.bf16.mxu0 %v6219
    %7208 = vmatpush1.bf16.msra.mxu0 %v6218
    %7209 = vmatprep.subr.bf16.mxu0 %v6215
    %7210 = vmatpush1.bf16.msra.mxu0 %v6214
    %7211 = vmatprep.subr.bf16.mxu0 %v6211
    %7212 = vmatpush1.bf16.msra.mxu0 %v6210
    %7213 = vmatprep.subr.bf16.mxu0 %v6207
    %7214 = vmatpush1.bf16.msra.mxu0 %v6206
    %7215 = vmatprep.subr.bf16.mxu0 %v6203
    %7216 = vmatpush1.bf16.msra.mxu0 %v6202
    %7217 = vmatprep.subr.bf16.mxu0 %v6199
    %7218 = vmatpush1.bf16.msra.mxu0 %v6198
    %7219 = vmatprep.subr.bf16.mxu0 %v6195
    %7220 = vmatpush1.bf16.msra.mxu0 %v6194
    %7221 = vmatprep.subr.bf16.mxu0 %v6255
    %7222 = vmatpush2.bf16.msra.mxu0 %v6254
    %7223 = vmatprep.subr.bf16.mxu0 %v6251
    %7224 = vmatpush2.bf16.msra.mxu0 %v6250
    %7225 = vmatprep.subr.bf16.mxu0 %v6247
    %7226 = vmatpush2.bf16.msra.mxu0 %v6246
    %7227 = vmatprep.subr.bf16.mxu0 %v6243
    %7228 = vmatpush2.bf16.msra.mxu0 %v6242
    %7229 = vmatprep.subr.bf16.mxu0 %v6239
    %7230 = vmatpush2.bf16.msra.mxu0 %v6238
    %7231 = vmatprep.subr.bf16.mxu0 %v6235
    %7232 = vmatpush2.bf16.msra.mxu0 %v6234
    %7233 = vmatprep.subr.bf16.mxu0 %v6231
    %7234 = vmatpush2.bf16.msra.mxu0 %v6230
    %7235 = vmatprep.subr.bf16.mxu0 %v6227
    %7236 = vmatpush2.bf16.msra.mxu0 %v6226
    %7237 = vmatprep.mubr.bf16.mxu0 %v5021
    %7238 = vmatmul.mubr.bf16.gmra.mxu0 %v5020
    %v7239 = vpop.f32.mrf.mxu0
    %v7240 = vadd.f32 %v7127, %v7239
    %v7241 = vpop.f32.mrf.mxu0
    %v7242 = vadd.f32 %v7129, %v7241
    %v7243 = vpop.f32.mrf.mxu0
    %v7244 = vadd.f32 %v7131, %v7243
    %v7245 = vpop.f32.mrf.mxu0
    %v7246 = vadd.f32 %v7133, %v7245
    %7247 = vmatprep.mubr.bf16.mxu0 %v5029
    %7248 = vmatmul.mubr.bf16.gmra.mxu0 %v5028
    %v7249 = vpop.f32.mrf.mxu0
    %v7250 = vadd.f32 %v7137, %v7249
    %v7251 = vpop.f32.mrf.mxu0
    %v7252 = vadd.f32 %v7139, %v7251
    %v7253 = vpop.f32.mrf.mxu0
    %v7254 = vadd.f32 %v7141, %v7253
    %v7255 = vpop.f32.mrf.mxu0
    %v7256 = vadd.f32 %v7143, %v7255
    %7257 = vmatprep.mubr.bf16.mxu0 %v5037
    %7258 = vmatmul.mubr.bf16.gmra.mxu0 %v5036
    %v7259 = vpop.f32.mrf.mxu0
    %v7260 = vadd.f32 %v7147, %v7259
    %v7261 = vpop.f32.mrf.mxu0
    %v7262 = vadd.f32 %v7149, %v7261
    %v7263 = vpop.f32.mrf.mxu0
    %v7264 = vadd.f32 %v7151, %v7263
    %v7265 = vpop.f32.mrf.mxu0
    %v7266 = vadd.f32 %v7153, %v7265
    %7267 = vmatprep.mubr.bf16.mxu0 %v5045
    %7268 = vmatmul.mubr.bf16.gmra.mxu0 %v5044
    %v7269 = vpop.f32.mrf.mxu0
    %v7270 = vadd.f32 %v7157, %v7269
    %v7271 = vpop.f32.mrf.mxu0
    %v7272 = vadd.f32 %v7159, %v7271
    %v7273 = vpop.f32.mrf.mxu0
    %v7274 = vadd.f32 %v7161, %v7273
    %v7275 = vpop.f32.mrf.mxu0
    %v7276 = vadd.f32 %v7163, %v7275
    %7277 = vmatprep.mubr.bf16.mxu0 %v5053
    %7278 = vmatmul.mubr.bf16.gmra.mxu0 %v5052
    %v7279 = vpop.f32.mrf.mxu0
    %v7280 = vadd.f32 %v7167, %v7279
    %v7281 = vpop.f32.mrf.mxu0
    %v7282 = vadd.f32 %v7169, %v7281
    %v7283 = vpop.f32.mrf.mxu0
    %v7284 = vadd.f32 %v7171, %v7283
    %v7285 = vpop.f32.mrf.mxu0
    %v7286 = vadd.f32 %v7173, %v7285
    %7287 = vmatprep.mubr.bf16.mxu0 %v5061
    %7288 = vmatmul.mubr.bf16.gmra.mxu0 %v5060
    %v7289 = vpop.f32.mrf.mxu0
    %v7290 = vadd.f32 %v7177, %v7289
    %v7291 = vpop.f32.mrf.mxu0
    %v7292 = vadd.f32 %v7179, %v7291
    %v7293 = vpop.f32.mrf.mxu0
    %v7294 = vadd.f32 %v7181, %v7293
    %v7295 = vpop.f32.mrf.mxu0
    %v7296 = vadd.f32 %v7183, %v7295
    %7297 = vmatprep.mubr.bf16.mxu0 %v5069
    %7298 = vmatmul.mubr.bf16.gmra.mxu0 %v5068
    %v7299 = vpop.f32.mrf.mxu0
    %v7300 = vadd.f32 %v7187, %v7299
    %v7301 = vpop.f32.mrf.mxu0
    %v7302 = vadd.f32 %v7189, %v7301
    %v7303 = vpop.f32.mrf.mxu0
    %v7304 = vadd.f32 %v7191, %v7303
    %v7305 = vpop.f32.mrf.mxu0
    %v7306 = vadd.f32 %v7193, %v7305
    %7307 = vmatprep.mubr.bf16.mxu0 %v5077
    %7308 = vmatmul.mubr.bf16.gmra.mxu0 %v5076
    %v7309 = vpop.f32.mrf.mxu0
    %v7310 = vadd.f32 %v7197, %v7309
    %v7311 = vpop.f32.mrf.mxu0
    %v7312 = vadd.f32 %v7199, %v7311
    %v7313 = vpop.f32.mrf.mxu0
    %v7314 = vadd.f32 %v7201, %v7313
    %v7315 = vpop.f32.mrf.mxu0
    %v7316 = vadd.f32 %v7203, %v7315
    %7317 = vdwg.mxu0
    %7318 = vmatprep.subr.bf16.mxu0 %v6287
    %7319 = vmatpush1.bf16.msra.mxu0 %v6286
    %7320 = vmatprep.subr.bf16.mxu0 %v6283
    %7321 = vmatpush1.bf16.msra.mxu0 %v6282
    %7322 = vmatprep.subr.bf16.mxu0 %v6279
    %7323 = vmatpush1.bf16.msra.mxu0 %v6278
    %7324 = vmatprep.subr.bf16.mxu0 %v6275
    %7325 = vmatpush1.bf16.msra.mxu0 %v6274
    %7326 = vmatprep.subr.bf16.mxu0 %v6271
    %7327 = vmatpush1.bf16.msra.mxu0 %v6270
    %7328 = vmatprep.subr.bf16.mxu0 %v6267
    %7329 = vmatpush1.bf16.msra.mxu0 %v6266
    %7330 = vmatprep.subr.bf16.mxu0 %v6263
    %7331 = vmatpush1.bf16.msra.mxu0 %v6262
    %7332 = vmatprep.subr.bf16.mxu0 %v6259
    %7333 = vmatpush1.bf16.msra.mxu0 %v6258
    %7334 = vmatprep.subr.bf16.mxu0 %v6319
    %7335 = vmatpush2.bf16.msra.mxu0 %v6318
    %7336 = vmatprep.subr.bf16.mxu0 %v6315
    %7337 = vmatpush2.bf16.msra.mxu0 %v6314
    %7338 = vmatprep.subr.bf16.mxu0 %v6311
    %7339 = vmatpush2.bf16.msra.mxu0 %v6310
    %7340 = vmatprep.subr.bf16.mxu0 %v6307
    %7341 = vmatpush2.bf16.msra.mxu0 %v6306
    %7342 = vmatprep.subr.bf16.mxu0 %v6303
    %7343 = vmatpush2.bf16.msra.mxu0 %v6302
    %7344 = vmatprep.subr.bf16.mxu0 %v6299
    %7345 = vmatpush2.bf16.msra.mxu0 %v6298
    %7346 = vmatprep.subr.bf16.mxu0 %v6295
    %7347 = vmatpush2.bf16.msra.mxu0 %v6294
    %7348 = vmatprep.subr.bf16.mxu0 %v6291
    %7349 = vmatpush2.bf16.msra.mxu0 %v6290
    %7350 = vmatprep.mubr.bf16.mxu0 %v5023
    %7351 = vmatmul.mubr.bf16.gmra.mxu0 %v5022
    %v7352 = vpop.f32.mrf.mxu0
    %v7353 = vadd.f32 %v7240, %v7352
    %v7354 = vpop.f32.mrf.mxu0
    %v7355 = vadd.f32 %v7242, %v7354
    %v7356 = vpop.f32.mrf.mxu0
    %v7357 = vadd.f32 %v7244, %v7356
    %v7358 = vpop.f32.mrf.mxu0
    %v7359 = vadd.f32 %v7246, %v7358
    %7360 = vmatprep.mubr.bf16.mxu0 %v5031
    %7361 = vmatmul.mubr.bf16.gmra.mxu0 %v5030
    %v7362 = vpop.f32.mrf.mxu0
    %v7363 = vadd.f32 %v7250, %v7362
    %v7364 = vpop.f32.mrf.mxu0
    %v7365 = vadd.f32 %v7252, %v7364
    %v7366 = vpop.f32.mrf.mxu0
    %v7367 = vadd.f32 %v7254, %v7366
    %v7368 = vpop.f32.mrf.mxu0
    %v7369 = vadd.f32 %v7256, %v7368
    %7370 = vmatprep.mubr.bf16.mxu0 %v5039
    %7371 = vmatmul.mubr.bf16.gmra.mxu0 %v5038
    %v7372 = vpop.f32.mrf.mxu0
    %v7373 = vadd.f32 %v7260, %v7372
    %v7374 = vpop.f32.mrf.mxu0
    %v7375 = vadd.f32 %v7262, %v7374
    %v7376 = vpop.f32.mrf.mxu0
    %v7377 = vadd.f32 %v7264, %v7376
    %v7378 = vpop.f32.mrf.mxu0
    %v7379 = vadd.f32 %v7266, %v7378
    %7380 = vmatprep.mubr.bf16.mxu0 %v5047
    %7381 = vmatmul.mubr.bf16.gmra.mxu0 %v5046
    %v7382 = vpop.f32.mrf.mxu0
    %v7383 = vadd.f32 %v7270, %v7382
    %v7384 = vpop.f32.mrf.mxu0
    %v7385 = vadd.f32 %v7272, %v7384
    %v7386 = vpop.f32.mrf.mxu0
    %v7387 = vadd.f32 %v7274, %v7386
    %v7388 = vpop.f32.mrf.mxu0
    %v7389 = vadd.f32 %v7276, %v7388
    %7390 = vmatprep.mubr.bf16.mxu0 %v5055
    %7391 = vmatmul.mubr.bf16.gmra.mxu0 %v5054
    %v7392 = vpop.f32.mrf.mxu0
    %v7393 = vadd.f32 %v7280, %v7392
    %v7394 = vpop.f32.mrf.mxu0
    %v7395 = vadd.f32 %v7282, %v7394
    %v7396 = vpop.f32.mrf.mxu0
    %v7397 = vadd.f32 %v7284, %v7396
    %v7398 = vpop.f32.mrf.mxu0
    %v7399 = vadd.f32 %v7286, %v7398
    %7400 = vmatprep.mubr.bf16.mxu0 %v5063
    %7401 = vmatmul.mubr.bf16.gmra.mxu0 %v5062
    %v7402 = vpop.f32.mrf.mxu0
    %v7403 = vadd.f32 %v7290, %v7402
    %v7404 = vpop.f32.mrf.mxu0
    %v7405 = vadd.f32 %v7292, %v7404
    %v7406 = vpop.f32.mrf.mxu0
    %v7407 = vadd.f32 %v7294, %v7406
    %v7408 = vpop.f32.mrf.mxu0
    %v7409 = vadd.f32 %v7296, %v7408
    %7410 = vmatprep.mubr.bf16.mxu0 %v5071
    %7411 = vmatmul.mubr.bf16.gmra.mxu0 %v5070
    %v7412 = vpop.f32.mrf.mxu0
    %v7413 = vadd.f32 %v7300, %v7412
    %v7414 = vpop.f32.mrf.mxu0
    %v7415 = vadd.f32 %v7302, %v7414
    %v7416 = vpop.f32.mrf.mxu0
    %v7417 = vadd.f32 %v7304, %v7416
    %v7418 = vpop.f32.mrf.mxu0
    %v7419 = vadd.f32 %v7306, %v7418
    %7420 = vmatprep.mubr.bf16.mxu0 %v5079
    %7421 = vmatmul.mubr.bf16.gmra.mxu0 %v5078
    %v7422 = vpop.f32.mrf.mxu0
    %v7423 = vadd.f32 %v7310, %v7422
    %v7424 = vpop.f32.mrf.mxu0
    %v7425 = vadd.f32 %v7312, %v7424
    %v7426 = vpop.f32.mrf.mxu0
    %v7427 = vadd.f32 %v7314, %v7426
    %v7428 = vpop.f32.mrf.mxu0
    %v7429 = vadd.f32 %v7316, %v7428
    %7430 = vdwg.mxu0
    %7431 = vmatprep.subr.bf16.mxu0 %v6351
    %7432 = vmatpush1.bf16.msra.mxu0 %v6350
    %7433 = vmatprep.subr.bf16.mxu0 %v6347
    %7434 = vmatpush1.bf16.msra.mxu0 %v6346
    %7435 = vmatprep.subr.bf16.mxu0 %v6343
    %7436 = vmatpush1.bf16.msra.mxu0 %v6342
    %7437 = vmatprep.subr.bf16.mxu0 %v6339
    %7438 = vmatpush1.bf16.msra.mxu0 %v6338
    %7439 = vmatprep.subr.bf16.mxu0 %v6335
    %7440 = vmatpush1.bf16.msra.mxu0 %v6334
    %7441 = vmatprep.subr.bf16.mxu0 %v6331
    %7442 = vmatpush1.bf16.msra.mxu0 %v6330
    %7443 = vmatprep.subr.bf16.mxu0 %v6327
    %7444 = vmatpush1.bf16.msra.mxu0 %v6326
    %7445 = vmatprep.subr.bf16.mxu0 %v6323
    %7446 = vmatpush1.bf16.msra.mxu0 %v6322
    %7447 = vmatprep.subr.bf16.mxu0 %v6383
    %7448 = vmatpush2.bf16.msra.mxu0 %v6382
    %7449 = vmatprep.subr.bf16.mxu0 %v6379
    %7450 = vmatpush2.bf16.msra.mxu0 %v6378
    %7451 = vmatprep.subr.bf16.mxu0 %v6375
    %7452 = vmatpush2.bf16.msra.mxu0 %v6374
    %7453 = vmatprep.subr.bf16.mxu0 %v6371
    %7454 = vmatpush2.bf16.msra.mxu0 %v6370
    %7455 = vmatprep.subr.bf16.mxu0 %v6367
    %7456 = vmatpush2.bf16.msra.mxu0 %v6366
    %7457 = vmatprep.subr.bf16.mxu0 %v6363
    %7458 = vmatpush2.bf16.msra.mxu0 %v6362
    %7459 = vmatprep.subr.bf16.mxu0 %v6359
    %7460 = vmatpush2.bf16.msra.mxu0 %v6358
    %7461 = vmatprep.subr.bf16.mxu0 %v6355
    %7462 = vmatpush2.bf16.msra.mxu0 %v6354
    %7463 = vmatprep.mubr.bf16.mxu0 %v5025
    %7464 = vmatmul.mubr.bf16.gmra.mxu0 %v5024
    %v7465 = vpop.f32.mrf.mxu0
    %v7466 = vadd.f32 %v7353, %v7465
    %v7467 = vpop.f32.mrf.mxu0
    %v7468 = vadd.f32 %v7355, %v7467
    %v7469 = vpop.f32.mrf.mxu0
    %v7470 = vadd.f32 %v7357, %v7469
    %v7471 = vpop.f32.mrf.mxu0
    %v7472 = vadd.f32 %v7359, %v7471
    %7473 = vmatprep.mubr.bf16.mxu0 %v5033
    %7474 = vmatmul.mubr.bf16.gmra.mxu0 %v5032
    %v7475 = vpop.f32.mrf.mxu0
    %v7476 = vadd.f32 %v7363, %v7475
    %v7477 = vpop.f32.mrf.mxu0
    %v7478 = vadd.f32 %v7365, %v7477
    %v7479 = vpop.f32.mrf.mxu0
    %v7480 = vadd.f32 %v7367, %v7479
    %v7481 = vpop.f32.mrf.mxu0
    %v7482 = vadd.f32 %v7369, %v7481
    %7483 = vmatprep.mubr.bf16.mxu0 %v5041
    %7484 = vmatmul.mubr.bf16.gmra.mxu0 %v5040
    %v7485 = vpop.f32.mrf.mxu0
    %v7486 = vadd.f32 %v7373, %v7485
    %v7487 = vpop.f32.mrf.mxu0
    %v7488 = vadd.f32 %v7375, %v7487
    %v7489 = vpop.f32.mrf.mxu0
    %v7490 = vadd.f32 %v7377, %v7489
    %v7491 = vpop.f32.mrf.mxu0
    %v7492 = vadd.f32 %v7379, %v7491
    %7493 = vmatprep.mubr.bf16.mxu0 %v5049
    %7494 = vmatmul.mubr.bf16.gmra.mxu0 %v5048
    %v7495 = vpop.f32.mrf.mxu0
    %v7496 = vadd.f32 %v7383, %v7495
    %v7497 = vpop.f32.mrf.mxu0
    %v7498 = vadd.f32 %v7385, %v7497
    %v7499 = vpop.f32.mrf.mxu0
    %v7500 = vadd.f32 %v7387, %v7499
    %v7501 = vpop.f32.mrf.mxu0
    %v7502 = vadd.f32 %v7389, %v7501
    %7503 = vmatprep.mubr.bf16.mxu0 %v5057
    %7504 = vmatmul.mubr.bf16.gmra.mxu0 %v5056
    %v7505 = vpop.f32.mrf.mxu0
    %v7506 = vadd.f32 %v7393, %v7505
    %v7507 = vpop.f32.mrf.mxu0
    %v7508 = vadd.f32 %v7395, %v7507
    %v7509 = vpop.f32.mrf.mxu0
    %v7510 = vadd.f32 %v7397, %v7509
    %v7511 = vpop.f32.mrf.mxu0
    %v7512 = vadd.f32 %v7399, %v7511
    %7513 = vmatprep.mubr.bf16.mxu0 %v5065
    %7514 = vmatmul.mubr.bf16.gmra.mxu0 %v5064
    %v7515 = vpop.f32.mrf.mxu0
    %v7516 = vadd.f32 %v7403, %v7515
    %v7517 = vpop.f32.mrf.mxu0
    %v7518 = vadd.f32 %v7405, %v7517
    %v7519 = vpop.f32.mrf.mxu0
    %v7520 = vadd.f32 %v7407, %v7519
    %v7521 = vpop.f32.mrf.mxu0
    %v7522 = vadd.f32 %v7409, %v7521
    %7523 = vmatprep.mubr.bf16.mxu0 %v5073
    %7524 = vmatmul.mubr.bf16.gmra.mxu0 %v5072
    %v7525 = vpop.f32.mrf.mxu0
    %v7526 = vadd.f32 %v7413, %v7525
    %v7527 = vpop.f32.mrf.mxu0
    %v7528 = vadd.f32 %v7415, %v7527
    %v7529 = vpop.f32.mrf.mxu0
    %v7530 = vadd.f32 %v7417, %v7529
    %v7531 = vpop.f32.mrf.mxu0
    %v7532 = vadd.f32 %v7419, %v7531
    %7533 = vmatprep.mubr.bf16.mxu0 %v5081
    %7534 = vmatmul.mubr.bf16.gmra.mxu0 %v5080
    %v7535 = vpop.f32.mrf.mxu0
    %v7536 = vadd.f32 %v7423, %v7535
    %v7537 = vpop.f32.mrf.mxu0
    %v7538 = vadd.f32 %v7425, %v7537
    %v7539 = vpop.f32.mrf.mxu0
    %v7540 = vadd.f32 %v7427, %v7539
    %v7541 = vpop.f32.mrf.mxu0
    %v7542 = vadd.f32 %v7429, %v7541
    %7543 = vdwg.mxu0
    %v7544 = vmax.f32 %v7014, 0.0
    %v7545 = vmax.f32 %v7016, 0.0
    %v7546 = vmax.f32 %v7466, 0.0
    %v7547 = vmax.f32 %v7468, 0.0
    %v7548 = vmax.f32 %v7018, 0.0
    %v7549 = vmax.f32 %v7020, 0.0
    %v7550 = vmax.f32 %v7470, 0.0
    %v7551 = vmax.f32 %v7472, 0.0
    %v7552 = vmax.f32 %v7024, 0.0
    %v7553 = vmax.f32 %v7026, 0.0
    %v7554 = vmax.f32 %v7476, 0.0
    %v7555 = vmax.f32 %v7478, 0.0
    %v7556 = vmax.f32 %v7028, 0.0
    %v7557 = vmax.f32 %v7030, 0.0
    %v7558 = vmax.f32 %v7480, 0.0
    %v7559 = vmax.f32 %v7482, 0.0
    %v7560 = vmax.f32 %v7034, 0.0
    %v7561 = vmax.f32 %v7036, 0.0
    %v7562 = vmax.f32 %v7486, 0.0
    %v7563 = vmax.f32 %v7488, 0.0
    %v7564 = vmax.f32 %v7038, 0.0
    %v7565 = vmax.f32 %v7040, 0.0
    %v7566 = vmax.f32 %v7490, 0.0
    %v7567 = vmax.f32 %v7492, 0.0
    %v7568 = vmax.f32 %v7044, 0.0
    %v7569 = vmax.f32 %v7046, 0.0
    %v7570 = vmax.f32 %v7496, 0.0
    %v7571 = vmax.f32 %v7498, 0.0
    %v7572 = vmax.f32 %v7048, 0.0
    %v7573 = vmax.f32 %v7050, 0.0
    %v7574 = vmax.f32 %v7500, 0.0
    %v7575 = vmax.f32 %v7502, 0.0
    %v7576 = vmax.f32 %v7054, 0.0
    %v7577 = vmax.f32 %v7056, 0.0
    %v7578 = vmax.f32 %v7506, 0.0
    %v7579 = vmax.f32 %v7508, 0.0
    %v7580 = vmax.f32 %v7058, 0.0
    %v7581 = vmax.f32 %v7060, 0.0
    %v7582 = vmax.f32 %v7510, 0.0
    %v7583 = vmax.f32 %v7512, 0.0
    %v7584 = vmax.f32 %v7064, 0.0
    %v7585 = vmax.f32 %v7066, 0.0
    %v7586 = vmax.f32 %v7516, 0.0
    %v7587 = vmax.f32 %v7518, 0.0
    %v7588 = vmax.f32 %v7068, 0.0
    %v7589 = vmax.f32 %v7070, 0.0
    %v7590 = vmax.f32 %v7520, 0.0
    %v7591 = vmax.f32 %v7522, 0.0
    %v7592 = vmax.f32 %v7074, 0.0
    %v7593 = vmax.f32 %v7076, 0.0
    %v7594 = vmax.f32 %v7526, 0.0
    %v7595 = vmax.f32 %v7528, 0.0
    %v7596 = vmax.f32 %v7078, 0.0
    %v7597 = vmax.f32 %v7080, 0.0
    %v7598 = vmax.f32 %v7530, 0.0
    %v7599 = vmax.f32 %v7532, 0.0
    %v7600 = vmax.f32 %v7084, 0.0
    %v7601 = vmax.f32 %v7086, 0.0
    %v7602 = vmax.f32 %v7536, 0.0
    %v7603 = vmax.f32 %v7538, 0.0
    %v7604 = vmax.f32 %v7088, 0.0
    %v7605 = vmax.f32 %v7090, 0.0
    %v7606 = vmax.f32 %v7540, 0.0
    %v7607 = vmax.f32 %v7542, 0.0
    %v7608 = vpack.c.bf16 %v7548, %v7544
    %v7609 = vpack.c.bf16 %v7549, %v7545
    %v7610 = vpack.c.bf16 %v7550, %v7546
    %v7611 = vpack.c.bf16 %v7551, %v7547
    %v7612 = vpack.c.bf16 %v7556, %v7552
    %v7613 = vpack.c.bf16 %v7557, %v7553
    %v7614 = vpack.c.bf16 %v7558, %v7554
    %v7615 = vpack.c.bf16 %v7559, %v7555
    %v7616 = vpack.c.bf16 %v7564, %v7560
    %v7617 = vpack.c.bf16 %v7565, %v7561
    %v7618 = vpack.c.bf16 %v7566, %v7562
    %v7619 = vpack.c.bf16 %v7567, %v7563
    %v7620 = vpack.c.bf16 %v7572, %v7568
    %v7621 = vpack.c.bf16 %v7573, %v7569
    %v7622 = vpack.c.bf16 %v7574, %v7570
    %v7623 = vpack.c.bf16 %v7575, %v7571
    %v7624 = vpack.c.bf16 %v7580, %v7576
    %v7625 = vpack.c.bf16 %v7581, %v7577
    %v7626 = vpack.c.bf16 %v7582, %v7578
    %v7627 = vpack.c.bf16 %v7583, %v7579
    %v7628 = vpack.c.bf16 %v7588, %v7584
    %v7629 = vpack.c.bf16 %v7589, %v7585
    %v7630 = vpack.c.bf16 %v7590, %v7586
    %v7631 = vpack.c.bf16 %v7591, %v7587
    %v7632 = vpack.c.bf16 %v7596, %v7592
    %v7633 = vpack.c.bf16 %v7597, %v7593
    %v7634 = vpack.c.bf16 %v7598, %v7594
    %v7635 = vpack.c.bf16 %v7599, %v7595
    %v7636 = vpack.c.bf16 %v7604, %v7600
    %v7637 = vpack.c.bf16 %v7605, %v7601
    %v7638 = vpack.c.bf16 %v7606, %v7602
    %v7639 = vpack.c.bf16 %v7607, %v7603
    %v7640 = vld [vmem:[#allocation13] sm:$0xf]
    %v7641 = vld [vmem:[#allocation13 + $0x4] sm:$0xf]
    %v7642 = vld [vmem:[#allocation13 + $0x8] sm:$0xf]
    %v7643 = vld [vmem:[#allocation13 + $0xc] sm:$0xf]
    %v7644 = vld [vmem:[#allocation13 + $0x10] sm:$0xf]
    %v7645 = vld [vmem:[#allocation13 + $0x14] sm:$0xf]
    %v7646 = vld [vmem:[#allocation13 + $0x18] sm:$0xf]
    %v7647 = vld [vmem:[#allocation13 + $0x1c] sm:$0xf]
    %v7648 = vld [vmem:[#allocation13 + $0x20] sm:$0xf]
    %v7649 = vld [vmem:[#allocation13 + $0x24] sm:$0xf]
    %v7650 = vld [vmem:[#allocation13 + $0x28] sm:$0xf]
    %v7651 = vld [vmem:[#allocation13 + $0x2c] sm:$0xf]
    %v7652 = vld [vmem:[#allocation13 + $0x30] sm:$0xf]
    %v7653 = vld [vmem:[#allocation13 + $0x34] sm:$0xf]
    %v7654 = vld [vmem:[#allocation13 + $0x38] sm:$0xf]
    %v7655 = vld [vmem:[#allocation13 + $0x3c] sm:$0xf]
    %v7656 = vld [vmem:[#allocation13 + $0x40] sm:$0xf]
    %v7657 = vld [vmem:[#allocation13 + $0x44] sm:$0xf]
    %v7658 = vld [vmem:[#allocation13 + $0x48] sm:$0xf]
    %v7659 = vld [vmem:[#allocation13 + $0x4c] sm:$0xf]
    %v7660 = vld [vmem:[#allocation13 + $0x50] sm:$0xf]
    %v7661 = vld [vmem:[#allocation13 + $0x54] sm:$0xf]
    %v7662 = vld [vmem:[#allocation13 + $0x58] sm:$0xf]
    %v7663 = vld [vmem:[#allocation13 + $0x5c] sm:$0xf]
    %v7664 = vld [vmem:[#allocation13 + $0x60] sm:$0xf]
    %v7665 = vld [vmem:[#allocation13 + $0x64] sm:$0xf]
    %v7666 = vld [vmem:[#allocation13 + $0x68] sm:$0xf]
    %v7667 = vld [vmem:[#allocation13 + $0x6c] sm:$0xf]
    %v7668 = vld [vmem:[#allocation13 + $0x70] sm:$0xf]
    %v7669 = vld [vmem:[#allocation13 + $0x74] sm:$0xf]
    %v7670 = vld [vmem:[#allocation13 + $0x78] sm:$0xf]
    %v7671 = vld [vmem:[#allocation13 + $0x7c] sm:$0xf]
    %v7672 = vld [vmem:[#allocation13 + $0x80] sm:$0xf]
    %v7673 = vld [vmem:[#allocation13 + $0x84] sm:$0xf]
    %v7674 = vld [vmem:[#allocation13 + $0x88] sm:$0xf]
    %v7675 = vld [vmem:[#allocation13 + $0x8c] sm:$0xf]
    %v7676 = vld [vmem:[#allocation13 + $0x90] sm:$0xf]
    %v7677 = vld [vmem:[#allocation13 + $0x94] sm:$0xf]
    %v7678 = vld [vmem:[#allocation13 + $0x98] sm:$0xf]
    %v7679 = vld [vmem:[#allocation13 + $0x9c] sm:$0xf]
    %v7680 = vld [vmem:[#allocation13 + $0xa0] sm:$0xf]
    %v7681 = vld [vmem:[#allocation13 + $0xa4] sm:$0xf]
    %v7682 = vld [vmem:[#allocation13 + $0xa8] sm:$0xf]
    %v7683 = vld [vmem:[#allocation13 + $0xac] sm:$0xf]
    %v7684 = vld [vmem:[#allocation13 + $0xb0] sm:$0xf]
    %v7685 = vld [vmem:[#allocation13 + $0xb4] sm:$0xf]
    %v7686 = vld [vmem:[#allocation13 + $0xb8] sm:$0xf]
    %v7687 = vld [vmem:[#allocation13 + $0xbc] sm:$0xf]
    %v7688 = vld [vmem:[#allocation13 + $0xc0] sm:$0xf]
    %v7689 = vld [vmem:[#allocation13 + $0xc4] sm:$0xf]
    %v7690 = vld [vmem:[#allocation13 + $0xc8] sm:$0xf]
    %v7691 = vld [vmem:[#allocation13 + $0xcc] sm:$0xf]
    %v7692 = vld [vmem:[#allocation13 + $0xd0] sm:$0xf]
    %v7693 = vld [vmem:[#allocation13 + $0xd4] sm:$0xf]
    %v7694 = vld [vmem:[#allocation13 + $0xd8] sm:$0xf]
    %v7695 = vld [vmem:[#allocation13 + $0xdc] sm:$0xf]
    %v7696 = vld [vmem:[#allocation13 + $0xe0] sm:$0xf]
    %v7697 = vld [vmem:[#allocation13 + $0xe4] sm:$0xf]
    %v7698 = vld [vmem:[#allocation13 + $0xe8] sm:$0xf]
    %v7699 = vld [vmem:[#allocation13 + $0xec] sm:$0xf]
    %v7700 = vld [vmem:[#allocation13 + $0xf0] sm:$0xf]
    %v7701 = vld [vmem:[#allocation13 + $0xf4] sm:$0xf]
    %v7702 = vld [vmem:[#allocation13 + $0xf8] sm:$0xf]
    %v7703 = vld [vmem:[#allocation13 + $0xfc] sm:$0xf]
    %v7704 = vld [vmem:[#allocation14] sm:$0x1]
    %v7706 = vlaneseq
    %v7707 = vshrl.u32 %v7706, 7
    %v7708 = vsub.s32 0, %v7707
    %v7709 = vrot.slane %v7704, %v7708
    %v7775 = vunpack.c.l.b16 %v7640
    %v7776 = vunpack.c.l.b16 %v7641
    %v7777 = vunpack.c.l.b16 %v7642
    %v7778 = vunpack.c.l.b16 %v7643
    %v7779 = vunpack.c.l.b16 %v7644
    %v7780 = vunpack.c.l.b16 %v7645
    %v7781 = vunpack.c.l.b16 %v7646
    %v7782 = vunpack.c.l.b16 %v7647
    %v7783 = vunpack.c.l.b16 %v7648
    %v7784 = vunpack.c.l.b16 %v7649
    %v7785 = vunpack.c.l.b16 %v7650
    %v7786 = vunpack.c.l.b16 %v7651
    %v7787 = vunpack.c.l.b16 %v7652
    %v7788 = vunpack.c.l.b16 %v7653
    %v7789 = vunpack.c.l.b16 %v7654
    %v7790 = vunpack.c.l.b16 %v7655
    %v7791 = vunpack.c.l.b16 %v7656
    %v7792 = vunpack.c.l.b16 %v7657
    %v7793 = vunpack.c.l.b16 %v7658
    %v7794 = vunpack.c.l.b16 %v7659
    %v7795 = vunpack.c.l.b16 %v7660
    %v7796 = vunpack.c.l.b16 %v7661
    %v7797 = vunpack.c.l.b16 %v7662
    %v7798 = vunpack.c.l.b16 %v7663
    %v7799 = vunpack.c.l.b16 %v7664
    %v7800 = vunpack.c.l.b16 %v7665
    %v7801 = vunpack.c.l.b16 %v7666
    %v7802 = vunpack.c.l.b16 %v7667
    %v7803 = vunpack.c.l.b16 %v7668
    %v7804 = vunpack.c.l.b16 %v7669
    %v7805 = vunpack.c.l.b16 %v7670
    %v7806 = vunpack.c.l.b16 %v7671
    %v7807 = vunpack.c.l.b16 %v7672
    %v7808 = vunpack.c.l.b16 %v7673
    %v7809 = vunpack.c.l.b16 %v7674
    %v7810 = vunpack.c.l.b16 %v7675
    %v7811 = vunpack.c.l.b16 %v7676
    %v7812 = vunpack.c.l.b16 %v7677
    %v7813 = vunpack.c.l.b16 %v7678
    %v7814 = vunpack.c.l.b16 %v7679
    %v7815 = vunpack.c.l.b16 %v7680
    %v7816 = vunpack.c.l.b16 %v7681
    %v7817 = vunpack.c.l.b16 %v7682
    %v7818 = vunpack.c.l.b16 %v7683
    %v7819 = vunpack.c.l.b16 %v7684
    %v7820 = vunpack.c.l.b16 %v7685
    %v7821 = vunpack.c.l.b16 %v7686
    %v7822 = vunpack.c.l.b16 %v7687
    %v7823 = vunpack.c.l.b16 %v7688
    %v7824 = vunpack.c.l.b16 %v7689
    %v7825 = vunpack.c.l.b16 %v7690
    %v7826 = vunpack.c.l.b16 %v7691
    %v7827 = vunpack.c.l.b16 %v7692
    %v7828 = vunpack.c.l.b16 %v7693
    %v7829 = vunpack.c.l.b16 %v7694
    %v7830 = vunpack.c.l.b16 %v7695
    %v7831 = vunpack.c.l.b16 %v7696
    %v7832 = vunpack.c.l.b16 %v7697
    %v7833 = vunpack.c.l.b16 %v7698
    %v7834 = vunpack.c.l.b16 %v7699
    %v7835 = vunpack.c.l.b16 %v7700
    %v7836 = vunpack.c.l.b16 %v7701
    %v7837 = vunpack.c.l.b16 %v7702
    %v7838 = vunpack.c.l.b16 %v7703
    %v7839 = vpack.c.b16 %v7776, %v7775
    %v7840 = vpack.c.b16 %v7778, %v7777
    %v7841 = vpack.c.b16 %v7780, %v7779
    %v7842 = vpack.c.b16 %v7782, %v7781
    %v7843 = vpack.c.b16 %v7784, %v7783
    %v7844 = vpack.c.b16 %v7786, %v7785
    %v7845 = vpack.c.b16 %v7788, %v7787
    %v7846 = vpack.c.b16 %v7790, %v7789
    %v7847 = vpack.c.b16 %v7792, %v7791
    %v7848 = vpack.c.b16 %v7794, %v7793
    %v7849 = vpack.c.b16 %v7796, %v7795
    %v7850 = vpack.c.b16 %v7798, %v7797
    %v7851 = vpack.c.b16 %v7800, %v7799
    %v7852 = vpack.c.b16 %v7802, %v7801
    %v7853 = vpack.c.b16 %v7804, %v7803
    %v7854 = vpack.c.b16 %v7806, %v7805
    %v7855 = vpack.c.b16 %v7808, %v7807
    %v7856 = vpack.c.b16 %v7810, %v7809
    %v7857 = vpack.c.b16 %v7812, %v7811
    %v7858 = vpack.c.b16 %v7814, %v7813
    %v7859 = vpack.c.b16 %v7816, %v7815
    %v7860 = vpack.c.b16 %v7818, %v7817
    %v7861 = vpack.c.b16 %v7820, %v7819
    %v7862 = vpack.c.b16 %v7822, %v7821
    %v7863 = vpack.c.b16 %v7824, %v7823
    %v7864 = vpack.c.b16 %v7826, %v7825
    %v7865 = vpack.c.b16 %v7828, %v7827
    %v7866 = vpack.c.b16 %v7830, %v7829
    %v7867 = vpack.c.b16 %v7832, %v7831
    %v7868 = vpack.c.b16 %v7834, %v7833
    %v7869 = vpack.c.b16 %v7836, %v7835
    %v7870 = vpack.c.b16 %v7838, %v7837
    %7903 = vmatprep.subr.bf16.mxu0 0
    %7904 = vmatpush1.bf16.msra.mxu0 %v7846
    %7905 = vmatprep.subr.bf16.mxu0 0
    %7906 = vmatpush1.bf16.msra.mxu0 %v7845
    %7907 = vmatprep.subr.bf16.mxu0 0
    %7908 = vmatpush1.bf16.msra.mxu0 %v7844
    %7909 = vmatprep.subr.bf16.mxu0 0
    %7910 = vmatpush1.bf16.msra.mxu0 %v7843
    %7911 = vmatprep.subr.bf16.mxu0 0
    %7912 = vmatpush1.bf16.msra.mxu0 %v7842
    %7913 = vmatprep.subr.bf16.mxu0 0
    %7914 = vmatpush1.bf16.msra.mxu0 %v7841
    %7915 = vmatprep.subr.bf16.mxu0 0
    %7916 = vmatpush1.bf16.msra.mxu0 %v7840
    %7917 = vmatprep.subr.bf16.mxu0 0
    %7918 = vmatpush1.bf16.msra.mxu0 %v7839
    %7919 = vmatprep.subr.bf16.mxu0 0
    %7920 = vmatpush2.bf16.msra.mxu0 %v7854
    %7921 = vmatprep.subr.bf16.mxu0 0
    %7922 = vmatpush2.bf16.msra.mxu0 %v7853
    %7923 = vmatprep.subr.bf16.mxu0 0
    %7924 = vmatpush2.bf16.msra.mxu0 %v7852
    %7925 = vmatprep.subr.bf16.mxu0 0
    %7926 = vmatpush2.bf16.msra.mxu0 %v7851
    %7927 = vmatprep.subr.bf16.mxu0 0
    %7928 = vmatpush2.bf16.msra.mxu0 %v7850
    %7929 = vmatprep.subr.bf16.mxu0 0
    %7930 = vmatpush2.bf16.msra.mxu0 %v7849
    %7931 = vmatprep.subr.bf16.mxu0 0
    %7932 = vmatpush2.bf16.msra.mxu0 %v7848
    %7933 = vmatprep.subr.bf16.mxu0 0
    %7934 = vmatpush2.bf16.msra.mxu0 %v7847
    %7935 = vmatprep.mubr.bf16.mxu0 %v7609
    %7936 = vmatmul.mubr.bf16.gmra.mxu0 %v7608
    %v7937 = vpop.f32.mrf.mxu0
    %v7938 = vadd.f32 %v7709, %v7937
    %v7939 = vpop.f32.mrf.mxu0
    %v7940 = vpop.f32.mrf.mxu0
    %v7941 = vadd.f32 %v7709, %v7940
    %v7942 = vpop.f32.mrf.mxu0
    %7943 = vmatprep.mubr.bf16.mxu0 %v7613
    %7944 = vmatmul.mubr.bf16.gmra.mxu0 %v7612
    %v7945 = vpop.f32.mrf.mxu0
    %v7946 = vadd.f32 %v7709, %v7945
    %v7947 = vpop.f32.mrf.mxu0
    %v7948 = vpop.f32.mrf.mxu0
    %v7949 = vadd.f32 %v7709, %v7948
    %v7950 = vpop.f32.mrf.mxu0
    %7951 = vmatprep.mubr.bf16.mxu0 %v7617
    %7952 = vmatmul.mubr.bf16.gmra.mxu0 %v7616
    %v7953 = vpop.f32.mrf.mxu0
    %v7954 = vadd.f32 %v7709, %v7953
    %v7955 = vpop.f32.mrf.mxu0
    %v7956 = vpop.f32.mrf.mxu0
    %v7957 = vadd.f32 %v7709, %v7956
    %v7958 = vpop.f32.mrf.mxu0
    %7959 = vmatprep.mubr.bf16.mxu0 %v7621
    %7960 = vmatmul.mubr.bf16.gmra.mxu0 %v7620
    %v7961 = vpop.f32.mrf.mxu0
    %v7962 = vadd.f32 %v7709, %v7961
    %v7963 = vpop.f32.mrf.mxu0
    %v7964 = vpop.f32.mrf.mxu0
    %v7965 = vadd.f32 %v7709, %v7964
    %v7966 = vpop.f32.mrf.mxu0
    %7967 = vmatprep.mubr.bf16.mxu0 %v7625
    %7968 = vmatmul.mubr.bf16.gmra.mxu0 %v7624
    %v7969 = vpop.f32.mrf.mxu0
    %v7970 = vadd.f32 %v7709, %v7969
    %v7971 = vpop.f32.mrf.mxu0
    %v7972 = vpop.f32.mrf.mxu0
    %v7973 = vadd.f32 %v7709, %v7972
    %v7974 = vpop.f32.mrf.mxu0
    %7975 = vmatprep.mubr.bf16.mxu0 %v7629
    %7976 = vmatmul.mubr.bf16.gmra.mxu0 %v7628
    %v7977 = vpop.f32.mrf.mxu0
    %v7978 = vadd.f32 %v7709, %v7977
    %v7979 = vpop.f32.mrf.mxu0
    %v7980 = vpop.f32.mrf.mxu0
    %v7981 = vadd.f32 %v7709, %v7980
    %v7982 = vpop.f32.mrf.mxu0
    %7983 = vmatprep.mubr.bf16.mxu0 %v7633
    %7984 = vmatmul.mubr.bf16.gmra.mxu0 %v7632
    %v7985 = vpop.f32.mrf.mxu0
    %v7986 = vadd.f32 %v7709, %v7985
    %v7987 = vpop.f32.mrf.mxu0
    %v7988 = vpop.f32.mrf.mxu0
    %v7989 = vadd.f32 %v7709, %v7988
    %v7990 = vpop.f32.mrf.mxu0
    %7991 = vmatprep.mubr.bf16.mxu0 %v7637
    %7992 = vmatmul.mubr.bf16.gmra.mxu0 %v7636
    %v7993 = vpop.f32.mrf.mxu0
    %v7994 = vadd.f32 %v7709, %v7993
    %v7995 = vpop.f32.mrf.mxu0
    %v7996 = vpop.f32.mrf.mxu0
    %v7997 = vadd.f32 %v7709, %v7996
    %v7998 = vpop.f32.mrf.mxu0
    %7999 = vdwg.mxu0
    %8000 = vmatprep.subr.bf16.mxu0 0
    %8001 = vmatpush1.bf16.msra.mxu0 %v7862
    %8002 = vmatprep.subr.bf16.mxu0 0
    %8003 = vmatpush1.bf16.msra.mxu0 %v7861
    %8004 = vmatprep.subr.bf16.mxu0 0
    %8005 = vmatpush1.bf16.msra.mxu0 %v7860
    %8006 = vmatprep.subr.bf16.mxu0 0
    %8007 = vmatpush1.bf16.msra.mxu0 %v7859
    %8008 = vmatprep.subr.bf16.mxu0 0
    %8009 = vmatpush1.bf16.msra.mxu0 %v7858
    %8010 = vmatprep.subr.bf16.mxu0 0
    %8011 = vmatpush1.bf16.msra.mxu0 %v7857
    %8012 = vmatprep.subr.bf16.mxu0 0
    %8013 = vmatpush1.bf16.msra.mxu0 %v7856
    %8014 = vmatprep.subr.bf16.mxu0 0
    %8015 = vmatpush1.bf16.msra.mxu0 %v7855
    %8016 = vmatprep.subr.bf16.mxu0 0
    %8017 = vmatpush2.bf16.msra.mxu0 %v7870
    %8018 = vmatprep.subr.bf16.mxu0 0
    %8019 = vmatpush2.bf16.msra.mxu0 %v7869
    %8020 = vmatprep.subr.bf16.mxu0 0
    %8021 = vmatpush2.bf16.msra.mxu0 %v7868
    %8022 = vmatprep.subr.bf16.mxu0 0
    %8023 = vmatpush2.bf16.msra.mxu0 %v7867
    %8024 = vmatprep.subr.bf16.mxu0 0
    %8025 = vmatpush2.bf16.msra.mxu0 %v7866
    %8026 = vmatprep.subr.bf16.mxu0 0
    %8027 = vmatpush2.bf16.msra.mxu0 %v7865
    %8028 = vmatprep.subr.bf16.mxu0 0
    %8029 = vmatpush2.bf16.msra.mxu0 %v7864
    %8030 = vmatprep.subr.bf16.mxu0 0
    %8031 = vmatpush2.bf16.msra.mxu0 %v7863
    %8032 = vmatprep.mubr.bf16.mxu0 %v7611
    %8033 = vmatmul.mubr.bf16.gmra.mxu0 %v7610
    %v8034 = vpop.f32.mrf.mxu0
    %v8035 = vadd.f32 %v7938, %v8034
    %v8036 = vpop.f32.mrf.mxu0
    %v8037 = vpop.f32.mrf.mxu0
    %v8038 = vadd.f32 %v7941, %v8037
    %v8039 = vpop.f32.mrf.mxu0
    %8040 = vmatprep.mubr.bf16.mxu0 %v7615
    %8041 = vmatmul.mubr.bf16.gmra.mxu0 %v7614
    %v8042 = vpop.f32.mrf.mxu0
    %v8043 = vadd.f32 %v7946, %v8042
    %v8044 = vpop.f32.mrf.mxu0
    %v8045 = vpop.f32.mrf.mxu0
    %v8046 = vadd.f32 %v7949, %v8045
    %v8047 = vpop.f32.mrf.mxu0
    %8048 = vmatprep.mubr.bf16.mxu0 %v7619
    %8049 = vmatmul.mubr.bf16.gmra.mxu0 %v7618
    %v8050 = vpop.f32.mrf.mxu0
    %v8051 = vadd.f32 %v7954, %v8050
    %v8052 = vpop.f32.mrf.mxu0
    %v8053 = vpop.f32.mrf.mxu0
    %v8054 = vadd.f32 %v7957, %v8053
    %v8055 = vpop.f32.mrf.mxu0
    %8056 = vmatprep.mubr.bf16.mxu0 %v7623
    %8057 = vmatmul.mubr.bf16.gmra.mxu0 %v7622
    %v8058 = vpop.f32.mrf.mxu0
    %v8059 = vadd.f32 %v7962, %v8058
    %v8060 = vpop.f32.mrf.mxu0
    %v8061 = vpop.f32.mrf.mxu0
    %v8062 = vadd.f32 %v7965, %v8061
    %v8063 = vpop.f32.mrf.mxu0
    %8064 = vmatprep.mubr.bf16.mxu0 %v7627
    %8065 = vmatmul.mubr.bf16.gmra.mxu0 %v7626
    %v8066 = vpop.f32.mrf.mxu0
    %v8067 = vadd.f32 %v7970, %v8066
    %v8068 = vpop.f32.mrf.mxu0
    %v8069 = vpop.f32.mrf.mxu0
    %v8070 = vadd.f32 %v7973, %v8069
    %v8071 = vpop.f32.mrf.mxu0
    %8072 = vmatprep.mubr.bf16.mxu0 %v7631
    %8073 = vmatmul.mubr.bf16.gmra.mxu0 %v7630
    %v8074 = vpop.f32.mrf.mxu0
    %v8075 = vadd.f32 %v7978, %v8074
    %v8076 = vpop.f32.mrf.mxu0
    %v8077 = vpop.f32.mrf.mxu0
    %v8078 = vadd.f32 %v7981, %v8077
    %v8079 = vpop.f32.mrf.mxu0
    %8080 = vmatprep.mubr.bf16.mxu0 %v7635
    %8081 = vmatmul.mubr.bf16.gmra.mxu0 %v7634
    %v8082 = vpop.f32.mrf.mxu0
    %v8083 = vadd.f32 %v7986, %v8082
    %v8084 = vpop.f32.mrf.mxu0
    %v8085 = vpop.f32.mrf.mxu0
    %v8086 = vadd.f32 %v7989, %v8085
    %v8087 = vpop.f32.mrf.mxu0
    %8088 = vmatprep.mubr.bf16.mxu0 %v7639
    %8089 = vmatmul.mubr.bf16.gmra.mxu0 %v7638
    %v8090 = vpop.f32.mrf.mxu0
    %v8091 = vadd.f32 %v7994, %v8090
    %v8092 = vpop.f32.mrf.mxu0
    %v8093 = vpop.f32.mrf.mxu0
    %v8094 = vadd.f32 %v7997, %v8093
    %v8095 = vpop.f32.mrf.mxu0
    %8096 = vdwg.mxu0
    %8097 = vst [vmem:[#allocation16] sm:$0xff] %v8035
    %8098 = vst [vmem:[#allocation16 + $0x8] sm:$0xff] %v8038
    %8099 = vst [vmem:[#allocation16 + $0x10] sm:$0xff] %v8043
    %8100 = vst [vmem:[#allocation16 + $0x18] sm:$0xff] %v8046
    %8101 = vst [vmem:[#allocation16 + $0x20] sm:$0xff] %v8051
    %8102 = vst [vmem:[#allocation16 + $0x28] sm:$0xff] %v8054
    %8103 = vst [vmem:[#allocation16 + $0x30] sm:$0xff] %v8059
    %8104 = vst [vmem:[#allocation16 + $0x38] sm:$0xff] %v8062
    %8105 = vst [vmem:[#allocation16 + $0x40] sm:$0xff] %v8067
    %8106 = vst [vmem:[#allocation16 + $0x48] sm:$0xff] %v8070
    %8107 = vst [vmem:[#allocation16 + $0x50] sm:$0xff] %v8075
    %8108 = vst [vmem:[#allocation16 + $0x58] sm:$0xff] %v8078
    %8109 = vst [vmem:[#allocation16 + $0x60] sm:$0xff] %v8083
    %8110 = vst [vmem:[#allocation16 + $0x68] sm:$0xff] %v8086
    %8111 = vst [vmem:[#allocation16 + $0x70] sm:$0xff] %v8091
    %8112 = vst [vmem:[#allocation16 + $0x78] sm:$0xff] %v8094
    // Predicated region
    $region70: #{tpu_custom_call.1} parent=1 // pred_check
      _
    $region71: #{tpu_custom_call.1} parent=1 // pred_check_branch
      %8114 = sbr.rel (0) target = $region73
    $region72: #{tpu_custom_call.1} parent=1 // pred_region
      %s8116 = ssub.s32 2048, 2048
      %8117 = vsyncadd [#allocation4], %s8116
      %s8118 = sshll.u32 [#allocation16], 4
      %s8119 = int_to_ptr.vmem [resolvable:$true] %s8118
      %8124 = dma.vmem_to_hbm [thread:$0]  %s8119, 2048, %s9, [#allocation4], 128, 128, 8
    $region73: #{tpu_custom_call.1} parent=1 // pred_fallthru
      _
    // Predicated region
    $region74: #{tpu_custom_call.1} parent=1 // pred_check
      _
    $region75: #{tpu_custom_call.1} parent=1 // pred_check_branch
      %8126 = sbr.rel (0) target = $region77
    $region76: #{tpu_custom_call.1} parent=1 // pred_region
      %8127 = dma.done [#allocation4], 2048
    $region77: #{tpu_custom_call.1} parent=1 // pred_fallthru
      _
    %8128 = vsyncpa [#allocation3], 1
    %8129 = vsyncpa [#allocation6], 1
    %8130 = vsyncpa [#allocation9], 1
    %8131 = vsyncpa [#allocation12], 1
    %8132 = vsyncpa [#allocation15], 1
    %8133 = vsyncpa [#allocation4], 1

</llo_original>
